<compile_context>
chip_gen: v5e
topology: v5e:2x2
jax: 0.10.0
libtpu: 0.0.40
codegen_flags: <defaults>
</compile_context>

<pallas_src>
import functools

import jax
import jax.numpy as jnp
from jax import lax
from jax.experimental import pallas as pl
from jax.experimental.pallas import tpu as pltpu


def _wideblock_kernel(*refs, stride, has_shortcut):
    if has_shortcut:
        (x_ref, bn1s_ref, bn1b_ref, w1_ref, bn2s_ref, bn2b_ref, w2_ref,
         fb_ref, ws_ref, out_ref, im1_ref, im2_ref) = refs
    else:
        (x_ref, bn1s_ref, bn1b_ref, w1_ref, bn2s_ref, bn2b_ref, w2_ref,
         fb_ref, out_ref, im1_ref, im2_ref) = refs
        ws_ref = None

    _, H, W, Cin = x_ref.shape
    _, Ho, Wo, Cout = out_ref.shape
    s = stride
    f32 = jnp.float32
    act_dt = im1_ref.dtype            # bf16 : MXU-native input dtype

    # --- vertical zero-pad rows of the im2col buffers (tiny stores; done every
    #     step so a megacore split of the batch axis stays correct — all other
    #     scratch cells are fully overwritten each step).  Horizontal zero
    #     padding is built directly into the stored slab: no column halo. -----
    im1_ref[0:1, :, :] = jnp.zeros((1, Wo, 3 * Cin), act_dt)
    im1_ref[H + 1:H + 2, :, :] = jnp.zeros((1, Wo, 3 * Cin), act_dt)
    im2_ref[0:1, :, :] = jnp.zeros((1, Wo, 3 * Cout), act_dt)
    im2_ref[Ho + 1:Ho + 2, :, :] = jnp.zeros((1, Wo, 3 * Cout), act_dt)

    def fill_im2col(im_ref, v, wcols, st):
        # v: (rows, vW, C) f32 activation image.  Writes rows [1:rows+1] of
        # im_ref with B[r, w, kw*C + c] = v_zeropad[r, st*w + kw - 1, c]
        # as ONE aligned, lane-dense bf16 store (kw packed on the lane axis).
        rows, vW, C = v.shape
        zcol = jnp.zeros((rows, 1, C), v.dtype)
        if st == 1:
            center = v
            left = jnp.concatenate([zcol, v[:, :wcols - 1, :]], axis=1)
            right = jnp.concatenate([v[:, 1:, :], zcol], axis=1)
        else:
            # TODO(synk): stride > 1 (value-level column decimation) is not
            # exercised by the test below.
            center = v[:, 0:st * wcols:st, :]
            right = v[:, 1:st * wcols:st, :]
            left = jnp.concatenate(
                [zcol, v[:, st - 1:st * (wcols - 1):st, :]], axis=1)
        slab = jnp.concatenate([left, center, right], axis=-1)   # (rows,wcols,3C)
        im_ref[1:rows + 1, :, :] = slab.astype(im_ref.dtype)

    def conv3x3(im_ref, w_ref, kdim, st):
        # 3 whole-image MXU matmuls, M = Ho*Wo, K = 3*C (kw folded into K).
        acc = None
        for kh in range(3):
            if st == 1:
                rows = im_ref[kh:kh + Ho, :, :]
            else:
                # TODO(synk): strided (stride > 1) row selection is untested.
                rows = im_ref[pl.ds(kh, Ho, stride=st), :, :]
            d = jnp.dot(rows.reshape(Ho * Wo, kdim), w_ref[kh],
                        preferred_element_type=f32)
            acc = d if acc is None else acc + d
        return acc                                    # (Ho*Wo, Cout) f32

    # ------------- BN1 + ReLU -> im2col buffer (one aligned store) -----------
    x = x_ref[0]                                      # (H, W, Cin) f32
    v1 = jnp.maximum(x * bn1s_ref[...] + bn1b_ref[...], 0.0)
    fill_im2col(im1_ref, v1, Wo, s)

    # conv1 (stride=s) -> BN2 (conv1 bias already folded into bn2b) -> ReLU.
    # Dropout is the identity in inference mode.
    h2 = jnp.maximum(conv3x3(im1_ref, w1_ref, 3 * Cin, s) * bn2s_ref[...]
                     + bn2b_ref[...], 0.0)
    fill_im2col(im2_ref, h2.reshape(Ho, Wo, Cout), Wo, 1)

    # conv2 (3x3, stride 1, pad 1)
    acc2 = conv3x3(im2_ref, w2_ref, 3 * Cout, 1)

    # shortcut: re-read x_ref at its use site (no long-lived f32 temporary).
    if s == 1:
        xs = x_ref[0]
    else:
        # TODO(synk): stride > 1 shortcut decimation is untested.
        xs = x_ref[0][0:s * (Ho - 1) + 1:s, 0:s * (Wo - 1) + 1:s, :]
    if has_shortcut:
        short = jnp.dot(xs.reshape(Ho * Wo, Cin).astype(act_dt), ws_ref[...],
                        preferred_element_type=f32)
    else:
        short = xs.reshape(Ho * Wo, Cin)              # exact f32 identity add

    out2d = acc2 + short + fb_ref[...]                # fb = b2 (+ bs)
    out_ref[0, :, :, :] = out2d.reshape(Ho, Wo, Cout).astype(out_ref.dtype)


def wideblock_pallas(x_nchw, p, *, stride=1, eps=1e-5):
    N, Cin, H, W = x_nchw.shape
    Cout = p["w1"].shape[-1]
    Ho = (H + 2 - 3) // stride + 1
    Wo = (W + 2 - 3) // stride + 1
    # The in-kernel (rows, Wo, C) <-> (rows*Wo, C) reshapes are layout-free only
    # when the width is a multiple of the 8-sublane tile (true for WideResNet
    # spatial sizes 8/16/32).
    # TODO(synk): larger spatial sizes would need an additional row-tiled grid axis.
    assert W % 8 == 0 and Wo % 8 == 0, "W and Wo must be multiples of 8"

    f32 = jnp.float32
    bf16 = jnp.bfloat16

    # NCHW -> NHWC.  x stays f32 so BN1 math and the identity-shortcut add are
    # exact; conv operands are cast to bf16 only at the MXU.
    x = jnp.transpose(x_nchw, (0, 2, 3, 1)).astype(f32)

    # Fold BatchNorm (inference) into per-channel scale/bias; fold conv1's bias
    # into the BN2 affine, and conv2 + shortcut biases into one final bias.
    s1 = p["bn1_gamma"] / jnp.sqrt(p["bn1_var"] + eps)
    o1 = p["bn1_beta"] - p["bn1_mean"] * s1
    s2 = p["bn2_gamma"] / jnp.sqrt(p["bn2_var"] + eps)
    o2 = p["bn2_beta"] - p["bn2_mean"] * s2
    bn2b = p["b1"] * s2 + o2
    has_shortcut = (stride != 1) or (Cin != Cout)
    fb = p["b2"] + (p["bs"] if has_shortcut else 0.0)

    # Weights reshaped so the matmul K axis packs (kw, C): K index = kw*C + c.
    w1r = p["w1"].reshape(3, 3 * Cin, Cout).astype(bf16)
    w2r = p["w2"].reshape(3, 3 * Cout, Cout).astype(bf16)

    args = [
        x,
        s1.reshape(1, 1, Cin).astype(f32), o1.reshape(1, 1, Cin).astype(f32),
        w1r,
        s2.reshape(1, Cout).astype(f32), bn2b.reshape(1, Cout).astype(f32),
        w2r,
        fb.reshape(1, Cout).astype(f32),
    ]
    if has_shortcut:
        args.append(p["ws"].reshape(Cin, Cout).astype(bf16))

    im1_shape = (H + 2, Wo, 3 * Cin)
    im2_shape = (Ho + 2, Wo, 3 * Cout)
    scratch_shapes = [pltpu.VMEM(im1_shape, bf16),
                      pltpu.VMEM(im2_shape, bf16)]

    # VMEM budget: double-buffered x/out blocks, constants (covers the
    # double-buffered fallback), bf16 im2col scratch, in-kernel f32 slabs.
    const_bytes = sum(int(a.size) * a.dtype.itemsize for a in args[1:])
    est = (2 * 4 * H * W * Cin                       # x block (f32), 2 buffers
           + 2 * 4 * Ho * Wo * Cout                  # out block (f32), 2 buffers
           + 2 * const_bytes
           + 2 * im1_shape[0] * im1_shape[1] * im1_shape[2]
           + 2 * im2_shape[0] * im2_shape[1] * im2_shape[2]
           + 10 * Ho * Wo * Cout * 4                 # acc / h2 / out temporaries
           + 6 * H * W * Cin * 4)                    # BN1 / shifted-slab temporaries
    try:
        phys_vmem = int(pltpu.get_tpu_info().vmem_capacity_bytes)
    except Exception:
        phys_vmem = 64 * 1024 * 1024
    # Keep headroom below the physical per-core VMEM (critical on v7x's 64 MiB;
    # allows ~100 MiB on v5e/v6e's 128 MiB).
    vmem_limit = int(min(max(2 * est, 32 * 1024 * 1024), (phys_vmem * 4) // 5))

    kernel = functools.partial(_wideblock_kernel, stride=stride,
                               has_shortcut=has_shortcut)

    def build(single_buffer_consts):
        def const_spec(shape):
            nd = len(shape)
            if single_buffer_consts:
                # Grid-invariant operands: no double buffering (saves ~7.5 MB
                # per 640-ch 3x3 bf16 weight on v7x's 64 MiB VMEM).
                return pl.BlockSpec(shape, lambda n, _nd=nd: (0,) * _nd,
                                    pipeline_mode=pl.Buffered(1))
            return pl.BlockSpec(shape, lambda n, _nd=nd: (0,) * _nd)

        in_specs = [
            pl.BlockSpec((1, H, W, Cin), lambda n: (n, 0, 0, 0)),
            const_spec((1, 1, Cin)), const_spec((1, 1, Cin)),
            const_spec((3, 3 * Cin, Cout)),
            const_spec((1, Cout)), const_spec((1, Cout)),
            const_spec((3, 3 * Cout, Cout)),
            const_spec((1, Cout)),
        ]
        if has_shortcut:
            in_specs.append(const_spec((Cin, Cout)))

        return pl.pallas_call(
            kernel,
            out_shape=jax.ShapeDtypeStruct((N, Ho, Wo, Cout), f32),
            grid_spec=pltpu.PrefetchScalarGridSpec(
                num_scalar_prefetch=0,
                grid=(N,),
                in_specs=in_specs,
                out_specs=pl.BlockSpec((1, Ho, Wo, Cout),
                                       lambda n: (n, 0, 0, 0)),
                scratch_shapes=scratch_shapes,
            ),
            compiler_params=pltpu.CompilerParams(
                dimension_semantics=("parallel",),   # batch axis -> 2 TCs on v7x
                vmem_limit_bytes=vmem_limit,
            ),
        )

    try:
        out_nhwc = jax.block_until_ready(build(True)(*args))
    except Exception:
        # Fallback for JAX builds without BlockSpec(pipeline_mode=pl.Buffered(1)).
        out_nhwc = jax.block_until_ready(build(False)(*args))

    return jnp.transpose(out_nhwc, (0, 3, 1, 2))      # NHWC -> NCHW


# ------------------------------ pure-JAX reference ---------------------------
def wideblock_ref(x_nchw, p, *, stride=1, eps=1e-5):
    x = jnp.transpose(x_nchw, (0, 2, 3, 1)).astype(jnp.float32)

    def bn(h, g, b, m, v):
        return (h - m) / jnp.sqrt(v + eps) * g + b

    def conv(h, w, b, s, pad):
        o = lax.conv_general_dilated(h, w, (s, s), pad,
                                     dimension_numbers=("NHWC", "HWIO", "NHWC"),
                                     precision=lax.Precision.HIGHEST)
        return o + b

    h = jax.nn.relu(bn(x, p["bn1_gamma"], p["bn1_beta"], p["bn1_mean"], p["bn1_var"]))
    h = conv(h, p["w1"], p["b1"], stride, ((1, 1), (1, 1)))
    h = jax.nn.relu(bn(h, p["bn2_gamma"], p["bn2_beta"], p["bn2_mean"], p["bn2_var"]))
    h = conv(h, p["w2"], p["b2"], 1, ((1, 1), (1, 1)))
    Cin, Cout = x.shape[-1], p["w1"].shape[-1]
    if stride != 1 or Cin != Cout:
        sc = conv(x, p["ws"], p["bs"], stride, ((0, 0), (0, 0)))
    else:
        sc = x
    return jnp.transpose(h + sc, (0, 3, 1, 2))


def make_params(key, in_ch, out_ch):
    ks = jax.random.split(key, 14)
    f = jnp.float32
    return dict(
        bn1_gamma=jax.random.uniform(ks[0], (in_ch,), f, 0.5, 1.5),
        bn1_beta=0.1 * jax.random.normal(ks[1], (in_ch,), f),
        bn1_mean=0.1 * jax.random.normal(ks[2], (in_ch,), f),
        bn1_var=jax.random.uniform(ks[3], (in_ch,), f, 0.5, 1.5),
        w1=0.1 * jax.random.normal(ks[4], (3, 3, in_ch, out_ch), f),
        b1=0.1 * jax.random.normal(ks[5], (out_ch,), f),
        bn2_gamma=jax.random.uniform(ks[6], (out_ch,), f, 0.5, 1.5),
        bn2_beta=0.1 * jax.random.normal(ks[7], (out_ch,), f),
        bn2_mean=0.1 * jax.random.normal(ks[8], (out_ch,), f),
        bn2_var=jax.random.uniform(ks[9], (out_ch,), f, 0.5, 1.5),
        w2=0.1 * jax.random.normal(ks[10], (3, 3, out_ch, out_ch), f),
        b2=0.1 * jax.random.normal(ks[11], (out_ch,), f),
        ws=0.1 * jax.random.normal(ks[12], (1, 1, in_ch, out_ch), f),
        bs=0.1 * jax.random.normal(ks[13], (out_ch,), f),
    )


if __name__ == "__main__":
    key = jax.random.PRNGKey(0)
    kx1, kp1, kx2, kp2 = jax.random.split(key, 4)

    # Case 1: channel expansion (Cin != Cout) -> 1x1-conv shortcut path.
    N, Cin, Cout, H, W = 2, 4, 8, 16, 16
    x1 = jax.random.normal(kx1, (N, Cin, H, W), jnp.float32)
    p1 = make_params(kp1, Cin, Cout)
    out1 = jax.block_until_ready(wideblock_pallas(x1, p1, stride=1))
    ref1 = wideblock_ref(x1, p1, stride=1)
    assert out1.shape == ref1.shape == (N, Cout, H, W)
    err1 = float(jnp.max(jnp.abs(out1 - ref1)))
    # bf16 MXU inputs (f32 accumulation) vs. f32 HIGHEST-precision reference.
    if not jnp.allclose(out1, ref1, atol=5e-2, rtol=5e-2):
        raise AssertionError(f"shortcut-path mismatch, max abs err = {err1}")

    # Case 2: same channels, stride 1 -> exact (f32) identity shortcut path.
    C2 = 8
    x2 = jax.random.normal(kx2, (N, C2, H, W), jnp.float32)
    p2 = make_params(kp2, C2, C2)
    out2 = jax.block_until_ready(wideblock_pallas(x2, p2, stride=1))
    ref2 = wideblock_ref(x2, p2, stride=1)
    assert out2.shape == ref2.shape == (N, C2, H, W)
    err2 = float(jnp.max(jnp.abs(out2 - ref2)))
    if not jnp.allclose(out2, ref2, atol=5e-2, rtol=5e-2):
        raise AssertionError(f"identity-path mismatch, max abs err = {err2}")

    print("KERNEL_OK")
</pallas_src>

<mosaic_0001>
module attributes {stable_mosaic.version = 11 : i64} {
  func.func @_wideblock_kernel(%arg0: i32, %arg1: memref<1x16x16x4xf32, #tpu.memory_space<vmem>>, %arg2: memref<1x1x4xf32, #tpu.memory_space<vmem>>, %arg3: memref<1x1x4xf32, #tpu.memory_space<vmem>>, %arg4: memref<3x12x8xbf16, #tpu.memory_space<vmem>>, %arg5: memref<1x8xf32, #tpu.memory_space<vmem>>, %arg6: memref<1x8xf32, #tpu.memory_space<vmem>>, %arg7: memref<3x24x8xbf16, #tpu.memory_space<vmem>>, %arg8: memref<1x8xf32, #tpu.memory_space<vmem>>, %arg9: memref<4x8xbf16, #tpu.memory_space<vmem>>, %arg10: memref<1x16x16x8xf32, #tpu.memory_space<vmem>>, %arg11: memref<18x16x12xbf16, #tpu.memory_space<vmem>>, %arg12: memref<18x16x24xbf16, #tpu.memory_space<vmem>>) attributes {dimension_semantics = [#tpu.dimension_semantics<parallel>], iteration_bounds = array<i64: 2>, scalar_prefetch = 0 : i64, scratch_operands = 2 : i64, tpu.core_type = #tpu.core_type<tc>, window_params = [{transform_indices = @transform_0, window_bounds = array<i64: 1, 16, 16, 4>}, {pipeline_mode = #tpu.pipeline_mode<synchronous>, transform_indices = @transform_1, window_bounds = array<i64: 1, 1, 4>}, {pipeline_mode = #tpu.pipeline_mode<synchronous>, transform_indices = @transform_2, window_bounds = array<i64: 1, 1, 4>}, {pipeline_mode = #tpu.pipeline_mode<synchronous>, transform_indices = @transform_3, window_bounds = array<i64: 3, 12, 8>}, {pipeline_mode = #tpu.pipeline_mode<synchronous>, transform_indices = @transform_4, window_bounds = array<i64: 1, 8>}, {pipeline_mode = #tpu.pipeline_mode<synchronous>, transform_indices = @transform_5, window_bounds = array<i64: 1, 8>}, {pipeline_mode = #tpu.pipeline_mode<synchronous>, transform_indices = @transform_6, window_bounds = array<i64: 3, 24, 8>}, {pipeline_mode = #tpu.pipeline_mode<synchronous>, transform_indices = @transform_7, window_bounds = array<i64: 1, 8>}, {pipeline_mode = #tpu.pipeline_mode<synchronous>, transform_indices = @transform_8, window_bounds = array<i64: 4, 8>}, {transform_indices = @transform_9, window_bounds = array<i64: 1, 16, 16, 8>}]} {
    %cst = arith.constant 0.000000e+00 : bf16
    %0 = vector.broadcast %cst : bf16 to vector<1x16x12xbf16>
    %c0 = arith.constant 0 : index
    %c0_0 = arith.constant 0 : index
    %c0_1 = arith.constant 0 : index
    %1 = vector.load %arg11[%c0, %c0_0, %c0_1] : memref<18x16x12xbf16, #tpu.memory_space<vmem>>, vector<1x16x12xbf16>
    tpu.vector_store %arg11[%c0, %c0_0, %c0_1], %0 {strides = array<i32>} : memref<18x16x12xbf16, #tpu.memory_space<vmem>>, vector<1x16x12xbf16>,
    %cst_2 = arith.constant 0.000000e+00 : bf16
    %2 = vector.broadcast %cst_2 : bf16 to vector<1x16x12xbf16>
    %c17 = arith.constant 17 : index
    %c0_3 = arith.constant 0 : index
    %c0_4 = arith.constant 0 : index
    %3 = vector.load %arg11[%c17, %c0_3, %c0_4] : memref<18x16x12xbf16, #tpu.memory_space<vmem>>, vector<1x16x12xbf16>
    tpu.vector_store %arg11[%c17, %c0_3, %c0_4], %2 {strides = array<i32>} : memref<18x16x12xbf16, #tpu.memory_space<vmem>>, vector<1x16x12xbf16>,
    %cst_5 = arith.constant 0.000000e+00 : bf16
    %4 = vector.broadcast %cst_5 : bf16 to vector<1x16x24xbf16>
    %c0_6 = arith.constant 0 : index
    %c0_7 = arith.constant 0 : index
    %c0_8 = arith.constant 0 : index
    %5 = vector.load %arg12[%c0_6, %c0_7, %c0_8] : memref<18x16x24xbf16, #tpu.memory_space<vmem>>, vector<1x16x24xbf16>
    tpu.vector_store %arg12[%c0_6, %c0_7, %c0_8], %4 {strides = array<i32>} : memref<18x16x24xbf16, #tpu.memory_space<vmem>>, vector<1x16x24xbf16>,
    %cst_9 = arith.constant 0.000000e+00 : bf16
    %6 = vector.broadcast %cst_9 : bf16 to vector<1x16x24xbf16>
    %c17_10 = arith.constant 17 : index
    %c0_11 = arith.constant 0 : index
    %c0_12 = arith.constant 0 : index
    %7 = vector.load %arg12[%c17_10, %c0_11, %c0_12] : memref<18x16x24xbf16, #tpu.memory_space<vmem>>, vector<1x16x24xbf16>
    tpu.vector_store %arg12[%c17_10, %c0_11, %c0_12], %6 {strides = array<i32>} : memref<18x16x24xbf16, #tpu.memory_space<vmem>>, vector<1x16x24xbf16>,
    %c0_13 = arith.constant 0 : index
    %c0_14 = arith.constant 0 : index
    %c0_15 = arith.constant 0 : index
    %c0_16 = arith.constant 0 : index
    %8 = vector.load %arg1[%c0_13, %c0_14, %c0_15, %c0_16] : memref<1x16x16x4xf32, #tpu.memory_space<vmem>>, vector<1x16x16x4xf32>
    %9 = vector.shape_cast %8 : vector<1x16x16x4xf32> to vector<16x16x4xf32>
    %c0_17 = arith.constant 0 : index
    %c0_18 = arith.constant 0 : index
    %c0_19 = arith.constant 0 : index
    %10 = vector.load %arg2[%c0_17, %c0_18, %c0_19] : memref<1x1x4xf32, #tpu.memory_space<vmem>>, vector<1x1x4xf32>
    %11 = vector.broadcast %10 : vector<1x1x4xf32> to vector<16x16x4xf32>
    %12 = arith.mulf %9, %11 : vector<16x16x4xf32>
    %c0_20 = arith.constant 0 : index
    %c0_21 = arith.constant 0 : index
    %c0_22 = arith.constant 0 : index
    %13 = vector.load %arg3[%c0_20, %c0_21, %c0_22] : memref<1x1x4xf32, #tpu.memory_space<vmem>>, vector<1x1x4xf32>
    %14 = vector.broadcast %13 : vector<1x1x4xf32> to vector<16x16x4xf32>
    %15 = arith.addf %12, %14 : vector<16x16x4xf32>
    %cst_23 = arith.constant 0.000000e+00 : f32
    %16 = vector.broadcast %cst_23 : f32 to vector<16x16x4xf32>
    %17 = arith.maximumf %15, %16 : vector<16x16x4xf32>
    %cst_24 = arith.constant 0.000000e+00 : f32
    %18 = vector.broadcast %cst_24 : f32 to vector<16x1x4xf32>
    %19 = vector.extract_strided_slice %17 {offsets = [0, 0, 0], sizes = [16, 15, 4], strides = [1, 1, 1]} : vector<16x16x4xf32> to vector<16x15x4xf32>
    %20 = tpu.concatenate %18, %19 in 1 : vector<16x1x4xf32>, vector<16x15x4xf32> -> vector<16x16x4xf32>
    %21 = vector.extract_strided_slice %17 {offsets = [0, 1, 0], sizes = [16, 15, 4], strides = [1, 1, 1]} : vector<16x16x4xf32> to vector<16x15x4xf32>
    %22 = tpu.concatenate %21, %18 in 1 : vector<16x15x4xf32>, vector<16x1x4xf32> -> vector<16x16x4xf32>
    %23 = tpu.concatenate %20, %17, %22 in 2 : vector<16x16x4xf32>, vector<16x16x4xf32>, vector<16x16x4xf32> -> vector<16x16x12xf32>
    %24 = arith.truncf %23 : vector<16x16x12xf32> to vector<16x16x12xbf16>
    %c1 = arith.constant 1 : index
    %c0_25 = arith.constant 0 : index
    %c0_26 = arith.constant 0 : index
    %25 = vector.load %arg11[%c1, %c0_25, %c0_26] : memref<18x16x12xbf16, #tpu.memory_space<vmem>>, vector<16x16x12xbf16>
    tpu.vector_store %arg11[%c1, %c0_25, %c0_26], %24 {strides = array<i32>} : memref<18x16x12xbf16, #tpu.memory_space<vmem>>, vector<16x16x12xbf16>,
    %c0_27 = arith.constant 0 : index
    %c0_28 = arith.constant 0 : index
    %c0_29 = arith.constant 0 : index
    %26 = vector.load %arg11[%c0_27, %c0_28, %c0_29] : memref<18x16x12xbf16, #tpu.memory_space<vmem>>, vector<16x16x12xbf16>
    %27 = vector.shape_cast %26 : vector<16x16x12xbf16> to vector<256x12xbf16>
    %c0_30 = arith.constant 0 : index
    %c0_31 = arith.constant 0 : index
    %c0_32 = arith.constant 0 : index
    %28 = vector.load %arg4[%c0_30, %c0_31, %c0_32] : memref<3x12x8xbf16, #tpu.memory_space<vmem>>, vector<1x12x8xbf16>
    %29 = vector.shape_cast %28 : vector<1x12x8xbf16> to vector<12x8xbf16>
    %cst_33 = arith.constant dense<0.000000e+00> : vector<256x8xf32>
    %30 = tpu.matmul %27, %29, %cst_33 {dimension_numbers = #tpu.dot_dimension_numbers<[1], [0], [0], [1], [0, 0, 1, 1], [], []>} : vector<256x12xbf16>, vector<12x8xbf16>, vector<256x8xf32> -> vector<256x8xf32>
    %c1_34 = arith.constant 1 : index
    %c0_35 = arith.constant 0 : index
    %c0_36 = arith.constant 0 : index
    %31 = vector.load %arg11[%c1_34, %c0_35, %c0_36] : memref<18x16x12xbf16, #tpu.memory_space<vmem>>, vector<16x16x12xbf16>
    %32 = vector.shape_cast %31 : vector<16x16x12xbf16> to vector<256x12xbf16>
    %c1_37 = arith.constant 1 : index
    %c0_38 = arith.constant 0 : index
    %c0_39 = arith.constant 0 : index
    %33 = vector.load %arg4[%c1_37, %c0_38, %c0_39] : memref<3x12x8xbf16, #tpu.memory_space<vmem>>, vector<1x12x8xbf16>
    %34 = vector.shape_cast %33 : vector<1x12x8xbf16> to vector<12x8xbf16>
    %cst_40 = arith.constant dense<0.000000e+00> : vector<256x8xf32>
    %35 = tpu.matmul %32, %34, %cst_40 {dimension_numbers = #tpu.dot_dimension_numbers<[1], [0], [0], [1], [0, 0, 1, 1], [], []>} : vector<256x12xbf16>, vector<12x8xbf16>, vector<256x8xf32> -> vector<256x8xf32>
    %36 = arith.addf %30, %35 : vector<256x8xf32>
    %c2 = arith.constant 2 : index
    %c0_41 = arith.constant 0 : index
    %c0_42 = arith.constant 0 : index
    %37 = vector.load %arg11[%c2, %c0_41, %c0_42] : memref<18x16x12xbf16, #tpu.memory_space<vmem>>, vector<16x16x12xbf16>
    %38 = vector.shape_cast %37 : vector<16x16x12xbf16> to vector<256x12xbf16>
    %c2_43 = arith.constant 2 : index
    %c0_44 = arith.constant 0 : index
    %c0_45 = arith.constant 0 : index
    %39 = vector.load %arg4[%c2_43, %c0_44, %c0_45] : memref<3x12x8xbf16, #tpu.memory_space<vmem>>, vector<1x12x8xbf16>
    %40 = vector.shape_cast %39 : vector<1x12x8xbf16> to vector<12x8xbf16>
    %cst_46 = arith.constant dense<0.000000e+00> : vector<256x8xf32>
    %41 = tpu.matmul %38, %40, %cst_46 {dimension_numbers = #tpu.dot_dimension_numbers<[1], [0], [0], [1], [0, 0, 1, 1], [], []>} : vector<256x12xbf16>, vector<12x8xbf16>, vector<256x8xf32> -> vector<256x8xf32>
    %42 = arith.addf %36, %41 : vector<256x8xf32>
    %c0_47 = arith.constant 0 : index
    %c0_48 = arith.constant 0 : index
    %43 = vector.load %arg5[%c0_47, %c0_48] : memref<1x8xf32, #tpu.memory_space<vmem>>, vector<1x8xf32>
    %44 = vector.broadcast %43 : vector<1x8xf32> to vector<256x8xf32>
    %45 = arith.mulf %42, %44 : vector<256x8xf32>
    %c0_49 = arith.constant 0 : index
    %c0_50 = arith.constant 0 : index
    %46 = vector.load %arg6[%c0_49, %c0_50] : memref<1x8xf32, #tpu.memory_space<vmem>>, vector<1x8xf32>
    %47 = vector.broadcast %46 : vector<1x8xf32> to vector<256x8xf32>
    %48 = arith.addf %45, %47 : vector<256x8xf32>
    %cst_51 = arith.constant 0.000000e+00 : f32
    %49 = vector.broadcast %cst_51 : f32 to vector<256x8xf32>
    %50 = arith.maximumf %48, %49 : vector<256x8xf32>
    %51 = vector.shape_cast %50 : vector<256x8xf32> to vector<16x16x8xf32>
    %cst_52 = arith.constant 0.000000e+00 : f32
    %52 = vector.broadcast %cst_52 : f32 to vector<16x1x8xf32>
    %53 = vector.extract_strided_slice %51 {offsets = [0, 0, 0], sizes = [16, 15, 8], strides = [1, 1, 1]} : vector<16x16x8xf32> to vector<16x15x8xf32>
    %54 = tpu.concatenate %52, %53 in 1 : vector<16x1x8xf32>, vector<16x15x8xf32> -> vector<16x16x8xf32>
    %55 = vector.extract_strided_slice %51 {offsets = [0, 1, 0], sizes = [16, 15, 8], strides = [1, 1, 1]} : vector<16x16x8xf32> to vector<16x15x8xf32>
    %56 = tpu.concatenate %55, %52 in 1 : vector<16x15x8xf32>, vector<16x1x8xf32> -> vector<16x16x8xf32>
    %57 = tpu.concatenate %54, %51, %56 in 2 : vector<16x16x8xf32>, vector<16x16x8xf32>, vector<16x16x8xf32> -> vector<16x16x24xf32>
    %58 = arith.truncf %57 : vector<16x16x24xf32> to vector<16x16x24xbf16>
    %c1_53 = arith.constant 1 : index
    %c0_54 = arith.constant 0 : index
    %c0_55 = arith.constant 0 : index
    %59 = vector.load %arg12[%c1_53, %c0_54, %c0_55] : memref<18x16x24xbf16, #tpu.memory_space<vmem>>, vector<16x16x24xbf16>
    tpu.vector_store %arg12[%c1_53, %c0_54, %c0_55], %58 {strides = array<i32>} : memref<18x16x24xbf16, #tpu.memory_space<vmem>>, vector<16x16x24xbf16>,
    %c0_56 = arith.constant 0 : index
    %c0_57 = arith.constant 0 : index
    %c0_58 = arith.constant 0 : index
    %60 = vector.load %arg12[%c0_56, %c0_57, %c0_58] : memref<18x16x24xbf16, #tpu.memory_space<vmem>>, vector<16x16x24xbf16>
    %61 = vector.shape_cast %60 : vector<16x16x24xbf16> to vector<256x24xbf16>
    %c0_59 = arith.constant 0 : index
    %c0_60 = arith.constant 0 : index
    %c0_61 = arith.constant 0 : index
    %62 = vector.load %arg7[%c0_59, %c0_60, %c0_61] : memref<3x24x8xbf16, #tpu.memory_space<vmem>>, vector<1x24x8xbf16>
    %63 = vector.shape_cast %62 : vector<1x24x8xbf16> to vector<24x8xbf16>
    %cst_62 = arith.constant dense<0.000000e+00> : vector<256x8xf32>
    %64 = tpu.matmul %61, %63, %cst_62 {dimension_numbers = #tpu.dot_dimension_numbers<[1], [0], [0], [1], [0, 0, 1, 1], [], []>} : vector<256x24xbf16>, vector<24x8xbf16>, vector<256x8xf32> -> vector<256x8xf32>
    %c1_63 = arith.constant 1 : index
    %c0_64 = arith.constant 0 : index
    %c0_65 = arith.constant 0 : index
    %65 = vector.load %arg12[%c1_63, %c0_64, %c0_65] : memref<18x16x24xbf16, #tpu.memory_space<vmem>>, vector<16x16x24xbf16>
    %66 = vector.shape_cast %65 : vector<16x16x24xbf16> to vector<256x24xbf16>
    %c1_66 = arith.constant 1 : index
    %c0_67 = arith.constant 0 : index
    %c0_68 = arith.constant 0 : index
    %67 = vector.load %arg7[%c1_66, %c0_67, %c0_68] : memref<3x24x8xbf16, #tpu.memory_space<vmem>>, vector<1x24x8xbf16>
    %68 = vector.shape_cast %67 : vector<1x24x8xbf16> to vector<24x8xbf16>
    %cst_69 = arith.constant dense<0.000000e+00> : vector<256x8xf32>
    %69 = tpu.matmul %66, %68, %cst_69 {dimension_numbers = #tpu.dot_dimension_numbers<[1], [0], [0], [1], [0, 0, 1, 1], [], []>} : vector<256x24xbf16>, vector<24x8xbf16>, vector<256x8xf32> -> vector<256x8xf32>
    %70 = arith.addf %64, %69 : vector<256x8xf32>
    %c2_70 = arith.constant 2 : index
    %c0_71 = arith.constant 0 : index
    %c0_72 = arith.constant 0 : index
    %71 = vector.load %arg12[%c2_70, %c0_71, %c0_72] : memref<18x16x24xbf16, #tpu.memory_space<vmem>>, vector<16x16x24xbf16>
    %72 = vector.shape_cast %71 : vector<16x16x24xbf16> to vector<256x24xbf16>
    %c2_73 = arith.constant 2 : index
    %c0_74 = arith.constant 0 : index
    %c0_75 = arith.constant 0 : index
    %73 = vector.load %arg7[%c2_73, %c0_74, %c0_75] : memref<3x24x8xbf16, #tpu.memory_space<vmem>>, vector<1x24x8xbf16>
    %74 = vector.shape_cast %73 : vector<1x24x8xbf16> to vector<24x8xbf16>
    %cst_76 = arith.constant dense<0.000000e+00> : vector<256x8xf32>
    %75 = tpu.matmul %72, %74, %cst_76 {dimension_numbers = #tpu.dot_dimension_numbers<[1], [0], [0], [1], [0, 0, 1, 1], [], []>} : vector<256x24xbf16>, vector<24x8xbf16>, vector<256x8xf32> -> vector<256x8xf32>
    %76 = arith.addf %70, %75 : vector<256x8xf32>
    %c0_77 = arith.constant 0 : index
    %c0_78 = arith.constant 0 : index
    %c0_79 = arith.constant 0 : index
    %c0_80 = arith.constant 0 : index
    %77 = vector.load %arg1[%c0_77, %c0_78, %c0_79, %c0_80] : memref<1x16x16x4xf32, #tpu.memory_space<vmem>>, vector<1x16x16x4xf32>
    %78 = vector.shape_cast %77 : vector<1x16x16x4xf32> to vector<16x16x4xf32>
    %79 = vector.shape_cast %78 : vector<16x16x4xf32> to vector<256x4xf32>
    %80 = arith.truncf %79 : vector<256x4xf32> to vector<256x4xbf16>
    %c0_81 = arith.constant 0 : index
    %c0_82 = arith.constant 0 : index
    %81 = vector.load %arg9[%c0_81, %c0_82] : memref<4x8xbf16, #tpu.memory_space<vmem>>, vector<4x8xbf16>
    %cst_83 = arith.constant dense<0.000000e+00> : vector<256x8xf32>
    %82 = tpu.matmul %80, %81, %cst_83 {dimension_numbers = #tpu.dot_dimension_numbers<[1], [0], [0], [1], [0, 0, 1, 1], [], []>} : vector<256x4xbf16>, vector<4x8xbf16>, vector<256x8xf32> -> vector<256x8xf32>
    %83 = arith.addf %76, %82 : vector<256x8xf32>
    %c0_84 = arith.constant 0 : index
    %c0_85 = arith.constant 0 : index
    %84 = vector.load %arg8[%c0_84, %c0_85] : memref<1x8xf32, #tpu.memory_space<vmem>>, vector<1x8xf32>
    %85 = vector.broadcast %84 : vector<1x8xf32> to vector<256x8xf32>
    %86 = arith.addf %83, %85 : vector<256x8xf32>
    %87 = vector.shape_cast %86 : vector<256x8xf32> to vector<16x16x8xf32>
    %c0_86 = arith.constant 0 : index
    %c0_87 = arith.constant 0 : index
    %c0_88 = arith.constant 0 : index
    %c0_89 = arith.constant 0 : index
    %88 = vector.load %arg10[%c0_86, %c0_87, %c0_88, %c0_89] : memref<1x16x16x8xf32, #tpu.memory_space<vmem>>, vector<1x16x16x8xf32>
    %89 = vector.shape_cast %88 : vector<1x16x16x8xf32> to vector<16x16x8xf32>
    %90 = vector.shape_cast %87 : vector<16x16x8xf32> to vector<1x16x16x8xf32>
    tpu.vector_store %arg10[%c0_86, %c0_87, %c0_88, %c0_89], %90 {strides = array<i32>} : memref<1x16x16x8xf32, #tpu.memory_space<vmem>>, vector<1x16x16x8xf32>,
    return
  }
  func.func @transform_0(%arg0: i32) -> (i32, i32, i32, i32) {
    %c0_i32 = arith.constant 0 : i32
    %c0_i32_0 = arith.constant 0 : i32
    %c0_i32_1 = arith.constant 0 : i32
    %c0_i32_2 = arith.constant 0 : i32
    return %arg0, %c0_i32, %c0_i32_0, %c0_i32_1 : i32, i32, i32, i32
  }
  func.func @transform_1(%arg0: i32) -> (i32, i32, i32) {
    %c0_i32 = arith.constant 0 : i32
    %c0_i32_0 = arith.constant 0 : i32
    %c0_i32_1 = arith.constant 0 : i32
    %c0_i32_2 = arith.constant 0 : i32
    return %c0_i32, %c0_i32_0, %c0_i32_1 : i32, i32, i32
  }
  func.func @transform_2(%arg0: i32) -> (i32, i32, i32) {
    %c0_i32 = arith.constant 0 : i32
    %c0_i32_0 = arith.constant 0 : i32
    %c0_i32_1 = arith.constant 0 : i32
    %c0_i32_2 = arith.constant 0 : i32
    return %c0_i32, %c0_i32_0, %c0_i32_1 : i32, i32, i32
  }
  func.func @transform_3(%arg0: i32) -> (i32, i32, i32) {
    %c0_i32 = arith.constant 0 : i32
    %c0_i32_0 = arith.constant 0 : i32
    %c0_i32_1 = arith.constant 0 : i32
    %c0_i32_2 = arith.constant 0 : i32
    return %c0_i32, %c0_i32_0, %c0_i32_1 : i32, i32, i32
  }
  func.func @transform_4(%arg0: i32) -> (i32, i32) {
    %c0_i32 = arith.constant 0 : i32
    %c0_i32_0 = arith.constant 0 : i32
    %c0_i32_1 = arith.constant 0 : i32
    return %c0_i32, %c0_i32_0 : i32, i32
  }
  func.func @transform_5(%arg0: i32) -> (i32, i32) {
    %c0_i32 = arith.constant 0 : i32
    %c0_i32_0 = arith.constant 0 : i32
    %c0_i32_1 = arith.constant 0 : i32
    return %c0_i32, %c0_i32_0 : i32, i32
  }
  func.func @transform_6(%arg0: i32) -> (i32, i32, i32) {
    %c0_i32 = arith.constant 0 : i32
    %c0_i32_0 = arith.constant 0 : i32
    %c0_i32_1 = arith.constant 0 : i32
    %c0_i32_2 = arith.constant 0 : i32
    return %c0_i32, %c0_i32_0, %c0_i32_1 : i32, i32, i32
  }
  func.func @transform_7(%arg0: i32) -> (i32, i32) {
    %c0_i32 = arith.constant 0 : i32
    %c0_i32_0 = arith.constant 0 : i32
    %c0_i32_1 = arith.constant 0 : i32
    return %c0_i32, %c0_i32_0 : i32, i32
  }
  func.func @transform_8(%arg0: i32) -> (i32, i32) {
    %c0_i32 = arith.constant 0 : i32
    %c0_i32_0 = arith.constant 0 : i32
    %c0_i32_1 = arith.constant 0 : i32
    return %c0_i32, %c0_i32_0 : i32, i32
  }
  func.func @transform_9(%arg0: i32) -> (i32, i32, i32, i32) {
    %c0_i32 = arith.constant 0 : i32
    %c0_i32_0 = arith.constant 0 : i32
    %c0_i32_1 = arith.constant 0 : i32
    %c0_i32_2 = arith.constant 0 : i32
    return %arg0, %c0_i32, %c0_i32_0, %c0_i32_1 : i32, i32, i32, i32
  }
}

module attributes {stable_mosaic.version = 11 : i64} {
  func.func @_wideblock_kernel(%arg0: i32, %arg1: memref<1x16x16x4xf32, #tpu.memory_space<vmem>>, %arg2: memref<1x1x4xf32, #tpu.memory_space<vmem>>, %arg3: memref<1x1x4xf32, #tpu.memory_space<vmem>>, %arg4: memref<3x12x8xbf16, #tpu.memory_space<vmem>>, %arg5: memref<1x8xf32, #tpu.memory_space<vmem>>, %arg6: memref<1x8xf32, #tpu.memory_space<vmem>>, %arg7: memref<3x24x8xbf16, #tpu.memory_space<vmem>>, %arg8: memref<1x8xf32, #tpu.memory_space<vmem>>, %arg9: memref<4x8xbf16, #tpu.memory_space<vmem>>, %arg10: memref<1x16x16x8xf32, #tpu.memory_space<vmem>>, %arg11: memref<18x16x12xbf16, #tpu.memory_space<vmem>>, %arg12: memref<18x16x24xbf16, #tpu.memory_space<vmem>>) attributes {dimension_semantics = [#tpu.dimension_semantics<parallel>], iteration_bounds = array<i64: 2>, scalar_prefetch = 0 : i64, scratch_operands = 2 : i64, tpu.core_type = #tpu.core_type<tc>, window_params = [{transform_indices = @transform_0, window_bounds = array<i64: 1, 16, 16, 4>}, {pipeline_mode = #tpu.pipeline_mode<synchronous>, transform_indices = @transform_1, window_bounds = array<i64: 1, 1, 4>}, {pipeline_mode = #tpu.pipeline_mode<synchronous>, transform_indices = @transform_2, window_bounds = array<i64: 1, 1, 4>}, {pipeline_mode = #tpu.pipeline_mode<synchronous>, transform_indices = @transform_3, window_bounds = array<i64: 3, 12, 8>}, {pipeline_mode = #tpu.pipeline_mode<synchronous>, transform_indices = @transform_4, window_bounds = array<i64: 1, 8>}, {pipeline_mode = #tpu.pipeline_mode<synchronous>, transform_indices = @transform_5, window_bounds = array<i64: 1, 8>}, {pipeline_mode = #tpu.pipeline_mode<synchronous>, transform_indices = @transform_6, window_bounds = array<i64: 3, 24, 8>}, {pipeline_mode = #tpu.pipeline_mode<synchronous>, transform_indices = @transform_7, window_bounds = array<i64: 1, 8>}, {pipeline_mode = #tpu.pipeline_mode<synchronous>, transform_indices = @transform_8, window_bounds = array<i64: 4, 8>}, {transform_indices = @transform_9, window_bounds = array<i64: 1, 16, 16, 8>}]} {
    %cst = arith.constant 0.000000e+00 : bf16
    %0 = vector.broadcast %cst : bf16 to vector<1x16x12xbf16>
    %c0 = arith.constant 0 : index
    %c0_0 = arith.constant 0 : index
    %c0_1 = arith.constant 0 : index
    %1 = vector.load %arg11[%c0, %c0_0, %c0_1] : memref<18x16x12xbf16, #tpu.memory_space<vmem>>, vector<1x16x12xbf16>
    tpu.vector_store %arg11[%c0, %c0_0, %c0_1], %0 {strides = array<i32>} : memref<18x16x12xbf16, #tpu.memory_space<vmem>>, vector<1x16x12xbf16>,
    %cst_2 = arith.constant 0.000000e+00 : bf16
    %2 = vector.broadcast %cst_2 : bf16 to vector<1x16x12xbf16>
    %c17 = arith.constant 17 : index
    %c0_3 = arith.constant 0 : index
    %c0_4 = arith.constant 0 : index
    %3 = vector.load %arg11[%c17, %c0_3, %c0_4] : memref<18x16x12xbf16, #tpu.memory_space<vmem>>, vector<1x16x12xbf16>
    tpu.vector_store %arg11[%c17, %c0_3, %c0_4], %2 {strides = array<i32>} : memref<18x16x12xbf16, #tpu.memory_space<vmem>>, vector<1x16x12xbf16>,
    %cst_5 = arith.constant 0.000000e+00 : bf16
    %4 = vector.broadcast %cst_5 : bf16 to vector<1x16x24xbf16>
    %c0_6 = arith.constant 0 : index
    %c0_7 = arith.constant 0 : index
    %c0_8 = arith.constant 0 : index
    %5 = vector.load %arg12[%c0_6, %c0_7, %c0_8] : memref<18x16x24xbf16, #tpu.memory_space<vmem>>, vector<1x16x24xbf16>
    tpu.vector_store %arg12[%c0_6, %c0_7, %c0_8], %4 {strides = array<i32>} : memref<18x16x24xbf16, #tpu.memory_space<vmem>>, vector<1x16x24xbf16>,
    %cst_9 = arith.constant 0.000000e+00 : bf16
    %6 = vector.broadcast %cst_9 : bf16 to vector<1x16x24xbf16>
    %c17_10 = arith.constant 17 : index
    %c0_11 = arith.constant 0 : index
    %c0_12 = arith.constant 0 : index
    %7 = vector.load %arg12[%c17_10, %c0_11, %c0_12] : memref<18x16x24xbf16, #tpu.memory_space<vmem>>, vector<1x16x24xbf16>
    tpu.vector_store %arg12[%c17_10, %c0_11, %c0_12], %6 {strides = array<i32>} : memref<18x16x24xbf16, #tpu.memory_space<vmem>>, vector<1x16x24xbf16>,
    %c0_13 = arith.constant 0 : index
    %c0_14 = arith.constant 0 : index
    %c0_15 = arith.constant 0 : index
    %c0_16 = arith.constant 0 : index
    %8 = vector.load %arg1[%c0_13, %c0_14, %c0_15, %c0_16] : memref<1x16x16x4xf32, #tpu.memory_space<vmem>>, vector<1x16x16x4xf32>
    %9 = vector.shape_cast %8 : vector<1x16x16x4xf32> to vector<16x16x4xf32>
    %c0_17 = arith.constant 0 : index
    %c0_18 = arith.constant 0 : index
    %c0_19 = arith.constant 0 : index
    %10 = vector.load %arg2[%c0_17, %c0_18, %c0_19] : memref<1x1x4xf32, #tpu.memory_space<vmem>>, vector<1x1x4xf32>
    %11 = vector.broadcast %10 : vector<1x1x4xf32> to vector<16x16x4xf32>
    %12 = arith.mulf %9, %11 : vector<16x16x4xf32>
    %c0_20 = arith.constant 0 : index
    %c0_21 = arith.constant 0 : index
    %c0_22 = arith.constant 0 : index
    %13 = vector.load %arg3[%c0_20, %c0_21, %c0_22] : memref<1x1x4xf32, #tpu.memory_space<vmem>>, vector<1x1x4xf32>
    %14 = vector.broadcast %13 : vector<1x1x4xf32> to vector<16x16x4xf32>
    %15 = arith.addf %12, %14 : vector<16x16x4xf32>
    %cst_23 = arith.constant 0.000000e+00 : f32
    %16 = vector.broadcast %cst_23 : f32 to vector<16x16x4xf32>
    %17 = arith.maximumf %15, %16 : vector<16x16x4xf32>
    %cst_24 = arith.constant 0.000000e+00 : f32
    %18 = vector.broadcast %cst_24 : f32 to vector<16x1x4xf32>
    %19 = vector.extract_strided_slice %17 {offsets = [0, 0, 0], sizes = [16, 15, 4], strides = [1, 1, 1]} : vector<16x16x4xf32> to vector<16x15x4xf32>
    %20 = tpu.concatenate %18, %19 in 1 : vector<16x1x4xf32>, vector<16x15x4xf32> -> vector<16x16x4xf32>
    %21 = vector.extract_strided_slice %17 {offsets = [0, 1, 0], sizes = [16, 15, 4], strides = [1, 1, 1]} : vector<16x16x4xf32> to vector<16x15x4xf32>
    %22 = tpu.concatenate %21, %18 in 1 : vector<16x15x4xf32>, vector<16x1x4xf32> -> vector<16x16x4xf32>
    %23 = tpu.concatenate %20, %17, %22 in 2 : vector<16x16x4xf32>, vector<16x16x4xf32>, vector<16x16x4xf32> -> vector<16x16x12xf32>
    %24 = arith.truncf %23 : vector<16x16x12xf32> to vector<16x16x12xbf16>
    %c1 = arith.constant 1 : index
    %c0_25 = arith.constant 0 : index
    %c0_26 = arith.constant 0 : index
    %25 = vector.load %arg11[%c1, %c0_25, %c0_26] : memref<18x16x12xbf16, #tpu.memory_space<vmem>>, vector<16x16x12xbf16>
    tpu.vector_store %arg11[%c1, %c0_25, %c0_26], %24 {strides = array<i32>} : memref<18x16x12xbf16, #tpu.memory_space<vmem>>, vector<16x16x12xbf16>,
    %c0_27 = arith.constant 0 : index
    %c0_28 = arith.constant 0 : index
    %c0_29 = arith.constant 0 : index
    %26 = vector.load %arg11[%c0_27, %c0_28, %c0_29] : memref<18x16x12xbf16, #tpu.memory_space<vmem>>, vector<16x16x12xbf16>
    %27 = vector.shape_cast %26 : vector<16x16x12xbf16> to vector<256x12xbf16>
    %c0_30 = arith.constant 0 : index
    %c0_31 = arith.constant 0 : index
    %c0_32 = arith.constant 0 : index
    %28 = vector.load %arg4[%c0_30, %c0_31, %c0_32] : memref<3x12x8xbf16, #tpu.memory_space<vmem>>, vector<1x12x8xbf16>
    %29 = vector.shape_cast %28 : vector<1x12x8xbf16> to vector<12x8xbf16>
    %cst_33 = arith.constant dense<0.000000e+00> : vector<256x8xf32>
    %30 = tpu.matmul %27, %29, %cst_33 {dimension_numbers = #tpu.dot_dimension_numbers<[1], [0], [0], [1], [0, 0, 1, 1], [], []>} : vector<256x12xbf16>, vector<12x8xbf16>, vector<256x8xf32> -> vector<256x8xf32>
    %c1_34 = arith.constant 1 : index
    %c0_35 = arith.constant 0 : index
    %c0_36 = arith.constant 0 : index
    %31 = vector.load %arg11[%c1_34, %c0_35, %c0_36] : memref<18x16x12xbf16, #tpu.memory_space<vmem>>, vector<16x16x12xbf16>
    %32 = vector.shape_cast %31 : vector<16x16x12xbf16> to vector<256x12xbf16>
    %c1_37 = arith.constant 1 : index
    %c0_38 = arith.constant 0 : index
    %c0_39 = arith.constant 0 : index
    %33 = vector.load %arg4[%c1_37, %c0_38, %c0_39] : memref<3x12x8xbf16, #tpu.memory_space<vmem>>, vector<1x12x8xbf16>
    %34 = vector.shape_cast %33 : vector<1x12x8xbf16> to vector<12x8xbf16>
    %cst_40 = arith.constant dense<0.000000e+00> : vector<256x8xf32>
    %35 = tpu.matmul %32, %34, %cst_40 {dimension_numbers = #tpu.dot_dimension_numbers<[1], [0], [0], [1], [0, 0, 1, 1], [], []>} : vector<256x12xbf16>, vector<12x8xbf16>, vector<256x8xf32> -> vector<256x8xf32>
    %36 = arith.addf %30, %35 : vector<256x8xf32>
    %c2 = arith.constant 2 : index
    %c0_41 = arith.constant 0 : index
    %c0_42 = arith.constant 0 : index
    %37 = vector.load %arg11[%c2, %c0_41, %c0_42] : memref<18x16x12xbf16, #tpu.memory_space<vmem>>, vector<16x16x12xbf16>
    %38 = vector.shape_cast %37 : vector<16x16x12xbf16> to vector<256x12xbf16>
    %c2_43 = arith.constant 2 : index
    %c0_44 = arith.constant 0 : index
    %c0_45 = arith.constant 0 : index
    %39 = vector.load %arg4[%c2_43, %c0_44, %c0_45] : memref<3x12x8xbf16, #tpu.memory_space<vmem>>, vector<1x12x8xbf16>
    %40 = vector.shape_cast %39 : vector<1x12x8xbf16> to vector<12x8xbf16>
    %cst_46 = arith.constant dense<0.000000e+00> : vector<256x8xf32>
    %41 = tpu.matmul %38, %40, %cst_46 {dimension_numbers = #tpu.dot_dimension_numbers<[1], [0], [0], [1], [0, 0, 1, 1], [], []>} : vector<256x12xbf16>, vector<12x8xbf16>, vector<256x8xf32> -> vector<256x8xf32>
    %42 = arith.addf %36, %41 : vector<256x8xf32>
    %c0_47 = arith.constant 0 : index
    %c0_48 = arith.constant 0 : index
    %43 = vector.load %arg5[%c0_47, %c0_48] : memref<1x8xf32, #tpu.memory_space<vmem>>, vector<1x8xf32>
    %44 = vector.broadcast %43 : vector<1x8xf32> to vector<256x8xf32>
    %45 = arith.mulf %42, %44 : vector<256x8xf32>
    %c0_49 = arith.constant 0 : index
    %c0_50 = arith.constant 0 : index
    %46 = vector.load %arg6[%c0_49, %c0_50] : memref<1x8xf32, #tpu.memory_space<vmem>>, vector<1x8xf32>
    %47 = vector.broadcast %46 : vector<1x8xf32> to vector<256x8xf32>
    %48 = arith.addf %45, %47 : vector<256x8xf32>
    %cst_51 = arith.constant 0.000000e+00 : f32
    %49 = vector.broadcast %cst_51 : f32 to vector<256x8xf32>
    %50 = arith.maximumf %48, %49 : vector<256x8xf32>
    %51 = vector.shape_cast %50 : vector<256x8xf32> to vector<16x16x8xf32>
    %cst_52 = arith.constant 0.000000e+00 : f32
    %52 = vector.broadcast %cst_52 : f32 to vector<16x1x8xf32>
    %53 = vector.extract_strided_slice %51 {offsets = [0, 0, 0], sizes = [16, 15, 8], strides = [1, 1, 1]} : vector<16x16x8xf32> to vector<16x15x8xf32>
    %54 = tpu.concatenate %52, %53 in 1 : vector<16x1x8xf32>, vector<16x15x8xf32> -> vector<16x16x8xf32>
    %55 = vector.extract_strided_slice %51 {offsets = [0, 1, 0], sizes = [16, 15, 8], strides = [1, 1, 1]} : vector<16x16x8xf32> to vector<16x15x8xf32>
    %56 = tpu.concatenate %55, %52 in 1 : vector<16x15x8xf32>, vector<16x1x8xf32> -> vector<16x16x8xf32>
    %57 = tpu.concatenate %54, %51, %56 in 2 : vector<16x16x8xf32>, vector<16x16x8xf32>, vector<16x16x8xf32> -> vector<16x16x24xf32>
    %58 = arith.truncf %57 : vector<16x16x24xf32> to vector<16x16x24xbf16>
    %c1_53 = arith.constant 1 : index
    %c0_54 = arith.constant 0 : index
    %c0_55 = arith.constant 0 : index
    %59 = vector.load %arg12[%c1_53, %c0_54, %c0_55] : memref<18x16x24xbf16, #tpu.memory_space<vmem>>, vector<16x16x24xbf16>
    tpu.vector_store %arg12[%c1_53, %c0_54, %c0_55], %58 {strides = array<i32>} : memref<18x16x24xbf16, #tpu.memory_space<vmem>>, vector<16x16x24xbf16>,
    %c0_56 = arith.constant 0 : index
    %c0_57 = arith.constant 0 : index
    %c0_58 = arith.constant 0 : index
    %60 = vector.load %arg12[%c0_56, %c0_57, %c0_58] : memref<18x16x24xbf16, #tpu.memory_space<vmem>>, vector<16x16x24xbf16>
    %61 = vector.shape_cast %60 : vector<16x16x24xbf16> to vector<256x24xbf16>
    %c0_59 = arith.constant 0 : index
    %c0_60 = arith.constant 0 : index
    %c0_61 = arith.constant 0 : index
    %62 = vector.load %arg7[%c0_59, %c0_60, %c0_61] : memref<3x24x8xbf16, #tpu.memory_space<vmem>>, vector<1x24x8xbf16>
    %63 = vector.shape_cast %62 : vector<1x24x8xbf16> to vector<24x8xbf16>
    %cst_62 = arith.constant dense<0.000000e+00> : vector<256x8xf32>
    %64 = tpu.matmul %61, %63, %cst_62 {dimension_numbers = #tpu.dot_dimension_numbers<[1], [0], [0], [1], [0, 0, 1, 1], [], []>} : vector<256x24xbf16>, vector<24x8xbf16>, vector<256x8xf32> -> vector<256x8xf32>
    %c1_63 = arith.constant 1 : index
    %c0_64 = arith.constant 0 : index
    %c0_65 = arith.constant 0 : index
    %65 = vector.load %arg12[%c1_63, %c0_64, %c0_65] : memref<18x16x24xbf16, #tpu.memory_space<vmem>>, vector<16x16x24xbf16>
    %66 = vector.shape_cast %65 : vector<16x16x24xbf16> to vector<256x24xbf16>
    %c1_66 = arith.constant 1 : index
    %c0_67 = arith.constant 0 : index
    %c0_68 = arith.constant 0 : index
    %67 = vector.load %arg7[%c1_66, %c0_67, %c0_68] : memref<3x24x8xbf16, #tpu.memory_space<vmem>>, vector<1x24x8xbf16>
    %68 = vector.shape_cast %67 : vector<1x24x8xbf16> to vector<24x8xbf16>
    %cst_69 = arith.constant dense<0.000000e+00> : vector<256x8xf32>
    %69 = tpu.matmul %66, %68, %cst_69 {dimension_numbers = #tpu.dot_dimension_numbers<[1], [0], [0], [1], [0, 0, 1, 1], [], []>} : vector<256x24xbf16>, vector<24x8xbf16>, vector<256x8xf32> -> vector<256x8xf32>
    %70 = arith.addf %64, %69 : vector<256x8xf32>
    %c2_70 = arith.constant 2 : index
    %c0_71 = arith.constant 0 : index
    %c0_72 = arith.constant 0 : index
    %71 = vector.load %arg12[%c2_70, %c0_71, %c0_72] : memref<18x16x24xbf16, #tpu.memory_space<vmem>>, vector<16x16x24xbf16>
    %72 = vector.shape_cast %71 : vector<16x16x24xbf16> to vector<256x24xbf16>
    %c2_73 = arith.constant 2 : index
    %c0_74 = arith.constant 0 : index
    %c0_75 = arith.constant 0 : index
    %73 = vector.load %arg7[%c2_73, %c0_74, %c0_75] : memref<3x24x8xbf16, #tpu.memory_space<vmem>>, vector<1x24x8xbf16>
    %74 = vector.shape_cast %73 : vector<1x24x8xbf16> to vector<24x8xbf16>
    %cst_76 = arith.constant dense<0.000000e+00> : vector<256x8xf32>
    %75 = tpu.matmul %72, %74, %cst_76 {dimension_numbers = #tpu.dot_dimension_numbers<[1], [0], [0], [1], [0, 0, 1, 1], [], []>} : vector<256x24xbf16>, vector<24x8xbf16>, vector<256x8xf32> -> vector<256x8xf32>
    %76 = arith.addf %70, %75 : vector<256x8xf32>
    %c0_77 = arith.constant 0 : index
    %c0_78 = arith.constant 0 : index
    %c0_79 = arith.constant 0 : index
    %c0_80 = arith.constant 0 : index
    %77 = vector.load %arg1[%c0_77, %c0_78, %c0_79, %c0_80] : memref<1x16x16x4xf32, #tpu.memory_space<vmem>>, vector<1x16x16x4xf32>
    %78 = vector.shape_cast %77 : vector<1x16x16x4xf32> to vector<16x16x4xf32>
    %79 = vector.shape_cast %78 : vector<16x16x4xf32> to vector<256x4xf32>
    %80 = arith.truncf %79 : vector<256x4xf32> to vector<256x4xbf16>
    %c0_81 = arith.constant 0 : index
    %c0_82 = arith.constant 0 : index
    %81 = vector.load %arg9[%c0_81, %c0_82] : memref<4x8xbf16, #tpu.memory_space<vmem>>, vector<4x8xbf16>
    %cst_83 = arith.constant dense<0.000000e+00> : vector<256x8xf32>
    %82 = tpu.matmul %80, %81, %cst_83 {dimension_numbers = #tpu.dot_dimension_numbers<[1], [0], [0], [1], [0, 0, 1, 1], [], []>} : vector<256x4xbf16>, vector<4x8xbf16>, vector<256x8xf32> -> vector<256x8xf32>
    %83 = arith.addf %76, %82 : vector<256x8xf32>
    %c0_84 = arith.constant 0 : index
    %c0_85 = arith.constant 0 : index
    %84 = vector.load %arg8[%c0_84, %c0_85] : memref<1x8xf32, #tpu.memory_space<vmem>>, vector<1x8xf32>
    %85 = vector.broadcast %84 : vector<1x8xf32> to vector<256x8xf32>
    %86 = arith.addf %83, %85 : vector<256x8xf32>
    %87 = vector.shape_cast %86 : vector<256x8xf32> to vector<16x16x8xf32>
    %c0_86 = arith.constant 0 : index
    %c0_87 = arith.constant 0 : index
    %c0_88 = arith.constant 0 : index
    %c0_89 = arith.constant 0 : index
    %88 = vector.load %arg10[%c0_86, %c0_87, %c0_88, %c0_89] : memref<1x16x16x8xf32, #tpu.memory_space<vmem>>, vector<1x16x16x8xf32>
    %89 = vector.shape_cast %88 : vector<1x16x16x8xf32> to vector<16x16x8xf32>
    %90 = vector.shape_cast %87 : vector<16x16x8xf32> to vector<1x16x16x8xf32>
    tpu.vector_store %arg10[%c0_86, %c0_87, %c0_88, %c0_89], %90 {strides = array<i32>} : memref<1x16x16x8xf32, #tpu.memory_space<vmem>>, vector<1x16x16x8xf32>,
    return
  }
  func.func @transform_0(%arg0: i32) -> (i32, i32, i32, i32) {
    %c0_i32 = arith.constant 0 : i32
    %c0_i32_0 = arith.constant 0 : i32
    %c0_i32_1 = arith.constant 0 : i32
    %c0_i32_2 = arith.constant 0 : i32
    return %arg0, %c0_i32, %c0_i32_0, %c0_i32_1 : i32, i32, i32, i32
  }
  func.func @transform_1(%arg0: i32) -> (i32, i32, i32) {
    %c0_i32 = arith.constant 0 : i32
    %c0_i32_0 = arith.constant 0 : i32
    %c0_i32_1 = arith.constant 0 : i32
    %c0_i32_2 = arith.constant 0 : i32
    return %c0_i32, %c0_i32_0, %c0_i32_1 : i32, i32, i32
  }
  func.func @transform_2(%arg0: i32) -> (i32, i32, i32) {
    %c0_i32 = arith.constant 0 : i32
    %c0_i32_0 = arith.constant 0 : i32
    %c0_i32_1 = arith.constant 0 : i32
    %c0_i32_2 = arith.constant 0 : i32
    return %c0_i32, %c0_i32_0, %c0_i32_1 : i32, i32, i32
  }
  func.func @transform_3(%arg0: i32) -> (i32, i32, i32) {
    %c0_i32 = arith.constant 0 : i32
    %c0_i32_0 = arith.constant 0 : i32
    %c0_i32_1 = arith.constant 0 : i32
    %c0_i32_2 = arith.constant 0 : i32
    return %c0_i32, %c0_i32_0, %c0_i32_1 : i32, i32, i32
  }
  func.func @transform_4(%arg0: i32) -> (i32, i32) {
    %c0_i32 = arith.constant 0 : i32
    %c0_i32_0 = arith.constant 0 : i32
    %c0_i32_1 = arith.constant 0 : i32
    return %c0_i32, %c0_i32_0 : i32, i32
  }
  func.func @transform_5(%arg0: i32) -> (i32, i32) {
    %c0_i32 = arith.constant 0 : i32
    %c0_i32_0 = arith.constant 0 : i32
    %c0_i32_1 = arith.constant 0 : i32
    return %c0_i32, %c0_i32_0 : i32, i32
  }
  func.func @transform_6(%arg0: i32) -> (i32, i32, i32) {
    %c0_i32 = arith.constant 0 : i32
    %c0_i32_0 = arith.constant 0 : i32
    %c0_i32_1 = arith.constant 0 : i32
    %c0_i32_2 = arith.constant 0 : i32
    return %c0_i32, %c0_i32_0, %c0_i32_1 : i32, i32, i32
  }
  func.func @transform_7(%arg0: i32) -> (i32, i32) {
    %c0_i32 = arith.constant 0 : i32
    %c0_i32_0 = arith.constant 0 : i32
    %c0_i32_1 = arith.constant 0 : i32
    return %c0_i32, %c0_i32_0 : i32, i32
  }
  func.func @transform_8(%arg0: i32) -> (i32, i32) {
    %c0_i32 = arith.constant 0 : i32
    %c0_i32_0 = arith.constant 0 : i32
    %c0_i32_1 = arith.constant 0 : i32
    return %c0_i32, %c0_i32_0 : i32, i32
  }
  func.func @transform_9(%arg0: i32) -> (i32, i32, i32, i32) {
    %c0_i32 = arith.constant 0 : i32
    %c0_i32_0 = arith.constant 0 : i32
    %c0_i32_1 = arith.constant 0 : i32
    %c0_i32_2 = arith.constant 0 : i32
    return %arg0, %c0_i32, %c0_i32_0, %c0_i32_1 : i32, i32, i32, i32
  }
}

</mosaic_0001>

<llo_original>
// kernel: tpu_custom_call.1
$region0: #{tpu_custom_call.1}
  #allocation0 [shape = 'u32[]', space=smem, size = 0x4, offset = 0x4, fixed_abs, tag = 'smem constant byte address 0x4 - core index']
  #allocation1 [shape = 'u32[72,128]{1,0:T(1,128)}', space=vmem, size = 0x9000, scoped, tag = 'internal scratch']
  #allocation2 [shape = 'bf16[18,16,12]{2,1,0:T(8,128)(2,1)}', space=vmem, size = 0x12000, scoped, tag = 'scratch operand']
  #allocation3 [shape = 'bf16[18,16,24]{2,1,0:T(8,128)(2,1)}', space=vmem, size = 0x12000, scoped, tag = 'scratch operand']
  %s0 = inlined_call_operand.vmem [shape: f32[2,16,16,4], index: 0, kind: input, shape index: {}]
  %s1 = inlined_call_operand.vmem [shape: f32[1,1,4], index: 1, kind: input, shape index: {}]
  %s2 = inlined_call_operand.vmem [shape: f32[1,1,4], index: 2, kind: input, shape index: {}]
  %s3 = inlined_call_operand.vmem [shape: bf16[3,12,8], index: 3, kind: input, shape index: {}]
  %s4 = inlined_call_operand.vmem [shape: f32[1,8], index: 4, kind: input, shape index: {}]
  %s5 = inlined_call_operand.vmem [shape: f32[1,8], index: 5, kind: input, shape index: {}]
  %s6 = inlined_call_operand.vmem [shape: bf16[3,24,8], index: 6, kind: input, shape index: {}]
  %s7 = inlined_call_operand.vmem [shape: f32[1,8], index: 7, kind: input, shape index: {}]
  %s8 = inlined_call_operand.vmem [shape: bf16[4,8], index: 8, kind: input, shape index: {}]
  %s9 = inlined_call_operand.vmem [shape: f32[2,16,16,8], index: 9, kind: output, shape index: {}]
  %s10 = sld [smem:[#allocation0]]
  $region69: #{tpu_custom_call.1} parent=0
    _
  %s12 = ssub.s32 1, %s10
  %s13 = scalar_select 0, %s12, %s10
  loop: start=0, step=1, limit=4
  $region2: #{tpu_custom_call.1} parent=0 // loop_pre_header
    _
  $region3: #{tpu_custom_call.1} parent=0 // loop_header
    %s15 = sphi 0, %s19
    %p16 = scmp.ge.s32.totalorder %s15, 4
    %s25 = sphi 0, %s27
    %s28 = sphi 0, %s25
    %s29 = sphi 0, %s28
    %s45 = sphi 0, %s29
    %s49 = sphi 0, %s49
    %s51 = sphi 0, %s49
    %s52 = sphi 0, %s51
    %s66 = sphi 0, %s52
    %s70 = sphi 0, %s70
    %s72 = sphi 0, %s70
    %s73 = sphi 0, %s72
    %s87 = sphi 0, %s73
    %s91 = sphi 0, %s91
    %s93 = sphi 0, %s91
    %s94 = sphi 0, %s93
    %s108 = sphi 0, %s94
    %s112 = sphi 0, %s112
    %s114 = sphi 0, %s112
    %s115 = sphi 0, %s114
    %s129 = sphi 0, %s115
    %s133 = sphi 0, %s133
    %s135 = sphi 0, %s133
    %s136 = sphi 0, %s135
    %s150 = sphi 0, %s136
    %s154 = sphi 0, %s154
    %s156 = sphi 0, %s154
    %s157 = sphi 0, %s156
    %s171 = sphi 0, %s157
    %s175 = sphi 0, %s175
    %s177 = sphi 0, %s175
    %s178 = sphi 0, %s177
    %s192 = sphi 0, %s178
    %s196 = sphi 0, %s196
    %s198 = sphi 0, %s196
    %s199 = sphi 0, %s198
    %s213 = sphi 0, %s199
    %s219 = sphi 0, %s221
    %s222 = sphi 0, %s219
    %s223 = sphi 0, %s222
    %s239 = sphi 0, %s223
  $region4: #{tpu_custom_call.1} parent=0 // loop_header_branch
    %18 = sbr.rel (%p16) target = $region8
  $region5: #{tpu_custom_call.1} parent=0 // loop_body
    %s20 = ssub.s32 %s15, 1
    %s21 = ssub.s32 %s15, 2
    %s22 = sadd.s32 %s15, 1
    %s23 = ssub.s32 %s15, %s22
    %p24 = scmp.eq.s32.totalorder %s23, 0
    %s26 = sadd.s32 %s25, 1
    %s27 = scalar_select %p24, %s25, %s26
    %p30 = pneg %p24
    %p31 = scmp.eq.s32.totalorder %s15, 1
    %p32 = por %p30, %p31
    %p33 = scmp.ne.s32.totalorder %s25, %s28
    %p34 = scmp.eq.s32.totalorder %s15, 0
    %p35 = por %p33, %p34
    %p36 = scmp.ne.s32.totalorder %s25, %s28
    %p37 = scmp.eq.s32.totalorder %s20, 1
    %p38 = por %p36, %p37
    %p39 = scmp.ne.s32.totalorder %s28, %s29
    %p40 = scmp.eq.s32.totalorder %s20, 0
    %p41 = por %p39, %p40
    %p42 = scmp.ne.s32.totalorder %s28, %s29
    %p43 = scmp.eq.s32.totalorder %s21, 1
    %p44 = por %p42, %p43
    %p46 = scmp.ne.s32.totalorder %s29, %s45
    %p47 = scmp.eq.s32.totalorder %s21, 0
    %p48 = por %p46, %p47
    %s50 = sadd.s32 %s49, 1
    %p53 = scmp.eq.s32.totalorder %s15, 1
    %p54 = scmp.ne.s32.totalorder %s49, %s51
    %p55 = scmp.eq.s32.totalorder %s15, 0
    %p56 = por %p54, %p55
    %p57 = scmp.ne.s32.totalorder %s49, %s51
    %p58 = scmp.eq.s32.totalorder %s20, 1
    %p59 = por %p57, %p58
    %p60 = scmp.ne.s32.totalorder %s51, %s52
    %p61 = scmp.eq.s32.totalorder %s20, 0
    %p62 = por %p60, %p61
    %p63 = scmp.ne.s32.totalorder %s51, %s52
    %p64 = scmp.eq.s32.totalorder %s21, 1
    %p65 = por %p63, %p64
    %p67 = scmp.ne.s32.totalorder %s52, %s66
    %p68 = scmp.eq.s32.totalorder %s21, 0
    %p69 = por %p67, %p68
    %s71 = sadd.s32 %s70, 1
    %p74 = scmp.eq.s32.totalorder %s15, 1
    %p75 = scmp.ne.s32.totalorder %s70, %s72
    %p76 = scmp.eq.s32.totalorder %s15, 0
    %p77 = por %p75, %p76
    %p78 = scmp.ne.s32.totalorder %s70, %s72
    %p79 = scmp.eq.s32.totalorder %s20, 1
    %p80 = por %p78, %p79
    %p81 = scmp.ne.s32.totalorder %s72, %s73
    %p82 = scmp.eq.s32.totalorder %s20, 0
    %p83 = por %p81, %p82
    %p84 = scmp.ne.s32.totalorder %s72, %s73
    %p85 = scmp.eq.s32.totalorder %s21, 1
    %p86 = por %p84, %p85
    %p88 = scmp.ne.s32.totalorder %s73, %s87
    %p89 = scmp.eq.s32.totalorder %s21, 0
    %p90 = por %p88, %p89
    %s92 = sadd.s32 %s91, 1
    %p95 = scmp.eq.s32.totalorder %s15, 1
    %p96 = scmp.ne.s32.totalorder %s91, %s93
    %p97 = scmp.eq.s32.totalorder %s15, 0
    %p98 = por %p96, %p97
    %p99 = scmp.ne.s32.totalorder %s91, %s93
    %p100 = scmp.eq.s32.totalorder %s20, 1
    %p101 = por %p99, %p100
    %p102 = scmp.ne.s32.totalorder %s93, %s94
    %p103 = scmp.eq.s32.totalorder %s20, 0
    %p104 = por %p102, %p103
    %p105 = scmp.ne.s32.totalorder %s93, %s94
    %p106 = scmp.eq.s32.totalorder %s21, 1
    %p107 = por %p105, %p106
    %p109 = scmp.ne.s32.totalorder %s94, %s108
    %p110 = scmp.eq.s32.totalorder %s21, 0
    %p111 = por %p109, %p110
    %s113 = sadd.s32 %s112, 1
    %p116 = scmp.eq.s32.totalorder %s15, 1
    %p117 = scmp.ne.s32.totalorder %s112, %s114
    %p118 = scmp.eq.s32.totalorder %s15, 0
    %p119 = por %p117, %p118
    %p120 = scmp.ne.s32.totalorder %s112, %s114
    %p121 = scmp.eq.s32.totalorder %s20, 1
    %p122 = por %p120, %p121
    %p123 = scmp.ne.s32.totalorder %s114, %s115
    %p124 = scmp.eq.s32.totalorder %s20, 0
    %p125 = por %p123, %p124
    %p126 = scmp.ne.s32.totalorder %s114, %s115
    %p127 = scmp.eq.s32.totalorder %s21, 1
    %p128 = por %p126, %p127
    %p130 = scmp.ne.s32.totalorder %s115, %s129
    %p131 = scmp.eq.s32.totalorder %s21, 0
    %p132 = por %p130, %p131
    %s134 = sadd.s32 %s133, 1
    %p137 = scmp.eq.s32.totalorder %s15, 1
    %p138 = scmp.ne.s32.totalorder %s133, %s135
    %p139 = scmp.eq.s32.totalorder %s15, 0
    %p140 = por %p138, %p139
    %p141 = scmp.ne.s32.totalorder %s133, %s135
    %p142 = scmp.eq.s32.totalorder %s20, 1
    %p143 = por %p141, %p142
    %p144 = scmp.ne.s32.totalorder %s135, %s136
    %p145 = scmp.eq.s32.totalorder %s20, 0
    %p146 = por %p144, %p145
    %p147 = scmp.ne.s32.totalorder %s135, %s136
    %p148 = scmp.eq.s32.totalorder %s21, 1
    %p149 = por %p147, %p148
    %p151 = scmp.ne.s32.totalorder %s136, %s150
    %p152 = scmp.eq.s32.totalorder %s21, 0
    %p153 = por %p151, %p152
    %s155 = sadd.s32 %s154, 1
    %p158 = scmp.eq.s32.totalorder %s15, 1
    %p159 = scmp.ne.s32.totalorder %s154, %s156
    %p160 = scmp.eq.s32.totalorder %s15, 0
    %p161 = por %p159, %p160
    %p162 = scmp.ne.s32.totalorder %s154, %s156
    %p163 = scmp.eq.s32.totalorder %s20, 1
    %p164 = por %p162, %p163
    %p165 = scmp.ne.s32.totalorder %s156, %s157
    %p166 = scmp.eq.s32.totalorder %s20, 0
    %p167 = por %p165, %p166
    %p168 = scmp.ne.s32.totalorder %s156, %s157
    %p169 = scmp.eq.s32.totalorder %s21, 1
    %p170 = por %p168, %p169
    %p172 = scmp.ne.s32.totalorder %s157, %s171
    %p173 = scmp.eq.s32.totalorder %s21, 0
    %p174 = por %p172, %p173
    %s176 = sadd.s32 %s175, 1
    %p179 = scmp.eq.s32.totalorder %s15, 1
    %p180 = scmp.ne.s32.totalorder %s175, %s177
    %p181 = scmp.eq.s32.totalorder %s15, 0
    %p182 = por %p180, %p181
    %p183 = scmp.ne.s32.totalorder %s175, %s177
    %p184 = scmp.eq.s32.totalorder %s20, 1
    %p185 = por %p183, %p184
    %p186 = scmp.ne.s32.totalorder %s177, %s178
    %p187 = scmp.eq.s32.totalorder %s20, 0
    %p188 = por %p186, %p187
    %p189 = scmp.ne.s32.totalorder %s177, %s178
    %p190 = scmp.eq.s32.totalorder %s21, 1
    %p191 = por %p189, %p190
    %p193 = scmp.ne.s32.totalorder %s178, %s192
    %p194 = scmp.eq.s32.totalorder %s21, 0
    %p195 = por %p193, %p194
    %s197 = sadd.s32 %s196, 1
    %p200 = scmp.eq.s32.totalorder %s15, 1
    %p201 = scmp.ne.s32.totalorder %s196, %s198
    %p202 = scmp.eq.s32.totalorder %s15, 0
    %p203 = por %p201, %p202
    %p204 = scmp.ne.s32.totalorder %s196, %s198
    %p205 = scmp.eq.s32.totalorder %s20, 1
    %p206 = por %p204, %p205
    %p207 = scmp.ne.s32.totalorder %s198, %s199
    %p208 = scmp.eq.s32.totalorder %s20, 0
    %p209 = por %p207, %p208
    %p210 = scmp.ne.s32.totalorder %s198, %s199
    %p211 = scmp.eq.s32.totalorder %s21, 1
    %p212 = por %p210, %p211
    %p214 = scmp.ne.s32.totalorder %s199, %s213
    %p215 = scmp.eq.s32.totalorder %s21, 0
    %p216 = por %p214, %p215
    %s217 = ssub.s32 %s15, %s22
    %p218 = scmp.eq.s32.totalorder %s217, 0
    %s220 = sadd.s32 %s219, 1
    %s221 = scalar_select %p218, %s219, %s220
    %p224 = pneg %p218
    %p225 = scmp.eq.s32.totalorder %s15, 1
    %p226 = por %p224, %p225
    %p227 = scmp.ne.s32.totalorder %s219, %s222
    %p228 = scmp.eq.s32.totalorder %s15, 0
    %p229 = por %p227, %p228
    %p230 = scmp.ne.s32.totalorder %s219, %s222
    %p231 = scmp.eq.s32.totalorder %s20, 1
    %p232 = por %p230, %p231
    %p233 = scmp.ne.s32.totalorder %s222, %s223
    %p234 = scmp.eq.s32.totalorder %s20, 0
    %p235 = por %p233, %p234
    %p236 = scmp.ne.s32.totalorder %s222, %s223
    %p237 = scmp.eq.s32.totalorder %s21, 1
    %p238 = por %p236, %p237
    %p240 = scmp.ne.s32.totalorder %s223, %s239
    %p241 = scmp.eq.s32.totalorder %s21, 0
    %p242 = por %p240, %p241
    %p243 = scmp.le.s32.totalorder 1, %s15
    %p244 = scmp.lt.s32.totalorder %s15, 3
    %p245 = pnand %p243, %p244
    %p246 = pneg %p245
    // Predicated region
    $region9: #{tpu_custom_call.1} parent=5 // pred_check
      _
    $region10: #{tpu_custom_call.1} parent=5 // pred_check_branch
      %248 = sbr.rel (%p245) target = $region12
    $region11: #{tpu_custom_call.1} parent=5 // pred_region
      %s249 = ssub.s32 %s15, 1
      // Predicated region
      $region13: #{tpu_custom_call.1} parent=11 // pred_check
        %p250 = pneg %p62
      $region14: #{tpu_custom_call.1} parent=11 // pred_check_branch
        %252 = sbr.rel (%p250) target = $region16
      $region15: #{tpu_custom_call.1} parent=11 // pred_region
        _
      $region16: #{tpu_custom_call.1} parent=11 // pred_fallthru
        _
      // Predicated region
      $region17: #{tpu_custom_call.1} parent=11 // pred_check
        %p253 = pneg %p83
      $region18: #{tpu_custom_call.1} parent=11 // pred_check_branch
        %255 = sbr.rel (%p253) target = $region20
      $region19: #{tpu_custom_call.1} parent=11 // pred_region
        _
      $region20: #{tpu_custom_call.1} parent=11 // pred_fallthru
        _
      // Predicated region
      $region21: #{tpu_custom_call.1} parent=11 // pred_check
        %p256 = pneg %p104
      $region22: #{tpu_custom_call.1} parent=11 // pred_check_branch
        %258 = sbr.rel (%p256) target = $region24
      $region23: #{tpu_custom_call.1} parent=11 // pred_region
        _
      $region24: #{tpu_custom_call.1} parent=11 // pred_fallthru
        _
      // Predicated region
      $region25: #{tpu_custom_call.1} parent=11 // pred_check
        %p259 = pneg %p125
      $region26: #{tpu_custom_call.1} parent=11 // pred_check_branch
        %261 = sbr.rel (%p259) target = $region28
      $region27: #{tpu_custom_call.1} parent=11 // pred_region
        _
      $region28: #{tpu_custom_call.1} parent=11 // pred_fallthru
        _
      // Predicated region
      $region29: #{tpu_custom_call.1} parent=11 // pred_check
        %p262 = pneg %p146
      $region30: #{tpu_custom_call.1} parent=11 // pred_check_branch
        %264 = sbr.rel (%p262) target = $region32
      $region31: #{tpu_custom_call.1} parent=11 // pred_region
        _
      $region32: #{tpu_custom_call.1} parent=11 // pred_fallthru
        _
      // Predicated region
      $region33: #{tpu_custom_call.1} parent=11 // pred_check
        %p265 = pneg %p167
      $region34: #{tpu_custom_call.1} parent=11 // pred_check_branch
        %267 = sbr.rel (%p265) target = $region36
      $region35: #{tpu_custom_call.1} parent=11 // pred_region
        _
      $region36: #{tpu_custom_call.1} parent=11 // pred_fallthru
        _
      // Predicated region
      $region37: #{tpu_custom_call.1} parent=11 // pred_check
        %p268 = pneg %p188
      $region38: #{tpu_custom_call.1} parent=11 // pred_check_branch
        %270 = sbr.rel (%p268) target = $region40
      $region39: #{tpu_custom_call.1} parent=11 // pred_region
        _
      $region40: #{tpu_custom_call.1} parent=11 // pred_fallthru
        _
      // Predicated region
      $region41: #{tpu_custom_call.1} parent=11 // pred_check
        %p271 = pneg %p209
      $region42: #{tpu_custom_call.1} parent=11 // pred_check_branch
        %273 = sbr.rel (%p271) target = $region44
      $region43: #{tpu_custom_call.1} parent=11 // pred_region
        _
      $region44: #{tpu_custom_call.1} parent=11 // pred_fallthru
        _
    $region12: #{tpu_custom_call.1} parent=5 // pred_fallthru
      _
    %p274 = scmp.lt.s32.totalorder %s15, 2
    // Predicated region
    $region45: #{tpu_custom_call.1} parent=5 // pred_check
      %p275 = pneg %p274
    $region46: #{tpu_custom_call.1} parent=5 // pred_check_branch
      %277 = sbr.rel (%p275) target = $region48
    $region47: #{tpu_custom_call.1} parent=5 // pred_region
      // Predicated region
      $region49: #{tpu_custom_call.1} parent=47 // pred_check
        %p278 = pneg %p35
      $region50: #{tpu_custom_call.1} parent=47 // pred_check_branch
        %280 = sbr.rel (%p278) target = $region52
      $region51: #{tpu_custom_call.1} parent=47 // pred_region
        %p281 = scmp.lt.s32.totalorder %s15, 1
        %s282 = scalar_select %p281, %s15, 1
        %s283 = smul.addr %s282, 32
        %s284 = smul.addr %s283, 8
        %s285 = scalar_lea.vmem %s0, %s284
      $region52: #{tpu_custom_call.1} parent=47 // pred_fallthru
        _
    $region48: #{tpu_custom_call.1} parent=5 // pred_fallthru
      _
    %p286 = scmp.le.s32.totalorder 1, %s15
    %p287 = scmp.lt.s32.totalorder %s15, 3
    %p288 = pnand %p286, %p287
    %p289 = pneg %p288
    // Predicated region
    $region53: #{tpu_custom_call.1} parent=5 // pred_check
      _
    $region54: #{tpu_custom_call.1} parent=5 // pred_check_branch
      %291 = sbr.rel (%p288) target = $region56
    $region55: #{tpu_custom_call.1} parent=5 // pred_region
      %s292 = ssub.s32 %s15, 1
      %p293 = scmp.lt.s32.totalorder %s20, 1
      %s294 = scalar_select %p293, %s20, 1
      %s295 = smul.addr %s294, 32
      %s296 = smul.addr %s295, 8
      %s297 = scalar_lea.vmem %s0, %s296
      %p298 = pneg %p41
      %p299 = pneg %p38
      %p300 = pneg %p62
      %p301 = pneg %p59
      %p302 = pneg %p83
      %p303 = pneg %p80
      %p304 = pneg %p104
      %p305 = pneg %p101
      %p306 = pneg %p125
      %p307 = pneg %p122
      %p308 = pneg %p146
      %p309 = pneg %p143
      %p310 = pneg %p167
      %p311 = pneg %p164
      %p312 = pneg %p188
      %p313 = pneg %p185
      %p314 = pneg %p209
      %p315 = pneg %p206
      %p316 = pneg %p235
      %p317 = pneg %p232
      %p318 = scmp.lt.s32.totalorder %s20, 1
      %s319 = scalar_select %p318, %s20, 1
      %s320 = smul.addr %s319, 32
      %s321 = smul.addr %s320, 8
      %s322 = scalar_lea.vmem %s9, %s321
      %p323 = scmp.lt.s32.totalorder %s20, 1
      %s324 = scalar_select %p323, %s20, 1
      %s325 = smul.addr %s324, 32
      %s326 = smul.addr %s325, 8
      %s327 = scalar_lea.vmem %s0, %s326
      %p328 = scmp.lt.s32.totalorder %s20, 1
      %s329 = scalar_select %p328, %s20, 1
      %s330 = smul.addr %s329, 32
      %s331 = smul.addr %s330, 8
      %s332 = scalar_lea.vmem %s9, %s331
      %vm334 = vcmask 93184
      %335 = vst.msk [vmem:[#allocation2] sm:$0xf] %vm334, 0
      %336 = vst.msk [vmem:[#allocation2 + $0x4] sm:$0xf] %vm334, 0
      %s337 = scalar_lea.vmem [#allocation2], 136
      %338 = vst.msk [vmem:[%s337] sm:$0xf] %vm334, 0
      %339 = vst.msk [vmem:[%s337 + $0x4] sm:$0xf] %vm334, 0
      %vm340 = vcmask 191488
      %341 = vst.msk [vmem:[#allocation3] sm:$0xf] %vm340, 0
      %342 = vst.msk [vmem:[#allocation3 + $0x4] sm:$0xf] %vm340, 0
      %s343 = scalar_lea.vmem [#allocation3], 136
      %344 = vst.msk [vmem:[%s343] sm:$0xf] %vm340, 0
      %345 = vst.msk [vmem:[%s343 + $0x4] sm:$0xf] %vm340, 0
      %v346 = vld [vmem:[%s327] sm:$0xff]
      %v347 = vld [vmem:[%s327 + $0x8] sm:$0xff]
      %v348 = vld [vmem:[%s327 + $0x10] sm:$0xff]
      %v349 = vld [vmem:[%s327 + $0x18] sm:$0xff]
      %v350 = vld [vmem:[%s327 + $0x20] sm:$0xff]
      %v351 = vld [vmem:[%s327 + $0x28] sm:$0xff]
      %v352 = vld [vmem:[%s327 + $0x30] sm:$0xff]
      %v353 = vld [vmem:[%s327 + $0x38] sm:$0xff]
      %v354 = vld [vmem:[%s327 + $0x40] sm:$0xff]
      %v355 = vld [vmem:[%s327 + $0x48] sm:$0xff]
      %v356 = vld [vmem:[%s327 + $0x50] sm:$0xff]
      %v357 = vld [vmem:[%s327 + $0x58] sm:$0xff]
      %v358 = vld [vmem:[%s327 + $0x60] sm:$0xff]
      %v359 = vld [vmem:[%s327 + $0x68] sm:$0xff]
      %v360 = vld [vmem:[%s327 + $0x70] sm:$0xff]
      %v361 = vld [vmem:[%s327 + $0x78] sm:$0xff]
      %v362 = vld [vmem:[%s327 + $0x80] sm:$0xff]
      %v363 = vld [vmem:[%s327 + $0x88] sm:$0xff]
      %v364 = vld [vmem:[%s327 + $0x90] sm:$0xff]
      %v365 = vld [vmem:[%s327 + $0x98] sm:$0xff]
      %v366 = vld [vmem:[%s327 + $0xa0] sm:$0xff]
      %v367 = vld [vmem:[%s327 + $0xa8] sm:$0xff]
      %v368 = vld [vmem:[%s327 + $0xb0] sm:$0xff]
      %v369 = vld [vmem:[%s327 + $0xb8] sm:$0xff]
      %v370 = vld [vmem:[%s327 + $0xc0] sm:$0xff]
      %v371 = vld [vmem:[%s327 + $0xc8] sm:$0xff]
      %v372 = vld [vmem:[%s327 + $0xd0] sm:$0xff]
      %v373 = vld [vmem:[%s327 + $0xd8] sm:$0xff]
      %v374 = vld [vmem:[%s327 + $0xe0] sm:$0xff]
      %v375 = vld [vmem:[%s327 + $0xe8] sm:$0xff]
      %v376 = vld [vmem:[%s327 + $0xf0] sm:$0xff]
      %v377 = vld [vmem:[%s327 + $0xf8] sm:$0xff]
      %v378 = vld [vmem:[%s1] sm:$0x1]
      %v380 = vperm.slane %v378, 0
      %v382 = vmul.f32 %v346, %v380
      %v383 = vmul.f32 %v347, %v380
      %v384 = vmul.f32 %v348, %v380
      %v385 = vmul.f32 %v349, %v380
      %v386 = vmul.f32 %v350, %v380
      %v387 = vmul.f32 %v351, %v380
      %v388 = vmul.f32 %v352, %v380
      %v389 = vmul.f32 %v353, %v380
      %v390 = vmul.f32 %v354, %v380
      %v391 = vmul.f32 %v355, %v380
      %v392 = vmul.f32 %v356, %v380
      %v393 = vmul.f32 %v357, %v380
      %v394 = vmul.f32 %v358, %v380
      %v395 = vmul.f32 %v359, %v380
      %v396 = vmul.f32 %v360, %v380
      %v397 = vmul.f32 %v361, %v380
      %v398 = vmul.f32 %v362, %v380
      %v399 = vmul.f32 %v363, %v380
      %v400 = vmul.f32 %v364, %v380
      %v401 = vmul.f32 %v365, %v380
      %v402 = vmul.f32 %v366, %v380
      %v403 = vmul.f32 %v367, %v380
      %v404 = vmul.f32 %v368, %v380
      %v405 = vmul.f32 %v369, %v380
      %v406 = vmul.f32 %v370, %v380
      %v407 = vmul.f32 %v371, %v380
      %v408 = vmul.f32 %v372, %v380
      %v409 = vmul.f32 %v373, %v380
      %v410 = vmul.f32 %v374, %v380
      %v411 = vmul.f32 %v375, %v380
      %v412 = vmul.f32 %v376, %v380
      %v413 = vmul.f32 %v377, %v380
      %v414 = vld [vmem:[%s2] sm:$0x1]
      %v416 = vperm.slane %v414, 0
      %v418 = vadd.f32 %v382, %v416
      %v419 = vadd.f32 %v383, %v416
      %v420 = vadd.f32 %v384, %v416
      %v421 = vadd.f32 %v385, %v416
      %v422 = vadd.f32 %v386, %v416
      %v423 = vadd.f32 %v387, %v416
      %v424 = vadd.f32 %v388, %v416
      %v425 = vadd.f32 %v389, %v416
      %v426 = vadd.f32 %v390, %v416
      %v427 = vadd.f32 %v391, %v416
      %v428 = vadd.f32 %v392, %v416
      %v429 = vadd.f32 %v393, %v416
      %v430 = vadd.f32 %v394, %v416
      %v431 = vadd.f32 %v395, %v416
      %v432 = vadd.f32 %v396, %v416
      %v433 = vadd.f32 %v397, %v416
      %v434 = vadd.f32 %v398, %v416
      %v435 = vadd.f32 %v399, %v416
      %v436 = vadd.f32 %v400, %v416
      %v437 = vadd.f32 %v401, %v416
      %v438 = vadd.f32 %v402, %v416
      %v439 = vadd.f32 %v403, %v416
      %v440 = vadd.f32 %v404, %v416
      %v441 = vadd.f32 %v405, %v416
      %v442 = vadd.f32 %v406, %v416
      %v443 = vadd.f32 %v407, %v416
      %v444 = vadd.f32 %v408, %v416
      %v445 = vadd.f32 %v409, %v416
      %v446 = vadd.f32 %v410, %v416
      %v447 = vadd.f32 %v411, %v416
      %v448 = vadd.f32 %v412, %v416
      %v449 = vadd.f32 %v413, %v416
      %v450 = vmax.f32 %v418, 0.0
      %v451 = vmax.f32 %v419, 0.0
      %v452 = vmax.f32 %v420, 0.0
      %v453 = vmax.f32 %v421, 0.0
      %v454 = vmax.f32 %v422, 0.0
      %v455 = vmax.f32 %v423, 0.0
      %v456 = vmax.f32 %v424, 0.0
      %v457 = vmax.f32 %v425, 0.0
      %v458 = vmax.f32 %v426, 0.0
      %v459 = vmax.f32 %v427, 0.0
      %v460 = vmax.f32 %v428, 0.0
      %v461 = vmax.f32 %v429, 0.0
      %v462 = vmax.f32 %v430, 0.0
      %v463 = vmax.f32 %v431, 0.0
      %v464 = vmax.f32 %v432, 0.0
      %v465 = vmax.f32 %v433, 0.0
      %v466 = vmax.f32 %v434, 0.0
      %v467 = vmax.f32 %v435, 0.0
      %v468 = vmax.f32 %v436, 0.0
      %v469 = vmax.f32 %v437, 0.0
      %v470 = vmax.f32 %v438, 0.0
      %v471 = vmax.f32 %v439, 0.0
      %v472 = vmax.f32 %v440, 0.0
      %v473 = vmax.f32 %v441, 0.0
      %v474 = vmax.f32 %v442, 0.0
      %v475 = vmax.f32 %v443, 0.0
      %v476 = vmax.f32 %v444, 0.0
      %v477 = vmax.f32 %v445, 0.0
      %v478 = vmax.f32 %v446, 0.0
      %v479 = vmax.f32 %v447, 0.0
      %v480 = vmax.f32 %v448, 0.0
      %v481 = vmax.f32 %v449, 0.0
      %vm514 = vcmask 1040384
      %v515 = vrot.slane %v450, 7
      %v516 = vrot.slane %v451, 7
      %v517 = vsel %vm514, %v515, %v516
      %v518 = vrot.slane %v452, 7
      %v519 = vrot.slane %v453, 7
      %v520 = vsel %vm514, %v518, %v519
      %v521 = vrot.slane %v454, 7
      %v522 = vrot.slane %v455, 7
      %v523 = vsel %vm514, %v521, %v522
      %v524 = vrot.slane %v456, 7
      %v525 = vrot.slane %v457, 7
      %v526 = vsel %vm514, %v524, %v525
      %v527 = vrot.slane %v458, 7
      %v528 = vrot.slane %v459, 7
      %v529 = vsel %vm514, %v527, %v528
      %v530 = vrot.slane %v460, 7
      %v531 = vrot.slane %v461, 7
      %v532 = vsel %vm514, %v530, %v531
      %v533 = vrot.slane %v462, 7
      %v534 = vrot.slane %v463, 7
      %v535 = vsel %vm514, %v533, %v534
      %v536 = vrot.slane %v464, 7
      %v537 = vrot.slane %v465, 7
      %v538 = vsel %vm514, %v536, %v537
      %v539 = vrot.slane %v466, 7
      %v540 = vrot.slane %v467, 7
      %v541 = vsel %vm514, %v539, %v540
      %v542 = vrot.slane %v468, 7
      %v543 = vrot.slane %v469, 7
      %v544 = vsel %vm514, %v542, %v543
      %v545 = vrot.slane %v470, 7
      %v546 = vrot.slane %v471, 7
      %v547 = vsel %vm514, %v545, %v546
      %v548 = vrot.slane %v472, 7
      %v549 = vrot.slane %v473, 7
      %v550 = vsel %vm514, %v548, %v549
      %v551 = vrot.slane %v474, 7
      %v552 = vrot.slane %v475, 7
      %v553 = vsel %vm514, %v551, %v552
      %v554 = vrot.slane %v476, 7
      %v555 = vrot.slane %v477, 7
      %v556 = vsel %vm514, %v554, %v555
      %v557 = vrot.slane %v478, 7
      %v558 = vrot.slane %v479, 7
      %v559 = vsel %vm514, %v557, %v558
      %v560 = vrot.slane %v480, 7
      %v561 = vrot.slane %v481, 7
      %v562 = vsel %vm514, %v560, %v561
      %v595 = vsel %vm514, 0.0, %v515
      %v596 = vsel %vm514, 0.0, %v518
      %v597 = vsel %vm514, 0.0, %v521
      %v598 = vsel %vm514, 0.0, %v524
      %v599 = vsel %vm514, 0.0, %v527
      %v600 = vsel %vm514, 0.0, %v530
      %v601 = vsel %vm514, 0.0, %v533
      %v602 = vsel %vm514, 0.0, %v536
      %v603 = vsel %vm514, 0.0, %v539
      %v604 = vsel %vm514, 0.0, %v542
      %v605 = vsel %vm514, 0.0, %v545
      %v606 = vsel %vm514, 0.0, %v548
      %v607 = vsel %vm514, 0.0, %v551
      %v608 = vsel %vm514, 0.0, %v554
      %v609 = vsel %vm514, 0.0, %v557
      %v610 = vsel %vm514, 0.0, %v560
      %vm611 = vcmask 1046528
      %v612 = vrot.slane %v450, 1
      %v613 = vrot.slane %v451, 1
      %v614 = vsel %vm611, %v612, %v613
      %v615 = vrot.slane %v452, 1
      %v616 = vrot.slane %v453, 1
      %v617 = vsel %vm611, %v615, %v616
      %v618 = vrot.slane %v454, 1
      %v619 = vrot.slane %v455, 1
      %v620 = vsel %vm611, %v618, %v619
      %v621 = vrot.slane %v456, 1
      %v622 = vrot.slane %v457, 1
      %v623 = vsel %vm611, %v621, %v622
      %v624 = vrot.slane %v458, 1
      %v625 = vrot.slane %v459, 1
      %v626 = vsel %vm611, %v624, %v625
      %v627 = vrot.slane %v460, 1
      %v628 = vrot.slane %v461, 1
      %v629 = vsel %vm611, %v627, %v628
      %v630 = vrot.slane %v462, 1
      %v631 = vrot.slane %v463, 1
      %v632 = vsel %vm611, %v630, %v631
      %v633 = vrot.slane %v464, 1
      %v634 = vrot.slane %v465, 1
      %v635 = vsel %vm611, %v633, %v634
      %v636 = vrot.slane %v466, 1
      %v637 = vrot.slane %v467, 1
      %v638 = vsel %vm611, %v636, %v637
      %v639 = vrot.slane %v468, 1
      %v640 = vrot.slane %v469, 1
      %v641 = vsel %vm611, %v639, %v640
      %v642 = vrot.slane %v470, 1
      %v643 = vrot.slane %v471, 1
      %v644 = vsel %vm611, %v642, %v643
      %v645 = vrot.slane %v472, 1
      %v646 = vrot.slane %v473, 1
      %v647 = vsel %vm611, %v645, %v646
      %v648 = vrot.slane %v474, 1
      %v649 = vrot.slane %v475, 1
      %v650 = vsel %vm611, %v648, %v649
      %v651 = vrot.slane %v476, 1
      %v652 = vrot.slane %v477, 1
      %v653 = vsel %vm611, %v651, %v652
      %v654 = vrot.slane %v478, 1
      %v655 = vrot.slane %v479, 1
      %v656 = vsel %vm611, %v654, %v655
      %v657 = vrot.slane %v480, 1
      %v658 = vrot.slane %v481, 1
      %v659 = vsel %vm611, %v657, %v658
      %v676 = vsel %vm611, %v613, 0.0
      %v677 = vsel %vm611, %v616, 0.0
      %v678 = vsel %vm611, %v619, 0.0
      %v679 = vsel %vm611, %v622, 0.0
      %v680 = vsel %vm611, %v625, 0.0
      %v681 = vsel %vm611, %v628, 0.0
      %v682 = vsel %vm611, %v631, 0.0
      %v683 = vsel %vm611, %v634, 0.0
      %v684 = vsel %vm611, %v637, 0.0
      %v685 = vsel %vm611, %v640, 0.0
      %v686 = vsel %vm611, %v643, 0.0
      %v687 = vsel %vm611, %v646, 0.0
      %v688 = vsel %vm611, %v649, 0.0
      %v689 = vsel %vm611, %v652, 0.0
      %v690 = vsel %vm611, %v655, 0.0
      %v691 = vsel %vm611, %v658, 0.0
      %692 = vrot.lane.b32.xlu0 %v450, 4
      %v693 = vpop.permute.xlu0 %692
      %694 = vrot.lane.b32.xlu0 %v451, 4
      %v695 = vpop.permute.xlu0 %694
      %696 = vrot.lane.b32.xlu0 %v452, 4
      %v697 = vpop.permute.xlu0 %696
      %698 = vrot.lane.b32.xlu0 %v453, 4
      %v699 = vpop.permute.xlu0 %698
      %700 = vrot.lane.b32.xlu0 %v454, 4
      %v701 = vpop.permute.xlu0 %700
      %702 = vrot.lane.b32.xlu0 %v455, 4
      %v703 = vpop.permute.xlu0 %702
      %704 = vrot.lane.b32.xlu0 %v456, 4
      %v705 = vpop.permute.xlu0 %704
      %706 = vrot.lane.b32.xlu0 %v457, 4
      %v707 = vpop.permute.xlu0 %706
      %708 = vrot.lane.b32.xlu0 %v458, 4
      %v709 = vpop.permute.xlu0 %708
      %710 = vrot.lane.b32.xlu0 %v459, 4
      %v711 = vpop.permute.xlu0 %710
      %712 = vrot.lane.b32.xlu0 %v460, 4
      %v713 = vpop.permute.xlu0 %712
      %714 = vrot.lane.b32.xlu0 %v461, 4
      %v715 = vpop.permute.xlu0 %714
      %716 = vrot.lane.b32.xlu0 %v462, 4
      %v717 = vpop.permute.xlu0 %716
      %718 = vrot.lane.b32.xlu0 %v463, 4
      %v719 = vpop.permute.xlu0 %718
      %720 = vrot.lane.b32.xlu0 %v464, 4
      %v721 = vpop.permute.xlu0 %720
      %722 = vrot.lane.b32.xlu0 %v465, 4
      %v723 = vpop.permute.xlu0 %722
      %724 = vrot.lane.b32.xlu0 %v466, 4
      %v725 = vpop.permute.xlu0 %724
      %726 = vrot.lane.b32.xlu0 %v467, 4
      %v727 = vpop.permute.xlu0 %726
      %728 = vrot.lane.b32.xlu0 %v468, 4
      %v729 = vpop.permute.xlu0 %728
      %730 = vrot.lane.b32.xlu0 %v469, 4
      %v731 = vpop.permute.xlu0 %730
      %732 = vrot.lane.b32.xlu0 %v470, 4
      %v733 = vpop.permute.xlu0 %732
      %734 = vrot.lane.b32.xlu0 %v471, 4
      %v735 = vpop.permute.xlu0 %734
      %736 = vrot.lane.b32.xlu0 %v472, 4
      %v737 = vpop.permute.xlu0 %736
      %738 = vrot.lane.b32.xlu0 %v473, 4
      %v739 = vpop.permute.xlu0 %738
      %740 = vrot.lane.b32.xlu0 %v474, 4
      %v741 = vpop.permute.xlu0 %740
      %742 = vrot.lane.b32.xlu0 %v475, 4
      %v743 = vpop.permute.xlu0 %742
      %744 = vrot.lane.b32.xlu0 %v476, 4
      %v745 = vpop.permute.xlu0 %744
      %746 = vrot.lane.b32.xlu0 %v477, 4
      %v747 = vpop.permute.xlu0 %746
      %748 = vrot.lane.b32.xlu0 %v478, 4
      %v749 = vpop.permute.xlu0 %748
      %750 = vrot.lane.b32.xlu0 %v479, 4
      %v751 = vpop.permute.xlu0 %750
      %752 = vrot.lane.b32.xlu0 %v480, 4
      %v753 = vpop.permute.xlu0 %752
      %754 = vrot.lane.b32.xlu0 %v481, 4
      %v755 = vpop.permute.xlu0 %754
      %804 = vrot.lane.b32.xlu0 %v614, 8
      %v805 = vpop.permute.xlu0 %804
      %806 = vrot.lane.b32.xlu0 %v676, 8
      %v807 = vpop.permute.xlu0 %806
      %808 = vrot.lane.b32.xlu0 %v617, 8
      %v809 = vpop.permute.xlu0 %808
      %810 = vrot.lane.b32.xlu0 %v677, 8
      %v811 = vpop.permute.xlu0 %810
      %812 = vrot.lane.b32.xlu0 %v620, 8
      %v813 = vpop.permute.xlu0 %812
      %814 = vrot.lane.b32.xlu0 %v678, 8
      %v815 = vpop.permute.xlu0 %814
      %816 = vrot.lane.b32.xlu0 %v623, 8
      %v817 = vpop.permute.xlu0 %816
      %818 = vrot.lane.b32.xlu0 %v679, 8
      %v819 = vpop.permute.xlu0 %818
      %820 = vrot.lane.b32.xlu0 %v626, 8
      %v821 = vpop.permute.xlu0 %820
      %822 = vrot.lane.b32.xlu0 %v680, 8
      %v823 = vpop.permute.xlu0 %822
      %824 = vrot.lane.b32.xlu0 %v629, 8
      %v825 = vpop.permute.xlu0 %824
      %826 = vrot.lane.b32.xlu0 %v681, 8
      %v827 = vpop.permute.xlu0 %826
      %828 = vrot.lane.b32.xlu0 %v632, 8
      %v829 = vpop.permute.xlu0 %828
      %830 = vrot.lane.b32.xlu0 %v682, 8
      %v831 = vpop.permute.xlu0 %830
      %832 = vrot.lane.b32.xlu0 %v635, 8
      %v833 = vpop.permute.xlu0 %832
      %834 = vrot.lane.b32.xlu0 %v683, 8
      %v835 = vpop.permute.xlu0 %834
      %836 = vrot.lane.b32.xlu0 %v638, 8
      %v837 = vpop.permute.xlu0 %836
      %838 = vrot.lane.b32.xlu0 %v684, 8
      %v839 = vpop.permute.xlu0 %838
      %840 = vrot.lane.b32.xlu0 %v641, 8
      %v841 = vpop.permute.xlu0 %840
      %842 = vrot.lane.b32.xlu0 %v685, 8
      %v843 = vpop.permute.xlu0 %842
      %844 = vrot.lane.b32.xlu0 %v644, 8
      %v845 = vpop.permute.xlu0 %844
      %846 = vrot.lane.b32.xlu0 %v686, 8
      %v847 = vpop.permute.xlu0 %846
      %848 = vrot.lane.b32.xlu0 %v647, 8
      %v849 = vpop.permute.xlu0 %848
      %850 = vrot.lane.b32.xlu0 %v687, 8
      %v851 = vpop.permute.xlu0 %850
      %852 = vrot.lane.b32.xlu0 %v650, 8
      %v853 = vpop.permute.xlu0 %852
      %854 = vrot.lane.b32.xlu0 %v688, 8
      %v855 = vpop.permute.xlu0 %854
      %856 = vrot.lane.b32.xlu0 %v653, 8
      %v857 = vpop.permute.xlu0 %856
      %858 = vrot.lane.b32.xlu0 %v689, 8
      %v859 = vpop.permute.xlu0 %858
      %860 = vrot.lane.b32.xlu0 %v656, 8
      %v861 = vpop.permute.xlu0 %860
      %862 = vrot.lane.b32.xlu0 %v690, 8
      %v863 = vpop.permute.xlu0 %862
      %864 = vrot.lane.b32.xlu0 %v659, 8
      %v865 = vpop.permute.xlu0 %864
      %866 = vrot.lane.b32.xlu0 %v691, 8
      %v867 = vpop.permute.xlu0 %866
      %vm900 = vcmask 31744
      %v901 = vsel %vm900, %v595, %v693
      %v902 = vsel %vm900, %v517, %v695
      %v903 = vsel %vm900, %v596, %v697
      %v904 = vsel %vm900, %v520, %v699
      %v905 = vsel %vm900, %v597, %v701
      %v906 = vsel %vm900, %v523, %v703
      %v907 = vsel %vm900, %v598, %v705
      %v908 = vsel %vm900, %v526, %v707
      %v909 = vsel %vm900, %v599, %v709
      %v910 = vsel %vm900, %v529, %v711
      %v911 = vsel %vm900, %v600, %v713
      %v912 = vsel %vm900, %v532, %v715
      %v913 = vsel %vm900, %v601, %v717
      %v914 = vsel %vm900, %v535, %v719
      %v915 = vsel %vm900, %v602, %v721
      %v916 = vsel %vm900, %v538, %v723
      %v917 = vsel %vm900, %v603, %v725
      %v918 = vsel %vm900, %v541, %v727
      %v919 = vsel %vm900, %v604, %v729
      %v920 = vsel %vm900, %v544, %v731
      %v921 = vsel %vm900, %v605, %v733
      %v922 = vsel %vm900, %v547, %v735
      %v923 = vsel %vm900, %v606, %v737
      %v924 = vsel %vm900, %v550, %v739
      %v925 = vsel %vm900, %v607, %v741
      %v926 = vsel %vm900, %v553, %v743
      %v927 = vsel %vm900, %v608, %v745
      %v928 = vsel %vm900, %v556, %v747
      %v929 = vsel %vm900, %v609, %v749
      %v930 = vsel %vm900, %v559, %v751
      %v931 = vsel %vm900, %v610, %v753
      %v932 = vsel %vm900, %v562, %v755
      %vm933 = vcmask 64512
      %v934 = vsel %vm933, %v901, %v805
      %v935 = vsel %vm933, %v902, %v807
      %v936 = vsel %vm933, %v903, %v809
      %v937 = vsel %vm933, %v904, %v811
      %v938 = vsel %vm933, %v905, %v813
      %v939 = vsel %vm933, %v906, %v815
      %v940 = vsel %vm933, %v907, %v817
      %v941 = vsel %vm933, %v908, %v819
      %v942 = vsel %vm933, %v909, %v821
      %v943 = vsel %vm933, %v910, %v823
      %v944 = vsel %vm933, %v911, %v825
      %v945 = vsel %vm933, %v912, %v827
      %v946 = vsel %vm933, %v913, %v829
      %v947 = vsel %vm933, %v914, %v831
      %v948 = vsel %vm933, %v915, %v833
      %v949 = vsel %vm933, %v916, %v835
      %v950 = vsel %vm933, %v917, %v837
      %v951 = vsel %vm933, %v918, %v839
      %v952 = vsel %vm933, %v919, %v841
      %v953 = vsel %vm933, %v920, %v843
      %v954 = vsel %vm933, %v921, %v845
      %v955 = vsel %vm933, %v922, %v847
      %v956 = vsel %vm933, %v923, %v849
      %v957 = vsel %vm933, %v924, %v851
      %v958 = vsel %vm933, %v925, %v853
      %v959 = vsel %vm933, %v926, %v855
      %v960 = vsel %vm933, %v927, %v857
      %v961 = vsel %vm933, %v928, %v859
      %v962 = vsel %vm933, %v929, %v861
      %v963 = vsel %vm933, %v930, %v863
      %v964 = vsel %vm933, %v931, %v865
      %v965 = vsel %vm933, %v932, %v867
      %v966 = vpack.c.bf16 %v934, %v934
      %v967 = vpack.c.bf16 %v935, %v935
      %v968 = vpack.c.bf16 %v936, %v936
      %v969 = vpack.c.bf16 %v937, %v937
      %v970 = vpack.c.bf16 %v938, %v938
      %v971 = vpack.c.bf16 %v939, %v939
      %v972 = vpack.c.bf16 %v940, %v940
      %v973 = vpack.c.bf16 %v941, %v941
      %v974 = vpack.c.bf16 %v942, %v942
      %v975 = vpack.c.bf16 %v943, %v943
      %v976 = vpack.c.bf16 %v944, %v944
      %v977 = vpack.c.bf16 %v945, %v945
      %v978 = vpack.c.bf16 %v946, %v946
      %v979 = vpack.c.bf16 %v947, %v947
      %v980 = vpack.c.bf16 %v948, %v948
      %v981 = vpack.c.bf16 %v949, %v949
      %v982 = vpack.c.bf16 %v950, %v950
      %v983 = vpack.c.bf16 %v951, %v951
      %v984 = vpack.c.bf16 %v952, %v952
      %v985 = vpack.c.bf16 %v953, %v953
      %v986 = vpack.c.bf16 %v954, %v954
      %v987 = vpack.c.bf16 %v955, %v955
      %v988 = vpack.c.bf16 %v956, %v956
      %v989 = vpack.c.bf16 %v957, %v957
      %v990 = vpack.c.bf16 %v958, %v958
      %v991 = vpack.c.bf16 %v959, %v959
      %v992 = vpack.c.bf16 %v960, %v960
      %v993 = vpack.c.bf16 %v961, %v961
      %v994 = vpack.c.bf16 %v962, %v962
      %v995 = vpack.c.bf16 %v963, %v963
      %v996 = vpack.c.bf16 %v964, %v964
      %v997 = vpack.c.bf16 %v965, %v965
      %s998 = scalar_lea.vmem [#allocation2], 8
      %999 = vst.msk [vmem:[%s998] sm:$0xf] %vm334, %v966
      %1000 = vst.msk [vmem:[%s998 + $0x4] sm:$0xf] %vm334, %v967
      %1001 = vst.msk [vmem:[%s998 + $0x8] sm:$0xf] %vm334, %v968
      %1002 = vst.msk [vmem:[%s998 + $0xc] sm:$0xf] %vm334, %v969
      %1003 = vst.msk [vmem:[%s998 + $0x10] sm:$0xf] %vm334, %v970
      %1004 = vst.msk [vmem:[%s998 + $0x14] sm:$0xf] %vm334, %v971
      %1005 = vst.msk [vmem:[%s998 + $0x18] sm:$0xf] %vm334, %v972
      %1006 = vst.msk [vmem:[%s998 + $0x1c] sm:$0xf] %vm334, %v973
      %1007 = vst.msk [vmem:[%s998 + $0x20] sm:$0xf] %vm334, %v974
      %1008 = vst.msk [vmem:[%s998 + $0x24] sm:$0xf] %vm334, %v975
      %1009 = vst.msk [vmem:[%s998 + $0x28] sm:$0xf] %vm334, %v976
      %1010 = vst.msk [vmem:[%s998 + $0x2c] sm:$0xf] %vm334, %v977
      %1011 = vst.msk [vmem:[%s998 + $0x30] sm:$0xf] %vm334, %v978
      %1012 = vst.msk [vmem:[%s998 + $0x34] sm:$0xf] %vm334, %v979
      %1013 = vst.msk [vmem:[%s998 + $0x38] sm:$0xf] %vm334, %v980
      %1014 = vst.msk [vmem:[%s998 + $0x3c] sm:$0xf] %vm334, %v981
      %1015 = vst.msk [vmem:[%s998 + $0x40] sm:$0xf] %vm334, %v982
      %1016 = vst.msk [vmem:[%s998 + $0x44] sm:$0xf] %vm334, %v983
      %1017 = vst.msk [vmem:[%s998 + $0x48] sm:$0xf] %vm334, %v984
      %1018 = vst.msk [vmem:[%s998 + $0x4c] sm:$0xf] %vm334, %v985
      %1019 = vst.msk [vmem:[%s998 + $0x50] sm:$0xf] %vm334, %v986
      %1020 = vst.msk [vmem:[%s998 + $0x54] sm:$0xf] %vm334, %v987
      %1021 = vst.msk [vmem:[%s998 + $0x58] sm:$0xf] %vm334, %v988
      %1022 = vst.msk [vmem:[%s998 + $0x5c] sm:$0xf] %vm334, %v989
      %1023 = vst.msk [vmem:[%s998 + $0x60] sm:$0xf] %vm334, %v990
      %1024 = vst.msk [vmem:[%s998 + $0x64] sm:$0xf] %vm334, %v991
      %1025 = vst.msk [vmem:[%s998 + $0x68] sm:$0xf] %vm334, %v992
      %1026 = vst.msk [vmem:[%s998 + $0x6c] sm:$0xf] %vm334, %v993
      %1027 = vst.msk [vmem:[%s998 + $0x70] sm:$0xf] %vm334, %v994
      %1028 = vst.msk [vmem:[%s998 + $0x74] sm:$0xf] %vm334, %v995
      %1029 = vst.msk [vmem:[%s998 + $0x78] sm:$0xf] %vm334, %v996
      %1030 = vst.msk [vmem:[%s998 + $0x7c] sm:$0xf] %vm334, %v997
      %v1031 = vld [vmem:[#allocation2] sm:$0xf]
      %v1032 = vld [vmem:[#allocation2 + $0x4] sm:$0xf]
      %v1033 = vld [vmem:[#allocation2 + $0x8] sm:$0xf]
      %v1034 = vld [vmem:[#allocation2 + $0xc] sm:$0xf]
      %v1035 = vld [vmem:[#allocation2 + $0x10] sm:$0xf]
      %v1036 = vld [vmem:[#allocation2 + $0x14] sm:$0xf]
      %v1037 = vld [vmem:[#allocation2 + $0x18] sm:$0xf]
      %v1038 = vld [vmem:[#allocation2 + $0x1c] sm:$0xf]
      %v1039 = vld [vmem:[#allocation2 + $0x20] sm:$0xf]
      %v1040 = vld [vmem:[#allocation2 + $0x24] sm:$0xf]
      %v1041 = vld [vmem:[#allocation2 + $0x28] sm:$0xf]
      %v1042 = vld [vmem:[#allocation2 + $0x2c] sm:$0xf]
      %v1043 = vld [vmem:[#allocation2 + $0x30] sm:$0xf]
      %v1044 = vld [vmem:[#allocation2 + $0x34] sm:$0xf]
      %v1045 = vld [vmem:[#allocation2 + $0x38] sm:$0xf]
      %v1046 = vld [vmem:[#allocation2 + $0x3c] sm:$0xf]
      %v1047 = vld [vmem:[#allocation2 + $0x40] sm:$0xf]
      %v1048 = vld [vmem:[#allocation2 + $0x44] sm:$0xf]
      %v1049 = vld [vmem:[#allocation2 + $0x48] sm:$0xf]
      %v1050 = vld [vmem:[#allocation2 + $0x4c] sm:$0xf]
      %v1051 = vld [vmem:[#allocation2 + $0x50] sm:$0xf]
      %v1052 = vld [vmem:[#allocation2 + $0x54] sm:$0xf]
      %v1053 = vld [vmem:[#allocation2 + $0x58] sm:$0xf]
      %v1054 = vld [vmem:[#allocation2 + $0x5c] sm:$0xf]
      %v1055 = vld [vmem:[#allocation2 + $0x60] sm:$0xf]
      %v1056 = vld [vmem:[#allocation2 + $0x64] sm:$0xf]
      %v1057 = vld [vmem:[#allocation2 + $0x68] sm:$0xf]
      %v1058 = vld [vmem:[#allocation2 + $0x6c] sm:$0xf]
      %v1059 = vld [vmem:[#allocation2 + $0x70] sm:$0xf]
      %v1060 = vld [vmem:[#allocation2 + $0x74] sm:$0xf]
      %v1061 = vld [vmem:[#allocation2 + $0x78] sm:$0xf]
      %v1062 = vld [vmem:[#allocation2 + $0x7c] sm:$0xf]
      %v1063 = vld [vmem:[%s3] sm:$0xf]
      %v1064 = vld [vmem:[%s3 + $0x4] sm:$0x3]
      %v1065 = vld [vmem:[%s998] sm:$0xf]
      %v1066 = vld [vmem:[%s998 + $0x4] sm:$0xf]
      %v1067 = vld [vmem:[%s998 + $0x8] sm:$0xf]
      %v1068 = vld [vmem:[%s998 + $0xc] sm:$0xf]
      %v1069 = vld [vmem:[%s998 + $0x10] sm:$0xf]
      %v1070 = vld [vmem:[%s998 + $0x14] sm:$0xf]
      %v1071 = vld [vmem:[%s998 + $0x18] sm:$0xf]
      %v1072 = vld [vmem:[%s998 + $0x1c] sm:$0xf]
      %v1073 = vld [vmem:[%s998 + $0x20] sm:$0xf]
      %v1074 = vld [vmem:[%s998 + $0x24] sm:$0xf]
      %v1075 = vld [vmem:[%s998 + $0x28] sm:$0xf]
      %v1076 = vld [vmem:[%s998 + $0x2c] sm:$0xf]
      %v1077 = vld [vmem:[%s998 + $0x30] sm:$0xf]
      %v1078 = vld [vmem:[%s998 + $0x34] sm:$0xf]
      %v1079 = vld [vmem:[%s998 + $0x38] sm:$0xf]
      %v1080 = vld [vmem:[%s998 + $0x3c] sm:$0xf]
      %v1081 = vld [vmem:[%s998 + $0x40] sm:$0xf]
      %v1082 = vld [vmem:[%s998 + $0x44] sm:$0xf]
      %v1083 = vld [vmem:[%s998 + $0x48] sm:$0xf]
      %v1084 = vld [vmem:[%s998 + $0x4c] sm:$0xf]
      %v1085 = vld [vmem:[%s998 + $0x50] sm:$0xf]
      %v1086 = vld [vmem:[%s998 + $0x54] sm:$0xf]
      %v1087 = vld [vmem:[%s998 + $0x58] sm:$0xf]
      %v1088 = vld [vmem:[%s998 + $0x5c] sm:$0xf]
      %v1089 = vld [vmem:[%s998 + $0x60] sm:$0xf]
      %v1090 = vld [vmem:[%s998 + $0x64] sm:$0xf]
      %v1091 = vld [vmem:[%s998 + $0x68] sm:$0xf]
      %v1092 = vld [vmem:[%s998 + $0x6c] sm:$0xf]
      %v1093 = vld [vmem:[%s998 + $0x70] sm:$0xf]
      %v1094 = vld [vmem:[%s998 + $0x74] sm:$0xf]
      %v1095 = vld [vmem:[%s998 + $0x78] sm:$0xf]
      %v1096 = vld [vmem:[%s998 + $0x7c] sm:$0xf]
      %s1097 = scalar_lea.vmem %s3, 8
      %v1098 = vld [vmem:[%s1097] sm:$0xf]
      %v1099 = vld [vmem:[%s1097 + $0x4] sm:$0x3]
      %v1132 = vunpack.c.l.b16 %v1065
      %v1133 = vunpack.c.l.b16 %v1066
      %v1134 = vunpack.c.l.b16 %v1067
      %v1135 = vunpack.c.l.b16 %v1068
      %v1136 = vunpack.c.l.b16 %v1069
      %v1137 = vunpack.c.l.b16 %v1070
      %v1138 = vunpack.c.l.b16 %v1071
      %v1139 = vunpack.c.l.b16 %v1072
      %v1140 = vunpack.c.l.b16 %v1073
      %v1141 = vunpack.c.l.b16 %v1074
      %v1142 = vunpack.c.l.b16 %v1075
      %v1143 = vunpack.c.l.b16 %v1076
      %v1144 = vunpack.c.l.b16 %v1077
      %v1145 = vunpack.c.l.b16 %v1078
      %v1146 = vunpack.c.l.b16 %v1079
      %v1147 = vunpack.c.l.b16 %v1080
      %v1148 = vunpack.c.l.b16 %v1081
      %v1149 = vunpack.c.l.b16 %v1082
      %v1150 = vunpack.c.l.b16 %v1083
      %v1151 = vunpack.c.l.b16 %v1084
      %v1152 = vunpack.c.l.b16 %v1085
      %v1153 = vunpack.c.l.b16 %v1086
      %v1154 = vunpack.c.l.b16 %v1087
      %v1155 = vunpack.c.l.b16 %v1088
      %v1156 = vunpack.c.l.b16 %v1089
      %v1157 = vunpack.c.l.b16 %v1090
      %v1158 = vunpack.c.l.b16 %v1091
      %v1159 = vunpack.c.l.b16 %v1092
      %v1160 = vunpack.c.l.b16 %v1093
      %v1161 = vunpack.c.l.b16 %v1094
      %v1162 = vunpack.c.l.b16 %v1095
      %v1163 = vunpack.c.l.b16 %v1096
      %v1164 = vpack.c.b16 %v1133, %v1132
      %v1165 = vpack.c.b16 %v1135, %v1134
      %v1166 = vpack.c.b16 %v1137, %v1136
      %v1167 = vpack.c.b16 %v1139, %v1138
      %v1168 = vpack.c.b16 %v1141, %v1140
      %v1169 = vpack.c.b16 %v1143, %v1142
      %v1170 = vpack.c.b16 %v1145, %v1144
      %v1171 = vpack.c.b16 %v1147, %v1146
      %v1172 = vpack.c.b16 %v1149, %v1148
      %v1173 = vpack.c.b16 %v1151, %v1150
      %v1174 = vpack.c.b16 %v1153, %v1152
      %v1175 = vpack.c.b16 %v1155, %v1154
      %v1176 = vpack.c.b16 %v1157, %v1156
      %v1177 = vpack.c.b16 %v1159, %v1158
      %v1178 = vpack.c.b16 %v1161, %v1160
      %v1179 = vpack.c.b16 %v1163, %v1162
      %v1182 = vunpack.c.l.b16 %v1098
      %v1183 = vunpack.c.l.b16 %v1099
      %v1184 = vpack.c.b16 %v1183, %v1182
      %vm1185 = vcmask 97280
      %v1187 = vsel %vm1185, %v1164, 0
      %v1190 = vsel %vm1185, %v1165, 0
      %v1193 = vsel %vm1185, %v1166, 0
      %v1196 = vsel %vm1185, %v1167, 0
      %v1199 = vsel %vm1185, %v1168, 0
      %v1202 = vsel %vm1185, %v1169, 0
      %v1205 = vsel %vm1185, %v1170, 0
      %v1208 = vsel %vm1185, %v1171, 0
      %v1211 = vsel %vm1185, %v1172, 0
      %v1214 = vsel %vm1185, %v1173, 0
      %v1217 = vsel %vm1185, %v1174, 0
      %v1220 = vsel %vm1185, %v1175, 0
      %v1223 = vsel %vm1185, %v1176, 0
      %v1226 = vsel %vm1185, %v1177, 0
      %v1229 = vsel %vm1185, %v1178, 0
      %v1232 = vsel %vm1185, %v1179, 0
      %vm1234 = vcmask 1045504
      %v1236 = vsel %vm1234, %v1184, 0
      %1238 = vmatpush.bf16.msra.mxu0 0
      %1239 = vmatpush.bf16.msra.mxu0 0
      %1240 = vmatpush.bf16.msra.mxu0 0
      %1241 = vmatpush.bf16.msra.mxu0 0
      %1242 = vmatpush.bf16.msra.mxu0 0
      %1243 = vmatpush.bf16.msra.mxu0 0
      %1244 = vmatpush.bf16.msra.mxu0 0
      %1245 = vmatpush.bf16.msra.mxu0 %v1236
      %1246 = vmatmul.bf16.gmra.mxu0 %v1187
      %v1247 = vpop.f32.mrf.mxu0
      %v1248 = vadd.f32 0.0, %v1247
      %v1249 = vpop.f32.mrf.mxu0
      %v1250 = vadd.f32 0.0, %v1249
      %1251 = vmatmul.bf16.gmra.mxu0 %v1190
      %v1252 = vpop.f32.mrf.mxu0
      %v1253 = vadd.f32 0.0, %v1252
      %v1254 = vpop.f32.mrf.mxu0
      %v1255 = vadd.f32 0.0, %v1254
      %1256 = vmatmul.bf16.gmra.mxu0 %v1193
      %v1257 = vpop.f32.mrf.mxu0
      %v1258 = vadd.f32 0.0, %v1257
      %v1259 = vpop.f32.mrf.mxu0
      %v1260 = vadd.f32 0.0, %v1259
      %1261 = vmatmul.bf16.gmra.mxu0 %v1196
      %v1262 = vpop.f32.mrf.mxu0
      %v1263 = vadd.f32 0.0, %v1262
      %v1264 = vpop.f32.mrf.mxu0
      %v1265 = vadd.f32 0.0, %v1264
      %1266 = vmatmul.bf16.gmra.mxu0 %v1199
      %v1267 = vpop.f32.mrf.mxu0
      %v1268 = vadd.f32 0.0, %v1267
      %v1269 = vpop.f32.mrf.mxu0
      %v1270 = vadd.f32 0.0, %v1269
      %1271 = vmatmul.bf16.gmra.mxu0 %v1202
      %v1272 = vpop.f32.mrf.mxu0
      %v1273 = vadd.f32 0.0, %v1272
      %v1274 = vpop.f32.mrf.mxu0
      %v1275 = vadd.f32 0.0, %v1274
      %1276 = vmatmul.bf16.gmra.mxu0 %v1205
      %v1277 = vpop.f32.mrf.mxu0
      %v1278 = vadd.f32 0.0, %v1277
      %v1279 = vpop.f32.mrf.mxu0
      %v1280 = vadd.f32 0.0, %v1279
      %1281 = vmatmul.bf16.gmra.mxu0 %v1208
      %v1282 = vpop.f32.mrf.mxu0
      %v1283 = vadd.f32 0.0, %v1282
      %v1284 = vpop.f32.mrf.mxu0
      %v1285 = vadd.f32 0.0, %v1284
      %1286 = vmatmul.bf16.gmra.mxu0 %v1211
      %v1287 = vpop.f32.mrf.mxu0
      %v1288 = vadd.f32 0.0, %v1287
      %v1289 = vpop.f32.mrf.mxu0
      %v1290 = vadd.f32 0.0, %v1289
      %1291 = vmatmul.bf16.gmra.mxu0 %v1214
      %v1292 = vpop.f32.mrf.mxu0
      %v1293 = vadd.f32 0.0, %v1292
      %v1294 = vpop.f32.mrf.mxu0
      %v1295 = vadd.f32 0.0, %v1294
      %1296 = vmatmul.bf16.gmra.mxu0 %v1217
      %v1297 = vpop.f32.mrf.mxu0
      %v1298 = vadd.f32 0.0, %v1297
      %v1299 = vpop.f32.mrf.mxu0
      %v1300 = vadd.f32 0.0, %v1299
      %1301 = vmatmul.bf16.gmra.mxu0 %v1220
      %v1302 = vpop.f32.mrf.mxu0
      %v1303 = vadd.f32 0.0, %v1302
      %v1304 = vpop.f32.mrf.mxu0
      %v1305 = vadd.f32 0.0, %v1304
      %1306 = vmatmul.bf16.gmra.mxu0 %v1223
      %v1307 = vpop.f32.mrf.mxu0
      %v1308 = vadd.f32 0.0, %v1307
      %v1309 = vpop.f32.mrf.mxu0
      %v1310 = vadd.f32 0.0, %v1309
      %1311 = vmatmul.bf16.gmra.mxu0 %v1226
      %v1312 = vpop.f32.mrf.mxu0
      %v1313 = vadd.f32 0.0, %v1312
      %v1314 = vpop.f32.mrf.mxu0
      %v1315 = vadd.f32 0.0, %v1314
      %1316 = vmatmul.bf16.gmra.mxu0 %v1229
      %v1317 = vpop.f32.mrf.mxu0
      %v1318 = vadd.f32 0.0, %v1317
      %v1319 = vpop.f32.mrf.mxu0
      %v1320 = vadd.f32 0.0, %v1319
      %1321 = vmatmul.bf16.gmra.mxu0 %v1232
      %v1322 = vpop.f32.mrf.mxu0
      %v1323 = vadd.f32 0.0, %v1322
      %v1324 = vpop.f32.mrf.mxu0
      %v1325 = vadd.f32 0.0, %v1324
      %1326 = vdwg.mxu0
      %v1359 = vunpack.c.l.b16 %v1031
      %v1360 = vunpack.c.l.b16 %v1032
      %v1361 = vunpack.c.l.b16 %v1033
      %v1362 = vunpack.c.l.b16 %v1034
      %v1363 = vunpack.c.l.b16 %v1035
      %v1364 = vunpack.c.l.b16 %v1036
      %v1365 = vunpack.c.l.b16 %v1037
      %v1366 = vunpack.c.l.b16 %v1038
      %v1367 = vunpack.c.l.b16 %v1039
      %v1368 = vunpack.c.l.b16 %v1040
      %v1369 = vunpack.c.l.b16 %v1041
      %v1370 = vunpack.c.l.b16 %v1042
      %v1371 = vunpack.c.l.b16 %v1043
      %v1372 = vunpack.c.l.b16 %v1044
      %v1373 = vunpack.c.l.b16 %v1045
      %v1374 = vunpack.c.l.b16 %v1046
      %v1375 = vunpack.c.l.b16 %v1047
      %v1376 = vunpack.c.l.b16 %v1048
      %v1377 = vunpack.c.l.b16 %v1049
      %v1378 = vunpack.c.l.b16 %v1050
      %v1379 = vunpack.c.l.b16 %v1051
      %v1380 = vunpack.c.l.b16 %v1052
      %v1381 = vunpack.c.l.b16 %v1053
      %v1382 = vunpack.c.l.b16 %v1054
      %v1383 = vunpack.c.l.b16 %v1055
      %v1384 = vunpack.c.l.b16 %v1056
      %v1385 = vunpack.c.l.b16 %v1057
      %v1386 = vunpack.c.l.b16 %v1058
      %v1387 = vunpack.c.l.b16 %v1059
      %v1388 = vunpack.c.l.b16 %v1060
      %v1389 = vunpack.c.l.b16 %v1061
      %v1390 = vunpack.c.l.b16 %v1062
      %v1391 = vpack.c.b16 %v1360, %v1359
      %v1392 = vpack.c.b16 %v1362, %v1361
      %v1393 = vpack.c.b16 %v1364, %v1363
      %v1394 = vpack.c.b16 %v1366, %v1365
      %v1395 = vpack.c.b16 %v1368, %v1367
      %v1396 = vpack.c.b16 %v1370, %v1369
      %v1397 = vpack.c.b16 %v1372, %v1371
      %v1398 = vpack.c.b16 %v1374, %v1373
      %v1399 = vpack.c.b16 %v1376, %v1375
      %v1400 = vpack.c.b16 %v1378, %v1377
      %v1401 = vpack.c.b16 %v1380, %v1379
      %v1402 = vpack.c.b16 %v1382, %v1381
      %v1403 = vpack.c.b16 %v1384, %v1383
      %v1404 = vpack.c.b16 %v1386, %v1385
      %v1405 = vpack.c.b16 %v1388, %v1387
      %v1406 = vpack.c.b16 %v1390, %v1389
      %v1409 = vunpack.c.l.b16 %v1063
      %v1410 = vunpack.c.l.b16 %v1064
      %v1411 = vpack.c.b16 %v1410, %v1409
      %v1413 = vsel %vm1185, %v1391, 0
      %v1416 = vsel %vm1185, %v1392, 0
      %v1419 = vsel %vm1185, %v1393, 0
      %v1422 = vsel %vm1185, %v1394, 0
      %v1425 = vsel %vm1185, %v1395, 0
      %v1428 = vsel %vm1185, %v1396, 0
      %v1431 = vsel %vm1185, %v1397, 0
      %v1434 = vsel %vm1185, %v1398, 0
      %v1437 = vsel %vm1185, %v1399, 0
      %v1440 = vsel %vm1185, %v1400, 0
      %v1443 = vsel %vm1185, %v1401, 0
      %v1446 = vsel %vm1185, %v1402, 0
      %v1449 = vsel %vm1185, %v1403, 0
      %v1452 = vsel %vm1185, %v1404, 0
      %v1455 = vsel %vm1185, %v1405, 0
      %v1458 = vsel %vm1185, %v1406, 0
      %v1461 = vsel %vm1234, %v1411, 0
      %1463 = vmatpush.bf16.msra.mxu0 0
      %1464 = vmatpush.bf16.msra.mxu0 0
      %1465 = vmatpush.bf16.msra.mxu0 0
      %1466 = vmatpush.bf16.msra.mxu0 0
      %1467 = vmatpush.bf16.msra.mxu0 0
      %1468 = vmatpush.bf16.msra.mxu0 0
      %1469 = vmatpush.bf16.msra.mxu0 0
      %1470 = vmatpush.bf16.msra.mxu0 %v1461
      %1471 = vmatmul.bf16.gmra.mxu0 %v1413
      %v1472 = vpop.f32.mrf.mxu0
      %v1473 = vadd.f32 %v1248, %v1472
      %v1474 = vpop.f32.mrf.mxu0
      %v1475 = vadd.f32 %v1250, %v1474
      %1476 = vmatmul.bf16.gmra.mxu0 %v1416
      %v1477 = vpop.f32.mrf.mxu0
      %v1478 = vadd.f32 %v1253, %v1477
      %v1479 = vpop.f32.mrf.mxu0
      %v1480 = vadd.f32 %v1255, %v1479
      %1481 = vmatmul.bf16.gmra.mxu0 %v1419
      %v1482 = vpop.f32.mrf.mxu0
      %v1483 = vadd.f32 %v1258, %v1482
      %v1484 = vpop.f32.mrf.mxu0
      %v1485 = vadd.f32 %v1260, %v1484
      %1486 = vmatmul.bf16.gmra.mxu0 %v1422
      %v1487 = vpop.f32.mrf.mxu0
      %v1488 = vadd.f32 %v1263, %v1487
      %v1489 = vpop.f32.mrf.mxu0
      %v1490 = vadd.f32 %v1265, %v1489
      %1491 = vmatmul.bf16.gmra.mxu0 %v1425
      %v1492 = vpop.f32.mrf.mxu0
      %v1493 = vadd.f32 %v1268, %v1492
      %v1494 = vpop.f32.mrf.mxu0
      %v1495 = vadd.f32 %v1270, %v1494
      %1496 = vmatmul.bf16.gmra.mxu0 %v1428
      %v1497 = vpop.f32.mrf.mxu0
      %v1498 = vadd.f32 %v1273, %v1497
      %v1499 = vpop.f32.mrf.mxu0
      %v1500 = vadd.f32 %v1275, %v1499
      %1501 = vmatmul.bf16.gmra.mxu0 %v1431
      %v1502 = vpop.f32.mrf.mxu0
      %v1503 = vadd.f32 %v1278, %v1502
      %v1504 = vpop.f32.mrf.mxu0
      %v1505 = vadd.f32 %v1280, %v1504
      %1506 = vmatmul.bf16.gmra.mxu0 %v1434
      %v1507 = vpop.f32.mrf.mxu0
      %v1508 = vadd.f32 %v1283, %v1507
      %v1509 = vpop.f32.mrf.mxu0
      %v1510 = vadd.f32 %v1285, %v1509
      %1511 = vmatmul.bf16.gmra.mxu0 %v1437
      %v1512 = vpop.f32.mrf.mxu0
      %v1513 = vadd.f32 %v1288, %v1512
      %v1514 = vpop.f32.mrf.mxu0
      %v1515 = vadd.f32 %v1290, %v1514
      %1516 = vmatmul.bf16.gmra.mxu0 %v1440
      %v1517 = vpop.f32.mrf.mxu0
      %v1518 = vadd.f32 %v1293, %v1517
      %v1519 = vpop.f32.mrf.mxu0
      %v1520 = vadd.f32 %v1295, %v1519
      %1521 = vmatmul.bf16.gmra.mxu0 %v1443
      %v1522 = vpop.f32.mrf.mxu0
      %v1523 = vadd.f32 %v1298, %v1522
      %v1524 = vpop.f32.mrf.mxu0
      %v1525 = vadd.f32 %v1300, %v1524
      %1526 = vmatmul.bf16.gmra.mxu0 %v1446
      %v1527 = vpop.f32.mrf.mxu0
      %v1528 = vadd.f32 %v1303, %v1527
      %v1529 = vpop.f32.mrf.mxu0
      %v1530 = vadd.f32 %v1305, %v1529
      %1531 = vmatmul.bf16.gmra.mxu0 %v1449
      %v1532 = vpop.f32.mrf.mxu0
      %v1533 = vadd.f32 %v1308, %v1532
      %v1534 = vpop.f32.mrf.mxu0
      %v1535 = vadd.f32 %v1310, %v1534
      %1536 = vmatmul.bf16.gmra.mxu0 %v1452
      %v1537 = vpop.f32.mrf.mxu0
      %v1538 = vadd.f32 %v1313, %v1537
      %v1539 = vpop.f32.mrf.mxu0
      %v1540 = vadd.f32 %v1315, %v1539
      %1541 = vmatmul.bf16.gmra.mxu0 %v1455
      %v1542 = vpop.f32.mrf.mxu0
      %v1543 = vadd.f32 %v1318, %v1542
      %v1544 = vpop.f32.mrf.mxu0
      %v1545 = vadd.f32 %v1320, %v1544
      %1546 = vmatmul.bf16.gmra.mxu0 %v1458
      %v1547 = vpop.f32.mrf.mxu0
      %v1548 = vadd.f32 %v1323, %v1547
      %v1549 = vpop.f32.mrf.mxu0
      %v1550 = vadd.f32 %v1325, %v1549
      %1551 = vdwg.mxu0
      %s1552 = scalar_lea.vmem [#allocation2], 16
      %v1553 = vld [vmem:[%s1552] sm:$0xf]
      %v1554 = vld [vmem:[%s1552 + $0x4] sm:$0xf]
      %v1555 = vld [vmem:[%s1552 + $0x8] sm:$0xf]
      %v1556 = vld [vmem:[%s1552 + $0xc] sm:$0xf]
      %v1557 = vld [vmem:[%s1552 + $0x10] sm:$0xf]
      %v1558 = vld [vmem:[%s1552 + $0x14] sm:$0xf]
      %v1559 = vld [vmem:[%s1552 + $0x18] sm:$0xf]
      %v1560 = vld [vmem:[%s1552 + $0x1c] sm:$0xf]
      %v1561 = vld [vmem:[%s1552 + $0x20] sm:$0xf]
      %v1562 = vld [vmem:[%s1552 + $0x24] sm:$0xf]
      %v1563 = vld [vmem:[%s1552 + $0x28] sm:$0xf]
      %v1564 = vld [vmem:[%s1552 + $0x2c] sm:$0xf]
      %v1565 = vld [vmem:[%s1552 + $0x30] sm:$0xf]
      %v1566 = vld [vmem:[%s1552 + $0x34] sm:$0xf]
      %v1567 = vld [vmem:[%s1552 + $0x38] sm:$0xf]
      %v1568 = vld [vmem:[%s1552 + $0x3c] sm:$0xf]
      %v1569 = vld [vmem:[%s1552 + $0x40] sm:$0xf]
      %v1570 = vld [vmem:[%s1552 + $0x44] sm:$0xf]
      %v1571 = vld [vmem:[%s1552 + $0x48] sm:$0xf]
      %v1572 = vld [vmem:[%s1552 + $0x4c] sm:$0xf]
      %v1573 = vld [vmem:[%s1552 + $0x50] sm:$0xf]
      %v1574 = vld [vmem:[%s1552 + $0x54] sm:$0xf]
      %v1575 = vld [vmem:[%s1552 + $0x58] sm:$0xf]
      %v1576 = vld [vmem:[%s1552 + $0x5c] sm:$0xf]
      %v1577 = vld [vmem:[%s1552 + $0x60] sm:$0xf]
      %v1578 = vld [vmem:[%s1552 + $0x64] sm:$0xf]
      %v1579 = vld [vmem:[%s1552 + $0x68] sm:$0xf]
      %v1580 = vld [vmem:[%s1552 + $0x6c] sm:$0xf]
      %v1581 = vld [vmem:[%s1552 + $0x70] sm:$0xf]
      %v1582 = vld [vmem:[%s1552 + $0x74] sm:$0xf]
      %v1583 = vld [vmem:[%s1552 + $0x78] sm:$0xf]
      %v1584 = vld [vmem:[%s1552 + $0x7c] sm:$0xf]
      %s1585 = scalar_lea.vmem %s3, 16
      %v1586 = vld [vmem:[%s1585] sm:$0xf]
      %v1587 = vld [vmem:[%s1585 + $0x4] sm:$0x3]
      %v1620 = vunpack.c.l.b16 %v1553
      %v1621 = vunpack.c.l.b16 %v1554
      %v1622 = vunpack.c.l.b16 %v1555
      %v1623 = vunpack.c.l.b16 %v1556
      %v1624 = vunpack.c.l.b16 %v1557
      %v1625 = vunpack.c.l.b16 %v1558
      %v1626 = vunpack.c.l.b16 %v1559
      %v1627 = vunpack.c.l.b16 %v1560
      %v1628 = vunpack.c.l.b16 %v1561
      %v1629 = vunpack.c.l.b16 %v1562
      %v1630 = vunpack.c.l.b16 %v1563
      %v1631 = vunpack.c.l.b16 %v1564
      %v1632 = vunpack.c.l.b16 %v1565
      %v1633 = vunpack.c.l.b16 %v1566
      %v1634 = vunpack.c.l.b16 %v1567
      %v1635 = vunpack.c.l.b16 %v1568
      %v1636 = vunpack.c.l.b16 %v1569
      %v1637 = vunpack.c.l.b16 %v1570
      %v1638 = vunpack.c.l.b16 %v1571
      %v1639 = vunpack.c.l.b16 %v1572
      %v1640 = vunpack.c.l.b16 %v1573
      %v1641 = vunpack.c.l.b16 %v1574
      %v1642 = vunpack.c.l.b16 %v1575
      %v1643 = vunpack.c.l.b16 %v1576
      %v1644 = vunpack.c.l.b16 %v1577
      %v1645 = vunpack.c.l.b16 %v1578
      %v1646 = vunpack.c.l.b16 %v1579
      %v1647 = vunpack.c.l.b16 %v1580
      %v1648 = vunpack.c.l.b16 %v1581
      %v1649 = vunpack.c.l.b16 %v1582
      %v1650 = vunpack.c.l.b16 %v1583
      %v1651 = vunpack.c.l.b16 %v1584
      %v1652 = vpack.c.b16 %v1621, %v1620
      %v1653 = vpack.c.b16 %v1623, %v1622
      %v1654 = vpack.c.b16 %v1625, %v1624
      %v1655 = vpack.c.b16 %v1627, %v1626
      %v1656 = vpack.c.b16 %v1629, %v1628
      %v1657 = vpack.c.b16 %v1631, %v1630
      %v1658 = vpack.c.b16 %v1633, %v1632
      %v1659 = vpack.c.b16 %v1635, %v1634
      %v1660 = vpack.c.b16 %v1637, %v1636
      %v1661 = vpack.c.b16 %v1639, %v1638
      %v1662 = vpack.c.b16 %v1641, %v1640
      %v1663 = vpack.c.b16 %v1643, %v1642
      %v1664 = vpack.c.b16 %v1645, %v1644
      %v1665 = vpack.c.b16 %v1647, %v1646
      %v1666 = vpack.c.b16 %v1649, %v1648
      %v1667 = vpack.c.b16 %v1651, %v1650
      %v1670 = vunpack.c.l.b16 %v1586
      %v1671 = vunpack.c.l.b16 %v1587
      %v1672 = vpack.c.b16 %v1671, %v1670
      %v1674 = vsel %vm1185, %v1652, 0
      %v1677 = vsel %vm1185, %v1653, 0
      %v1680 = vsel %vm1185, %v1654, 0
      %v1683 = vsel %vm1185, %v1655, 0
      %v1686 = vsel %vm1185, %v1656, 0
      %v1689 = vsel %vm1185, %v1657, 0
      %v1692 = vsel %vm1185, %v1658, 0
      %v1695 = vsel %vm1185, %v1659, 0
      %v1698 = vsel %vm1185, %v1660, 0
      %v1701 = vsel %vm1185, %v1661, 0
      %v1704 = vsel %vm1185, %v1662, 0
      %v1707 = vsel %vm1185, %v1663, 0
      %v1710 = vsel %vm1185, %v1664, 0
      %v1713 = vsel %vm1185, %v1665, 0
      %v1716 = vsel %vm1185, %v1666, 0
      %v1719 = vsel %vm1185, %v1667, 0
      %v1722 = vsel %vm1234, %v1672, 0
      %1724 = vmatpush.bf16.msra.mxu0 0
      %1725 = vmatpush.bf16.msra.mxu0 0
      %1726 = vmatpush.bf16.msra.mxu0 0
      %1727 = vmatpush.bf16.msra.mxu0 0
      %1728 = vmatpush.bf16.msra.mxu0 0
      %1729 = vmatpush.bf16.msra.mxu0 0
      %1730 = vmatpush.bf16.msra.mxu0 0
      %1731 = vmatpush.bf16.msra.mxu0 %v1722
      %1732 = vmatmul.bf16.gmra.mxu0 %v1674
      %v1733 = vpop.f32.mrf.mxu0
      %v1734 = vadd.f32 0.0, %v1733
      %v1735 = vpop.f32.mrf.mxu0
      %v1736 = vadd.f32 0.0, %v1735
      %1737 = vmatmul.bf16.gmra.mxu0 %v1677
      %v1738 = vpop.f32.mrf.mxu0
      %v1739 = vadd.f32 0.0, %v1738
      %v1740 = vpop.f32.mrf.mxu0
      %v1741 = vadd.f32 0.0, %v1740
      %1742 = vmatmul.bf16.gmra.mxu0 %v1680
      %v1743 = vpop.f32.mrf.mxu0
      %v1744 = vadd.f32 0.0, %v1743
      %v1745 = vpop.f32.mrf.mxu0
      %v1746 = vadd.f32 0.0, %v1745
      %1747 = vmatmul.bf16.gmra.mxu0 %v1683
      %v1748 = vpop.f32.mrf.mxu0
      %v1749 = vadd.f32 0.0, %v1748
      %v1750 = vpop.f32.mrf.mxu0
      %v1751 = vadd.f32 0.0, %v1750
      %1752 = vmatmul.bf16.gmra.mxu0 %v1686
      %v1753 = vpop.f32.mrf.mxu0
      %v1754 = vadd.f32 0.0, %v1753
      %v1755 = vpop.f32.mrf.mxu0
      %v1756 = vadd.f32 0.0, %v1755
      %1757 = vmatmul.bf16.gmra.mxu0 %v1689
      %v1758 = vpop.f32.mrf.mxu0
      %v1759 = vadd.f32 0.0, %v1758
      %v1760 = vpop.f32.mrf.mxu0
      %v1761 = vadd.f32 0.0, %v1760
      %1762 = vmatmul.bf16.gmra.mxu0 %v1692
      %v1763 = vpop.f32.mrf.mxu0
      %v1764 = vadd.f32 0.0, %v1763
      %v1765 = vpop.f32.mrf.mxu0
      %v1766 = vadd.f32 0.0, %v1765
      %1767 = vmatmul.bf16.gmra.mxu0 %v1695
      %v1768 = vpop.f32.mrf.mxu0
      %v1769 = vadd.f32 0.0, %v1768
      %v1770 = vpop.f32.mrf.mxu0
      %v1771 = vadd.f32 0.0, %v1770
      %1772 = vmatmul.bf16.gmra.mxu0 %v1698
      %v1773 = vpop.f32.mrf.mxu0
      %v1774 = vadd.f32 0.0, %v1773
      %v1775 = vpop.f32.mrf.mxu0
      %v1776 = vadd.f32 0.0, %v1775
      %1777 = vmatmul.bf16.gmra.mxu0 %v1701
      %v1778 = vpop.f32.mrf.mxu0
      %v1779 = vadd.f32 0.0, %v1778
      %v1780 = vpop.f32.mrf.mxu0
      %v1781 = vadd.f32 0.0, %v1780
      %1782 = vmatmul.bf16.gmra.mxu0 %v1704
      %v1783 = vpop.f32.mrf.mxu0
      %v1784 = vadd.f32 0.0, %v1783
      %v1785 = vpop.f32.mrf.mxu0
      %v1786 = vadd.f32 0.0, %v1785
      %1787 = vmatmul.bf16.gmra.mxu0 %v1707
      %v1788 = vpop.f32.mrf.mxu0
      %v1789 = vadd.f32 0.0, %v1788
      %v1790 = vpop.f32.mrf.mxu0
      %v1791 = vadd.f32 0.0, %v1790
      %1792 = vmatmul.bf16.gmra.mxu0 %v1710
      %v1793 = vpop.f32.mrf.mxu0
      %v1794 = vadd.f32 0.0, %v1793
      %v1795 = vpop.f32.mrf.mxu0
      %v1796 = vadd.f32 0.0, %v1795
      %1797 = vmatmul.bf16.gmra.mxu0 %v1713
      %v1798 = vpop.f32.mrf.mxu0
      %v1799 = vadd.f32 0.0, %v1798
      %v1800 = vpop.f32.mrf.mxu0
      %v1801 = vadd.f32 0.0, %v1800
      %1802 = vmatmul.bf16.gmra.mxu0 %v1716
      %v1803 = vpop.f32.mrf.mxu0
      %v1804 = vadd.f32 0.0, %v1803
      %v1805 = vpop.f32.mrf.mxu0
      %v1806 = vadd.f32 0.0, %v1805
      %1807 = vmatmul.bf16.gmra.mxu0 %v1719
      %v1808 = vpop.f32.mrf.mxu0
      %v1809 = vadd.f32 0.0, %v1808
      %v1810 = vpop.f32.mrf.mxu0
      %v1811 = vadd.f32 0.0, %v1810
      %1812 = vdwg.mxu0
      %v1813 = vadd.f32 %v1473, %v1734
      %v1814 = vadd.f32 %v1475, %v1736
      %v1815 = vadd.f32 %v1478, %v1739
      %v1816 = vadd.f32 %v1480, %v1741
      %v1817 = vadd.f32 %v1483, %v1744
      %v1818 = vadd.f32 %v1485, %v1746
      %v1819 = vadd.f32 %v1488, %v1749
      %v1820 = vadd.f32 %v1490, %v1751
      %v1821 = vadd.f32 %v1493, %v1754
      %v1822 = vadd.f32 %v1495, %v1756
      %v1823 = vadd.f32 %v1498, %v1759
      %v1824 = vadd.f32 %v1500, %v1761
      %v1825 = vadd.f32 %v1503, %v1764
      %v1826 = vadd.f32 %v1505, %v1766
      %v1827 = vadd.f32 %v1508, %v1769
      %v1828 = vadd.f32 %v1510, %v1771
      %v1829 = vadd.f32 %v1513, %v1774
      %v1830 = vadd.f32 %v1515, %v1776
      %v1831 = vadd.f32 %v1518, %v1779
      %v1832 = vadd.f32 %v1520, %v1781
      %v1833 = vadd.f32 %v1523, %v1784
      %v1834 = vadd.f32 %v1525, %v1786
      %v1835 = vadd.f32 %v1528, %v1789
      %v1836 = vadd.f32 %v1530, %v1791
      %v1837 = vadd.f32 %v1533, %v1794
      %v1838 = vadd.f32 %v1535, %v1796
      %v1839 = vadd.f32 %v1538, %v1799
      %v1840 = vadd.f32 %v1540, %v1801
      %v1841 = vadd.f32 %v1543, %v1804
      %v1842 = vadd.f32 %v1545, %v1806
      %v1843 = vadd.f32 %v1548, %v1809
      %v1844 = vadd.f32 %v1550, %v1811
      %v1845 = vld [vmem:[%s4] sm:$0x1]
      %v1847 = vperm.slane %v1845, 0
      %v1849 = vmul.f32 %v1813, %v1847
      %v1850 = vmul.f32 %v1814, %v1847
      %v1851 = vmul.f32 %v1815, %v1847
      %v1852 = vmul.f32 %v1816, %v1847
      %v1853 = vmul.f32 %v1817, %v1847
      %v1854 = vmul.f32 %v1818, %v1847
      %v1855 = vmul.f32 %v1819, %v1847
      %v1856 = vmul.f32 %v1820, %v1847
      %v1857 = vmul.f32 %v1821, %v1847
      %v1858 = vmul.f32 %v1822, %v1847
      %v1859 = vmul.f32 %v1823, %v1847
      %v1860 = vmul.f32 %v1824, %v1847
      %v1861 = vmul.f32 %v1825, %v1847
      %v1862 = vmul.f32 %v1826, %v1847
      %v1863 = vmul.f32 %v1827, %v1847
      %v1864 = vmul.f32 %v1828, %v1847
      %v1865 = vmul.f32 %v1829, %v1847
      %v1866 = vmul.f32 %v1830, %v1847
      %v1867 = vmul.f32 %v1831, %v1847
      %v1868 = vmul.f32 %v1832, %v1847
      %v1869 = vmul.f32 %v1833, %v1847
      %v1870 = vmul.f32 %v1834, %v1847
      %v1871 = vmul.f32 %v1835, %v1847
      %v1872 = vmul.f32 %v1836, %v1847
      %v1873 = vmul.f32 %v1837, %v1847
      %v1874 = vmul.f32 %v1838, %v1847
      %v1875 = vmul.f32 %v1839, %v1847
      %v1876 = vmul.f32 %v1840, %v1847
      %v1877 = vmul.f32 %v1841, %v1847
      %v1878 = vmul.f32 %v1842, %v1847
      %v1879 = vmul.f32 %v1843, %v1847
      %v1880 = vmul.f32 %v1844, %v1847
      %v1881 = vld [vmem:[%s5] sm:$0x1]
      %v1883 = vperm.slane %v1881, 0
      %v1885 = vadd.f32 %v1849, %v1883
      %v1886 = vadd.f32 %v1850, %v1883
      %v1887 = vadd.f32 %v1851, %v1883
      %v1888 = vadd.f32 %v1852, %v1883
      %v1889 = vadd.f32 %v1853, %v1883
      %v1890 = vadd.f32 %v1854, %v1883
      %v1891 = vadd.f32 %v1855, %v1883
      %v1892 = vadd.f32 %v1856, %v1883
      %v1893 = vadd.f32 %v1857, %v1883
      %v1894 = vadd.f32 %v1858, %v1883
      %v1895 = vadd.f32 %v1859, %v1883
      %v1896 = vadd.f32 %v1860, %v1883
      %v1897 = vadd.f32 %v1861, %v1883
      %v1898 = vadd.f32 %v1862, %v1883
      %v1899 = vadd.f32 %v1863, %v1883
      %v1900 = vadd.f32 %v1864, %v1883
      %v1901 = vadd.f32 %v1865, %v1883
      %v1902 = vadd.f32 %v1866, %v1883
      %v1903 = vadd.f32 %v1867, %v1883
      %v1904 = vadd.f32 %v1868, %v1883
      %v1905 = vadd.f32 %v1869, %v1883
      %v1906 = vadd.f32 %v1870, %v1883
      %v1907 = vadd.f32 %v1871, %v1883
      %v1908 = vadd.f32 %v1872, %v1883
      %v1909 = vadd.f32 %v1873, %v1883
      %v1910 = vadd.f32 %v1874, %v1883
      %v1911 = vadd.f32 %v1875, %v1883
      %v1912 = vadd.f32 %v1876, %v1883
      %v1913 = vadd.f32 %v1877, %v1883
      %v1914 = vadd.f32 %v1878, %v1883
      %v1915 = vadd.f32 %v1879, %v1883
      %v1916 = vadd.f32 %v1880, %v1883
      %v1917 = vmax.f32 %v1885, 0.0
      %v1918 = vmax.f32 %v1886, 0.0
      %v1919 = vmax.f32 %v1887, 0.0
      %v1920 = vmax.f32 %v1888, 0.0
      %v1921 = vmax.f32 %v1889, 0.0
      %v1922 = vmax.f32 %v1890, 0.0
      %v1923 = vmax.f32 %v1891, 0.0
      %v1924 = vmax.f32 %v1892, 0.0
      %v1925 = vmax.f32 %v1893, 0.0
      %v1926 = vmax.f32 %v1894, 0.0
      %v1927 = vmax.f32 %v1895, 0.0
      %v1928 = vmax.f32 %v1896, 0.0
      %v1929 = vmax.f32 %v1897, 0.0
      %v1930 = vmax.f32 %v1898, 0.0
      %v1931 = vmax.f32 %v1899, 0.0
      %v1932 = vmax.f32 %v1900, 0.0
      %v1933 = vmax.f32 %v1901, 0.0
      %v1934 = vmax.f32 %v1902, 0.0
      %v1935 = vmax.f32 %v1903, 0.0
      %v1936 = vmax.f32 %v1904, 0.0
      %v1937 = vmax.f32 %v1905, 0.0
      %v1938 = vmax.f32 %v1906, 0.0
      %v1939 = vmax.f32 %v1907, 0.0
      %v1940 = vmax.f32 %v1908, 0.0
      %v1941 = vmax.f32 %v1909, 0.0
      %v1942 = vmax.f32 %v1910, 0.0
      %v1943 = vmax.f32 %v1911, 0.0
      %v1944 = vmax.f32 %v1912, 0.0
      %v1945 = vmax.f32 %v1913, 0.0
      %v1946 = vmax.f32 %v1914, 0.0
      %v1947 = vmax.f32 %v1915, 0.0
      %v1948 = vmax.f32 %v1916, 0.0
      %v1981 = vrot.slane %v1917, 7
      %v1982 = vrot.slane %v1918, 7
      %v1983 = vsel %vm514, %v1981, %v1982
      %v1984 = vrot.slane %v1919, 7
      %v1985 = vrot.slane %v1920, 7
      %v1986 = vsel %vm514, %v1984, %v1985
      %v1987 = vrot.slane %v1921, 7
      %v1988 = vrot.slane %v1922, 7
      %v1989 = vsel %vm514, %v1987, %v1988
      %v1990 = vrot.slane %v1923, 7
      %v1991 = vrot.slane %v1924, 7
      %v1992 = vsel %vm514, %v1990, %v1991
      %v1993 = vrot.slane %v1925, 7
      %v1994 = vrot.slane %v1926, 7
      %v1995 = vsel %vm514, %v1993, %v1994
      %v1996 = vrot.slane %v1927, 7
      %v1997 = vrot.slane %v1928, 7
      %v1998 = vsel %vm514, %v1996, %v1997
      %v1999 = vrot.slane %v1929, 7
      %v2000 = vrot.slane %v1930, 7
      %v2001 = vsel %vm514, %v1999, %v2000
      %v2002 = vrot.slane %v1931, 7
      %v2003 = vrot.slane %v1932, 7
      %v2004 = vsel %vm514, %v2002, %v2003
      %v2005 = vrot.slane %v1933, 7
      %v2006 = vrot.slane %v1934, 7
      %v2007 = vsel %vm514, %v2005, %v2006
      %v2008 = vrot.slane %v1935, 7
      %v2009 = vrot.slane %v1936, 7
      %v2010 = vsel %vm514, %v2008, %v2009
      %v2011 = vrot.slane %v1937, 7
      %v2012 = vrot.slane %v1938, 7
      %v2013 = vsel %vm514, %v2011, %v2012
      %v2014 = vrot.slane %v1939, 7
      %v2015 = vrot.slane %v1940, 7
      %v2016 = vsel %vm514, %v2014, %v2015
      %v2017 = vrot.slane %v1941, 7
      %v2018 = vrot.slane %v1942, 7
      %v2019 = vsel %vm514, %v2017, %v2018
      %v2020 = vrot.slane %v1943, 7
      %v2021 = vrot.slane %v1944, 7
      %v2022 = vsel %vm514, %v2020, %v2021
      %v2023 = vrot.slane %v1945, 7
      %v2024 = vrot.slane %v1946, 7
      %v2025 = vsel %vm514, %v2023, %v2024
      %v2026 = vrot.slane %v1947, 7
      %v2027 = vrot.slane %v1948, 7
      %v2028 = vsel %vm514, %v2026, %v2027
      %v2061 = vsel %vm514, 0.0, %v1981
      %v2062 = vsel %vm514, 0.0, %v1984
      %v2063 = vsel %vm514, 0.0, %v1987
      %v2064 = vsel %vm514, 0.0, %v1990
      %v2065 = vsel %vm514, 0.0, %v1993
      %v2066 = vsel %vm514, 0.0, %v1996
      %v2067 = vsel %vm514, 0.0, %v1999
      %v2068 = vsel %vm514, 0.0, %v2002
      %v2069 = vsel %vm514, 0.0, %v2005
      %v2070 = vsel %vm514, 0.0, %v2008
      %v2071 = vsel %vm514, 0.0, %v2011
      %v2072 = vsel %vm514, 0.0, %v2014
      %v2073 = vsel %vm514, 0.0, %v2017
      %v2074 = vsel %vm514, 0.0, %v2020
      %v2075 = vsel %vm514, 0.0, %v2023
      %v2076 = vsel %vm514, 0.0, %v2026
      %v2077 = vrot.slane %v1917, 1
      %v2078 = vrot.slane %v1918, 1
      %v2079 = vsel %vm611, %v2077, %v2078
      %v2080 = vrot.slane %v1919, 1
      %v2081 = vrot.slane %v1920, 1
      %v2082 = vsel %vm611, %v2080, %v2081
      %v2083 = vrot.slane %v1921, 1
      %v2084 = vrot.slane %v1922, 1
      %v2085 = vsel %vm611, %v2083, %v2084
      %v2086 = vrot.slane %v1923, 1
      %v2087 = vrot.slane %v1924, 1
      %v2088 = vsel %vm611, %v2086, %v2087
      %v2089 = vrot.slane %v1925, 1
      %v2090 = vrot.slane %v1926, 1
      %v2091 = vsel %vm611, %v2089, %v2090
      %v2092 = vrot.slane %v1927, 1
      %v2093 = vrot.slane %v1928, 1
      %v2094 = vsel %vm611, %v2092, %v2093
      %v2095 = vrot.slane %v1929, 1
      %v2096 = vrot.slane %v1930, 1
      %v2097 = vsel %vm611, %v2095, %v2096
      %v2098 = vrot.slane %v1931, 1
      %v2099 = vrot.slane %v1932, 1
      %v2100 = vsel %vm611, %v2098, %v2099
      %v2101 = vrot.slane %v1933, 1
      %v2102 = vrot.slane %v1934, 1
      %v2103 = vsel %vm611, %v2101, %v2102
      %v2104 = vrot.slane %v1935, 1
      %v2105 = vrot.slane %v1936, 1
      %v2106 = vsel %vm611, %v2104, %v2105
      %v2107 = vrot.slane %v1937, 1
      %v2108 = vrot.slane %v1938, 1
      %v2109 = vsel %vm611, %v2107, %v2108
      %v2110 = vrot.slane %v1939, 1
      %v2111 = vrot.slane %v1940, 1
      %v2112 = vsel %vm611, %v2110, %v2111
      %v2113 = vrot.slane %v1941, 1
      %v2114 = vrot.slane %v1942, 1
      %v2115 = vsel %vm611, %v2113, %v2114
      %v2116 = vrot.slane %v1943, 1
      %v2117 = vrot.slane %v1944, 1
      %v2118 = vsel %vm611, %v2116, %v2117
      %v2119 = vrot.slane %v1945, 1
      %v2120 = vrot.slane %v1946, 1
      %v2121 = vsel %vm611, %v2119, %v2120
      %v2122 = vrot.slane %v1947, 1
      %v2123 = vrot.slane %v1948, 1
      %v2124 = vsel %vm611, %v2122, %v2123
      %v2141 = vsel %vm611, %v2078, 0.0
      %v2142 = vsel %vm611, %v2081, 0.0
      %v2143 = vsel %vm611, %v2084, 0.0
      %v2144 = vsel %vm611, %v2087, 0.0
      %v2145 = vsel %vm611, %v2090, 0.0
      %v2146 = vsel %vm611, %v2093, 0.0
      %v2147 = vsel %vm611, %v2096, 0.0
      %v2148 = vsel %vm611, %v2099, 0.0
      %v2149 = vsel %vm611, %v2102, 0.0
      %v2150 = vsel %vm611, %v2105, 0.0
      %v2151 = vsel %vm611, %v2108, 0.0
      %v2152 = vsel %vm611, %v2111, 0.0
      %v2153 = vsel %vm611, %v2114, 0.0
      %v2154 = vsel %vm611, %v2117, 0.0
      %v2155 = vsel %vm611, %v2120, 0.0
      %v2156 = vsel %vm611, %v2123, 0.0
      %2157 = vrot.lane.b32.xlu0 %v1917, 8
      %v2158 = vpop.permute.xlu0 %2157
      %2159 = vrot.lane.b32.xlu0 %v1918, 8
      %v2160 = vpop.permute.xlu0 %2159
      %2161 = vrot.lane.b32.xlu0 %v1919, 8
      %v2162 = vpop.permute.xlu0 %2161
      %2163 = vrot.lane.b32.xlu0 %v1920, 8
      %v2164 = vpop.permute.xlu0 %2163
      %2165 = vrot.lane.b32.xlu0 %v1921, 8
      %v2166 = vpop.permute.xlu0 %2165
      %2167 = vrot.lane.b32.xlu0 %v1922, 8
      %v2168 = vpop.permute.xlu0 %2167
      %2169 = vrot.lane.b32.xlu0 %v1923, 8
      %v2170 = vpop.permute.xlu0 %2169
      %2171 = vrot.lane.b32.xlu0 %v1924, 8
      %v2172 = vpop.permute.xlu0 %2171
      %2173 = vrot.lane.b32.xlu0 %v1925, 8
      %v2174 = vpop.permute.xlu0 %2173
      %2175 = vrot.lane.b32.xlu0 %v1926, 8
      %v2176 = vpop.permute.xlu0 %2175
      %2177 = vrot.lane.b32.xlu0 %v1927, 8
      %v2178 = vpop.permute.xlu0 %2177
      %2179 = vrot.lane.b32.xlu0 %v1928, 8
      %v2180 = vpop.permute.xlu0 %2179
      %2181 = vrot.lane.b32.xlu0 %v1929, 8
      %v2182 = vpop.permute.xlu0 %2181
      %2183 = vrot.lane.b32.xlu0 %v1930, 8
      %v2184 = vpop.permute.xlu0 %2183
      %2185 = vrot.lane.b32.xlu0 %v1931, 8
      %v2186 = vpop.permute.xlu0 %2185
      %2187 = vrot.lane.b32.xlu0 %v1932, 8
      %v2188 = vpop.permute.xlu0 %2187
      %2189 = vrot.lane.b32.xlu0 %v1933, 8
      %v2190 = vpop.permute.xlu0 %2189
      %2191 = vrot.lane.b32.xlu0 %v1934, 8
      %v2192 = vpop.permute.xlu0 %2191
      %2193 = vrot.lane.b32.xlu0 %v1935, 8
      %v2194 = vpop.permute.xlu0 %2193
      %2195 = vrot.lane.b32.xlu0 %v1936, 8
      %v2196 = vpop.permute.xlu0 %2195
      %2197 = vrot.lane.b32.xlu0 %v1937, 8
      %v2198 = vpop.permute.xlu0 %2197
      %2199 = vrot.lane.b32.xlu0 %v1938, 8
      %v2200 = vpop.permute.xlu0 %2199
      %2201 = vrot.lane.b32.xlu0 %v1939, 8
      %v2202 = vpop.permute.xlu0 %2201
      %2203 = vrot.lane.b32.xlu0 %v1940, 8
      %v2204 = vpop.permute.xlu0 %2203
      %2205 = vrot.lane.b32.xlu0 %v1941, 8
      %v2206 = vpop.permute.xlu0 %2205
      %2207 = vrot.lane.b32.xlu0 %v1942, 8
      %v2208 = vpop.permute.xlu0 %2207
      %2209 = vrot.lane.b32.xlu0 %v1943, 8
      %v2210 = vpop.permute.xlu0 %2209
      %2211 = vrot.lane.b32.xlu0 %v1944, 8
      %v2212 = vpop.permute.xlu0 %2211
      %2213 = vrot.lane.b32.xlu0 %v1945, 8
      %v2214 = vpop.permute.xlu0 %2213
      %2215 = vrot.lane.b32.xlu0 %v1946, 8
      %v2216 = vpop.permute.xlu0 %2215
      %2217 = vrot.lane.b32.xlu0 %v1947, 8
      %v2218 = vpop.permute.xlu0 %2217
      %2219 = vrot.lane.b32.xlu0 %v1948, 8
      %v2220 = vpop.permute.xlu0 %2219
      %2269 = vrot.lane.b32.xlu0 %v2079, 16
      %v2270 = vpop.permute.xlu0 %2269
      %2271 = vrot.lane.b32.xlu0 %v2141, 16
      %v2272 = vpop.permute.xlu0 %2271
      %2273 = vrot.lane.b32.xlu0 %v2082, 16
      %v2274 = vpop.permute.xlu0 %2273
      %2275 = vrot.lane.b32.xlu0 %v2142, 16
      %v2276 = vpop.permute.xlu0 %2275
      %2277 = vrot.lane.b32.xlu0 %v2085, 16
      %v2278 = vpop.permute.xlu0 %2277
      %2279 = vrot.lane.b32.xlu0 %v2143, 16
      %v2280 = vpop.permute.xlu0 %2279
      %2281 = vrot.lane.b32.xlu0 %v2088, 16
      %v2282 = vpop.permute.xlu0 %2281
      %2283 = vrot.lane.b32.xlu0 %v2144, 16
      %v2284 = vpop.permute.xlu0 %2283
      %2285 = vrot.lane.b32.xlu0 %v2091, 16
      %v2286 = vpop.permute.xlu0 %2285
      %2287 = vrot.lane.b32.xlu0 %v2145, 16
      %v2288 = vpop.permute.xlu0 %2287
      %2289 = vrot.lane.b32.xlu0 %v2094, 16
      %v2290 = vpop.permute.xlu0 %2289
      %2291 = vrot.lane.b32.xlu0 %v2146, 16
      %v2292 = vpop.permute.xlu0 %2291
      %2293 = vrot.lane.b32.xlu0 %v2097, 16
      %v2294 = vpop.permute.xlu0 %2293
      %2295 = vrot.lane.b32.xlu0 %v2147, 16
      %v2296 = vpop.permute.xlu0 %2295
      %2297 = vrot.lane.b32.xlu0 %v2100, 16
      %v2298 = vpop.permute.xlu0 %2297
      %2299 = vrot.lane.b32.xlu0 %v2148, 16
      %v2300 = vpop.permute.xlu0 %2299
      %2301 = vrot.lane.b32.xlu0 %v2103, 16
      %v2302 = vpop.permute.xlu0 %2301
      %2303 = vrot.lane.b32.xlu0 %v2149, 16
      %v2304 = vpop.permute.xlu0 %2303
      %2305 = vrot.lane.b32.xlu0 %v2106, 16
      %v2306 = vpop.permute.xlu0 %2305
      %2307 = vrot.lane.b32.xlu0 %v2150, 16
      %v2308 = vpop.permute.xlu0 %2307
      %2309 = vrot.lane.b32.xlu0 %v2109, 16
      %v2310 = vpop.permute.xlu0 %2309
      %2311 = vrot.lane.b32.xlu0 %v2151, 16
      %v2312 = vpop.permute.xlu0 %2311
      %2313 = vrot.lane.b32.xlu0 %v2112, 16
      %v2314 = vpop.permute.xlu0 %2313
      %2315 = vrot.lane.b32.xlu0 %v2152, 16
      %v2316 = vpop.permute.xlu0 %2315
      %2317 = vrot.lane.b32.xlu0 %v2115, 16
      %v2318 = vpop.permute.xlu0 %2317
      %2319 = vrot.lane.b32.xlu0 %v2153, 16
      %v2320 = vpop.permute.xlu0 %2319
      %2321 = vrot.lane.b32.xlu0 %v2118, 16
      %v2322 = vpop.permute.xlu0 %2321
      %2323 = vrot.lane.b32.xlu0 %v2154, 16
      %v2324 = vpop.permute.xlu0 %2323
      %2325 = vrot.lane.b32.xlu0 %v2121, 16
      %v2326 = vpop.permute.xlu0 %2325
      %2327 = vrot.lane.b32.xlu0 %v2155, 16
      %v2328 = vpop.permute.xlu0 %2327
      %2329 = vrot.lane.b32.xlu0 %v2124, 16
      %v2330 = vpop.permute.xlu0 %2329
      %2331 = vrot.lane.b32.xlu0 %v2156, 16
      %v2332 = vpop.permute.xlu0 %2331
      %v2365 = vsel %vm933, %v2061, %v2158
      %v2366 = vsel %vm933, %v1983, %v2160
      %v2367 = vsel %vm933, %v2062, %v2162
      %v2368 = vsel %vm933, %v1986, %v2164
      %v2369 = vsel %vm933, %v2063, %v2166
      %v2370 = vsel %vm933, %v1989, %v2168
      %v2371 = vsel %vm933, %v2064, %v2170
      %v2372 = vsel %vm933, %v1992, %v2172
      %v2373 = vsel %vm933, %v2065, %v2174
      %v2374 = vsel %vm933, %v1995, %v2176
      %v2375 = vsel %vm933, %v2066, %v2178
      %v2376 = vsel %vm933, %v1998, %v2180
      %v2377 = vsel %vm933, %v2067, %v2182
      %v2378 = vsel %vm933, %v2001, %v2184
      %v2379 = vsel %vm933, %v2068, %v2186
      %v2380 = vsel %vm933, %v2004, %v2188
      %v2381 = vsel %vm933, %v2069, %v2190
      %v2382 = vsel %vm933, %v2007, %v2192
      %v2383 = vsel %vm933, %v2070, %v2194
      %v2384 = vsel %vm933, %v2010, %v2196
      %v2385 = vsel %vm933, %v2071, %v2198
      %v2386 = vsel %vm933, %v2013, %v2200
      %v2387 = vsel %vm933, %v2072, %v2202
      %v2388 = vsel %vm933, %v2016, %v2204
      %v2389 = vsel %vm933, %v2073, %v2206
      %v2390 = vsel %vm933, %v2019, %v2208
      %v2391 = vsel %vm933, %v2074, %v2210
      %v2392 = vsel %vm933, %v2022, %v2212
      %v2393 = vsel %vm933, %v2075, %v2214
      %v2394 = vsel %vm933, %v2025, %v2216
      %v2395 = vsel %vm933, %v2076, %v2218
      %v2396 = vsel %vm933, %v2028, %v2220
      %vm2397 = vcmask 130048
      %v2398 = vsel %vm2397, %v2365, %v2270
      %v2399 = vsel %vm2397, %v2366, %v2272
      %v2400 = vsel %vm2397, %v2367, %v2274
      %v2401 = vsel %vm2397, %v2368, %v2276
      %v2402 = vsel %vm2397, %v2369, %v2278
      %v2403 = vsel %vm2397, %v2370, %v2280
      %v2404 = vsel %vm2397, %v2371, %v2282
      %v2405 = vsel %vm2397, %v2372, %v2284
      %v2406 = vsel %vm2397, %v2373, %v2286
      %v2407 = vsel %vm2397, %v2374, %v2288
      %v2408 = vsel %vm2397, %v2375, %v2290
      %v2409 = vsel %vm2397, %v2376, %v2292
      %v2410 = vsel %vm2397, %v2377, %v2294
      %v2411 = vsel %vm2397, %v2378, %v2296
      %v2412 = vsel %vm2397, %v2379, %v2298
      %v2413 = vsel %vm2397, %v2380, %v2300
      %v2414 = vsel %vm2397, %v2381, %v2302
      %v2415 = vsel %vm2397, %v2382, %v2304
      %v2416 = vsel %vm2397, %v2383, %v2306
      %v2417 = vsel %vm2397, %v2384, %v2308
      %v2418 = vsel %vm2397, %v2385, %v2310
      %v2419 = vsel %vm2397, %v2386, %v2312
      %v2420 = vsel %vm2397, %v2387, %v2314
      %v2421 = vsel %vm2397, %v2388, %v2316
      %v2422 = vsel %vm2397, %v2389, %v2318
      %v2423 = vsel %vm2397, %v2390, %v2320
      %v2424 = vsel %vm2397, %v2391, %v2322
      %v2425 = vsel %vm2397, %v2392, %v2324
      %v2426 = vsel %vm2397, %v2393, %v2326
      %v2427 = vsel %vm2397, %v2394, %v2328
      %v2428 = vsel %vm2397, %v2395, %v2330
      %v2429 = vsel %vm2397, %v2396, %v2332
      %v2430 = vpack.c.bf16 %v2398, %v2398
      %v2431 = vpack.c.bf16 %v2399, %v2399
      %v2432 = vpack.c.bf16 %v2400, %v2400
      %v2433 = vpack.c.bf16 %v2401, %v2401
      %v2434 = vpack.c.bf16 %v2402, %v2402
      %v2435 = vpack.c.bf16 %v2403, %v2403
      %v2436 = vpack.c.bf16 %v2404, %v2404
      %v2437 = vpack.c.bf16 %v2405, %v2405
      %v2438 = vpack.c.bf16 %v2406, %v2406
      %v2439 = vpack.c.bf16 %v2407, %v2407
      %v2440 = vpack.c.bf16 %v2408, %v2408
      %v2441 = vpack.c.bf16 %v2409, %v2409
      %v2442 = vpack.c.bf16 %v2410, %v2410
      %v2443 = vpack.c.bf16 %v2411, %v2411
      %v2444 = vpack.c.bf16 %v2412, %v2412
      %v2445 = vpack.c.bf16 %v2413, %v2413
      %v2446 = vpack.c.bf16 %v2414, %v2414
      %v2447 = vpack.c.bf16 %v2415, %v2415
      %v2448 = vpack.c.bf16 %v2416, %v2416
      %v2449 = vpack.c.bf16 %v2417, %v2417
      %v2450 = vpack.c.bf16 %v2418, %v2418
      %v2451 = vpack.c.bf16 %v2419, %v2419
      %v2452 = vpack.c.bf16 %v2420, %v2420
      %v2453 = vpack.c.bf16 %v2421, %v2421
      %v2454 = vpack.c.bf16 %v2422, %v2422
      %v2455 = vpack.c.bf16 %v2423, %v2423
      %v2456 = vpack.c.bf16 %v2424, %v2424
      %v2457 = vpack.c.bf16 %v2425, %v2425
      %v2458 = vpack.c.bf16 %v2426, %v2426
      %v2459 = vpack.c.bf16 %v2427, %v2427
      %v2460 = vpack.c.bf16 %v2428, %v2428
      %v2461 = vpack.c.bf16 %v2429, %v2429
      %s2462 = scalar_lea.vmem [#allocation3], 8
      %2463 = vst.msk [vmem:[%s2462] sm:$0xf] %vm340, %v2430
      %2464 = vst.msk [vmem:[%s2462 + $0x4] sm:$0xf] %vm340, %v2431
      %2465 = vst.msk [vmem:[%s2462 + $0x8] sm:$0xf] %vm340, %v2432
      %2466 = vst.msk [vmem:[%s2462 + $0xc] sm:$0xf] %vm340, %v2433
      %2467 = vst.msk [vmem:[%s2462 + $0x10] sm:$0xf] %vm340, %v2434
      %2468 = vst.msk [vmem:[%s2462 + $0x14] sm:$0xf] %vm340, %v2435
      %2469 = vst.msk [vmem:[%s2462 + $0x18] sm:$0xf] %vm340, %v2436
      %2470 = vst.msk [vmem:[%s2462 + $0x1c] sm:$0xf] %vm340, %v2437
      %2471 = vst.msk [vmem:[%s2462 + $0x20] sm:$0xf] %vm340, %v2438
      %2472 = vst.msk [vmem:[%s2462 + $0x24] sm:$0xf] %vm340, %v2439
      %2473 = vst.msk [vmem:[%s2462 + $0x28] sm:$0xf] %vm340, %v2440
      %2474 = vst.msk [vmem:[%s2462 + $0x2c] sm:$0xf] %vm340, %v2441
      %2475 = vst.msk [vmem:[%s2462 + $0x30] sm:$0xf] %vm340, %v2442
      %2476 = vst.msk [vmem:[%s2462 + $0x34] sm:$0xf] %vm340, %v2443
      %2477 = vst.msk [vmem:[%s2462 + $0x38] sm:$0xf] %vm340, %v2444
      %2478 = vst.msk [vmem:[%s2462 + $0x3c] sm:$0xf] %vm340, %v2445
      %2479 = vst.msk [vmem:[%s2462 + $0x40] sm:$0xf] %vm340, %v2446
      %2480 = vst.msk [vmem:[%s2462 + $0x44] sm:$0xf] %vm340, %v2447
      %2481 = vst.msk [vmem:[%s2462 + $0x48] sm:$0xf] %vm340, %v2448
      %2482 = vst.msk [vmem:[%s2462 + $0x4c] sm:$0xf] %vm340, %v2449
      %2483 = vst.msk [vmem:[%s2462 + $0x50] sm:$0xf] %vm340, %v2450
      %2484 = vst.msk [vmem:[%s2462 + $0x54] sm:$0xf] %vm340, %v2451
      %2485 = vst.msk [vmem:[%s2462 + $0x58] sm:$0xf] %vm340, %v2452
      %2486 = vst.msk [vmem:[%s2462 + $0x5c] sm:$0xf] %vm340, %v2453
      %2487 = vst.msk [vmem:[%s2462 + $0x60] sm:$0xf] %vm340, %v2454
      %2488 = vst.msk [vmem:[%s2462 + $0x64] sm:$0xf] %vm340, %v2455
      %2489 = vst.msk [vmem:[%s2462 + $0x68] sm:$0xf] %vm340, %v2456
      %2490 = vst.msk [vmem:[%s2462 + $0x6c] sm:$0xf] %vm340, %v2457
      %2491 = vst.msk [vmem:[%s2462 + $0x70] sm:$0xf] %vm340, %v2458
      %2492 = vst.msk [vmem:[%s2462 + $0x74] sm:$0xf] %vm340, %v2459
      %2493 = vst.msk [vmem:[%s2462 + $0x78] sm:$0xf] %vm340, %v2460
      %2494 = vst.msk [vmem:[%s2462 + $0x7c] sm:$0xf] %vm340, %v2461
      %v2495 = vld [vmem:[#allocation3] sm:$0xf]
      %v2496 = vld [vmem:[#allocation3 + $0x4] sm:$0xf]
      %v2497 = vld [vmem:[#allocation3 + $0x8] sm:$0xf]
      %v2498 = vld [vmem:[#allocation3 + $0xc] sm:$0xf]
      %v2499 = vld [vmem:[#allocation3 + $0x10] sm:$0xf]
      %v2500 = vld [vmem:[#allocation3 + $0x14] sm:$0xf]
      %v2501 = vld [vmem:[#allocation3 + $0x18] sm:$0xf]
      %v2502 = vld [vmem:[#allocation3 + $0x1c] sm:$0xf]
      %v2503 = vld [vmem:[#allocation3 + $0x20] sm:$0xf]
      %v2504 = vld [vmem:[#allocation3 + $0x24] sm:$0xf]
      %v2505 = vld [vmem:[#allocation3 + $0x28] sm:$0xf]
      %v2506 = vld [vmem:[#allocation3 + $0x2c] sm:$0xf]
      %v2507 = vld [vmem:[#allocation3 + $0x30] sm:$0xf]
      %v2508 = vld [vmem:[#allocation3 + $0x34] sm:$0xf]
      %v2509 = vld [vmem:[#allocation3 + $0x38] sm:$0xf]
      %v2510 = vld [vmem:[#allocation3 + $0x3c] sm:$0xf]
      %v2511 = vld [vmem:[#allocation3 + $0x40] sm:$0xf]
      %v2512 = vld [vmem:[#allocation3 + $0x44] sm:$0xf]
      %v2513 = vld [vmem:[#allocation3 + $0x48] sm:$0xf]
      %v2514 = vld [vmem:[#allocation3 + $0x4c] sm:$0xf]
      %v2515 = vld [vmem:[#allocation3 + $0x50] sm:$0xf]
      %v2516 = vld [vmem:[#allocation3 + $0x54] sm:$0xf]
      %v2517 = vld [vmem:[#allocation3 + $0x58] sm:$0xf]
      %v2518 = vld [vmem:[#allocation3 + $0x5c] sm:$0xf]
      %v2519 = vld [vmem:[#allocation3 + $0x60] sm:$0xf]
      %v2520 = vld [vmem:[#allocation3 + $0x64] sm:$0xf]
      %v2521 = vld [vmem:[#allocation3 + $0x68] sm:$0xf]
      %v2522 = vld [vmem:[#allocation3 + $0x6c] sm:$0xf]
      %v2523 = vld [vmem:[#allocation3 + $0x70] sm:$0xf]
      %v2524 = vld [vmem:[#allocation3 + $0x74] sm:$0xf]
      %v2525 = vld [vmem:[#allocation3 + $0x78] sm:$0xf]
      %v2526 = vld [vmem:[#allocation3 + $0x7c] sm:$0xf]
      %v2527 = vld [vmem:[%s6] sm:$0xf]
      %v2528 = vld [vmem:[%s6 + $0x4] sm:$0xf]
      %v2529 = vld [vmem:[%s6 + $0x8] sm:$0xf]
      %v2530 = vld [vmem:[%s2462] sm:$0xf]
      %v2531 = vld [vmem:[%s2462 + $0x4] sm:$0xf]
      %v2532 = vld [vmem:[%s2462 + $0x8] sm:$0xf]
      %v2533 = vld [vmem:[%s2462 + $0xc] sm:$0xf]
      %v2534 = vld [vmem:[%s2462 + $0x10] sm:$0xf]
      %v2535 = vld [vmem:[%s2462 + $0x14] sm:$0xf]
      %v2536 = vld [vmem:[%s2462 + $0x18] sm:$0xf]
      %v2537 = vld [vmem:[%s2462 + $0x1c] sm:$0xf]
      %v2538 = vld [vmem:[%s2462 + $0x20] sm:$0xf]
      %v2539 = vld [vmem:[%s2462 + $0x24] sm:$0xf]
      %v2540 = vld [vmem:[%s2462 + $0x28] sm:$0xf]
      %v2541 = vld [vmem:[%s2462 + $0x2c] sm:$0xf]
      %v2542 = vld [vmem:[%s2462 + $0x30] sm:$0xf]
      %v2543 = vld [vmem:[%s2462 + $0x34] sm:$0xf]
      %v2544 = vld [vmem:[%s2462 + $0x38] sm:$0xf]
      %v2545 = vld [vmem:[%s2462 + $0x3c] sm:$0xf]
      %v2546 = vld [vmem:[%s2462 + $0x40] sm:$0xf]
      %v2547 = vld [vmem:[%s2462 + $0x44] sm:$0xf]
      %v2548 = vld [vmem:[%s2462 + $0x48] sm:$0xf]
      %v2549 = vld [vmem:[%s2462 + $0x4c] sm:$0xf]
      %v2550 = vld [vmem:[%s2462 + $0x50] sm:$0xf]
      %v2551 = vld [vmem:[%s2462 + $0x54] sm:$0xf]
      %v2552 = vld [vmem:[%s2462 + $0x58] sm:$0xf]
      %v2553 = vld [vmem:[%s2462 + $0x5c] sm:$0xf]
      %v2554 = vld [vmem:[%s2462 + $0x60] sm:$0xf]
      %v2555 = vld [vmem:[%s2462 + $0x64] sm:$0xf]
      %v2556 = vld [vmem:[%s2462 + $0x68] sm:$0xf]
      %v2557 = vld [vmem:[%s2462 + $0x6c] sm:$0xf]
      %v2558 = vld [vmem:[%s2462 + $0x70] sm:$0xf]
      %v2559 = vld [vmem:[%s2462 + $0x74] sm:$0xf]
      %v2560 = vld [vmem:[%s2462 + $0x78] sm:$0xf]
      %v2561 = vld [vmem:[%s2462 + $0x7c] sm:$0xf]
      %s2562 = scalar_lea.vmem %s6, 12
      %v2563 = vld [vmem:[%s2562] sm:$0xf]
      %v2564 = vld [vmem:[%s2562 + $0x4] sm:$0xf]
      %v2565 = vld [vmem:[%s2562 + $0x8] sm:$0xf]
      %v2598 = vunpack.c.l.b16 %v2530
      %v2599 = vunpack.c.l.b16 %v2531
      %v2600 = vunpack.c.l.b16 %v2532
      %v2601 = vunpack.c.l.b16 %v2533
      %v2602 = vunpack.c.l.b16 %v2534
      %v2603 = vunpack.c.l.b16 %v2535
      %v2604 = vunpack.c.l.b16 %v2536
      %v2605 = vunpack.c.l.b16 %v2537
      %v2606 = vunpack.c.l.b16 %v2538
      %v2607 = vunpack.c.l.b16 %v2539
      %v2608 = vunpack.c.l.b16 %v2540
      %v2609 = vunpack.c.l.b16 %v2541
      %v2610 = vunpack.c.l.b16 %v2542
      %v2611 = vunpack.c.l.b16 %v2543
      %v2612 = vunpack.c.l.b16 %v2544
      %v2613 = vunpack.c.l.b16 %v2545
      %v2614 = vunpack.c.l.b16 %v2546
      %v2615 = vunpack.c.l.b16 %v2547
      %v2616 = vunpack.c.l.b16 %v2548
      %v2617 = vunpack.c.l.b16 %v2549
      %v2618 = vunpack.c.l.b16 %v2550
      %v2619 = vunpack.c.l.b16 %v2551
      %v2620 = vunpack.c.l.b16 %v2552
      %v2621 = vunpack.c.l.b16 %v2553
      %v2622 = vunpack.c.l.b16 %v2554
      %v2623 = vunpack.c.l.b16 %v2555
      %v2624 = vunpack.c.l.b16 %v2556
      %v2625 = vunpack.c.l.b16 %v2557
      %v2626 = vunpack.c.l.b16 %v2558
      %v2627 = vunpack.c.l.b16 %v2559
      %v2628 = vunpack.c.l.b16 %v2560
      %v2629 = vunpack.c.l.b16 %v2561
      %v2630 = vpack.c.b16 %v2599, %v2598
      %v2631 = vpack.c.b16 %v2601, %v2600
      %v2632 = vpack.c.b16 %v2603, %v2602
      %v2633 = vpack.c.b16 %v2605, %v2604
      %v2634 = vpack.c.b16 %v2607, %v2606
      %v2635 = vpack.c.b16 %v2609, %v2608
      %v2636 = vpack.c.b16 %v2611, %v2610
      %v2637 = vpack.c.b16 %v2613, %v2612
      %v2638 = vpack.c.b16 %v2615, %v2614
      %v2639 = vpack.c.b16 %v2617, %v2616
      %v2640 = vpack.c.b16 %v2619, %v2618
      %v2641 = vpack.c.b16 %v2621, %v2620
      %v2642 = vpack.c.b16 %v2623, %v2622
      %v2643 = vpack.c.b16 %v2625, %v2624
      %v2644 = vpack.c.b16 %v2627, %v2626
      %v2645 = vpack.c.b16 %v2629, %v2628
      %v2649 = vunpack.c.l.b16 %v2563
      %v2650 = vunpack.c.l.b16 %v2564
      %v2651 = vunpack.c.l.b16 %v2565
      %v2652 = vpack.c.b16 %v2650, %v2649
      %v2653 = vpack.c.b16 %v2651, %v2651
      %vm2655 = vcmask 195584
      %v2657 = vsel %vm2655, %v2630, 0
      %v2660 = vsel %vm2655, %v2631, 0
      %v2663 = vsel %vm2655, %v2632, 0
      %v2666 = vsel %vm2655, %v2633, 0
      %v2669 = vsel %vm2655, %v2634, 0
      %v2672 = vsel %vm2655, %v2635, 0
      %v2675 = vsel %vm2655, %v2636, 0
      %v2678 = vsel %vm2655, %v2637, 0
      %v2681 = vsel %vm2655, %v2638, 0
      %v2684 = vsel %vm2655, %v2639, 0
      %v2687 = vsel %vm2655, %v2640, 0
      %v2690 = vsel %vm2655, %v2641, 0
      %v2693 = vsel %vm2655, %v2642, 0
      %v2696 = vsel %vm2655, %v2643, 0
      %v2699 = vsel %vm2655, %v2644, 0
      %v2702 = vsel %vm2655, %v2645, 0
      %vm2704 = vcmask 1043456
      %v2706 = vsel %vm2704, %v2653, 0
      %2708 = vmatpush.bf16.msra.mxu0 0
      %2709 = vmatpush.bf16.msra.mxu0 0
      %2710 = vmatpush.bf16.msra.mxu0 0
      %2711 = vmatpush.bf16.msra.mxu0 0
      %2712 = vmatpush.bf16.msra.mxu0 0
      %2713 = vmatpush.bf16.msra.mxu0 0
      %2714 = vmatpush.bf16.msra.mxu0 %v2706
      %2715 = vmatpush.bf16.msra.mxu0 %v2652
      %2716 = vmatmul.bf16.gmra.mxu0 %v2657
      %v2717 = vpop.f32.mrf.mxu0
      %v2718 = vadd.f32 0.0, %v2717
      %v2719 = vpop.f32.mrf.mxu0
      %v2720 = vadd.f32 0.0, %v2719
      %2721 = vmatmul.bf16.gmra.mxu0 %v2660
      %v2722 = vpop.f32.mrf.mxu0
      %v2723 = vadd.f32 0.0, %v2722
      %v2724 = vpop.f32.mrf.mxu0
      %v2725 = vadd.f32 0.0, %v2724
      %2726 = vmatmul.bf16.gmra.mxu0 %v2663
      %v2727 = vpop.f32.mrf.mxu0
      %v2728 = vadd.f32 0.0, %v2727
      %v2729 = vpop.f32.mrf.mxu0
      %v2730 = vadd.f32 0.0, %v2729
      %2731 = vmatmul.bf16.gmra.mxu0 %v2666
      %v2732 = vpop.f32.mrf.mxu0
      %v2733 = vadd.f32 0.0, %v2732
      %v2734 = vpop.f32.mrf.mxu0
      %v2735 = vadd.f32 0.0, %v2734
      %2736 = vmatmul.bf16.gmra.mxu0 %v2669
      %v2737 = vpop.f32.mrf.mxu0
      %v2738 = vadd.f32 0.0, %v2737
      %v2739 = vpop.f32.mrf.mxu0
      %v2740 = vadd.f32 0.0, %v2739
      %2741 = vmatmul.bf16.gmra.mxu0 %v2672
      %v2742 = vpop.f32.mrf.mxu0
      %v2743 = vadd.f32 0.0, %v2742
      %v2744 = vpop.f32.mrf.mxu0
      %v2745 = vadd.f32 0.0, %v2744
      %2746 = vmatmul.bf16.gmra.mxu0 %v2675
      %v2747 = vpop.f32.mrf.mxu0
      %v2748 = vadd.f32 0.0, %v2747
      %v2749 = vpop.f32.mrf.mxu0
      %v2750 = vadd.f32 0.0, %v2749
      %2751 = vmatmul.bf16.gmra.mxu0 %v2678
      %v2752 = vpop.f32.mrf.mxu0
      %v2753 = vadd.f32 0.0, %v2752
      %v2754 = vpop.f32.mrf.mxu0
      %v2755 = vadd.f32 0.0, %v2754
      %2756 = vmatmul.bf16.gmra.mxu0 %v2681
      %v2757 = vpop.f32.mrf.mxu0
      %v2758 = vadd.f32 0.0, %v2757
      %v2759 = vpop.f32.mrf.mxu0
      %v2760 = vadd.f32 0.0, %v2759
      %2761 = vmatmul.bf16.gmra.mxu0 %v2684
      %v2762 = vpop.f32.mrf.mxu0
      %v2763 = vadd.f32 0.0, %v2762
      %v2764 = vpop.f32.mrf.mxu0
      %v2765 = vadd.f32 0.0, %v2764
      %2766 = vmatmul.bf16.gmra.mxu0 %v2687
      %v2767 = vpop.f32.mrf.mxu0
      %v2768 = vadd.f32 0.0, %v2767
      %v2769 = vpop.f32.mrf.mxu0
      %v2770 = vadd.f32 0.0, %v2769
      %2771 = vmatmul.bf16.gmra.mxu0 %v2690
      %v2772 = vpop.f32.mrf.mxu0
      %v2773 = vadd.f32 0.0, %v2772
      %v2774 = vpop.f32.mrf.mxu0
      %v2775 = vadd.f32 0.0, %v2774
      %2776 = vmatmul.bf16.gmra.mxu0 %v2693
      %v2777 = vpop.f32.mrf.mxu0
      %v2778 = vadd.f32 0.0, %v2777
      %v2779 = vpop.f32.mrf.mxu0
      %v2780 = vadd.f32 0.0, %v2779
      %2781 = vmatmul.bf16.gmra.mxu0 %v2696
      %v2782 = vpop.f32.mrf.mxu0
      %v2783 = vadd.f32 0.0, %v2782
      %v2784 = vpop.f32.mrf.mxu0
      %v2785 = vadd.f32 0.0, %v2784
      %2786 = vmatmul.bf16.gmra.mxu0 %v2699
      %v2787 = vpop.f32.mrf.mxu0
      %v2788 = vadd.f32 0.0, %v2787
      %v2789 = vpop.f32.mrf.mxu0
      %v2790 = vadd.f32 0.0, %v2789
      %2791 = vmatmul.bf16.gmra.mxu0 %v2702
      %v2792 = vpop.f32.mrf.mxu0
      %v2793 = vadd.f32 0.0, %v2792
      %v2794 = vpop.f32.mrf.mxu0
      %v2795 = vadd.f32 0.0, %v2794
      %2796 = vdwg.mxu0
      %v2829 = vunpack.c.l.b16 %v2495
      %v2830 = vunpack.c.l.b16 %v2496
      %v2831 = vunpack.c.l.b16 %v2497
      %v2832 = vunpack.c.l.b16 %v2498
      %v2833 = vunpack.c.l.b16 %v2499
      %v2834 = vunpack.c.l.b16 %v2500
      %v2835 = vunpack.c.l.b16 %v2501
      %v2836 = vunpack.c.l.b16 %v2502
      %v2837 = vunpack.c.l.b16 %v2503
      %v2838 = vunpack.c.l.b16 %v2504
      %v2839 = vunpack.c.l.b16 %v2505
      %v2840 = vunpack.c.l.b16 %v2506
      %v2841 = vunpack.c.l.b16 %v2507
      %v2842 = vunpack.c.l.b16 %v2508
      %v2843 = vunpack.c.l.b16 %v2509
      %v2844 = vunpack.c.l.b16 %v2510
      %v2845 = vunpack.c.l.b16 %v2511
      %v2846 = vunpack.c.l.b16 %v2512
      %v2847 = vunpack.c.l.b16 %v2513
      %v2848 = vunpack.c.l.b16 %v2514
      %v2849 = vunpack.c.l.b16 %v2515
      %v2850 = vunpack.c.l.b16 %v2516
      %v2851 = vunpack.c.l.b16 %v2517
      %v2852 = vunpack.c.l.b16 %v2518
      %v2853 = vunpack.c.l.b16 %v2519
      %v2854 = vunpack.c.l.b16 %v2520
      %v2855 = vunpack.c.l.b16 %v2521
      %v2856 = vunpack.c.l.b16 %v2522
      %v2857 = vunpack.c.l.b16 %v2523
      %v2858 = vunpack.c.l.b16 %v2524
      %v2859 = vunpack.c.l.b16 %v2525
      %v2860 = vunpack.c.l.b16 %v2526
      %v2861 = vpack.c.b16 %v2830, %v2829
      %v2862 = vpack.c.b16 %v2832, %v2831
      %v2863 = vpack.c.b16 %v2834, %v2833
      %v2864 = vpack.c.b16 %v2836, %v2835
      %v2865 = vpack.c.b16 %v2838, %v2837
      %v2866 = vpack.c.b16 %v2840, %v2839
      %v2867 = vpack.c.b16 %v2842, %v2841
      %v2868 = vpack.c.b16 %v2844, %v2843
      %v2869 = vpack.c.b16 %v2846, %v2845
      %v2870 = vpack.c.b16 %v2848, %v2847
      %v2871 = vpack.c.b16 %v2850, %v2849
      %v2872 = vpack.c.b16 %v2852, %v2851
      %v2873 = vpack.c.b16 %v2854, %v2853
      %v2874 = vpack.c.b16 %v2856, %v2855
      %v2875 = vpack.c.b16 %v2858, %v2857
      %v2876 = vpack.c.b16 %v2860, %v2859
      %v2880 = vunpack.c.l.b16 %v2527
      %v2881 = vunpack.c.l.b16 %v2528
      %v2882 = vunpack.c.l.b16 %v2529
      %v2883 = vpack.c.b16 %v2881, %v2880
      %v2884 = vpack.c.b16 %v2882, %v2882
      %v2887 = vsel %vm2655, %v2861, 0
      %v2890 = vsel %vm2655, %v2862, 0
      %v2893 = vsel %vm2655, %v2863, 0
      %v2896 = vsel %vm2655, %v2864, 0
      %v2899 = vsel %vm2655, %v2865, 0
      %v2902 = vsel %vm2655, %v2866, 0
      %v2905 = vsel %vm2655, %v2867, 0
      %v2908 = vsel %vm2655, %v2868, 0
      %v2911 = vsel %vm2655, %v2869, 0
      %v2914 = vsel %vm2655, %v2870, 0
      %v2917 = vsel %vm2655, %v2871, 0
      %v2920 = vsel %vm2655, %v2872, 0
      %v2923 = vsel %vm2655, %v2873, 0
      %v2926 = vsel %vm2655, %v2874, 0
      %v2929 = vsel %vm2655, %v2875, 0
      %v2932 = vsel %vm2655, %v2876, 0
      %v2935 = vsel %vm2704, %v2884, 0
      %2937 = vmatpush.bf16.msra.mxu0 0
      %2938 = vmatpush.bf16.msra.mxu0 0
      %2939 = vmatpush.bf16.msra.mxu0 0
      %2940 = vmatpush.bf16.msra.mxu0 0
      %2941 = vmatpush.bf16.msra.mxu0 0
      %2942 = vmatpush.bf16.msra.mxu0 0
      %2943 = vmatpush.bf16.msra.mxu0 %v2935
      %2944 = vmatpush.bf16.msra.mxu0 %v2883
      %2945 = vmatmul.bf16.gmra.mxu0 %v2887
      %v2946 = vpop.f32.mrf.mxu0
      %v2947 = vadd.f32 %v2718, %v2946
      %v2948 = vpop.f32.mrf.mxu0
      %v2949 = vadd.f32 %v2720, %v2948
      %2950 = vmatmul.bf16.gmra.mxu0 %v2890
      %v2951 = vpop.f32.mrf.mxu0
      %v2952 = vadd.f32 %v2723, %v2951
      %v2953 = vpop.f32.mrf.mxu0
      %v2954 = vadd.f32 %v2725, %v2953
      %2955 = vmatmul.bf16.gmra.mxu0 %v2893
      %v2956 = vpop.f32.mrf.mxu0
      %v2957 = vadd.f32 %v2728, %v2956
      %v2958 = vpop.f32.mrf.mxu0
      %v2959 = vadd.f32 %v2730, %v2958
      %2960 = vmatmul.bf16.gmra.mxu0 %v2896
      %v2961 = vpop.f32.mrf.mxu0
      %v2962 = vadd.f32 %v2733, %v2961
      %v2963 = vpop.f32.mrf.mxu0
      %v2964 = vadd.f32 %v2735, %v2963
      %2965 = vmatmul.bf16.gmra.mxu0 %v2899
      %v2966 = vpop.f32.mrf.mxu0
      %v2967 = vadd.f32 %v2738, %v2966
      %v2968 = vpop.f32.mrf.mxu0
      %v2969 = vadd.f32 %v2740, %v2968
      %2970 = vmatmul.bf16.gmra.mxu0 %v2902
      %v2971 = vpop.f32.mrf.mxu0
      %v2972 = vadd.f32 %v2743, %v2971
      %v2973 = vpop.f32.mrf.mxu0
      %v2974 = vadd.f32 %v2745, %v2973
      %2975 = vmatmul.bf16.gmra.mxu0 %v2905
      %v2976 = vpop.f32.mrf.mxu0
      %v2977 = vadd.f32 %v2748, %v2976
      %v2978 = vpop.f32.mrf.mxu0
      %v2979 = vadd.f32 %v2750, %v2978
      %2980 = vmatmul.bf16.gmra.mxu0 %v2908
      %v2981 = vpop.f32.mrf.mxu0
      %v2982 = vadd.f32 %v2753, %v2981
      %v2983 = vpop.f32.mrf.mxu0
      %v2984 = vadd.f32 %v2755, %v2983
      %2985 = vmatmul.bf16.gmra.mxu0 %v2911
      %v2986 = vpop.f32.mrf.mxu0
      %v2987 = vadd.f32 %v2758, %v2986
      %v2988 = vpop.f32.mrf.mxu0
      %v2989 = vadd.f32 %v2760, %v2988
      %2990 = vmatmul.bf16.gmra.mxu0 %v2914
      %v2991 = vpop.f32.mrf.mxu0
      %v2992 = vadd.f32 %v2763, %v2991
      %v2993 = vpop.f32.mrf.mxu0
      %v2994 = vadd.f32 %v2765, %v2993
      %2995 = vmatmul.bf16.gmra.mxu0 %v2917
      %v2996 = vpop.f32.mrf.mxu0
      %v2997 = vadd.f32 %v2768, %v2996
      %v2998 = vpop.f32.mrf.mxu0
      %v2999 = vadd.f32 %v2770, %v2998
      %3000 = vmatmul.bf16.gmra.mxu0 %v2920
      %v3001 = vpop.f32.mrf.mxu0
      %v3002 = vadd.f32 %v2773, %v3001
      %v3003 = vpop.f32.mrf.mxu0
      %v3004 = vadd.f32 %v2775, %v3003
      %3005 = vmatmul.bf16.gmra.mxu0 %v2923
      %v3006 = vpop.f32.mrf.mxu0
      %v3007 = vadd.f32 %v2778, %v3006
      %v3008 = vpop.f32.mrf.mxu0
      %v3009 = vadd.f32 %v2780, %v3008
      %3010 = vmatmul.bf16.gmra.mxu0 %v2926
      %v3011 = vpop.f32.mrf.mxu0
      %v3012 = vadd.f32 %v2783, %v3011
      %v3013 = vpop.f32.mrf.mxu0
      %v3014 = vadd.f32 %v2785, %v3013
      %3015 = vmatmul.bf16.gmra.mxu0 %v2929
      %v3016 = vpop.f32.mrf.mxu0
      %v3017 = vadd.f32 %v2788, %v3016
      %v3018 = vpop.f32.mrf.mxu0
      %v3019 = vadd.f32 %v2790, %v3018
      %3020 = vmatmul.bf16.gmra.mxu0 %v2932
      %v3021 = vpop.f32.mrf.mxu0
      %v3022 = vadd.f32 %v2793, %v3021
      %v3023 = vpop.f32.mrf.mxu0
      %v3024 = vadd.f32 %v2795, %v3023
      %3025 = vdwg.mxu0
      %s3026 = scalar_lea.vmem [#allocation3], 16
      %v3027 = vld [vmem:[%s3026] sm:$0xf]
      %v3028 = vld [vmem:[%s3026 + $0x4] sm:$0xf]
      %v3029 = vld [vmem:[%s3026 + $0x8] sm:$0xf]
      %v3030 = vld [vmem:[%s3026 + $0xc] sm:$0xf]
      %v3031 = vld [vmem:[%s3026 + $0x10] sm:$0xf]
      %v3032 = vld [vmem:[%s3026 + $0x14] sm:$0xf]
      %v3033 = vld [vmem:[%s3026 + $0x18] sm:$0xf]
      %v3034 = vld [vmem:[%s3026 + $0x1c] sm:$0xf]
      %v3035 = vld [vmem:[%s3026 + $0x20] sm:$0xf]
      %v3036 = vld [vmem:[%s3026 + $0x24] sm:$0xf]
      %v3037 = vld [vmem:[%s3026 + $0x28] sm:$0xf]
      %v3038 = vld [vmem:[%s3026 + $0x2c] sm:$0xf]
      %v3039 = vld [vmem:[%s3026 + $0x30] sm:$0xf]
      %v3040 = vld [vmem:[%s3026 + $0x34] sm:$0xf]
      %v3041 = vld [vmem:[%s3026 + $0x38] sm:$0xf]
      %v3042 = vld [vmem:[%s3026 + $0x3c] sm:$0xf]
      %v3043 = vld [vmem:[%s3026 + $0x40] sm:$0xf]
      %v3044 = vld [vmem:[%s3026 + $0x44] sm:$0xf]
      %v3045 = vld [vmem:[%s3026 + $0x48] sm:$0xf]
      %v3046 = vld [vmem:[%s3026 + $0x4c] sm:$0xf]
      %v3047 = vld [vmem:[%s3026 + $0x50] sm:$0xf]
      %v3048 = vld [vmem:[%s3026 + $0x54] sm:$0xf]
      %v3049 = vld [vmem:[%s3026 + $0x58] sm:$0xf]
      %v3050 = vld [vmem:[%s3026 + $0x5c] sm:$0xf]
      %v3051 = vld [vmem:[%s3026 + $0x60] sm:$0xf]
      %v3052 = vld [vmem:[%s3026 + $0x64] sm:$0xf]
      %v3053 = vld [vmem:[%s3026 + $0x68] sm:$0xf]
      %v3054 = vld [vmem:[%s3026 + $0x6c] sm:$0xf]
      %v3055 = vld [vmem:[%s3026 + $0x70] sm:$0xf]
      %v3056 = vld [vmem:[%s3026 + $0x74] sm:$0xf]
      %v3057 = vld [vmem:[%s3026 + $0x78] sm:$0xf]
      %v3058 = vld [vmem:[%s3026 + $0x7c] sm:$0xf]
      %s3059 = scalar_lea.vmem %s6, 24
      %v3060 = vld [vmem:[%s3059] sm:$0xf]
      %v3061 = vld [vmem:[%s3059 + $0x4] sm:$0xf]
      %v3062 = vld [vmem:[%s3059 + $0x8] sm:$0xf]
      %v3095 = vunpack.c.l.b16 %v3027
      %v3096 = vunpack.c.l.b16 %v3028
      %v3097 = vunpack.c.l.b16 %v3029
      %v3098 = vunpack.c.l.b16 %v3030
      %v3099 = vunpack.c.l.b16 %v3031
      %v3100 = vunpack.c.l.b16 %v3032
      %v3101 = vunpack.c.l.b16 %v3033
      %v3102 = vunpack.c.l.b16 %v3034
      %v3103 = vunpack.c.l.b16 %v3035
      %v3104 = vunpack.c.l.b16 %v3036
      %v3105 = vunpack.c.l.b16 %v3037
      %v3106 = vunpack.c.l.b16 %v3038
      %v3107 = vunpack.c.l.b16 %v3039
      %v3108 = vunpack.c.l.b16 %v3040
      %v3109 = vunpack.c.l.b16 %v3041
      %v3110 = vunpack.c.l.b16 %v3042
      %v3111 = vunpack.c.l.b16 %v3043
      %v3112 = vunpack.c.l.b16 %v3044
      %v3113 = vunpack.c.l.b16 %v3045
      %v3114 = vunpack.c.l.b16 %v3046
      %v3115 = vunpack.c.l.b16 %v3047
      %v3116 = vunpack.c.l.b16 %v3048
      %v3117 = vunpack.c.l.b16 %v3049
      %v3118 = vunpack.c.l.b16 %v3050
      %v3119 = vunpack.c.l.b16 %v3051
      %v3120 = vunpack.c.l.b16 %v3052
      %v3121 = vunpack.c.l.b16 %v3053
      %v3122 = vunpack.c.l.b16 %v3054
      %v3123 = vunpack.c.l.b16 %v3055
      %v3124 = vunpack.c.l.b16 %v3056
      %v3125 = vunpack.c.l.b16 %v3057
      %v3126 = vunpack.c.l.b16 %v3058
      %v3127 = vpack.c.b16 %v3096, %v3095
      %v3128 = vpack.c.b16 %v3098, %v3097
      %v3129 = vpack.c.b16 %v3100, %v3099
      %v3130 = vpack.c.b16 %v3102, %v3101
      %v3131 = vpack.c.b16 %v3104, %v3103
      %v3132 = vpack.c.b16 %v3106, %v3105
      %v3133 = vpack.c.b16 %v3108, %v3107
      %v3134 = vpack.c.b16 %v3110, %v3109
      %v3135 = vpack.c.b16 %v3112, %v3111
      %v3136 = vpack.c.b16 %v3114, %v3113
      %v3137 = vpack.c.b16 %v3116, %v3115
      %v3138 = vpack.c.b16 %v3118, %v3117
      %v3139 = vpack.c.b16 %v3120, %v3119
      %v3140 = vpack.c.b16 %v3122, %v3121
      %v3141 = vpack.c.b16 %v3124, %v3123
      %v3142 = vpack.c.b16 %v3126, %v3125
      %v3146 = vunpack.c.l.b16 %v3060
      %v3147 = vunpack.c.l.b16 %v3061
      %v3148 = vunpack.c.l.b16 %v3062
      %v3149 = vpack.c.b16 %v3147, %v3146
      %v3150 = vpack.c.b16 %v3148, %v3148
      %v3153 = vsel %vm2655, %v3127, 0
      %v3156 = vsel %vm2655, %v3128, 0
      %v3159 = vsel %vm2655, %v3129, 0
      %v3162 = vsel %vm2655, %v3130, 0
      %v3165 = vsel %vm2655, %v3131, 0
      %v3168 = vsel %vm2655, %v3132, 0
      %v3171 = vsel %vm2655, %v3133, 0
      %v3174 = vsel %vm2655, %v3134, 0
      %v3177 = vsel %vm2655, %v3135, 0
      %v3180 = vsel %vm2655, %v3136, 0
      %v3183 = vsel %vm2655, %v3137, 0
      %v3186 = vsel %vm2655, %v3138, 0
      %v3189 = vsel %vm2655, %v3139, 0
      %v3192 = vsel %vm2655, %v3140, 0
      %v3195 = vsel %vm2655, %v3141, 0
      %v3198 = vsel %vm2655, %v3142, 0
      %v3201 = vsel %vm2704, %v3150, 0
      %3203 = vmatpush.bf16.msra.mxu0 0
      %3204 = vmatpush.bf16.msra.mxu0 0
      %3205 = vmatpush.bf16.msra.mxu0 0
      %3206 = vmatpush.bf16.msra.mxu0 0
      %3207 = vmatpush.bf16.msra.mxu0 0
      %3208 = vmatpush.bf16.msra.mxu0 0
      %3209 = vmatpush.bf16.msra.mxu0 %v3201
      %3210 = vmatpush.bf16.msra.mxu0 %v3149
      %3211 = vmatmul.bf16.gmra.mxu0 %v3153
      %v3212 = vpop.f32.mrf.mxu0
      %v3213 = vadd.f32 0.0, %v3212
      %v3214 = vpop.f32.mrf.mxu0
      %v3215 = vadd.f32 0.0, %v3214
      %3216 = vmatmul.bf16.gmra.mxu0 %v3156
      %v3217 = vpop.f32.mrf.mxu0
      %v3218 = vadd.f32 0.0, %v3217
      %v3219 = vpop.f32.mrf.mxu0
      %v3220 = vadd.f32 0.0, %v3219
      %3221 = vmatmul.bf16.gmra.mxu0 %v3159
      %v3222 = vpop.f32.mrf.mxu0
      %v3223 = vadd.f32 0.0, %v3222
      %v3224 = vpop.f32.mrf.mxu0
      %v3225 = vadd.f32 0.0, %v3224
      %3226 = vmatmul.bf16.gmra.mxu0 %v3162
      %v3227 = vpop.f32.mrf.mxu0
      %v3228 = vadd.f32 0.0, %v3227
      %v3229 = vpop.f32.mrf.mxu0
      %v3230 = vadd.f32 0.0, %v3229
      %3231 = vmatmul.bf16.gmra.mxu0 %v3165
      %v3232 = vpop.f32.mrf.mxu0
      %v3233 = vadd.f32 0.0, %v3232
      %v3234 = vpop.f32.mrf.mxu0
      %v3235 = vadd.f32 0.0, %v3234
      %3236 = vmatmul.bf16.gmra.mxu0 %v3168
      %v3237 = vpop.f32.mrf.mxu0
      %v3238 = vadd.f32 0.0, %v3237
      %v3239 = vpop.f32.mrf.mxu0
      %v3240 = vadd.f32 0.0, %v3239
      %3241 = vmatmul.bf16.gmra.mxu0 %v3171
      %v3242 = vpop.f32.mrf.mxu0
      %v3243 = vadd.f32 0.0, %v3242
      %v3244 = vpop.f32.mrf.mxu0
      %v3245 = vadd.f32 0.0, %v3244
      %3246 = vmatmul.bf16.gmra.mxu0 %v3174
      %v3247 = vpop.f32.mrf.mxu0
      %v3248 = vadd.f32 0.0, %v3247
      %v3249 = vpop.f32.mrf.mxu0
      %v3250 = vadd.f32 0.0, %v3249
      %3251 = vmatmul.bf16.gmra.mxu0 %v3177
      %v3252 = vpop.f32.mrf.mxu0
      %v3253 = vadd.f32 0.0, %v3252
      %v3254 = vpop.f32.mrf.mxu0
      %v3255 = vadd.f32 0.0, %v3254
      %3256 = vmatmul.bf16.gmra.mxu0 %v3180
      %v3257 = vpop.f32.mrf.mxu0
      %v3258 = vadd.f32 0.0, %v3257
      %v3259 = vpop.f32.mrf.mxu0
      %v3260 = vadd.f32 0.0, %v3259
      %3261 = vmatmul.bf16.gmra.mxu0 %v3183
      %v3262 = vpop.f32.mrf.mxu0
      %v3263 = vadd.f32 0.0, %v3262
      %v3264 = vpop.f32.mrf.mxu0
      %v3265 = vadd.f32 0.0, %v3264
      %3266 = vmatmul.bf16.gmra.mxu0 %v3186
      %v3267 = vpop.f32.mrf.mxu0
      %v3268 = vadd.f32 0.0, %v3267
      %v3269 = vpop.f32.mrf.mxu0
      %v3270 = vadd.f32 0.0, %v3269
      %3271 = vmatmul.bf16.gmra.mxu0 %v3189
      %v3272 = vpop.f32.mrf.mxu0
      %v3273 = vadd.f32 0.0, %v3272
      %v3274 = vpop.f32.mrf.mxu0
      %v3275 = vadd.f32 0.0, %v3274
      %3276 = vmatmul.bf16.gmra.mxu0 %v3192
      %v3277 = vpop.f32.mrf.mxu0
      %v3278 = vadd.f32 0.0, %v3277
      %v3279 = vpop.f32.mrf.mxu0
      %v3280 = vadd.f32 0.0, %v3279
      %3281 = vmatmul.bf16.gmra.mxu0 %v3195
      %v3282 = vpop.f32.mrf.mxu0
      %v3283 = vadd.f32 0.0, %v3282
      %v3284 = vpop.f32.mrf.mxu0
      %v3285 = vadd.f32 0.0, %v3284
      %3286 = vmatmul.bf16.gmra.mxu0 %v3198
      %v3287 = vpop.f32.mrf.mxu0
      %v3288 = vadd.f32 0.0, %v3287
      %v3289 = vpop.f32.mrf.mxu0
      %v3290 = vadd.f32 0.0, %v3289
      %3291 = vdwg.mxu0
      %v3292 = vadd.f32 %v2947, %v3213
      %v3293 = vadd.f32 %v2949, %v3215
      %v3294 = vadd.f32 %v2952, %v3218
      %v3295 = vadd.f32 %v2954, %v3220
      %v3296 = vadd.f32 %v2957, %v3223
      %v3297 = vadd.f32 %v2959, %v3225
      %v3298 = vadd.f32 %v2962, %v3228
      %v3299 = vadd.f32 %v2964, %v3230
      %v3300 = vadd.f32 %v2967, %v3233
      %v3301 = vadd.f32 %v2969, %v3235
      %v3302 = vadd.f32 %v2972, %v3238
      %v3303 = vadd.f32 %v2974, %v3240
      %v3304 = vadd.f32 %v2977, %v3243
      %v3305 = vadd.f32 %v2979, %v3245
      %v3306 = vadd.f32 %v2982, %v3248
      %v3307 = vadd.f32 %v2984, %v3250
      %v3308 = vadd.f32 %v2987, %v3253
      %v3309 = vadd.f32 %v2989, %v3255
      %v3310 = vadd.f32 %v2992, %v3258
      %v3311 = vadd.f32 %v2994, %v3260
      %v3312 = vadd.f32 %v2997, %v3263
      %v3313 = vadd.f32 %v2999, %v3265
      %v3314 = vadd.f32 %v3002, %v3268
      %v3315 = vadd.f32 %v3004, %v3270
      %v3316 = vadd.f32 %v3007, %v3273
      %v3317 = vadd.f32 %v3009, %v3275
      %v3318 = vadd.f32 %v3012, %v3278
      %v3319 = vadd.f32 %v3014, %v3280
      %v3320 = vadd.f32 %v3017, %v3283
      %v3321 = vadd.f32 %v3019, %v3285
      %v3322 = vadd.f32 %v3022, %v3288
      %v3323 = vadd.f32 %v3024, %v3290
      %v3324 = vld [vmem:[%s327] sm:$0xff]
      %v3325 = vld [vmem:[%s327 + $0x8] sm:$0xff]
      %v3326 = vld [vmem:[%s327 + $0x10] sm:$0xff]
      %v3327 = vld [vmem:[%s327 + $0x18] sm:$0xff]
      %v3328 = vld [vmem:[%s327 + $0x20] sm:$0xff]
      %v3329 = vld [vmem:[%s327 + $0x28] sm:$0xff]
      %v3330 = vld [vmem:[%s327 + $0x30] sm:$0xff]
      %v3331 = vld [vmem:[%s327 + $0x38] sm:$0xff]
      %v3332 = vld [vmem:[%s327 + $0x40] sm:$0xff]
      %v3333 = vld [vmem:[%s327 + $0x48] sm:$0xff]
      %v3334 = vld [vmem:[%s327 + $0x50] sm:$0xff]
      %v3335 = vld [vmem:[%s327 + $0x58] sm:$0xff]
      %v3336 = vld [vmem:[%s327 + $0x60] sm:$0xff]
      %v3337 = vld [vmem:[%s327 + $0x68] sm:$0xff]
      %v3338 = vld [vmem:[%s327 + $0x70] sm:$0xff]
      %v3339 = vld [vmem:[%s327 + $0x78] sm:$0xff]
      %v3340 = vld [vmem:[%s327 + $0x80] sm:$0xff]
      %v3341 = vld [vmem:[%s327 + $0x88] sm:$0xff]
      %v3342 = vld [vmem:[%s327 + $0x90] sm:$0xff]
      %v3343 = vld [vmem:[%s327 + $0x98] sm:$0xff]
      %v3344 = vld [vmem:[%s327 + $0xa0] sm:$0xff]
      %v3345 = vld [vmem:[%s327 + $0xa8] sm:$0xff]
      %v3346 = vld [vmem:[%s327 + $0xb0] sm:$0xff]
      %v3347 = vld [vmem:[%s327 + $0xb8] sm:$0xff]
      %v3348 = vld [vmem:[%s327 + $0xc0] sm:$0xff]
      %v3349 = vld [vmem:[%s327 + $0xc8] sm:$0xff]
      %v3350 = vld [vmem:[%s327 + $0xd0] sm:$0xff]
      %v3351 = vld [vmem:[%s327 + $0xd8] sm:$0xff]
      %v3352 = vld [vmem:[%s327 + $0xe0] sm:$0xff]
      %v3353 = vld [vmem:[%s327 + $0xe8] sm:$0xff]
      %v3354 = vld [vmem:[%s327 + $0xf0] sm:$0xff]
      %v3355 = vld [vmem:[%s327 + $0xf8] sm:$0xff]
      %v3356 = vpack.c.bf16 %v3325, %v3324
      %v3357 = vpack.c.bf16 %v3327, %v3326
      %v3358 = vpack.c.bf16 %v3329, %v3328
      %v3359 = vpack.c.bf16 %v3331, %v3330
      %v3360 = vpack.c.bf16 %v3333, %v3332
      %v3361 = vpack.c.bf16 %v3335, %v3334
      %v3362 = vpack.c.bf16 %v3337, %v3336
      %v3363 = vpack.c.bf16 %v3339, %v3338
      %v3364 = vpack.c.bf16 %v3341, %v3340
      %v3365 = vpack.c.bf16 %v3343, %v3342
      %v3366 = vpack.c.bf16 %v3345, %v3344
      %v3367 = vpack.c.bf16 %v3347, %v3346
      %v3368 = vpack.c.bf16 %v3349, %v3348
      %v3369 = vpack.c.bf16 %v3351, %v3350
      %v3370 = vpack.c.bf16 %v3353, %v3352
      %v3371 = vpack.c.bf16 %v3355, %v3354
      %v3372 = vld [vmem:[%s8] sm:$0x3]
      %v3374 = vsel %vm900, %v3356, 0
      %v3377 = vsel %vm900, %v3357, 0
      %v3380 = vsel %vm900, %v3358, 0
      %v3383 = vsel %vm900, %v3359, 0
      %v3386 = vsel %vm900, %v3360, 0
      %v3389 = vsel %vm900, %v3361, 0
      %v3392 = vsel %vm900, %v3362, 0
      %v3395 = vsel %vm900, %v3363, 0
      %v3398 = vsel %vm900, %v3364, 0
      %v3401 = vsel %vm900, %v3365, 0
      %v3404 = vsel %vm900, %v3366, 0
      %v3407 = vsel %vm900, %v3367, 0
      %v3410 = vsel %vm900, %v3368, 0
      %v3413 = vsel %vm900, %v3369, 0
      %v3416 = vsel %vm900, %v3370, 0
      %v3419 = vsel %vm900, %v3371, 0
      %vm3421 = vcmask 1041408
      %v3423 = vsel %vm3421, %v3372, 0
      %3425 = vmatpush.bf16.msra.mxu0 0
      %3426 = vmatpush.bf16.msra.mxu0 0
      %3427 = vmatpush.bf16.msra.mxu0 0
      %3428 = vmatpush.bf16.msra.mxu0 0
      %3429 = vmatpush.bf16.msra.mxu0 0
      %3430 = vmatpush.bf16.msra.mxu0 0
      %3431 = vmatpush.bf16.msra.mxu0 0
      %3432 = vmatpush.bf16.msra.mxu0 %v3423
      %3433 = vmatmul.bf16.gmra.mxu0 %v3374
      %v3434 = vpop.f32.mrf.mxu0
      %v3435 = vadd.f32 0.0, %v3434
      %v3436 = vpop.f32.mrf.mxu0
      %v3437 = vadd.f32 0.0, %v3436
      %3438 = vmatmul.bf16.gmra.mxu0 %v3377
      %v3439 = vpop.f32.mrf.mxu0
      %v3440 = vadd.f32 0.0, %v3439
      %v3441 = vpop.f32.mrf.mxu0
      %v3442 = vadd.f32 0.0, %v3441
      %3443 = vmatmul.bf16.gmra.mxu0 %v3380
      %v3444 = vpop.f32.mrf.mxu0
      %v3445 = vadd.f32 0.0, %v3444
      %v3446 = vpop.f32.mrf.mxu0
      %v3447 = vadd.f32 0.0, %v3446
      %3448 = vmatmul.bf16.gmra.mxu0 %v3383
      %v3449 = vpop.f32.mrf.mxu0
      %v3450 = vadd.f32 0.0, %v3449
      %v3451 = vpop.f32.mrf.mxu0
      %v3452 = vadd.f32 0.0, %v3451
      %3453 = vmatmul.bf16.gmra.mxu0 %v3386
      %v3454 = vpop.f32.mrf.mxu0
      %v3455 = vadd.f32 0.0, %v3454
      %v3456 = vpop.f32.mrf.mxu0
      %v3457 = vadd.f32 0.0, %v3456
      %3458 = vmatmul.bf16.gmra.mxu0 %v3389
      %v3459 = vpop.f32.mrf.mxu0
      %v3460 = vadd.f32 0.0, %v3459
      %v3461 = vpop.f32.mrf.mxu0
      %v3462 = vadd.f32 0.0, %v3461
      %3463 = vmatmul.bf16.gmra.mxu0 %v3392
      %v3464 = vpop.f32.mrf.mxu0
      %v3465 = vadd.f32 0.0, %v3464
      %v3466 = vpop.f32.mrf.mxu0
      %v3467 = vadd.f32 0.0, %v3466
      %3468 = vmatmul.bf16.gmra.mxu0 %v3395
      %v3469 = vpop.f32.mrf.mxu0
      %v3470 = vadd.f32 0.0, %v3469
      %v3471 = vpop.f32.mrf.mxu0
      %v3472 = vadd.f32 0.0, %v3471
      %3473 = vmatmul.bf16.gmra.mxu0 %v3398
      %v3474 = vpop.f32.mrf.mxu0
      %v3475 = vadd.f32 0.0, %v3474
      %v3476 = vpop.f32.mrf.mxu0
      %v3477 = vadd.f32 0.0, %v3476
      %3478 = vmatmul.bf16.gmra.mxu0 %v3401
      %v3479 = vpop.f32.mrf.mxu0
      %v3480 = vadd.f32 0.0, %v3479
      %v3481 = vpop.f32.mrf.mxu0
      %v3482 = vadd.f32 0.0, %v3481
      %3483 = vmatmul.bf16.gmra.mxu0 %v3404
      %v3484 = vpop.f32.mrf.mxu0
      %v3485 = vadd.f32 0.0, %v3484
      %v3486 = vpop.f32.mrf.mxu0
      %v3487 = vadd.f32 0.0, %v3486
      %3488 = vmatmul.bf16.gmra.mxu0 %v3407
      %v3489 = vpop.f32.mrf.mxu0
      %v3490 = vadd.f32 0.0, %v3489
      %v3491 = vpop.f32.mrf.mxu0
      %v3492 = vadd.f32 0.0, %v3491
      %3493 = vmatmul.bf16.gmra.mxu0 %v3410
      %v3494 = vpop.f32.mrf.mxu0
      %v3495 = vadd.f32 0.0, %v3494
      %v3496 = vpop.f32.mrf.mxu0
      %v3497 = vadd.f32 0.0, %v3496
      %3498 = vmatmul.bf16.gmra.mxu0 %v3413
      %v3499 = vpop.f32.mrf.mxu0
      %v3500 = vadd.f32 0.0, %v3499
      %v3501 = vpop.f32.mrf.mxu0
      %v3502 = vadd.f32 0.0, %v3501
      %3503 = vmatmul.bf16.gmra.mxu0 %v3416
      %v3504 = vpop.f32.mrf.mxu0
      %v3505 = vadd.f32 0.0, %v3504
      %v3506 = vpop.f32.mrf.mxu0
      %v3507 = vadd.f32 0.0, %v3506
      %3508 = vmatmul.bf16.gmra.mxu0 %v3419
      %v3509 = vpop.f32.mrf.mxu0
      %v3510 = vadd.f32 0.0, %v3509
      %v3511 = vpop.f32.mrf.mxu0
      %v3512 = vadd.f32 0.0, %v3511
      %3513 = vdwg.mxu0
      %v3514 = vadd.f32 %v3292, %v3435
      %v3515 = vadd.f32 %v3293, %v3437
      %v3516 = vadd.f32 %v3294, %v3440
      %v3517 = vadd.f32 %v3295, %v3442
      %v3518 = vadd.f32 %v3296, %v3445
      %v3519 = vadd.f32 %v3297, %v3447
      %v3520 = vadd.f32 %v3298, %v3450
      %v3521 = vadd.f32 %v3299, %v3452
      %v3522 = vadd.f32 %v3300, %v3455
      %v3523 = vadd.f32 %v3301, %v3457
      %v3524 = vadd.f32 %v3302, %v3460
      %v3525 = vadd.f32 %v3303, %v3462
      %v3526 = vadd.f32 %v3304, %v3465
      %v3527 = vadd.f32 %v3305, %v3467
      %v3528 = vadd.f32 %v3306, %v3470
      %v3529 = vadd.f32 %v3307, %v3472
      %v3530 = vadd.f32 %v3308, %v3475
      %v3531 = vadd.f32 %v3309, %v3477
      %v3532 = vadd.f32 %v3310, %v3480
      %v3533 = vadd.f32 %v3311, %v3482
      %v3534 = vadd.f32 %v3312, %v3485
      %v3535 = vadd.f32 %v3313, %v3487
      %v3536 = vadd.f32 %v3314, %v3490
      %v3537 = vadd.f32 %v3315, %v3492
      %v3538 = vadd.f32 %v3316, %v3495
      %v3539 = vadd.f32 %v3317, %v3497
      %v3540 = vadd.f32 %v3318, %v3500
      %v3541 = vadd.f32 %v3319, %v3502
      %v3542 = vadd.f32 %v3320, %v3505
      %v3543 = vadd.f32 %v3321, %v3507
      %v3544 = vadd.f32 %v3322, %v3510
      %v3545 = vadd.f32 %v3323, %v3512
      %v3546 = vld [vmem:[%s7] sm:$0x1]
      %v3548 = vperm.slane %v3546, 0
      %v3550 = vadd.f32 %v3514, %v3548
      %v3551 = vadd.f32 %v3515, %v3548
      %v3552 = vadd.f32 %v3516, %v3548
      %v3553 = vadd.f32 %v3517, %v3548
      %v3554 = vadd.f32 %v3518, %v3548
      %v3555 = vadd.f32 %v3519, %v3548
      %v3556 = vadd.f32 %v3520, %v3548
      %v3557 = vadd.f32 %v3521, %v3548
      %v3558 = vadd.f32 %v3522, %v3548
      %v3559 = vadd.f32 %v3523, %v3548
      %v3560 = vadd.f32 %v3524, %v3548
      %v3561 = vadd.f32 %v3525, %v3548
      %v3562 = vadd.f32 %v3526, %v3548
      %v3563 = vadd.f32 %v3527, %v3548
      %v3564 = vadd.f32 %v3528, %v3548
      %v3565 = vadd.f32 %v3529, %v3548
      %v3566 = vadd.f32 %v3530, %v3548
      %v3567 = vadd.f32 %v3531, %v3548
      %v3568 = vadd.f32 %v3532, %v3548
      %v3569 = vadd.f32 %v3533, %v3548
      %v3570 = vadd.f32 %v3534, %v3548
      %v3571 = vadd.f32 %v3535, %v3548
      %v3572 = vadd.f32 %v3536, %v3548
      %v3573 = vadd.f32 %v3537, %v3548
      %v3574 = vadd.f32 %v3538, %v3548
      %v3575 = vadd.f32 %v3539, %v3548
      %v3576 = vadd.f32 %v3540, %v3548
      %v3577 = vadd.f32 %v3541, %v3548
      %v3578 = vadd.f32 %v3542, %v3548
      %v3579 = vadd.f32 %v3543, %v3548
      %v3580 = vadd.f32 %v3544, %v3548
      %v3581 = vadd.f32 %v3545, %v3548
      %3582 = vst.msk [vmem:[%s332] sm:$0xff] %vm933, %v3550
      %3583 = vst.msk [vmem:[%s332 + $0x8] sm:$0xff] %vm933, %v3551
      %3584 = vst.msk [vmem:[%s332 + $0x10] sm:$0xff] %vm933, %v3552
      %3585 = vst.msk [vmem:[%s332 + $0x18] sm:$0xff] %vm933, %v3553
      %3586 = vst.msk [vmem:[%s332 + $0x20] sm:$0xff] %vm933, %v3554
      %3587 = vst.msk [vmem:[%s332 + $0x28] sm:$0xff] %vm933, %v3555
      %3588 = vst.msk [vmem:[%s332 + $0x30] sm:$0xff] %vm933, %v3556
      %3589 = vst.msk [vmem:[%s332 + $0x38] sm:$0xff] %vm933, %v3557
      %3590 = vst.msk [vmem:[%s332 + $0x40] sm:$0xff] %vm933, %v3558
      %3591 = vst.msk [vmem:[%s332 + $0x48] sm:$0xff] %vm933, %v3559
      %3592 = vst.msk [vmem:[%s332 + $0x50] sm:$0xff] %vm933, %v3560
      %3593 = vst.msk [vmem:[%s332 + $0x58] sm:$0xff] %vm933, %v3561
      %3594 = vst.msk [vmem:[%s332 + $0x60] sm:$0xff] %vm933, %v3562
      %3595 = vst.msk [vmem:[%s332 + $0x68] sm:$0xff] %vm933, %v3563
      %3596 = vst.msk [vmem:[%s332 + $0x70] sm:$0xff] %vm933, %v3564
      %3597 = vst.msk [vmem:[%s332 + $0x78] sm:$0xff] %vm933, %v3565
      %3598 = vst.msk [vmem:[%s332 + $0x80] sm:$0xff] %vm933, %v3566
      %3599 = vst.msk [vmem:[%s332 + $0x88] sm:$0xff] %vm933, %v3567
      %3600 = vst.msk [vmem:[%s332 + $0x90] sm:$0xff] %vm933, %v3568
      %3601 = vst.msk [vmem:[%s332 + $0x98] sm:$0xff] %vm933, %v3569
      %3602 = vst.msk [vmem:[%s332 + $0xa0] sm:$0xff] %vm933, %v3570
      %3603 = vst.msk [vmem:[%s332 + $0xa8] sm:$0xff] %vm933, %v3571
      %3604 = vst.msk [vmem:[%s332 + $0xb0] sm:$0xff] %vm933, %v3572
      %3605 = vst.msk [vmem:[%s332 + $0xb8] sm:$0xff] %vm933, %v3573
      %3606 = vst.msk [vmem:[%s332 + $0xc0] sm:$0xff] %vm933, %v3574
      %3607 = vst.msk [vmem:[%s332 + $0xc8] sm:$0xff] %vm933, %v3575
      %3608 = vst.msk [vmem:[%s332 + $0xd0] sm:$0xff] %vm933, %v3576
      %3609 = vst.msk [vmem:[%s332 + $0xd8] sm:$0xff] %vm933, %v3577
      %3610 = vst.msk [vmem:[%s332 + $0xe0] sm:$0xff] %vm933, %v3578
      %3611 = vst.msk [vmem:[%s332 + $0xe8] sm:$0xff] %vm933, %v3579
      %3612 = vst.msk [vmem:[%s332 + $0xf0] sm:$0xff] %vm933, %v3580
      %3613 = vst.msk [vmem:[%s332 + $0xf8] sm:$0xff] %vm933, %v3581
      %p3614 = scmp.lt.s32.totalorder %s20, 1
      %s3615 = scalar_select %p3614, %s20, 1
      %s3616 = smul.addr %s3615, 32
      %s3617 = smul.addr %s3616, 8
      %s3618 = scalar_lea.vmem %s9, %s3617
      // Predicated region
      $region57: #{tpu_custom_call.1} parent=55 // pred_check
        %p3619 = pneg %p232
      $region58: #{tpu_custom_call.1} parent=55 // pred_check_branch
        %3621 = sbr.rel (%p3619) target = $region60
      $region59: #{tpu_custom_call.1} parent=55 // pred_region
        _
      $region60: #{tpu_custom_call.1} parent=55 // pred_fallthru
        _
    $region56: #{tpu_custom_call.1} parent=5 // pred_fallthru
      _
    %p3622 = scmp.le.s32.totalorder 2, %s15
    // Predicated region
    $region61: #{tpu_custom_call.1} parent=5 // pred_check
      %p3623 = pneg %p3622
    $region62: #{tpu_custom_call.1} parent=5 // pred_check_branch
      %3625 = sbr.rel (%p3623) target = $region64
    $region63: #{tpu_custom_call.1} parent=5 // pred_region
      %s3626 = ssub.s32 %s15, 2
      // Predicated region
      $region65: #{tpu_custom_call.1} parent=63 // pred_check
        %p3627 = pneg %p238
      $region66: #{tpu_custom_call.1} parent=63 // pred_check_branch
        %3629 = sbr.rel (%p3627) target = $region68
      $region67: #{tpu_custom_call.1} parent=63 // pred_region
        %p3630 = scmp.lt.s32.totalorder %s21, 1
        %s3631 = scalar_select %p3630, %s21, 1
        %s3632 = smul.addr %s3631, 32
        %s3633 = smul.addr %s3632, 8
        %s3634 = scalar_lea.vmem %s9, %s3633
      $region68: #{tpu_custom_call.1} parent=63 // pred_fallthru
        _
    $region64: #{tpu_custom_call.1} parent=5 // pred_fallthru
      _
  $region6: #{tpu_custom_call.1} parent=0 // loop_footer
    %s19 = sadd.s32 1, %s15
  $region7: #{tpu_custom_call.1} parent=0 // loop_footer_branch
    %14 = sbr.rel target = $region3
  $region8: #{tpu_custom_call.1} parent=0 // loop_exit
    _

// kernel: tpu_custom_call.1
$region0: #{tpu_custom_call.1}
  #allocation0 [shape = 'u32[]', space=smem, size = 0x4, offset = 0x4, fixed_abs, tag = 'smem constant byte address 0x4 - core index']
  #allocation1 [shape = 'u32[72,128]{1,0:T(1,128)}', space=vmem, size = 0x9000, scoped, tag = 'internal scratch']
  #allocation2 [shape = 'bf16[18,16,12]{2,1,0:T(8,128)(2,1)}', space=vmem, size = 0x12000, scoped, tag = 'scratch operand']
  #allocation3 [shape = 'bf16[18,16,24]{2,1,0:T(8,128)(2,1)}', space=vmem, size = 0x12000, scoped, tag = 'scratch operand']
  %s0 = inlined_call_operand.vmem [shape: f32[2,16,16,4], index: 0, kind: input, shape index: {}]
  %s1 = inlined_call_operand.vmem [shape: f32[1,1,4], index: 1, kind: input, shape index: {}]
  %s2 = inlined_call_operand.vmem [shape: f32[1,1,4], index: 2, kind: input, shape index: {}]
  %s3 = inlined_call_operand.vmem [shape: bf16[3,12,8], index: 3, kind: input, shape index: {}]
  %s4 = inlined_call_operand.vmem [shape: f32[1,8], index: 4, kind: input, shape index: {}]
  %s5 = inlined_call_operand.vmem [shape: f32[1,8], index: 5, kind: input, shape index: {}]
  %s6 = inlined_call_operand.vmem [shape: bf16[3,24,8], index: 6, kind: input, shape index: {}]
  %s7 = inlined_call_operand.vmem [shape: f32[1,8], index: 7, kind: input, shape index: {}]
  %s8 = inlined_call_operand.vmem [shape: bf16[4,8], index: 8, kind: input, shape index: {}]
  %s9 = inlined_call_operand.vmem [shape: f32[2,16,16,8], index: 9, kind: output, shape index: {}]
  %s10 = sld [smem:[#allocation0]]
  $region69: #{tpu_custom_call.1} parent=0
    _
  %s12 = ssub.s32 1, %s10
  %s13 = scalar_select 0, %s12, %s10
  loop: start=0, step=1, limit=4
  $region2: #{tpu_custom_call.1} parent=0 // loop_pre_header
    _
  $region3: #{tpu_custom_call.1} parent=0 // loop_header
    %s15 = sphi 0, %s19
    %p16 = scmp.ge.s32.totalorder %s15, 4
    %s25 = sphi 0, %s27
    %s28 = sphi 0, %s25
    %s29 = sphi 0, %s28
    %s45 = sphi 0, %s29
    %s49 = sphi 0, %s49
    %s51 = sphi 0, %s49
    %s52 = sphi 0, %s51
    %s66 = sphi 0, %s52
    %s70 = sphi 0, %s70
    %s72 = sphi 0, %s70
    %s73 = sphi 0, %s72
    %s87 = sphi 0, %s73
    %s91 = sphi 0, %s91
    %s93 = sphi 0, %s91
    %s94 = sphi 0, %s93
    %s108 = sphi 0, %s94
    %s112 = sphi 0, %s112
    %s114 = sphi 0, %s112
    %s115 = sphi 0, %s114
    %s129 = sphi 0, %s115
    %s133 = sphi 0, %s133
    %s135 = sphi 0, %s133
    %s136 = sphi 0, %s135
    %s150 = sphi 0, %s136
    %s154 = sphi 0, %s154
    %s156 = sphi 0, %s154
    %s157 = sphi 0, %s156
    %s171 = sphi 0, %s157
    %s175 = sphi 0, %s175
    %s177 = sphi 0, %s175
    %s178 = sphi 0, %s177
    %s192 = sphi 0, %s178
    %s196 = sphi 0, %s196
    %s198 = sphi 0, %s196
    %s199 = sphi 0, %s198
    %s213 = sphi 0, %s199
    %s219 = sphi 0, %s221
    %s222 = sphi 0, %s219
    %s223 = sphi 0, %s222
    %s239 = sphi 0, %s223
  $region4: #{tpu_custom_call.1} parent=0 // loop_header_branch
    %18 = sbr.rel (%p16) target = $region8
  $region5: #{tpu_custom_call.1} parent=0 // loop_body
    %s20 = ssub.s32 %s15, 1
    %s21 = ssub.s32 %s15, 2
    %s22 = sadd.s32 %s15, 1
    %s23 = ssub.s32 %s15, %s22
    %p24 = scmp.eq.s32.totalorder %s23, 0
    %s26 = sadd.s32 %s25, 1
    %s27 = scalar_select %p24, %s25, %s26
    %p30 = pneg %p24
    %p31 = scmp.eq.s32.totalorder %s15, 1
    %p32 = por %p30, %p31
    %p33 = scmp.ne.s32.totalorder %s25, %s28
    %p34 = scmp.eq.s32.totalorder %s15, 0
    %p35 = por %p33, %p34
    %p36 = scmp.ne.s32.totalorder %s25, %s28
    %p37 = scmp.eq.s32.totalorder %s20, 1
    %p38 = por %p36, %p37
    %p39 = scmp.ne.s32.totalorder %s28, %s29
    %p40 = scmp.eq.s32.totalorder %s20, 0
    %p41 = por %p39, %p40
    %p42 = scmp.ne.s32.totalorder %s28, %s29
    %p43 = scmp.eq.s32.totalorder %s21, 1
    %p44 = por %p42, %p43
    %p46 = scmp.ne.s32.totalorder %s29, %s45
    %p47 = scmp.eq.s32.totalorder %s21, 0
    %p48 = por %p46, %p47
    %s50 = sadd.s32 %s49, 1
    %p53 = scmp.eq.s32.totalorder %s15, 1
    %p54 = scmp.ne.s32.totalorder %s49, %s51
    %p55 = scmp.eq.s32.totalorder %s15, 0
    %p56 = por %p54, %p55
    %p57 = scmp.ne.s32.totalorder %s49, %s51
    %p58 = scmp.eq.s32.totalorder %s20, 1
    %p59 = por %p57, %p58
    %p60 = scmp.ne.s32.totalorder %s51, %s52
    %p61 = scmp.eq.s32.totalorder %s20, 0
    %p62 = por %p60, %p61
    %p63 = scmp.ne.s32.totalorder %s51, %s52
    %p64 = scmp.eq.s32.totalorder %s21, 1
    %p65 = por %p63, %p64
    %p67 = scmp.ne.s32.totalorder %s52, %s66
    %p68 = scmp.eq.s32.totalorder %s21, 0
    %p69 = por %p67, %p68
    %s71 = sadd.s32 %s70, 1
    %p74 = scmp.eq.s32.totalorder %s15, 1
    %p75 = scmp.ne.s32.totalorder %s70, %s72
    %p76 = scmp.eq.s32.totalorder %s15, 0
    %p77 = por %p75, %p76
    %p78 = scmp.ne.s32.totalorder %s70, %s72
    %p79 = scmp.eq.s32.totalorder %s20, 1
    %p80 = por %p78, %p79
    %p81 = scmp.ne.s32.totalorder %s72, %s73
    %p82 = scmp.eq.s32.totalorder %s20, 0
    %p83 = por %p81, %p82
    %p84 = scmp.ne.s32.totalorder %s72, %s73
    %p85 = scmp.eq.s32.totalorder %s21, 1
    %p86 = por %p84, %p85
    %p88 = scmp.ne.s32.totalorder %s73, %s87
    %p89 = scmp.eq.s32.totalorder %s21, 0
    %p90 = por %p88, %p89
    %s92 = sadd.s32 %s91, 1
    %p95 = scmp.eq.s32.totalorder %s15, 1
    %p96 = scmp.ne.s32.totalorder %s91, %s93
    %p97 = scmp.eq.s32.totalorder %s15, 0
    %p98 = por %p96, %p97
    %p99 = scmp.ne.s32.totalorder %s91, %s93
    %p100 = scmp.eq.s32.totalorder %s20, 1
    %p101 = por %p99, %p100
    %p102 = scmp.ne.s32.totalorder %s93, %s94
    %p103 = scmp.eq.s32.totalorder %s20, 0
    %p104 = por %p102, %p103
    %p105 = scmp.ne.s32.totalorder %s93, %s94
    %p106 = scmp.eq.s32.totalorder %s21, 1
    %p107 = por %p105, %p106
    %p109 = scmp.ne.s32.totalorder %s94, %s108
    %p110 = scmp.eq.s32.totalorder %s21, 0
    %p111 = por %p109, %p110
    %s113 = sadd.s32 %s112, 1
    %p116 = scmp.eq.s32.totalorder %s15, 1
    %p117 = scmp.ne.s32.totalorder %s112, %s114
    %p118 = scmp.eq.s32.totalorder %s15, 0
    %p119 = por %p117, %p118
    %p120 = scmp.ne.s32.totalorder %s112, %s114
    %p121 = scmp.eq.s32.totalorder %s20, 1
    %p122 = por %p120, %p121
    %p123 = scmp.ne.s32.totalorder %s114, %s115
    %p124 = scmp.eq.s32.totalorder %s20, 0
    %p125 = por %p123, %p124
    %p126 = scmp.ne.s32.totalorder %s114, %s115
    %p127 = scmp.eq.s32.totalorder %s21, 1
    %p128 = por %p126, %p127
    %p130 = scmp.ne.s32.totalorder %s115, %s129
    %p131 = scmp.eq.s32.totalorder %s21, 0
    %p132 = por %p130, %p131
    %s134 = sadd.s32 %s133, 1
    %p137 = scmp.eq.s32.totalorder %s15, 1
    %p138 = scmp.ne.s32.totalorder %s133, %s135
    %p139 = scmp.eq.s32.totalorder %s15, 0
    %p140 = por %p138, %p139
    %p141 = scmp.ne.s32.totalorder %s133, %s135
    %p142 = scmp.eq.s32.totalorder %s20, 1
    %p143 = por %p141, %p142
    %p144 = scmp.ne.s32.totalorder %s135, %s136
    %p145 = scmp.eq.s32.totalorder %s20, 0
    %p146 = por %p144, %p145
    %p147 = scmp.ne.s32.totalorder %s135, %s136
    %p148 = scmp.eq.s32.totalorder %s21, 1
    %p149 = por %p147, %p148
    %p151 = scmp.ne.s32.totalorder %s136, %s150
    %p152 = scmp.eq.s32.totalorder %s21, 0
    %p153 = por %p151, %p152
    %s155 = sadd.s32 %s154, 1
    %p158 = scmp.eq.s32.totalorder %s15, 1
    %p159 = scmp.ne.s32.totalorder %s154, %s156
    %p160 = scmp.eq.s32.totalorder %s15, 0
    %p161 = por %p159, %p160
    %p162 = scmp.ne.s32.totalorder %s154, %s156
    %p163 = scmp.eq.s32.totalorder %s20, 1
    %p164 = por %p162, %p163
    %p165 = scmp.ne.s32.totalorder %s156, %s157
    %p166 = scmp.eq.s32.totalorder %s20, 0
    %p167 = por %p165, %p166
    %p168 = scmp.ne.s32.totalorder %s156, %s157
    %p169 = scmp.eq.s32.totalorder %s21, 1
    %p170 = por %p168, %p169
    %p172 = scmp.ne.s32.totalorder %s157, %s171
    %p173 = scmp.eq.s32.totalorder %s21, 0
    %p174 = por %p172, %p173
    %s176 = sadd.s32 %s175, 1
    %p179 = scmp.eq.s32.totalorder %s15, 1
    %p180 = scmp.ne.s32.totalorder %s175, %s177
    %p181 = scmp.eq.s32.totalorder %s15, 0
    %p182 = por %p180, %p181
    %p183 = scmp.ne.s32.totalorder %s175, %s177
    %p184 = scmp.eq.s32.totalorder %s20, 1
    %p185 = por %p183, %p184
    %p186 = scmp.ne.s32.totalorder %s177, %s178
    %p187 = scmp.eq.s32.totalorder %s20, 0
    %p188 = por %p186, %p187
    %p189 = scmp.ne.s32.totalorder %s177, %s178
    %p190 = scmp.eq.s32.totalorder %s21, 1
    %p191 = por %p189, %p190
    %p193 = scmp.ne.s32.totalorder %s178, %s192
    %p194 = scmp.eq.s32.totalorder %s21, 0
    %p195 = por %p193, %p194
    %s197 = sadd.s32 %s196, 1
    %p200 = scmp.eq.s32.totalorder %s15, 1
    %p201 = scmp.ne.s32.totalorder %s196, %s198
    %p202 = scmp.eq.s32.totalorder %s15, 0
    %p203 = por %p201, %p202
    %p204 = scmp.ne.s32.totalorder %s196, %s198
    %p205 = scmp.eq.s32.totalorder %s20, 1
    %p206 = por %p204, %p205
    %p207 = scmp.ne.s32.totalorder %s198, %s199
    %p208 = scmp.eq.s32.totalorder %s20, 0
    %p209 = por %p207, %p208
    %p210 = scmp.ne.s32.totalorder %s198, %s199
    %p211 = scmp.eq.s32.totalorder %s21, 1
    %p212 = por %p210, %p211
    %p214 = scmp.ne.s32.totalorder %s199, %s213
    %p215 = scmp.eq.s32.totalorder %s21, 0
    %p216 = por %p214, %p215
    %s217 = ssub.s32 %s15, %s22
    %p218 = scmp.eq.s32.totalorder %s217, 0
    %s220 = sadd.s32 %s219, 1
    %s221 = scalar_select %p218, %s219, %s220
    %p224 = pneg %p218
    %p225 = scmp.eq.s32.totalorder %s15, 1
    %p226 = por %p224, %p225
    %p227 = scmp.ne.s32.totalorder %s219, %s222
    %p228 = scmp.eq.s32.totalorder %s15, 0
    %p229 = por %p227, %p228
    %p230 = scmp.ne.s32.totalorder %s219, %s222
    %p231 = scmp.eq.s32.totalorder %s20, 1
    %p232 = por %p230, %p231
    %p233 = scmp.ne.s32.totalorder %s222, %s223
    %p234 = scmp.eq.s32.totalorder %s20, 0
    %p235 = por %p233, %p234
    %p236 = scmp.ne.s32.totalorder %s222, %s223
    %p237 = scmp.eq.s32.totalorder %s21, 1
    %p238 = por %p236, %p237
    %p240 = scmp.ne.s32.totalorder %s223, %s239
    %p241 = scmp.eq.s32.totalorder %s21, 0
    %p242 = por %p240, %p241
    %p243 = scmp.le.s32.totalorder 1, %s15
    %p244 = scmp.lt.s32.totalorder %s15, 3
    %p245 = pnand %p243, %p244
    %p246 = pneg %p245
    // Predicated region
    $region9: #{tpu_custom_call.1} parent=5 // pred_check
      _
    $region10: #{tpu_custom_call.1} parent=5 // pred_check_branch
      %248 = sbr.rel (%p245) target = $region12
    $region11: #{tpu_custom_call.1} parent=5 // pred_region
      %s249 = ssub.s32 %s15, 1
      // Predicated region
      $region13: #{tpu_custom_call.1} parent=11 // pred_check
        %p250 = pneg %p62
      $region14: #{tpu_custom_call.1} parent=11 // pred_check_branch
        %252 = sbr.rel (%p250) target = $region16
      $region15: #{tpu_custom_call.1} parent=11 // pred_region
        _
      $region16: #{tpu_custom_call.1} parent=11 // pred_fallthru
        _
      // Predicated region
      $region17: #{tpu_custom_call.1} parent=11 // pred_check
        %p253 = pneg %p83
      $region18: #{tpu_custom_call.1} parent=11 // pred_check_branch
        %255 = sbr.rel (%p253) target = $region20
      $region19: #{tpu_custom_call.1} parent=11 // pred_region
        _
      $region20: #{tpu_custom_call.1} parent=11 // pred_fallthru
        _
      // Predicated region
      $region21: #{tpu_custom_call.1} parent=11 // pred_check
        %p256 = pneg %p104
      $region22: #{tpu_custom_call.1} parent=11 // pred_check_branch
        %258 = sbr.rel (%p256) target = $region24
      $region23: #{tpu_custom_call.1} parent=11 // pred_region
        _
      $region24: #{tpu_custom_call.1} parent=11 // pred_fallthru
        _
      // Predicated region
      $region25: #{tpu_custom_call.1} parent=11 // pred_check
        %p259 = pneg %p125
      $region26: #{tpu_custom_call.1} parent=11 // pred_check_branch
        %261 = sbr.rel (%p259) target = $region28
      $region27: #{tpu_custom_call.1} parent=11 // pred_region
        _
      $region28: #{tpu_custom_call.1} parent=11 // pred_fallthru
        _
      // Predicated region
      $region29: #{tpu_custom_call.1} parent=11 // pred_check
        %p262 = pneg %p146
      $region30: #{tpu_custom_call.1} parent=11 // pred_check_branch
        %264 = sbr.rel (%p262) target = $region32
      $region31: #{tpu_custom_call.1} parent=11 // pred_region
        _
      $region32: #{tpu_custom_call.1} parent=11 // pred_fallthru
        _
      // Predicated region
      $region33: #{tpu_custom_call.1} parent=11 // pred_check
        %p265 = pneg %p167
      $region34: #{tpu_custom_call.1} parent=11 // pred_check_branch
        %267 = sbr.rel (%p265) target = $region36
      $region35: #{tpu_custom_call.1} parent=11 // pred_region
        _
      $region36: #{tpu_custom_call.1} parent=11 // pred_fallthru
        _
      // Predicated region
      $region37: #{tpu_custom_call.1} parent=11 // pred_check
        %p268 = pneg %p188
      $region38: #{tpu_custom_call.1} parent=11 // pred_check_branch
        %270 = sbr.rel (%p268) target = $region40
      $region39: #{tpu_custom_call.1} parent=11 // pred_region
        _
      $region40: #{tpu_custom_call.1} parent=11 // pred_fallthru
        _
      // Predicated region
      $region41: #{tpu_custom_call.1} parent=11 // pred_check
        %p271 = pneg %p209
      $region42: #{tpu_custom_call.1} parent=11 // pred_check_branch
        %273 = sbr.rel (%p271) target = $region44
      $region43: #{tpu_custom_call.1} parent=11 // pred_region
        _
      $region44: #{tpu_custom_call.1} parent=11 // pred_fallthru
        _
    $region12: #{tpu_custom_call.1} parent=5 // pred_fallthru
      _
    %p274 = scmp.lt.s32.totalorder %s15, 2
    // Predicated region
    $region45: #{tpu_custom_call.1} parent=5 // pred_check
      %p275 = pneg %p274
    $region46: #{tpu_custom_call.1} parent=5 // pred_check_branch
      %277 = sbr.rel (%p275) target = $region48
    $region47: #{tpu_custom_call.1} parent=5 // pred_region
      // Predicated region
      $region49: #{tpu_custom_call.1} parent=47 // pred_check
        %p278 = pneg %p35
      $region50: #{tpu_custom_call.1} parent=47 // pred_check_branch
        %280 = sbr.rel (%p278) target = $region52
      $region51: #{tpu_custom_call.1} parent=47 // pred_region
        %p281 = scmp.lt.s32.totalorder %s15, 1
        %s282 = scalar_select %p281, %s15, 1
        %s283 = smul.addr %s282, 32
        %s284 = smul.addr %s283, 8
        %s285 = scalar_lea.vmem %s0, %s284
      $region52: #{tpu_custom_call.1} parent=47 // pred_fallthru
        _
    $region48: #{tpu_custom_call.1} parent=5 // pred_fallthru
      _
    %p286 = scmp.le.s32.totalorder 1, %s15
    %p287 = scmp.lt.s32.totalorder %s15, 3
    %p288 = pnand %p286, %p287
    %p289 = pneg %p288
    // Predicated region
    $region53: #{tpu_custom_call.1} parent=5 // pred_check
      _
    $region54: #{tpu_custom_call.1} parent=5 // pred_check_branch
      %291 = sbr.rel (%p288) target = $region56
    $region55: #{tpu_custom_call.1} parent=5 // pred_region
      %s292 = ssub.s32 %s15, 1
      %p293 = scmp.lt.s32.totalorder %s20, 1
      %s294 = scalar_select %p293, %s20, 1
      %s295 = smul.addr %s294, 32
      %s296 = smul.addr %s295, 8
      %s297 = scalar_lea.vmem %s0, %s296
      %p298 = pneg %p41
      %p299 = pneg %p38
      %p300 = pneg %p62
      %p301 = pneg %p59
      %p302 = pneg %p83
      %p303 = pneg %p80
      %p304 = pneg %p104
      %p305 = pneg %p101
      %p306 = pneg %p125
      %p307 = pneg %p122
      %p308 = pneg %p146
      %p309 = pneg %p143
      %p310 = pneg %p167
      %p311 = pneg %p164
      %p312 = pneg %p188
      %p313 = pneg %p185
      %p314 = pneg %p209
      %p315 = pneg %p206
      %p316 = pneg %p235
      %p317 = pneg %p232
      %p318 = scmp.lt.s32.totalorder %s20, 1
      %s319 = scalar_select %p318, %s20, 1
      %s320 = smul.addr %s319, 32
      %s321 = smul.addr %s320, 8
      %s322 = scalar_lea.vmem %s9, %s321
      %p323 = scmp.lt.s32.totalorder %s20, 1
      %s324 = scalar_select %p323, %s20, 1
      %s325 = smul.addr %s324, 32
      %s326 = smul.addr %s325, 8
      %s327 = scalar_lea.vmem %s0, %s326
      %p328 = scmp.lt.s32.totalorder %s20, 1
      %s329 = scalar_select %p328, %s20, 1
      %s330 = smul.addr %s329, 32
      %s331 = smul.addr %s330, 8
      %s332 = scalar_lea.vmem %s9, %s331
      %vm334 = vcmask 93184
      %335 = vst.msk [vmem:[#allocation2] sm:$0xf] %vm334, 0
      %336 = vst.msk [vmem:[#allocation2 + $0x4] sm:$0xf] %vm334, 0
      %s337 = scalar_lea.vmem [#allocation2], 136
      %338 = vst.msk [vmem:[%s337] sm:$0xf] %vm334, 0
      %339 = vst.msk [vmem:[%s337 + $0x4] sm:$0xf] %vm334, 0
      %vm340 = vcmask 191488
      %341 = vst.msk [vmem:[#allocation3] sm:$0xf] %vm340, 0
      %342 = vst.msk [vmem:[#allocation3 + $0x4] sm:$0xf] %vm340, 0
      %s343 = scalar_lea.vmem [#allocation3], 136
      %344 = vst.msk [vmem:[%s343] sm:$0xf] %vm340, 0
      %345 = vst.msk [vmem:[%s343 + $0x4] sm:$0xf] %vm340, 0
      %v346 = vld [vmem:[%s327] sm:$0xff]
      %v347 = vld [vmem:[%s327 + $0x8] sm:$0xff]
      %v348 = vld [vmem:[%s327 + $0x10] sm:$0xff]
      %v349 = vld [vmem:[%s327 + $0x18] sm:$0xff]
      %v350 = vld [vmem:[%s327 + $0x20] sm:$0xff]
      %v351 = vld [vmem:[%s327 + $0x28] sm:$0xff]
      %v352 = vld [vmem:[%s327 + $0x30] sm:$0xff]
      %v353 = vld [vmem:[%s327 + $0x38] sm:$0xff]
      %v354 = vld [vmem:[%s327 + $0x40] sm:$0xff]
      %v355 = vld [vmem:[%s327 + $0x48] sm:$0xff]
      %v356 = vld [vmem:[%s327 + $0x50] sm:$0xff]
      %v357 = vld [vmem:[%s327 + $0x58] sm:$0xff]
      %v358 = vld [vmem:[%s327 + $0x60] sm:$0xff]
      %v359 = vld [vmem:[%s327 + $0x68] sm:$0xff]
      %v360 = vld [vmem:[%s327 + $0x70] sm:$0xff]
      %v361 = vld [vmem:[%s327 + $0x78] sm:$0xff]
      %v362 = vld [vmem:[%s327 + $0x80] sm:$0xff]
      %v363 = vld [vmem:[%s327 + $0x88] sm:$0xff]
      %v364 = vld [vmem:[%s327 + $0x90] sm:$0xff]
      %v365 = vld [vmem:[%s327 + $0x98] sm:$0xff]
      %v366 = vld [vmem:[%s327 + $0xa0] sm:$0xff]
      %v367 = vld [vmem:[%s327 + $0xa8] sm:$0xff]
      %v368 = vld [vmem:[%s327 + $0xb0] sm:$0xff]
      %v369 = vld [vmem:[%s327 + $0xb8] sm:$0xff]
      %v370 = vld [vmem:[%s327 + $0xc0] sm:$0xff]
      %v371 = vld [vmem:[%s327 + $0xc8] sm:$0xff]
      %v372 = vld [vmem:[%s327 + $0xd0] sm:$0xff]
      %v373 = vld [vmem:[%s327 + $0xd8] sm:$0xff]
      %v374 = vld [vmem:[%s327 + $0xe0] sm:$0xff]
      %v375 = vld [vmem:[%s327 + $0xe8] sm:$0xff]
      %v376 = vld [vmem:[%s327 + $0xf0] sm:$0xff]
      %v377 = vld [vmem:[%s327 + $0xf8] sm:$0xff]
      %v378 = vld [vmem:[%s1] sm:$0x1]
      %v380 = vperm.slane %v378, 0
      %v382 = vmul.f32 %v346, %v380
      %v383 = vmul.f32 %v347, %v380
      %v384 = vmul.f32 %v348, %v380
      %v385 = vmul.f32 %v349, %v380
      %v386 = vmul.f32 %v350, %v380
      %v387 = vmul.f32 %v351, %v380
      %v388 = vmul.f32 %v352, %v380
      %v389 = vmul.f32 %v353, %v380
      %v390 = vmul.f32 %v354, %v380
      %v391 = vmul.f32 %v355, %v380
      %v392 = vmul.f32 %v356, %v380
      %v393 = vmul.f32 %v357, %v380
      %v394 = vmul.f32 %v358, %v380
      %v395 = vmul.f32 %v359, %v380
      %v396 = vmul.f32 %v360, %v380
      %v397 = vmul.f32 %v361, %v380
      %v398 = vmul.f32 %v362, %v380
      %v399 = vmul.f32 %v363, %v380
      %v400 = vmul.f32 %v364, %v380
      %v401 = vmul.f32 %v365, %v380
      %v402 = vmul.f32 %v366, %v380
      %v403 = vmul.f32 %v367, %v380
      %v404 = vmul.f32 %v368, %v380
      %v405 = vmul.f32 %v369, %v380
      %v406 = vmul.f32 %v370, %v380
      %v407 = vmul.f32 %v371, %v380
      %v408 = vmul.f32 %v372, %v380
      %v409 = vmul.f32 %v373, %v380
      %v410 = vmul.f32 %v374, %v380
      %v411 = vmul.f32 %v375, %v380
      %v412 = vmul.f32 %v376, %v380
      %v413 = vmul.f32 %v377, %v380
      %v414 = vld [vmem:[%s2] sm:$0x1]
      %v416 = vperm.slane %v414, 0
      %v418 = vadd.f32 %v382, %v416
      %v419 = vadd.f32 %v383, %v416
      %v420 = vadd.f32 %v384, %v416
      %v421 = vadd.f32 %v385, %v416
      %v422 = vadd.f32 %v386, %v416
      %v423 = vadd.f32 %v387, %v416
      %v424 = vadd.f32 %v388, %v416
      %v425 = vadd.f32 %v389, %v416
      %v426 = vadd.f32 %v390, %v416
      %v427 = vadd.f32 %v391, %v416
      %v428 = vadd.f32 %v392, %v416
      %v429 = vadd.f32 %v393, %v416
      %v430 = vadd.f32 %v394, %v416
      %v431 = vadd.f32 %v395, %v416
      %v432 = vadd.f32 %v396, %v416
      %v433 = vadd.f32 %v397, %v416
      %v434 = vadd.f32 %v398, %v416
      %v435 = vadd.f32 %v399, %v416
      %v436 = vadd.f32 %v400, %v416
      %v437 = vadd.f32 %v401, %v416
      %v438 = vadd.f32 %v402, %v416
      %v439 = vadd.f32 %v403, %v416
      %v440 = vadd.f32 %v404, %v416
      %v441 = vadd.f32 %v405, %v416
      %v442 = vadd.f32 %v406, %v416
      %v443 = vadd.f32 %v407, %v416
      %v444 = vadd.f32 %v408, %v416
      %v445 = vadd.f32 %v409, %v416
      %v446 = vadd.f32 %v410, %v416
      %v447 = vadd.f32 %v411, %v416
      %v448 = vadd.f32 %v412, %v416
      %v449 = vadd.f32 %v413, %v416
      %v450 = vmax.f32 %v418, 0.0
      %v451 = vmax.f32 %v419, 0.0
      %v452 = vmax.f32 %v420, 0.0
      %v453 = vmax.f32 %v421, 0.0
      %v454 = vmax.f32 %v422, 0.0
      %v455 = vmax.f32 %v423, 0.0
      %v456 = vmax.f32 %v424, 0.0
      %v457 = vmax.f32 %v425, 0.0
      %v458 = vmax.f32 %v426, 0.0
      %v459 = vmax.f32 %v427, 0.0
      %v460 = vmax.f32 %v428, 0.0
      %v461 = vmax.f32 %v429, 0.0
      %v462 = vmax.f32 %v430, 0.0
      %v463 = vmax.f32 %v431, 0.0
      %v464 = vmax.f32 %v432, 0.0
      %v465 = vmax.f32 %v433, 0.0
      %v466 = vmax.f32 %v434, 0.0
      %v467 = vmax.f32 %v435, 0.0
      %v468 = vmax.f32 %v436, 0.0
      %v469 = vmax.f32 %v437, 0.0
      %v470 = vmax.f32 %v438, 0.0
      %v471 = vmax.f32 %v439, 0.0
      %v472 = vmax.f32 %v440, 0.0
      %v473 = vmax.f32 %v441, 0.0
      %v474 = vmax.f32 %v442, 0.0
      %v475 = vmax.f32 %v443, 0.0
      %v476 = vmax.f32 %v444, 0.0
      %v477 = vmax.f32 %v445, 0.0
      %v478 = vmax.f32 %v446, 0.0
      %v479 = vmax.f32 %v447, 0.0
      %v480 = vmax.f32 %v448, 0.0
      %v481 = vmax.f32 %v449, 0.0
      %vm514 = vcmask 1040384
      %v515 = vrot.slane %v450, 7
      %v516 = vrot.slane %v451, 7
      %v517 = vsel %vm514, %v515, %v516
      %v518 = vrot.slane %v452, 7
      %v519 = vrot.slane %v453, 7
      %v520 = vsel %vm514, %v518, %v519
      %v521 = vrot.slane %v454, 7
      %v522 = vrot.slane %v455, 7
      %v523 = vsel %vm514, %v521, %v522
      %v524 = vrot.slane %v456, 7
      %v525 = vrot.slane %v457, 7
      %v526 = vsel %vm514, %v524, %v525
      %v527 = vrot.slane %v458, 7
      %v528 = vrot.slane %v459, 7
      %v529 = vsel %vm514, %v527, %v528
      %v530 = vrot.slane %v460, 7
      %v531 = vrot.slane %v461, 7
      %v532 = vsel %vm514, %v530, %v531
      %v533 = vrot.slane %v462, 7
      %v534 = vrot.slane %v463, 7
      %v535 = vsel %vm514, %v533, %v534
      %v536 = vrot.slane %v464, 7
      %v537 = vrot.slane %v465, 7
      %v538 = vsel %vm514, %v536, %v537
      %v539 = vrot.slane %v466, 7
      %v540 = vrot.slane %v467, 7
      %v541 = vsel %vm514, %v539, %v540
      %v542 = vrot.slane %v468, 7
      %v543 = vrot.slane %v469, 7
      %v544 = vsel %vm514, %v542, %v543
      %v545 = vrot.slane %v470, 7
      %v546 = vrot.slane %v471, 7
      %v547 = vsel %vm514, %v545, %v546
      %v548 = vrot.slane %v472, 7
      %v549 = vrot.slane %v473, 7
      %v550 = vsel %vm514, %v548, %v549
      %v551 = vrot.slane %v474, 7
      %v552 = vrot.slane %v475, 7
      %v553 = vsel %vm514, %v551, %v552
      %v554 = vrot.slane %v476, 7
      %v555 = vrot.slane %v477, 7
      %v556 = vsel %vm514, %v554, %v555
      %v557 = vrot.slane %v478, 7
      %v558 = vrot.slane %v479, 7
      %v559 = vsel %vm514, %v557, %v558
      %v560 = vrot.slane %v480, 7
      %v561 = vrot.slane %v481, 7
      %v562 = vsel %vm514, %v560, %v561
      %v595 = vsel %vm514, 0.0, %v515
      %v596 = vsel %vm514, 0.0, %v518
      %v597 = vsel %vm514, 0.0, %v521
      %v598 = vsel %vm514, 0.0, %v524
      %v599 = vsel %vm514, 0.0, %v527
      %v600 = vsel %vm514, 0.0, %v530
      %v601 = vsel %vm514, 0.0, %v533
      %v602 = vsel %vm514, 0.0, %v536
      %v603 = vsel %vm514, 0.0, %v539
      %v604 = vsel %vm514, 0.0, %v542
      %v605 = vsel %vm514, 0.0, %v545
      %v606 = vsel %vm514, 0.0, %v548
      %v607 = vsel %vm514, 0.0, %v551
      %v608 = vsel %vm514, 0.0, %v554
      %v609 = vsel %vm514, 0.0, %v557
      %v610 = vsel %vm514, 0.0, %v560
      %vm611 = vcmask 1046528
      %v612 = vrot.slane %v450, 1
      %v613 = vrot.slane %v451, 1
      %v614 = vsel %vm611, %v612, %v613
      %v615 = vrot.slane %v452, 1
      %v616 = vrot.slane %v453, 1
      %v617 = vsel %vm611, %v615, %v616
      %v618 = vrot.slane %v454, 1
      %v619 = vrot.slane %v455, 1
      %v620 = vsel %vm611, %v618, %v619
      %v621 = vrot.slane %v456, 1
      %v622 = vrot.slane %v457, 1
      %v623 = vsel %vm611, %v621, %v622
      %v624 = vrot.slane %v458, 1
      %v625 = vrot.slane %v459, 1
      %v626 = vsel %vm611, %v624, %v625
      %v627 = vrot.slane %v460, 1
      %v628 = vrot.slane %v461, 1
      %v629 = vsel %vm611, %v627, %v628
      %v630 = vrot.slane %v462, 1
      %v631 = vrot.slane %v463, 1
      %v632 = vsel %vm611, %v630, %v631
      %v633 = vrot.slane %v464, 1
      %v634 = vrot.slane %v465, 1
      %v635 = vsel %vm611, %v633, %v634
      %v636 = vrot.slane %v466, 1
      %v637 = vrot.slane %v467, 1
      %v638 = vsel %vm611, %v636, %v637
      %v639 = vrot.slane %v468, 1
      %v640 = vrot.slane %v469, 1
      %v641 = vsel %vm611, %v639, %v640
      %v642 = vrot.slane %v470, 1
      %v643 = vrot.slane %v471, 1
      %v644 = vsel %vm611, %v642, %v643
      %v645 = vrot.slane %v472, 1
      %v646 = vrot.slane %v473, 1
      %v647 = vsel %vm611, %v645, %v646
      %v648 = vrot.slane %v474, 1
      %v649 = vrot.slane %v475, 1
      %v650 = vsel %vm611, %v648, %v649
      %v651 = vrot.slane %v476, 1
      %v652 = vrot.slane %v477, 1
      %v653 = vsel %vm611, %v651, %v652
      %v654 = vrot.slane %v478, 1
      %v655 = vrot.slane %v479, 1
      %v656 = vsel %vm611, %v654, %v655
      %v657 = vrot.slane %v480, 1
      %v658 = vrot.slane %v481, 1
      %v659 = vsel %vm611, %v657, %v658
      %v676 = vsel %vm611, %v613, 0.0
      %v677 = vsel %vm611, %v616, 0.0
      %v678 = vsel %vm611, %v619, 0.0
      %v679 = vsel %vm611, %v622, 0.0
      %v680 = vsel %vm611, %v625, 0.0
      %v681 = vsel %vm611, %v628, 0.0
      %v682 = vsel %vm611, %v631, 0.0
      %v683 = vsel %vm611, %v634, 0.0
      %v684 = vsel %vm611, %v637, 0.0
      %v685 = vsel %vm611, %v640, 0.0
      %v686 = vsel %vm611, %v643, 0.0
      %v687 = vsel %vm611, %v646, 0.0
      %v688 = vsel %vm611, %v649, 0.0
      %v689 = vsel %vm611, %v652, 0.0
      %v690 = vsel %vm611, %v655, 0.0
      %v691 = vsel %vm611, %v658, 0.0
      %692 = vrot.lane.b32.xlu0 %v450, 4
      %v693 = vpop.permute.xlu0 %692
      %694 = vrot.lane.b32.xlu0 %v451, 4
      %v695 = vpop.permute.xlu0 %694
      %696 = vrot.lane.b32.xlu0 %v452, 4
      %v697 = vpop.permute.xlu0 %696
      %698 = vrot.lane.b32.xlu0 %v453, 4
      %v699 = vpop.permute.xlu0 %698
      %700 = vrot.lane.b32.xlu0 %v454, 4
      %v701 = vpop.permute.xlu0 %700
      %702 = vrot.lane.b32.xlu0 %v455, 4
      %v703 = vpop.permute.xlu0 %702
      %704 = vrot.lane.b32.xlu0 %v456, 4
      %v705 = vpop.permute.xlu0 %704
      %706 = vrot.lane.b32.xlu0 %v457, 4
      %v707 = vpop.permute.xlu0 %706
      %708 = vrot.lane.b32.xlu0 %v458, 4
      %v709 = vpop.permute.xlu0 %708
      %710 = vrot.lane.b32.xlu0 %v459, 4
      %v711 = vpop.permute.xlu0 %710
      %712 = vrot.lane.b32.xlu0 %v460, 4
      %v713 = vpop.permute.xlu0 %712
      %714 = vrot.lane.b32.xlu0 %v461, 4
      %v715 = vpop.permute.xlu0 %714
      %716 = vrot.lane.b32.xlu0 %v462, 4
      %v717 = vpop.permute.xlu0 %716
      %718 = vrot.lane.b32.xlu0 %v463, 4
      %v719 = vpop.permute.xlu0 %718
      %720 = vrot.lane.b32.xlu0 %v464, 4
      %v721 = vpop.permute.xlu0 %720
      %722 = vrot.lane.b32.xlu0 %v465, 4
      %v723 = vpop.permute.xlu0 %722
      %724 = vrot.lane.b32.xlu0 %v466, 4
      %v725 = vpop.permute.xlu0 %724
      %726 = vrot.lane.b32.xlu0 %v467, 4
      %v727 = vpop.permute.xlu0 %726
      %728 = vrot.lane.b32.xlu0 %v468, 4
      %v729 = vpop.permute.xlu0 %728
      %730 = vrot.lane.b32.xlu0 %v469, 4
      %v731 = vpop.permute.xlu0 %730
      %732 = vrot.lane.b32.xlu0 %v470, 4
      %v733 = vpop.permute.xlu0 %732
      %734 = vrot.lane.b32.xlu0 %v471, 4
      %v735 = vpop.permute.xlu0 %734
      %736 = vrot.lane.b32.xlu0 %v472, 4
      %v737 = vpop.permute.xlu0 %736
      %738 = vrot.lane.b32.xlu0 %v473, 4
      %v739 = vpop.permute.xlu0 %738
      %740 = vrot.lane.b32.xlu0 %v474, 4
      %v741 = vpop.permute.xlu0 %740
      %742 = vrot.lane.b32.xlu0 %v475, 4
      %v743 = vpop.permute.xlu0 %742
      %744 = vrot.lane.b32.xlu0 %v476, 4
      %v745 = vpop.permute.xlu0 %744
      %746 = vrot.lane.b32.xlu0 %v477, 4
      %v747 = vpop.permute.xlu0 %746
      %748 = vrot.lane.b32.xlu0 %v478, 4
      %v749 = vpop.permute.xlu0 %748
      %750 = vrot.lane.b32.xlu0 %v479, 4
      %v751 = vpop.permute.xlu0 %750
      %752 = vrot.lane.b32.xlu0 %v480, 4
      %v753 = vpop.permute.xlu0 %752
      %754 = vrot.lane.b32.xlu0 %v481, 4
      %v755 = vpop.permute.xlu0 %754
      %804 = vrot.lane.b32.xlu0 %v614, 8
      %v805 = vpop.permute.xlu0 %804
      %806 = vrot.lane.b32.xlu0 %v676, 8
      %v807 = vpop.permute.xlu0 %806
      %808 = vrot.lane.b32.xlu0 %v617, 8
      %v809 = vpop.permute.xlu0 %808
      %810 = vrot.lane.b32.xlu0 %v677, 8
      %v811 = vpop.permute.xlu0 %810
      %812 = vrot.lane.b32.xlu0 %v620, 8
      %v813 = vpop.permute.xlu0 %812
      %814 = vrot.lane.b32.xlu0 %v678, 8
      %v815 = vpop.permute.xlu0 %814
      %816 = vrot.lane.b32.xlu0 %v623, 8
      %v817 = vpop.permute.xlu0 %816
      %818 = vrot.lane.b32.xlu0 %v679, 8
      %v819 = vpop.permute.xlu0 %818
      %820 = vrot.lane.b32.xlu0 %v626, 8
      %v821 = vpop.permute.xlu0 %820
      %822 = vrot.lane.b32.xlu0 %v680, 8
      %v823 = vpop.permute.xlu0 %822
      %824 = vrot.lane.b32.xlu0 %v629, 8
      %v825 = vpop.permute.xlu0 %824
      %826 = vrot.lane.b32.xlu0 %v681, 8
      %v827 = vpop.permute.xlu0 %826
      %828 = vrot.lane.b32.xlu0 %v632, 8
      %v829 = vpop.permute.xlu0 %828
      %830 = vrot.lane.b32.xlu0 %v682, 8
      %v831 = vpop.permute.xlu0 %830
      %832 = vrot.lane.b32.xlu0 %v635, 8
      %v833 = vpop.permute.xlu0 %832
      %834 = vrot.lane.b32.xlu0 %v683, 8
      %v835 = vpop.permute.xlu0 %834
      %836 = vrot.lane.b32.xlu0 %v638, 8
      %v837 = vpop.permute.xlu0 %836
      %838 = vrot.lane.b32.xlu0 %v684, 8
      %v839 = vpop.permute.xlu0 %838
      %840 = vrot.lane.b32.xlu0 %v641, 8
      %v841 = vpop.permute.xlu0 %840
      %842 = vrot.lane.b32.xlu0 %v685, 8
      %v843 = vpop.permute.xlu0 %842
      %844 = vrot.lane.b32.xlu0 %v644, 8
      %v845 = vpop.permute.xlu0 %844
      %846 = vrot.lane.b32.xlu0 %v686, 8
      %v847 = vpop.permute.xlu0 %846
      %848 = vrot.lane.b32.xlu0 %v647, 8
      %v849 = vpop.permute.xlu0 %848
      %850 = vrot.lane.b32.xlu0 %v687, 8
      %v851 = vpop.permute.xlu0 %850
      %852 = vrot.lane.b32.xlu0 %v650, 8
      %v853 = vpop.permute.xlu0 %852
      %854 = vrot.lane.b32.xlu0 %v688, 8
      %v855 = vpop.permute.xlu0 %854
      %856 = vrot.lane.b32.xlu0 %v653, 8
      %v857 = vpop.permute.xlu0 %856
      %858 = vrot.lane.b32.xlu0 %v689, 8
      %v859 = vpop.permute.xlu0 %858
      %860 = vrot.lane.b32.xlu0 %v656, 8
      %v861 = vpop.permute.xlu0 %860
      %862 = vrot.lane.b32.xlu0 %v690, 8
      %v863 = vpop.permute.xlu0 %862
      %864 = vrot.lane.b32.xlu0 %v659, 8
      %v865 = vpop.permute.xlu0 %864
      %866 = vrot.lane.b32.xlu0 %v691, 8
      %v867 = vpop.permute.xlu0 %866
      %vm900 = vcmask 31744
      %v901 = vsel %vm900, %v595, %v693
      %v902 = vsel %vm900, %v517, %v695
      %v903 = vsel %vm900, %v596, %v697
      %v904 = vsel %vm900, %v520, %v699
      %v905 = vsel %vm900, %v597, %v701
      %v906 = vsel %vm900, %v523, %v703
      %v907 = vsel %vm900, %v598, %v705
      %v908 = vsel %vm900, %v526, %v707
      %v909 = vsel %vm900, %v599, %v709
      %v910 = vsel %vm900, %v529, %v711
      %v911 = vsel %vm900, %v600, %v713
      %v912 = vsel %vm900, %v532, %v715
      %v913 = vsel %vm900, %v601, %v717
      %v914 = vsel %vm900, %v535, %v719
      %v915 = vsel %vm900, %v602, %v721
      %v916 = vsel %vm900, %v538, %v723
      %v917 = vsel %vm900, %v603, %v725
      %v918 = vsel %vm900, %v541, %v727
      %v919 = vsel %vm900, %v604, %v729
      %v920 = vsel %vm900, %v544, %v731
      %v921 = vsel %vm900, %v605, %v733
      %v922 = vsel %vm900, %v547, %v735
      %v923 = vsel %vm900, %v606, %v737
      %v924 = vsel %vm900, %v550, %v739
      %v925 = vsel %vm900, %v607, %v741
      %v926 = vsel %vm900, %v553, %v743
      %v927 = vsel %vm900, %v608, %v745
      %v928 = vsel %vm900, %v556, %v747
      %v929 = vsel %vm900, %v609, %v749
      %v930 = vsel %vm900, %v559, %v751
      %v931 = vsel %vm900, %v610, %v753
      %v932 = vsel %vm900, %v562, %v755
      %vm933 = vcmask 64512
      %v934 = vsel %vm933, %v901, %v805
      %v935 = vsel %vm933, %v902, %v807
      %v936 = vsel %vm933, %v903, %v809
      %v937 = vsel %vm933, %v904, %v811
      %v938 = vsel %vm933, %v905, %v813
      %v939 = vsel %vm933, %v906, %v815
      %v940 = vsel %vm933, %v907, %v817
      %v941 = vsel %vm933, %v908, %v819
      %v942 = vsel %vm933, %v909, %v821
      %v943 = vsel %vm933, %v910, %v823
      %v944 = vsel %vm933, %v911, %v825
      %v945 = vsel %vm933, %v912, %v827
      %v946 = vsel %vm933, %v913, %v829
      %v947 = vsel %vm933, %v914, %v831
      %v948 = vsel %vm933, %v915, %v833
      %v949 = vsel %vm933, %v916, %v835
      %v950 = vsel %vm933, %v917, %v837
      %v951 = vsel %vm933, %v918, %v839
      %v952 = vsel %vm933, %v919, %v841
      %v953 = vsel %vm933, %v920, %v843
      %v954 = vsel %vm933, %v921, %v845
      %v955 = vsel %vm933, %v922, %v847
      %v956 = vsel %vm933, %v923, %v849
      %v957 = vsel %vm933, %v924, %v851
      %v958 = vsel %vm933, %v925, %v853
      %v959 = vsel %vm933, %v926, %v855
      %v960 = vsel %vm933, %v927, %v857
      %v961 = vsel %vm933, %v928, %v859
      %v962 = vsel %vm933, %v929, %v861
      %v963 = vsel %vm933, %v930, %v863
      %v964 = vsel %vm933, %v931, %v865
      %v965 = vsel %vm933, %v932, %v867
      %v966 = vpack.c.bf16 %v934, %v934
      %v967 = vpack.c.bf16 %v935, %v935
      %v968 = vpack.c.bf16 %v936, %v936
      %v969 = vpack.c.bf16 %v937, %v937
      %v970 = vpack.c.bf16 %v938, %v938
      %v971 = vpack.c.bf16 %v939, %v939
      %v972 = vpack.c.bf16 %v940, %v940
      %v973 = vpack.c.bf16 %v941, %v941
      %v974 = vpack.c.bf16 %v942, %v942
      %v975 = vpack.c.bf16 %v943, %v943
      %v976 = vpack.c.bf16 %v944, %v944
      %v977 = vpack.c.bf16 %v945, %v945
      %v978 = vpack.c.bf16 %v946, %v946
      %v979 = vpack.c.bf16 %v947, %v947
      %v980 = vpack.c.bf16 %v948, %v948
      %v981 = vpack.c.bf16 %v949, %v949
      %v982 = vpack.c.bf16 %v950, %v950
      %v983 = vpack.c.bf16 %v951, %v951
      %v984 = vpack.c.bf16 %v952, %v952
      %v985 = vpack.c.bf16 %v953, %v953
      %v986 = vpack.c.bf16 %v954, %v954
      %v987 = vpack.c.bf16 %v955, %v955
      %v988 = vpack.c.bf16 %v956, %v956
      %v989 = vpack.c.bf16 %v957, %v957
      %v990 = vpack.c.bf16 %v958, %v958
      %v991 = vpack.c.bf16 %v959, %v959
      %v992 = vpack.c.bf16 %v960, %v960
      %v993 = vpack.c.bf16 %v961, %v961
      %v994 = vpack.c.bf16 %v962, %v962
      %v995 = vpack.c.bf16 %v963, %v963
      %v996 = vpack.c.bf16 %v964, %v964
      %v997 = vpack.c.bf16 %v965, %v965
      %s998 = scalar_lea.vmem [#allocation2], 8
      %999 = vst.msk [vmem:[%s998] sm:$0xf] %vm334, %v966
      %1000 = vst.msk [vmem:[%s998 + $0x4] sm:$0xf] %vm334, %v967
      %1001 = vst.msk [vmem:[%s998 + $0x8] sm:$0xf] %vm334, %v968
      %1002 = vst.msk [vmem:[%s998 + $0xc] sm:$0xf] %vm334, %v969
      %1003 = vst.msk [vmem:[%s998 + $0x10] sm:$0xf] %vm334, %v970
      %1004 = vst.msk [vmem:[%s998 + $0x14] sm:$0xf] %vm334, %v971
      %1005 = vst.msk [vmem:[%s998 + $0x18] sm:$0xf] %vm334, %v972
      %1006 = vst.msk [vmem:[%s998 + $0x1c] sm:$0xf] %vm334, %v973
      %1007 = vst.msk [vmem:[%s998 + $0x20] sm:$0xf] %vm334, %v974
      %1008 = vst.msk [vmem:[%s998 + $0x24] sm:$0xf] %vm334, %v975
      %1009 = vst.msk [vmem:[%s998 + $0x28] sm:$0xf] %vm334, %v976
      %1010 = vst.msk [vmem:[%s998 + $0x2c] sm:$0xf] %vm334, %v977
      %1011 = vst.msk [vmem:[%s998 + $0x30] sm:$0xf] %vm334, %v978
      %1012 = vst.msk [vmem:[%s998 + $0x34] sm:$0xf] %vm334, %v979
      %1013 = vst.msk [vmem:[%s998 + $0x38] sm:$0xf] %vm334, %v980
      %1014 = vst.msk [vmem:[%s998 + $0x3c] sm:$0xf] %vm334, %v981
      %1015 = vst.msk [vmem:[%s998 + $0x40] sm:$0xf] %vm334, %v982
      %1016 = vst.msk [vmem:[%s998 + $0x44] sm:$0xf] %vm334, %v983
      %1017 = vst.msk [vmem:[%s998 + $0x48] sm:$0xf] %vm334, %v984
      %1018 = vst.msk [vmem:[%s998 + $0x4c] sm:$0xf] %vm334, %v985
      %1019 = vst.msk [vmem:[%s998 + $0x50] sm:$0xf] %vm334, %v986
      %1020 = vst.msk [vmem:[%s998 + $0x54] sm:$0xf] %vm334, %v987
      %1021 = vst.msk [vmem:[%s998 + $0x58] sm:$0xf] %vm334, %v988
      %1022 = vst.msk [vmem:[%s998 + $0x5c] sm:$0xf] %vm334, %v989
      %1023 = vst.msk [vmem:[%s998 + $0x60] sm:$0xf] %vm334, %v990
      %1024 = vst.msk [vmem:[%s998 + $0x64] sm:$0xf] %vm334, %v991
      %1025 = vst.msk [vmem:[%s998 + $0x68] sm:$0xf] %vm334, %v992
      %1026 = vst.msk [vmem:[%s998 + $0x6c] sm:$0xf] %vm334, %v993
      %1027 = vst.msk [vmem:[%s998 + $0x70] sm:$0xf] %vm334, %v994
      %1028 = vst.msk [vmem:[%s998 + $0x74] sm:$0xf] %vm334, %v995
      %1029 = vst.msk [vmem:[%s998 + $0x78] sm:$0xf] %vm334, %v996
      %1030 = vst.msk [vmem:[%s998 + $0x7c] sm:$0xf] %vm334, %v997
      %v1031 = vld [vmem:[#allocation2] sm:$0xf]
      %v1032 = vld [vmem:[#allocation2 + $0x4] sm:$0xf]
      %v1033 = vld [vmem:[#allocation2 + $0x8] sm:$0xf]
      %v1034 = vld [vmem:[#allocation2 + $0xc] sm:$0xf]
      %v1035 = vld [vmem:[#allocation2 + $0x10] sm:$0xf]
      %v1036 = vld [vmem:[#allocation2 + $0x14] sm:$0xf]
      %v1037 = vld [vmem:[#allocation2 + $0x18] sm:$0xf]
      %v1038 = vld [vmem:[#allocation2 + $0x1c] sm:$0xf]
      %v1039 = vld [vmem:[#allocation2 + $0x20] sm:$0xf]
      %v1040 = vld [vmem:[#allocation2 + $0x24] sm:$0xf]
      %v1041 = vld [vmem:[#allocation2 + $0x28] sm:$0xf]
      %v1042 = vld [vmem:[#allocation2 + $0x2c] sm:$0xf]
      %v1043 = vld [vmem:[#allocation2 + $0x30] sm:$0xf]
      %v1044 = vld [vmem:[#allocation2 + $0x34] sm:$0xf]
      %v1045 = vld [vmem:[#allocation2 + $0x38] sm:$0xf]
      %v1046 = vld [vmem:[#allocation2 + $0x3c] sm:$0xf]
      %v1047 = vld [vmem:[#allocation2 + $0x40] sm:$0xf]
      %v1048 = vld [vmem:[#allocation2 + $0x44] sm:$0xf]
      %v1049 = vld [vmem:[#allocation2 + $0x48] sm:$0xf]
      %v1050 = vld [vmem:[#allocation2 + $0x4c] sm:$0xf]
      %v1051 = vld [vmem:[#allocation2 + $0x50] sm:$0xf]
      %v1052 = vld [vmem:[#allocation2 + $0x54] sm:$0xf]
      %v1053 = vld [vmem:[#allocation2 + $0x58] sm:$0xf]
      %v1054 = vld [vmem:[#allocation2 + $0x5c] sm:$0xf]
      %v1055 = vld [vmem:[#allocation2 + $0x60] sm:$0xf]
      %v1056 = vld [vmem:[#allocation2 + $0x64] sm:$0xf]
      %v1057 = vld [vmem:[#allocation2 + $0x68] sm:$0xf]
      %v1058 = vld [vmem:[#allocation2 + $0x6c] sm:$0xf]
      %v1059 = vld [vmem:[#allocation2 + $0x70] sm:$0xf]
      %v1060 = vld [vmem:[#allocation2 + $0x74] sm:$0xf]
      %v1061 = vld [vmem:[#allocation2 + $0x78] sm:$0xf]
      %v1062 = vld [vmem:[#allocation2 + $0x7c] sm:$0xf]
      %v1063 = vld [vmem:[%s3] sm:$0xf]
      %v1064 = vld [vmem:[%s3 + $0x4] sm:$0x3]
      %v1065 = vld [vmem:[%s998] sm:$0xf]
      %v1066 = vld [vmem:[%s998 + $0x4] sm:$0xf]
      %v1067 = vld [vmem:[%s998 + $0x8] sm:$0xf]
      %v1068 = vld [vmem:[%s998 + $0xc] sm:$0xf]
      %v1069 = vld [vmem:[%s998 + $0x10] sm:$0xf]
      %v1070 = vld [vmem:[%s998 + $0x14] sm:$0xf]
      %v1071 = vld [vmem:[%s998 + $0x18] sm:$0xf]
      %v1072 = vld [vmem:[%s998 + $0x1c] sm:$0xf]
      %v1073 = vld [vmem:[%s998 + $0x20] sm:$0xf]
      %v1074 = vld [vmem:[%s998 + $0x24] sm:$0xf]
      %v1075 = vld [vmem:[%s998 + $0x28] sm:$0xf]
      %v1076 = vld [vmem:[%s998 + $0x2c] sm:$0xf]
      %v1077 = vld [vmem:[%s998 + $0x30] sm:$0xf]
      %v1078 = vld [vmem:[%s998 + $0x34] sm:$0xf]
      %v1079 = vld [vmem:[%s998 + $0x38] sm:$0xf]
      %v1080 = vld [vmem:[%s998 + $0x3c] sm:$0xf]
      %v1081 = vld [vmem:[%s998 + $0x40] sm:$0xf]
      %v1082 = vld [vmem:[%s998 + $0x44] sm:$0xf]
      %v1083 = vld [vmem:[%s998 + $0x48] sm:$0xf]
      %v1084 = vld [vmem:[%s998 + $0x4c] sm:$0xf]
      %v1085 = vld [vmem:[%s998 + $0x50] sm:$0xf]
      %v1086 = vld [vmem:[%s998 + $0x54] sm:$0xf]
      %v1087 = vld [vmem:[%s998 + $0x58] sm:$0xf]
      %v1088 = vld [vmem:[%s998 + $0x5c] sm:$0xf]
      %v1089 = vld [vmem:[%s998 + $0x60] sm:$0xf]
      %v1090 = vld [vmem:[%s998 + $0x64] sm:$0xf]
      %v1091 = vld [vmem:[%s998 + $0x68] sm:$0xf]
      %v1092 = vld [vmem:[%s998 + $0x6c] sm:$0xf]
      %v1093 = vld [vmem:[%s998 + $0x70] sm:$0xf]
      %v1094 = vld [vmem:[%s998 + $0x74] sm:$0xf]
      %v1095 = vld [vmem:[%s998 + $0x78] sm:$0xf]
      %v1096 = vld [vmem:[%s998 + $0x7c] sm:$0xf]
      %s1097 = scalar_lea.vmem %s3, 8
      %v1098 = vld [vmem:[%s1097] sm:$0xf]
      %v1099 = vld [vmem:[%s1097 + $0x4] sm:$0x3]
      %v1132 = vunpack.c.l.b16 %v1065
      %v1133 = vunpack.c.l.b16 %v1066
      %v1134 = vunpack.c.l.b16 %v1067
      %v1135 = vunpack.c.l.b16 %v1068
      %v1136 = vunpack.c.l.b16 %v1069
      %v1137 = vunpack.c.l.b16 %v1070
      %v1138 = vunpack.c.l.b16 %v1071
      %v1139 = vunpack.c.l.b16 %v1072
      %v1140 = vunpack.c.l.b16 %v1073
      %v1141 = vunpack.c.l.b16 %v1074
      %v1142 = vunpack.c.l.b16 %v1075
      %v1143 = vunpack.c.l.b16 %v1076
      %v1144 = vunpack.c.l.b16 %v1077
      %v1145 = vunpack.c.l.b16 %v1078
      %v1146 = vunpack.c.l.b16 %v1079
      %v1147 = vunpack.c.l.b16 %v1080
      %v1148 = vunpack.c.l.b16 %v1081
      %v1149 = vunpack.c.l.b16 %v1082
      %v1150 = vunpack.c.l.b16 %v1083
      %v1151 = vunpack.c.l.b16 %v1084
      %v1152 = vunpack.c.l.b16 %v1085
      %v1153 = vunpack.c.l.b16 %v1086
      %v1154 = vunpack.c.l.b16 %v1087
      %v1155 = vunpack.c.l.b16 %v1088
      %v1156 = vunpack.c.l.b16 %v1089
      %v1157 = vunpack.c.l.b16 %v1090
      %v1158 = vunpack.c.l.b16 %v1091
      %v1159 = vunpack.c.l.b16 %v1092
      %v1160 = vunpack.c.l.b16 %v1093
      %v1161 = vunpack.c.l.b16 %v1094
      %v1162 = vunpack.c.l.b16 %v1095
      %v1163 = vunpack.c.l.b16 %v1096
      %v1164 = vpack.c.b16 %v1133, %v1132
      %v1165 = vpack.c.b16 %v1135, %v1134
      %v1166 = vpack.c.b16 %v1137, %v1136
      %v1167 = vpack.c.b16 %v1139, %v1138
      %v1168 = vpack.c.b16 %v1141, %v1140
      %v1169 = vpack.c.b16 %v1143, %v1142
      %v1170 = vpack.c.b16 %v1145, %v1144
      %v1171 = vpack.c.b16 %v1147, %v1146
      %v1172 = vpack.c.b16 %v1149, %v1148
      %v1173 = vpack.c.b16 %v1151, %v1150
      %v1174 = vpack.c.b16 %v1153, %v1152
      %v1175 = vpack.c.b16 %v1155, %v1154
      %v1176 = vpack.c.b16 %v1157, %v1156
      %v1177 = vpack.c.b16 %v1159, %v1158
      %v1178 = vpack.c.b16 %v1161, %v1160
      %v1179 = vpack.c.b16 %v1163, %v1162
      %v1182 = vunpack.c.l.b16 %v1098
      %v1183 = vunpack.c.l.b16 %v1099
      %v1184 = vpack.c.b16 %v1183, %v1182
      %vm1185 = vcmask 97280
      %v1187 = vsel %vm1185, %v1164, 0
      %v1190 = vsel %vm1185, %v1165, 0
      %v1193 = vsel %vm1185, %v1166, 0
      %v1196 = vsel %vm1185, %v1167, 0
      %v1199 = vsel %vm1185, %v1168, 0
      %v1202 = vsel %vm1185, %v1169, 0
      %v1205 = vsel %vm1185, %v1170, 0
      %v1208 = vsel %vm1185, %v1171, 0
      %v1211 = vsel %vm1185, %v1172, 0
      %v1214 = vsel %vm1185, %v1173, 0
      %v1217 = vsel %vm1185, %v1174, 0
      %v1220 = vsel %vm1185, %v1175, 0
      %v1223 = vsel %vm1185, %v1176, 0
      %v1226 = vsel %vm1185, %v1177, 0
      %v1229 = vsel %vm1185, %v1178, 0
      %v1232 = vsel %vm1185, %v1179, 0
      %vm1234 = vcmask 1045504
      %v1236 = vsel %vm1234, %v1184, 0
      %1238 = vmatpush.bf16.msra.mxu0 0
      %1239 = vmatpush.bf16.msra.mxu0 0
      %1240 = vmatpush.bf16.msra.mxu0 0
      %1241 = vmatpush.bf16.msra.mxu0 0
      %1242 = vmatpush.bf16.msra.mxu0 0
      %1243 = vmatpush.bf16.msra.mxu0 0
      %1244 = vmatpush.bf16.msra.mxu0 0
      %1245 = vmatpush.bf16.msra.mxu0 %v1236
      %1246 = vmatmul.bf16.gmra.mxu0 %v1187
      %v1247 = vpop.f32.mrf.mxu0
      %v1248 = vadd.f32 0.0, %v1247
      %v1249 = vpop.f32.mrf.mxu0
      %v1250 = vadd.f32 0.0, %v1249
      %1251 = vmatmul.bf16.gmra.mxu0 %v1190
      %v1252 = vpop.f32.mrf.mxu0
      %v1253 = vadd.f32 0.0, %v1252
      %v1254 = vpop.f32.mrf.mxu0
      %v1255 = vadd.f32 0.0, %v1254
      %1256 = vmatmul.bf16.gmra.mxu0 %v1193
      %v1257 = vpop.f32.mrf.mxu0
      %v1258 = vadd.f32 0.0, %v1257
      %v1259 = vpop.f32.mrf.mxu0
      %v1260 = vadd.f32 0.0, %v1259
      %1261 = vmatmul.bf16.gmra.mxu0 %v1196
      %v1262 = vpop.f32.mrf.mxu0
      %v1263 = vadd.f32 0.0, %v1262
      %v1264 = vpop.f32.mrf.mxu0
      %v1265 = vadd.f32 0.0, %v1264
      %1266 = vmatmul.bf16.gmra.mxu0 %v1199
      %v1267 = vpop.f32.mrf.mxu0
      %v1268 = vadd.f32 0.0, %v1267
      %v1269 = vpop.f32.mrf.mxu0
      %v1270 = vadd.f32 0.0, %v1269
      %1271 = vmatmul.bf16.gmra.mxu0 %v1202
      %v1272 = vpop.f32.mrf.mxu0
      %v1273 = vadd.f32 0.0, %v1272
      %v1274 = vpop.f32.mrf.mxu0
      %v1275 = vadd.f32 0.0, %v1274
      %1276 = vmatmul.bf16.gmra.mxu0 %v1205
      %v1277 = vpop.f32.mrf.mxu0
      %v1278 = vadd.f32 0.0, %v1277
      %v1279 = vpop.f32.mrf.mxu0
      %v1280 = vadd.f32 0.0, %v1279
      %1281 = vmatmul.bf16.gmra.mxu0 %v1208
      %v1282 = vpop.f32.mrf.mxu0
      %v1283 = vadd.f32 0.0, %v1282
      %v1284 = vpop.f32.mrf.mxu0
      %v1285 = vadd.f32 0.0, %v1284
      %1286 = vmatmul.bf16.gmra.mxu0 %v1211
      %v1287 = vpop.f32.mrf.mxu0
      %v1288 = vadd.f32 0.0, %v1287
      %v1289 = vpop.f32.mrf.mxu0
      %v1290 = vadd.f32 0.0, %v1289
      %1291 = vmatmul.bf16.gmra.mxu0 %v1214
      %v1292 = vpop.f32.mrf.mxu0
      %v1293 = vadd.f32 0.0, %v1292
      %v1294 = vpop.f32.mrf.mxu0
      %v1295 = vadd.f32 0.0, %v1294
      %1296 = vmatmul.bf16.gmra.mxu0 %v1217
      %v1297 = vpop.f32.mrf.mxu0
      %v1298 = vadd.f32 0.0, %v1297
      %v1299 = vpop.f32.mrf.mxu0
      %v1300 = vadd.f32 0.0, %v1299
      %1301 = vmatmul.bf16.gmra.mxu0 %v1220
      %v1302 = vpop.f32.mrf.mxu0
      %v1303 = vadd.f32 0.0, %v1302
      %v1304 = vpop.f32.mrf.mxu0
      %v1305 = vadd.f32 0.0, %v1304
      %1306 = vmatmul.bf16.gmra.mxu0 %v1223
      %v1307 = vpop.f32.mrf.mxu0
      %v1308 = vadd.f32 0.0, %v1307
      %v1309 = vpop.f32.mrf.mxu0
      %v1310 = vadd.f32 0.0, %v1309
      %1311 = vmatmul.bf16.gmra.mxu0 %v1226
      %v1312 = vpop.f32.mrf.mxu0
      %v1313 = vadd.f32 0.0, %v1312
      %v1314 = vpop.f32.mrf.mxu0
      %v1315 = vadd.f32 0.0, %v1314
      %1316 = vmatmul.bf16.gmra.mxu0 %v1229
      %v1317 = vpop.f32.mrf.mxu0
      %v1318 = vadd.f32 0.0, %v1317
      %v1319 = vpop.f32.mrf.mxu0
      %v1320 = vadd.f32 0.0, %v1319
      %1321 = vmatmul.bf16.gmra.mxu0 %v1232
      %v1322 = vpop.f32.mrf.mxu0
      %v1323 = vadd.f32 0.0, %v1322
      %v1324 = vpop.f32.mrf.mxu0
      %v1325 = vadd.f32 0.0, %v1324
      %1326 = vdwg.mxu0
      %v1359 = vunpack.c.l.b16 %v1031
      %v1360 = vunpack.c.l.b16 %v1032
      %v1361 = vunpack.c.l.b16 %v1033
      %v1362 = vunpack.c.l.b16 %v1034
      %v1363 = vunpack.c.l.b16 %v1035
      %v1364 = vunpack.c.l.b16 %v1036
      %v1365 = vunpack.c.l.b16 %v1037
      %v1366 = vunpack.c.l.b16 %v1038
      %v1367 = vunpack.c.l.b16 %v1039
      %v1368 = vunpack.c.l.b16 %v1040
      %v1369 = vunpack.c.l.b16 %v1041
      %v1370 = vunpack.c.l.b16 %v1042
      %v1371 = vunpack.c.l.b16 %v1043
      %v1372 = vunpack.c.l.b16 %v1044
      %v1373 = vunpack.c.l.b16 %v1045
      %v1374 = vunpack.c.l.b16 %v1046
      %v1375 = vunpack.c.l.b16 %v1047
      %v1376 = vunpack.c.l.b16 %v1048
      %v1377 = vunpack.c.l.b16 %v1049
      %v1378 = vunpack.c.l.b16 %v1050
      %v1379 = vunpack.c.l.b16 %v1051
      %v1380 = vunpack.c.l.b16 %v1052
      %v1381 = vunpack.c.l.b16 %v1053
      %v1382 = vunpack.c.l.b16 %v1054
      %v1383 = vunpack.c.l.b16 %v1055
      %v1384 = vunpack.c.l.b16 %v1056
      %v1385 = vunpack.c.l.b16 %v1057
      %v1386 = vunpack.c.l.b16 %v1058
      %v1387 = vunpack.c.l.b16 %v1059
      %v1388 = vunpack.c.l.b16 %v1060
      %v1389 = vunpack.c.l.b16 %v1061
      %v1390 = vunpack.c.l.b16 %v1062
      %v1391 = vpack.c.b16 %v1360, %v1359
      %v1392 = vpack.c.b16 %v1362, %v1361
      %v1393 = vpack.c.b16 %v1364, %v1363
      %v1394 = vpack.c.b16 %v1366, %v1365
      %v1395 = vpack.c.b16 %v1368, %v1367
      %v1396 = vpack.c.b16 %v1370, %v1369
      %v1397 = vpack.c.b16 %v1372, %v1371
      %v1398 = vpack.c.b16 %v1374, %v1373
      %v1399 = vpack.c.b16 %v1376, %v1375
      %v1400 = vpack.c.b16 %v1378, %v1377
      %v1401 = vpack.c.b16 %v1380, %v1379
      %v1402 = vpack.c.b16 %v1382, %v1381
      %v1403 = vpack.c.b16 %v1384, %v1383
      %v1404 = vpack.c.b16 %v1386, %v1385
      %v1405 = vpack.c.b16 %v1388, %v1387
      %v1406 = vpack.c.b16 %v1390, %v1389
      %v1409 = vunpack.c.l.b16 %v1063
      %v1410 = vunpack.c.l.b16 %v1064
      %v1411 = vpack.c.b16 %v1410, %v1409
      %v1413 = vsel %vm1185, %v1391, 0
      %v1416 = vsel %vm1185, %v1392, 0
      %v1419 = vsel %vm1185, %v1393, 0
      %v1422 = vsel %vm1185, %v1394, 0
      %v1425 = vsel %vm1185, %v1395, 0
      %v1428 = vsel %vm1185, %v1396, 0
      %v1431 = vsel %vm1185, %v1397, 0
      %v1434 = vsel %vm1185, %v1398, 0
      %v1437 = vsel %vm1185, %v1399, 0
      %v1440 = vsel %vm1185, %v1400, 0
      %v1443 = vsel %vm1185, %v1401, 0
      %v1446 = vsel %vm1185, %v1402, 0
      %v1449 = vsel %vm1185, %v1403, 0
      %v1452 = vsel %vm1185, %v1404, 0
      %v1455 = vsel %vm1185, %v1405, 0
      %v1458 = vsel %vm1185, %v1406, 0
      %v1461 = vsel %vm1234, %v1411, 0
      %1463 = vmatpush.bf16.msra.mxu0 0
      %1464 = vmatpush.bf16.msra.mxu0 0
      %1465 = vmatpush.bf16.msra.mxu0 0
      %1466 = vmatpush.bf16.msra.mxu0 0
      %1467 = vmatpush.bf16.msra.mxu0 0
      %1468 = vmatpush.bf16.msra.mxu0 0
      %1469 = vmatpush.bf16.msra.mxu0 0
      %1470 = vmatpush.bf16.msra.mxu0 %v1461
      %1471 = vmatmul.bf16.gmra.mxu0 %v1413
      %v1472 = vpop.f32.mrf.mxu0
      %v1473 = vadd.f32 %v1248, %v1472
      %v1474 = vpop.f32.mrf.mxu0
      %v1475 = vadd.f32 %v1250, %v1474
      %1476 = vmatmul.bf16.gmra.mxu0 %v1416
      %v1477 = vpop.f32.mrf.mxu0
      %v1478 = vadd.f32 %v1253, %v1477
      %v1479 = vpop.f32.mrf.mxu0
      %v1480 = vadd.f32 %v1255, %v1479
      %1481 = vmatmul.bf16.gmra.mxu0 %v1419
      %v1482 = vpop.f32.mrf.mxu0
      %v1483 = vadd.f32 %v1258, %v1482
      %v1484 = vpop.f32.mrf.mxu0
      %v1485 = vadd.f32 %v1260, %v1484
      %1486 = vmatmul.bf16.gmra.mxu0 %v1422
      %v1487 = vpop.f32.mrf.mxu0
      %v1488 = vadd.f32 %v1263, %v1487
      %v1489 = vpop.f32.mrf.mxu0
      %v1490 = vadd.f32 %v1265, %v1489
      %1491 = vmatmul.bf16.gmra.mxu0 %v1425
      %v1492 = vpop.f32.mrf.mxu0
      %v1493 = vadd.f32 %v1268, %v1492
      %v1494 = vpop.f32.mrf.mxu0
      %v1495 = vadd.f32 %v1270, %v1494
      %1496 = vmatmul.bf16.gmra.mxu0 %v1428
      %v1497 = vpop.f32.mrf.mxu0
      %v1498 = vadd.f32 %v1273, %v1497
      %v1499 = vpop.f32.mrf.mxu0
      %v1500 = vadd.f32 %v1275, %v1499
      %1501 = vmatmul.bf16.gmra.mxu0 %v1431
      %v1502 = vpop.f32.mrf.mxu0
      %v1503 = vadd.f32 %v1278, %v1502
      %v1504 = vpop.f32.mrf.mxu0
      %v1505 = vadd.f32 %v1280, %v1504
      %1506 = vmatmul.bf16.gmra.mxu0 %v1434
      %v1507 = vpop.f32.mrf.mxu0
      %v1508 = vadd.f32 %v1283, %v1507
      %v1509 = vpop.f32.mrf.mxu0
      %v1510 = vadd.f32 %v1285, %v1509
      %1511 = vmatmul.bf16.gmra.mxu0 %v1437
      %v1512 = vpop.f32.mrf.mxu0
      %v1513 = vadd.f32 %v1288, %v1512
      %v1514 = vpop.f32.mrf.mxu0
      %v1515 = vadd.f32 %v1290, %v1514
      %1516 = vmatmul.bf16.gmra.mxu0 %v1440
      %v1517 = vpop.f32.mrf.mxu0
      %v1518 = vadd.f32 %v1293, %v1517
      %v1519 = vpop.f32.mrf.mxu0
      %v1520 = vadd.f32 %v1295, %v1519
      %1521 = vmatmul.bf16.gmra.mxu0 %v1443
      %v1522 = vpop.f32.mrf.mxu0
      %v1523 = vadd.f32 %v1298, %v1522
      %v1524 = vpop.f32.mrf.mxu0
      %v1525 = vadd.f32 %v1300, %v1524
      %1526 = vmatmul.bf16.gmra.mxu0 %v1446
      %v1527 = vpop.f32.mrf.mxu0
      %v1528 = vadd.f32 %v1303, %v1527
      %v1529 = vpop.f32.mrf.mxu0
      %v1530 = vadd.f32 %v1305, %v1529
      %1531 = vmatmul.bf16.gmra.mxu0 %v1449
      %v1532 = vpop.f32.mrf.mxu0
      %v1533 = vadd.f32 %v1308, %v1532
      %v1534 = vpop.f32.mrf.mxu0
      %v1535 = vadd.f32 %v1310, %v1534
      %1536 = vmatmul.bf16.gmra.mxu0 %v1452
      %v1537 = vpop.f32.mrf.mxu0
      %v1538 = vadd.f32 %v1313, %v1537
      %v1539 = vpop.f32.mrf.mxu0
      %v1540 = vadd.f32 %v1315, %v1539
      %1541 = vmatmul.bf16.gmra.mxu0 %v1455
      %v1542 = vpop.f32.mrf.mxu0
      %v1543 = vadd.f32 %v1318, %v1542
      %v1544 = vpop.f32.mrf.mxu0
      %v1545 = vadd.f32 %v1320, %v1544
      %1546 = vmatmul.bf16.gmra.mxu0 %v1458
      %v1547 = vpop.f32.mrf.mxu0
      %v1548 = vadd.f32 %v1323, %v1547
      %v1549 = vpop.f32.mrf.mxu0
      %v1550 = vadd.f32 %v1325, %v1549
      %1551 = vdwg.mxu0
      %s1552 = scalar_lea.vmem [#allocation2], 16
      %v1553 = vld [vmem:[%s1552] sm:$0xf]
      %v1554 = vld [vmem:[%s1552 + $0x4] sm:$0xf]
      %v1555 = vld [vmem:[%s1552 + $0x8] sm:$0xf]
      %v1556 = vld [vmem:[%s1552 + $0xc] sm:$0xf]
      %v1557 = vld [vmem:[%s1552 + $0x10] sm:$0xf]
      %v1558 = vld [vmem:[%s1552 + $0x14] sm:$0xf]
      %v1559 = vld [vmem:[%s1552 + $0x18] sm:$0xf]
      %v1560 = vld [vmem:[%s1552 + $0x1c] sm:$0xf]
      %v1561 = vld [vmem:[%s1552 + $0x20] sm:$0xf]
      %v1562 = vld [vmem:[%s1552 + $0x24] sm:$0xf]
      %v1563 = vld [vmem:[%s1552 + $0x28] sm:$0xf]
      %v1564 = vld [vmem:[%s1552 + $0x2c] sm:$0xf]
      %v1565 = vld [vmem:[%s1552 + $0x30] sm:$0xf]
      %v1566 = vld [vmem:[%s1552 + $0x34] sm:$0xf]
      %v1567 = vld [vmem:[%s1552 + $0x38] sm:$0xf]
      %v1568 = vld [vmem:[%s1552 + $0x3c] sm:$0xf]
      %v1569 = vld [vmem:[%s1552 + $0x40] sm:$0xf]
      %v1570 = vld [vmem:[%s1552 + $0x44] sm:$0xf]
      %v1571 = vld [vmem:[%s1552 + $0x48] sm:$0xf]
      %v1572 = vld [vmem:[%s1552 + $0x4c] sm:$0xf]
      %v1573 = vld [vmem:[%s1552 + $0x50] sm:$0xf]
      %v1574 = vld [vmem:[%s1552 + $0x54] sm:$0xf]
      %v1575 = vld [vmem:[%s1552 + $0x58] sm:$0xf]
      %v1576 = vld [vmem:[%s1552 + $0x5c] sm:$0xf]
      %v1577 = vld [vmem:[%s1552 + $0x60] sm:$0xf]
      %v1578 = vld [vmem:[%s1552 + $0x64] sm:$0xf]
      %v1579 = vld [vmem:[%s1552 + $0x68] sm:$0xf]
      %v1580 = vld [vmem:[%s1552 + $0x6c] sm:$0xf]
      %v1581 = vld [vmem:[%s1552 + $0x70] sm:$0xf]
      %v1582 = vld [vmem:[%s1552 + $0x74] sm:$0xf]
      %v1583 = vld [vmem:[%s1552 + $0x78] sm:$0xf]
      %v1584 = vld [vmem:[%s1552 + $0x7c] sm:$0xf]
      %s1585 = scalar_lea.vmem %s3, 16
      %v1586 = vld [vmem:[%s1585] sm:$0xf]
      %v1587 = vld [vmem:[%s1585 + $0x4] sm:$0x3]
      %v1620 = vunpack.c.l.b16 %v1553
      %v1621 = vunpack.c.l.b16 %v1554
      %v1622 = vunpack.c.l.b16 %v1555
      %v1623 = vunpack.c.l.b16 %v1556
      %v1624 = vunpack.c.l.b16 %v1557
      %v1625 = vunpack.c.l.b16 %v1558
      %v1626 = vunpack.c.l.b16 %v1559
      %v1627 = vunpack.c.l.b16 %v1560
      %v1628 = vunpack.c.l.b16 %v1561
      %v1629 = vunpack.c.l.b16 %v1562
      %v1630 = vunpack.c.l.b16 %v1563
      %v1631 = vunpack.c.l.b16 %v1564
      %v1632 = vunpack.c.l.b16 %v1565
      %v1633 = vunpack.c.l.b16 %v1566
      %v1634 = vunpack.c.l.b16 %v1567
      %v1635 = vunpack.c.l.b16 %v1568
      %v1636 = vunpack.c.l.b16 %v1569
      %v1637 = vunpack.c.l.b16 %v1570
      %v1638 = vunpack.c.l.b16 %v1571
      %v1639 = vunpack.c.l.b16 %v1572
      %v1640 = vunpack.c.l.b16 %v1573
      %v1641 = vunpack.c.l.b16 %v1574
      %v1642 = vunpack.c.l.b16 %v1575
      %v1643 = vunpack.c.l.b16 %v1576
      %v1644 = vunpack.c.l.b16 %v1577
      %v1645 = vunpack.c.l.b16 %v1578
      %v1646 = vunpack.c.l.b16 %v1579
      %v1647 = vunpack.c.l.b16 %v1580
      %v1648 = vunpack.c.l.b16 %v1581
      %v1649 = vunpack.c.l.b16 %v1582
      %v1650 = vunpack.c.l.b16 %v1583
      %v1651 = vunpack.c.l.b16 %v1584
      %v1652 = vpack.c.b16 %v1621, %v1620
      %v1653 = vpack.c.b16 %v1623, %v1622
      %v1654 = vpack.c.b16 %v1625, %v1624
      %v1655 = vpack.c.b16 %v1627, %v1626
      %v1656 = vpack.c.b16 %v1629, %v1628
      %v1657 = vpack.c.b16 %v1631, %v1630
      %v1658 = vpack.c.b16 %v1633, %v1632
      %v1659 = vpack.c.b16 %v1635, %v1634
      %v1660 = vpack.c.b16 %v1637, %v1636
      %v1661 = vpack.c.b16 %v1639, %v1638
      %v1662 = vpack.c.b16 %v1641, %v1640
      %v1663 = vpack.c.b16 %v1643, %v1642
      %v1664 = vpack.c.b16 %v1645, %v1644
      %v1665 = vpack.c.b16 %v1647, %v1646
      %v1666 = vpack.c.b16 %v1649, %v1648
      %v1667 = vpack.c.b16 %v1651, %v1650
      %v1670 = vunpack.c.l.b16 %v1586
      %v1671 = vunpack.c.l.b16 %v1587
      %v1672 = vpack.c.b16 %v1671, %v1670
      %v1674 = vsel %vm1185, %v1652, 0
      %v1677 = vsel %vm1185, %v1653, 0
      %v1680 = vsel %vm1185, %v1654, 0
      %v1683 = vsel %vm1185, %v1655, 0
      %v1686 = vsel %vm1185, %v1656, 0
      %v1689 = vsel %vm1185, %v1657, 0
      %v1692 = vsel %vm1185, %v1658, 0
      %v1695 = vsel %vm1185, %v1659, 0
      %v1698 = vsel %vm1185, %v1660, 0
      %v1701 = vsel %vm1185, %v1661, 0
      %v1704 = vsel %vm1185, %v1662, 0
      %v1707 = vsel %vm1185, %v1663, 0
      %v1710 = vsel %vm1185, %v1664, 0
      %v1713 = vsel %vm1185, %v1665, 0
      %v1716 = vsel %vm1185, %v1666, 0
      %v1719 = vsel %vm1185, %v1667, 0
      %v1722 = vsel %vm1234, %v1672, 0
      %1724 = vmatpush.bf16.msra.mxu0 0
      %1725 = vmatpush.bf16.msra.mxu0 0
      %1726 = vmatpush.bf16.msra.mxu0 0
      %1727 = vmatpush.bf16.msra.mxu0 0
      %1728 = vmatpush.bf16.msra.mxu0 0
      %1729 = vmatpush.bf16.msra.mxu0 0
      %1730 = vmatpush.bf16.msra.mxu0 0
      %1731 = vmatpush.bf16.msra.mxu0 %v1722
      %1732 = vmatmul.bf16.gmra.mxu0 %v1674
      %v1733 = vpop.f32.mrf.mxu0
      %v1734 = vadd.f32 0.0, %v1733
      %v1735 = vpop.f32.mrf.mxu0
      %v1736 = vadd.f32 0.0, %v1735
      %1737 = vmatmul.bf16.gmra.mxu0 %v1677
      %v1738 = vpop.f32.mrf.mxu0
      %v1739 = vadd.f32 0.0, %v1738
      %v1740 = vpop.f32.mrf.mxu0
      %v1741 = vadd.f32 0.0, %v1740
      %1742 = vmatmul.bf16.gmra.mxu0 %v1680
      %v1743 = vpop.f32.mrf.mxu0
      %v1744 = vadd.f32 0.0, %v1743
      %v1745 = vpop.f32.mrf.mxu0
      %v1746 = vadd.f32 0.0, %v1745
      %1747 = vmatmul.bf16.gmra.mxu0 %v1683
      %v1748 = vpop.f32.mrf.mxu0
      %v1749 = vadd.f32 0.0, %v1748
      %v1750 = vpop.f32.mrf.mxu0
      %v1751 = vadd.f32 0.0, %v1750
      %1752 = vmatmul.bf16.gmra.mxu0 %v1686
      %v1753 = vpop.f32.mrf.mxu0
      %v1754 = vadd.f32 0.0, %v1753
      %v1755 = vpop.f32.mrf.mxu0
      %v1756 = vadd.f32 0.0, %v1755
      %1757 = vmatmul.bf16.gmra.mxu0 %v1689
      %v1758 = vpop.f32.mrf.mxu0
      %v1759 = vadd.f32 0.0, %v1758
      %v1760 = vpop.f32.mrf.mxu0
      %v1761 = vadd.f32 0.0, %v1760
      %1762 = vmatmul.bf16.gmra.mxu0 %v1692
      %v1763 = vpop.f32.mrf.mxu0
      %v1764 = vadd.f32 0.0, %v1763
      %v1765 = vpop.f32.mrf.mxu0
      %v1766 = vadd.f32 0.0, %v1765
      %1767 = vmatmul.bf16.gmra.mxu0 %v1695
      %v1768 = vpop.f32.mrf.mxu0
      %v1769 = vadd.f32 0.0, %v1768
      %v1770 = vpop.f32.mrf.mxu0
      %v1771 = vadd.f32 0.0, %v1770
      %1772 = vmatmul.bf16.gmra.mxu0 %v1698
      %v1773 = vpop.f32.mrf.mxu0
      %v1774 = vadd.f32 0.0, %v1773
      %v1775 = vpop.f32.mrf.mxu0
      %v1776 = vadd.f32 0.0, %v1775
      %1777 = vmatmul.bf16.gmra.mxu0 %v1701
      %v1778 = vpop.f32.mrf.mxu0
      %v1779 = vadd.f32 0.0, %v1778
      %v1780 = vpop.f32.mrf.mxu0
      %v1781 = vadd.f32 0.0, %v1780
      %1782 = vmatmul.bf16.gmra.mxu0 %v1704
      %v1783 = vpop.f32.mrf.mxu0
      %v1784 = vadd.f32 0.0, %v1783
      %v1785 = vpop.f32.mrf.mxu0
      %v1786 = vadd.f32 0.0, %v1785
      %1787 = vmatmul.bf16.gmra.mxu0 %v1707
      %v1788 = vpop.f32.mrf.mxu0
      %v1789 = vadd.f32 0.0, %v1788
      %v1790 = vpop.f32.mrf.mxu0
      %v1791 = vadd.f32 0.0, %v1790
      %1792 = vmatmul.bf16.gmra.mxu0 %v1710
      %v1793 = vpop.f32.mrf.mxu0
      %v1794 = vadd.f32 0.0, %v1793
      %v1795 = vpop.f32.mrf.mxu0
      %v1796 = vadd.f32 0.0, %v1795
      %1797 = vmatmul.bf16.gmra.mxu0 %v1713
      %v1798 = vpop.f32.mrf.mxu0
      %v1799 = vadd.f32 0.0, %v1798
      %v1800 = vpop.f32.mrf.mxu0
      %v1801 = vadd.f32 0.0, %v1800
      %1802 = vmatmul.bf16.gmra.mxu0 %v1716
      %v1803 = vpop.f32.mrf.mxu0
      %v1804 = vadd.f32 0.0, %v1803
      %v1805 = vpop.f32.mrf.mxu0
      %v1806 = vadd.f32 0.0, %v1805
      %1807 = vmatmul.bf16.gmra.mxu0 %v1719
      %v1808 = vpop.f32.mrf.mxu0
      %v1809 = vadd.f32 0.0, %v1808
      %v1810 = vpop.f32.mrf.mxu0
      %v1811 = vadd.f32 0.0, %v1810
      %1812 = vdwg.mxu0
      %v1813 = vadd.f32 %v1473, %v1734
      %v1814 = vadd.f32 %v1475, %v1736
      %v1815 = vadd.f32 %v1478, %v1739
      %v1816 = vadd.f32 %v1480, %v1741
      %v1817 = vadd.f32 %v1483, %v1744
      %v1818 = vadd.f32 %v1485, %v1746
      %v1819 = vadd.f32 %v1488, %v1749
      %v1820 = vadd.f32 %v1490, %v1751
      %v1821 = vadd.f32 %v1493, %v1754
      %v1822 = vadd.f32 %v1495, %v1756
      %v1823 = vadd.f32 %v1498, %v1759
      %v1824 = vadd.f32 %v1500, %v1761
      %v1825 = vadd.f32 %v1503, %v1764
      %v1826 = vadd.f32 %v1505, %v1766
      %v1827 = vadd.f32 %v1508, %v1769
      %v1828 = vadd.f32 %v1510, %v1771
      %v1829 = vadd.f32 %v1513, %v1774
      %v1830 = vadd.f32 %v1515, %v1776
      %v1831 = vadd.f32 %v1518, %v1779
      %v1832 = vadd.f32 %v1520, %v1781
      %v1833 = vadd.f32 %v1523, %v1784
      %v1834 = vadd.f32 %v1525, %v1786
      %v1835 = vadd.f32 %v1528, %v1789
      %v1836 = vadd.f32 %v1530, %v1791
      %v1837 = vadd.f32 %v1533, %v1794
      %v1838 = vadd.f32 %v1535, %v1796
      %v1839 = vadd.f32 %v1538, %v1799
      %v1840 = vadd.f32 %v1540, %v1801
      %v1841 = vadd.f32 %v1543, %v1804
      %v1842 = vadd.f32 %v1545, %v1806
      %v1843 = vadd.f32 %v1548, %v1809
      %v1844 = vadd.f32 %v1550, %v1811
      %v1845 = vld [vmem:[%s4] sm:$0x1]
      %v1847 = vperm.slane %v1845, 0
      %v1849 = vmul.f32 %v1813, %v1847
      %v1850 = vmul.f32 %v1814, %v1847
      %v1851 = vmul.f32 %v1815, %v1847
      %v1852 = vmul.f32 %v1816, %v1847
      %v1853 = vmul.f32 %v1817, %v1847
      %v1854 = vmul.f32 %v1818, %v1847
      %v1855 = vmul.f32 %v1819, %v1847
      %v1856 = vmul.f32 %v1820, %v1847
      %v1857 = vmul.f32 %v1821, %v1847
      %v1858 = vmul.f32 %v1822, %v1847
      %v1859 = vmul.f32 %v1823, %v1847
      %v1860 = vmul.f32 %v1824, %v1847
      %v1861 = vmul.f32 %v1825, %v1847
      %v1862 = vmul.f32 %v1826, %v1847
      %v1863 = vmul.f32 %v1827, %v1847
      %v1864 = vmul.f32 %v1828, %v1847
      %v1865 = vmul.f32 %v1829, %v1847
      %v1866 = vmul.f32 %v1830, %v1847
      %v1867 = vmul.f32 %v1831, %v1847
      %v1868 = vmul.f32 %v1832, %v1847
      %v1869 = vmul.f32 %v1833, %v1847
      %v1870 = vmul.f32 %v1834, %v1847
      %v1871 = vmul.f32 %v1835, %v1847
      %v1872 = vmul.f32 %v1836, %v1847
      %v1873 = vmul.f32 %v1837, %v1847
      %v1874 = vmul.f32 %v1838, %v1847
      %v1875 = vmul.f32 %v1839, %v1847
      %v1876 = vmul.f32 %v1840, %v1847
      %v1877 = vmul.f32 %v1841, %v1847
      %v1878 = vmul.f32 %v1842, %v1847
      %v1879 = vmul.f32 %v1843, %v1847
      %v1880 = vmul.f32 %v1844, %v1847
      %v1881 = vld [vmem:[%s5] sm:$0x1]
      %v1883 = vperm.slane %v1881, 0
      %v1885 = vadd.f32 %v1849, %v1883
      %v1886 = vadd.f32 %v1850, %v1883
      %v1887 = vadd.f32 %v1851, %v1883
      %v1888 = vadd.f32 %v1852, %v1883
      %v1889 = vadd.f32 %v1853, %v1883
      %v1890 = vadd.f32 %v1854, %v1883
      %v1891 = vadd.f32 %v1855, %v1883
      %v1892 = vadd.f32 %v1856, %v1883
      %v1893 = vadd.f32 %v1857, %v1883
      %v1894 = vadd.f32 %v1858, %v1883
      %v1895 = vadd.f32 %v1859, %v1883
      %v1896 = vadd.f32 %v1860, %v1883
      %v1897 = vadd.f32 %v1861, %v1883
      %v1898 = vadd.f32 %v1862, %v1883
      %v1899 = vadd.f32 %v1863, %v1883
      %v1900 = vadd.f32 %v1864, %v1883
      %v1901 = vadd.f32 %v1865, %v1883
      %v1902 = vadd.f32 %v1866, %v1883
      %v1903 = vadd.f32 %v1867, %v1883
      %v1904 = vadd.f32 %v1868, %v1883
      %v1905 = vadd.f32 %v1869, %v1883
      %v1906 = vadd.f32 %v1870, %v1883
      %v1907 = vadd.f32 %v1871, %v1883
      %v1908 = vadd.f32 %v1872, %v1883
      %v1909 = vadd.f32 %v1873, %v1883
      %v1910 = vadd.f32 %v1874, %v1883
      %v1911 = vadd.f32 %v1875, %v1883
      %v1912 = vadd.f32 %v1876, %v1883
      %v1913 = vadd.f32 %v1877, %v1883
      %v1914 = vadd.f32 %v1878, %v1883
      %v1915 = vadd.f32 %v1879, %v1883
      %v1916 = vadd.f32 %v1880, %v1883
      %v1917 = vmax.f32 %v1885, 0.0
      %v1918 = vmax.f32 %v1886, 0.0
      %v1919 = vmax.f32 %v1887, 0.0
      %v1920 = vmax.f32 %v1888, 0.0
      %v1921 = vmax.f32 %v1889, 0.0
      %v1922 = vmax.f32 %v1890, 0.0
      %v1923 = vmax.f32 %v1891, 0.0
      %v1924 = vmax.f32 %v1892, 0.0
      %v1925 = vmax.f32 %v1893, 0.0
      %v1926 = vmax.f32 %v1894, 0.0
      %v1927 = vmax.f32 %v1895, 0.0
      %v1928 = vmax.f32 %v1896, 0.0
      %v1929 = vmax.f32 %v1897, 0.0
      %v1930 = vmax.f32 %v1898, 0.0
      %v1931 = vmax.f32 %v1899, 0.0
      %v1932 = vmax.f32 %v1900, 0.0
      %v1933 = vmax.f32 %v1901, 0.0
      %v1934 = vmax.f32 %v1902, 0.0
      %v1935 = vmax.f32 %v1903, 0.0
      %v1936 = vmax.f32 %v1904, 0.0
      %v1937 = vmax.f32 %v1905, 0.0
      %v1938 = vmax.f32 %v1906, 0.0
      %v1939 = vmax.f32 %v1907, 0.0
      %v1940 = vmax.f32 %v1908, 0.0
      %v1941 = vmax.f32 %v1909, 0.0
      %v1942 = vmax.f32 %v1910, 0.0
      %v1943 = vmax.f32 %v1911, 0.0
      %v1944 = vmax.f32 %v1912, 0.0
      %v1945 = vmax.f32 %v1913, 0.0
      %v1946 = vmax.f32 %v1914, 0.0
      %v1947 = vmax.f32 %v1915, 0.0
      %v1948 = vmax.f32 %v1916, 0.0
      %v1981 = vrot.slane %v1917, 7
      %v1982 = vrot.slane %v1918, 7
      %v1983 = vsel %vm514, %v1981, %v1982
      %v1984 = vrot.slane %v1919, 7
      %v1985 = vrot.slane %v1920, 7
      %v1986 = vsel %vm514, %v1984, %v1985
      %v1987 = vrot.slane %v1921, 7
      %v1988 = vrot.slane %v1922, 7
      %v1989 = vsel %vm514, %v1987, %v1988
      %v1990 = vrot.slane %v1923, 7
      %v1991 = vrot.slane %v1924, 7
      %v1992 = vsel %vm514, %v1990, %v1991
      %v1993 = vrot.slane %v1925, 7
      %v1994 = vrot.slane %v1926, 7
      %v1995 = vsel %vm514, %v1993, %v1994
      %v1996 = vrot.slane %v1927, 7
      %v1997 = vrot.slane %v1928, 7
      %v1998 = vsel %vm514, %v1996, %v1997
      %v1999 = vrot.slane %v1929, 7
      %v2000 = vrot.slane %v1930, 7
      %v2001 = vsel %vm514, %v1999, %v2000
      %v2002 = vrot.slane %v1931, 7
      %v2003 = vrot.slane %v1932, 7
      %v2004 = vsel %vm514, %v2002, %v2003
      %v2005 = vrot.slane %v1933, 7
      %v2006 = vrot.slane %v1934, 7
      %v2007 = vsel %vm514, %v2005, %v2006
      %v2008 = vrot.slane %v1935, 7
      %v2009 = vrot.slane %v1936, 7
      %v2010 = vsel %vm514, %v2008, %v2009
      %v2011 = vrot.slane %v1937, 7
      %v2012 = vrot.slane %v1938, 7
      %v2013 = vsel %vm514, %v2011, %v2012
      %v2014 = vrot.slane %v1939, 7
      %v2015 = vrot.slane %v1940, 7
      %v2016 = vsel %vm514, %v2014, %v2015
      %v2017 = vrot.slane %v1941, 7
      %v2018 = vrot.slane %v1942, 7
      %v2019 = vsel %vm514, %v2017, %v2018
      %v2020 = vrot.slane %v1943, 7
      %v2021 = vrot.slane %v1944, 7
      %v2022 = vsel %vm514, %v2020, %v2021
      %v2023 = vrot.slane %v1945, 7
      %v2024 = vrot.slane %v1946, 7
      %v2025 = vsel %vm514, %v2023, %v2024
      %v2026 = vrot.slane %v1947, 7
      %v2027 = vrot.slane %v1948, 7
      %v2028 = vsel %vm514, %v2026, %v2027
      %v2061 = vsel %vm514, 0.0, %v1981
      %v2062 = vsel %vm514, 0.0, %v1984
      %v2063 = vsel %vm514, 0.0, %v1987
      %v2064 = vsel %vm514, 0.0, %v1990
      %v2065 = vsel %vm514, 0.0, %v1993
      %v2066 = vsel %vm514, 0.0, %v1996
      %v2067 = vsel %vm514, 0.0, %v1999
      %v2068 = vsel %vm514, 0.0, %v2002
      %v2069 = vsel %vm514, 0.0, %v2005
      %v2070 = vsel %vm514, 0.0, %v2008
      %v2071 = vsel %vm514, 0.0, %v2011
      %v2072 = vsel %vm514, 0.0, %v2014
      %v2073 = vsel %vm514, 0.0, %v2017
      %v2074 = vsel %vm514, 0.0, %v2020
      %v2075 = vsel %vm514, 0.0, %v2023
      %v2076 = vsel %vm514, 0.0, %v2026
      %v2077 = vrot.slane %v1917, 1
      %v2078 = vrot.slane %v1918, 1
      %v2079 = vsel %vm611, %v2077, %v2078
      %v2080 = vrot.slane %v1919, 1
      %v2081 = vrot.slane %v1920, 1
      %v2082 = vsel %vm611, %v2080, %v2081
      %v2083 = vrot.slane %v1921, 1
      %v2084 = vrot.slane %v1922, 1
      %v2085 = vsel %vm611, %v2083, %v2084
      %v2086 = vrot.slane %v1923, 1
      %v2087 = vrot.slane %v1924, 1
      %v2088 = vsel %vm611, %v2086, %v2087
      %v2089 = vrot.slane %v1925, 1
      %v2090 = vrot.slane %v1926, 1
      %v2091 = vsel %vm611, %v2089, %v2090
      %v2092 = vrot.slane %v1927, 1
      %v2093 = vrot.slane %v1928, 1
      %v2094 = vsel %vm611, %v2092, %v2093
      %v2095 = vrot.slane %v1929, 1
      %v2096 = vrot.slane %v1930, 1
      %v2097 = vsel %vm611, %v2095, %v2096
      %v2098 = vrot.slane %v1931, 1
      %v2099 = vrot.slane %v1932, 1
      %v2100 = vsel %vm611, %v2098, %v2099
      %v2101 = vrot.slane %v1933, 1
      %v2102 = vrot.slane %v1934, 1
      %v2103 = vsel %vm611, %v2101, %v2102
      %v2104 = vrot.slane %v1935, 1
      %v2105 = vrot.slane %v1936, 1
      %v2106 = vsel %vm611, %v2104, %v2105
      %v2107 = vrot.slane %v1937, 1
      %v2108 = vrot.slane %v1938, 1
      %v2109 = vsel %vm611, %v2107, %v2108
      %v2110 = vrot.slane %v1939, 1
      %v2111 = vrot.slane %v1940, 1
      %v2112 = vsel %vm611, %v2110, %v2111
      %v2113 = vrot.slane %v1941, 1
      %v2114 = vrot.slane %v1942, 1
      %v2115 = vsel %vm611, %v2113, %v2114
      %v2116 = vrot.slane %v1943, 1
      %v2117 = vrot.slane %v1944, 1
      %v2118 = vsel %vm611, %v2116, %v2117
      %v2119 = vrot.slane %v1945, 1
      %v2120 = vrot.slane %v1946, 1
      %v2121 = vsel %vm611, %v2119, %v2120
      %v2122 = vrot.slane %v1947, 1
      %v2123 = vrot.slane %v1948, 1
      %v2124 = vsel %vm611, %v2122, %v2123
      %v2141 = vsel %vm611, %v2078, 0.0
      %v2142 = vsel %vm611, %v2081, 0.0
      %v2143 = vsel %vm611, %v2084, 0.0
      %v2144 = vsel %vm611, %v2087, 0.0
      %v2145 = vsel %vm611, %v2090, 0.0
      %v2146 = vsel %vm611, %v2093, 0.0
      %v2147 = vsel %vm611, %v2096, 0.0
      %v2148 = vsel %vm611, %v2099, 0.0
      %v2149 = vsel %vm611, %v2102, 0.0
      %v2150 = vsel %vm611, %v2105, 0.0
      %v2151 = vsel %vm611, %v2108, 0.0
      %v2152 = vsel %vm611, %v2111, 0.0
      %v2153 = vsel %vm611, %v2114, 0.0
      %v2154 = vsel %vm611, %v2117, 0.0
      %v2155 = vsel %vm611, %v2120, 0.0
      %v2156 = vsel %vm611, %v2123, 0.0
      %2157 = vrot.lane.b32.xlu0 %v1917, 8
      %v2158 = vpop.permute.xlu0 %2157
      %2159 = vrot.lane.b32.xlu0 %v1918, 8
      %v2160 = vpop.permute.xlu0 %2159
      %2161 = vrot.lane.b32.xlu0 %v1919, 8
      %v2162 = vpop.permute.xlu0 %2161
      %2163 = vrot.lane.b32.xlu0 %v1920, 8
      %v2164 = vpop.permute.xlu0 %2163
      %2165 = vrot.lane.b32.xlu0 %v1921, 8
      %v2166 = vpop.permute.xlu0 %2165
      %2167 = vrot.lane.b32.xlu0 %v1922, 8
      %v2168 = vpop.permute.xlu0 %2167
      %2169 = vrot.lane.b32.xlu0 %v1923, 8
      %v2170 = vpop.permute.xlu0 %2169
      %2171 = vrot.lane.b32.xlu0 %v1924, 8
      %v2172 = vpop.permute.xlu0 %2171
      %2173 = vrot.lane.b32.xlu0 %v1925, 8
      %v2174 = vpop.permute.xlu0 %2173
      %2175 = vrot.lane.b32.xlu0 %v1926, 8
      %v2176 = vpop.permute.xlu0 %2175
      %2177 = vrot.lane.b32.xlu0 %v1927, 8
      %v2178 = vpop.permute.xlu0 %2177
      %2179 = vrot.lane.b32.xlu0 %v1928, 8
      %v2180 = vpop.permute.xlu0 %2179
      %2181 = vrot.lane.b32.xlu0 %v1929, 8
      %v2182 = vpop.permute.xlu0 %2181
      %2183 = vrot.lane.b32.xlu0 %v1930, 8
      %v2184 = vpop.permute.xlu0 %2183
      %2185 = vrot.lane.b32.xlu0 %v1931, 8
      %v2186 = vpop.permute.xlu0 %2185
      %2187 = vrot.lane.b32.xlu0 %v1932, 8
      %v2188 = vpop.permute.xlu0 %2187
      %2189 = vrot.lane.b32.xlu0 %v1933, 8
      %v2190 = vpop.permute.xlu0 %2189
      %2191 = vrot.lane.b32.xlu0 %v1934, 8
      %v2192 = vpop.permute.xlu0 %2191
      %2193 = vrot.lane.b32.xlu0 %v1935, 8
      %v2194 = vpop.permute.xlu0 %2193
      %2195 = vrot.lane.b32.xlu0 %v1936, 8
      %v2196 = vpop.permute.xlu0 %2195
      %2197 = vrot.lane.b32.xlu0 %v1937, 8
      %v2198 = vpop.permute.xlu0 %2197
      %2199 = vrot.lane.b32.xlu0 %v1938, 8
      %v2200 = vpop.permute.xlu0 %2199
      %2201 = vrot.lane.b32.xlu0 %v1939, 8
      %v2202 = vpop.permute.xlu0 %2201
      %2203 = vrot.lane.b32.xlu0 %v1940, 8
      %v2204 = vpop.permute.xlu0 %2203
      %2205 = vrot.lane.b32.xlu0 %v1941, 8
      %v2206 = vpop.permute.xlu0 %2205
      %2207 = vrot.lane.b32.xlu0 %v1942, 8
      %v2208 = vpop.permute.xlu0 %2207
      %2209 = vrot.lane.b32.xlu0 %v1943, 8
      %v2210 = vpop.permute.xlu0 %2209
      %2211 = vrot.lane.b32.xlu0 %v1944, 8
      %v2212 = vpop.permute.xlu0 %2211
      %2213 = vrot.lane.b32.xlu0 %v1945, 8
      %v2214 = vpop.permute.xlu0 %2213
      %2215 = vrot.lane.b32.xlu0 %v1946, 8
      %v2216 = vpop.permute.xlu0 %2215
      %2217 = vrot.lane.b32.xlu0 %v1947, 8
      %v2218 = vpop.permute.xlu0 %2217
      %2219 = vrot.lane.b32.xlu0 %v1948, 8
      %v2220 = vpop.permute.xlu0 %2219
      %2269 = vrot.lane.b32.xlu0 %v2079, 16
      %v2270 = vpop.permute.xlu0 %2269
      %2271 = vrot.lane.b32.xlu0 %v2141, 16
      %v2272 = vpop.permute.xlu0 %2271
      %2273 = vrot.lane.b32.xlu0 %v2082, 16
      %v2274 = vpop.permute.xlu0 %2273
      %2275 = vrot.lane.b32.xlu0 %v2142, 16
      %v2276 = vpop.permute.xlu0 %2275
      %2277 = vrot.lane.b32.xlu0 %v2085, 16
      %v2278 = vpop.permute.xlu0 %2277
      %2279 = vrot.lane.b32.xlu0 %v2143, 16
      %v2280 = vpop.permute.xlu0 %2279
      %2281 = vrot.lane.b32.xlu0 %v2088, 16
      %v2282 = vpop.permute.xlu0 %2281
      %2283 = vrot.lane.b32.xlu0 %v2144, 16
      %v2284 = vpop.permute.xlu0 %2283
      %2285 = vrot.lane.b32.xlu0 %v2091, 16
      %v2286 = vpop.permute.xlu0 %2285
      %2287 = vrot.lane.b32.xlu0 %v2145, 16
      %v2288 = vpop.permute.xlu0 %2287
      %2289 = vrot.lane.b32.xlu0 %v2094, 16
      %v2290 = vpop.permute.xlu0 %2289
      %2291 = vrot.lane.b32.xlu0 %v2146, 16
      %v2292 = vpop.permute.xlu0 %2291
      %2293 = vrot.lane.b32.xlu0 %v2097, 16
      %v2294 = vpop.permute.xlu0 %2293
      %2295 = vrot.lane.b32.xlu0 %v2147, 16
      %v2296 = vpop.permute.xlu0 %2295
      %2297 = vrot.lane.b32.xlu0 %v2100, 16
      %v2298 = vpop.permute.xlu0 %2297
      %2299 = vrot.lane.b32.xlu0 %v2148, 16
      %v2300 = vpop.permute.xlu0 %2299
      %2301 = vrot.lane.b32.xlu0 %v2103, 16
      %v2302 = vpop.permute.xlu0 %2301
      %2303 = vrot.lane.b32.xlu0 %v2149, 16
      %v2304 = vpop.permute.xlu0 %2303
      %2305 = vrot.lane.b32.xlu0 %v2106, 16
      %v2306 = vpop.permute.xlu0 %2305
      %2307 = vrot.lane.b32.xlu0 %v2150, 16
      %v2308 = vpop.permute.xlu0 %2307
      %2309 = vrot.lane.b32.xlu0 %v2109, 16
      %v2310 = vpop.permute.xlu0 %2309
      %2311 = vrot.lane.b32.xlu0 %v2151, 16
      %v2312 = vpop.permute.xlu0 %2311
      %2313 = vrot.lane.b32.xlu0 %v2112, 16
      %v2314 = vpop.permute.xlu0 %2313
      %2315 = vrot.lane.b32.xlu0 %v2152, 16
      %v2316 = vpop.permute.xlu0 %2315
      %2317 = vrot.lane.b32.xlu0 %v2115, 16
      %v2318 = vpop.permute.xlu0 %2317
      %2319 = vrot.lane.b32.xlu0 %v2153, 16
      %v2320 = vpop.permute.xlu0 %2319
      %2321 = vrot.lane.b32.xlu0 %v2118, 16
      %v2322 = vpop.permute.xlu0 %2321
      %2323 = vrot.lane.b32.xlu0 %v2154, 16
      %v2324 = vpop.permute.xlu0 %2323
      %2325 = vrot.lane.b32.xlu0 %v2121, 16
      %v2326 = vpop.permute.xlu0 %2325
      %2327 = vrot.lane.b32.xlu0 %v2155, 16
      %v2328 = vpop.permute.xlu0 %2327
      %2329 = vrot.lane.b32.xlu0 %v2124, 16
      %v2330 = vpop.permute.xlu0 %2329
      %2331 = vrot.lane.b32.xlu0 %v2156, 16
      %v2332 = vpop.permute.xlu0 %2331
      %v2365 = vsel %vm933, %v2061, %v2158
      %v2366 = vsel %vm933, %v1983, %v2160
      %v2367 = vsel %vm933, %v2062, %v2162
      %v2368 = vsel %vm933, %v1986, %v2164
      %v2369 = vsel %vm933, %v2063, %v2166
      %v2370 = vsel %vm933, %v1989, %v2168
      %v2371 = vsel %vm933, %v2064, %v2170
      %v2372 = vsel %vm933, %v1992, %v2172
      %v2373 = vsel %vm933, %v2065, %v2174
      %v2374 = vsel %vm933, %v1995, %v2176
      %v2375 = vsel %vm933, %v2066, %v2178
      %v2376 = vsel %vm933, %v1998, %v2180
      %v2377 = vsel %vm933, %v2067, %v2182
      %v2378 = vsel %vm933, %v2001, %v2184
      %v2379 = vsel %vm933, %v2068, %v2186
      %v2380 = vsel %vm933, %v2004, %v2188
      %v2381 = vsel %vm933, %v2069, %v2190
      %v2382 = vsel %vm933, %v2007, %v2192
      %v2383 = vsel %vm933, %v2070, %v2194
      %v2384 = vsel %vm933, %v2010, %v2196
      %v2385 = vsel %vm933, %v2071, %v2198
      %v2386 = vsel %vm933, %v2013, %v2200
      %v2387 = vsel %vm933, %v2072, %v2202
      %v2388 = vsel %vm933, %v2016, %v2204
      %v2389 = vsel %vm933, %v2073, %v2206
      %v2390 = vsel %vm933, %v2019, %v2208
      %v2391 = vsel %vm933, %v2074, %v2210
      %v2392 = vsel %vm933, %v2022, %v2212
      %v2393 = vsel %vm933, %v2075, %v2214
      %v2394 = vsel %vm933, %v2025, %v2216
      %v2395 = vsel %vm933, %v2076, %v2218
      %v2396 = vsel %vm933, %v2028, %v2220
      %vm2397 = vcmask 130048
      %v2398 = vsel %vm2397, %v2365, %v2270
      %v2399 = vsel %vm2397, %v2366, %v2272
      %v2400 = vsel %vm2397, %v2367, %v2274
      %v2401 = vsel %vm2397, %v2368, %v2276
      %v2402 = vsel %vm2397, %v2369, %v2278
      %v2403 = vsel %vm2397, %v2370, %v2280
      %v2404 = vsel %vm2397, %v2371, %v2282
      %v2405 = vsel %vm2397, %v2372, %v2284
      %v2406 = vsel %vm2397, %v2373, %v2286
      %v2407 = vsel %vm2397, %v2374, %v2288
      %v2408 = vsel %vm2397, %v2375, %v2290
      %v2409 = vsel %vm2397, %v2376, %v2292
      %v2410 = vsel %vm2397, %v2377, %v2294
      %v2411 = vsel %vm2397, %v2378, %v2296
      %v2412 = vsel %vm2397, %v2379, %v2298
      %v2413 = vsel %vm2397, %v2380, %v2300
      %v2414 = vsel %vm2397, %v2381, %v2302
      %v2415 = vsel %vm2397, %v2382, %v2304
      %v2416 = vsel %vm2397, %v2383, %v2306
      %v2417 = vsel %vm2397, %v2384, %v2308
      %v2418 = vsel %vm2397, %v2385, %v2310
      %v2419 = vsel %vm2397, %v2386, %v2312
      %v2420 = vsel %vm2397, %v2387, %v2314
      %v2421 = vsel %vm2397, %v2388, %v2316
      %v2422 = vsel %vm2397, %v2389, %v2318
      %v2423 = vsel %vm2397, %v2390, %v2320
      %v2424 = vsel %vm2397, %v2391, %v2322
      %v2425 = vsel %vm2397, %v2392, %v2324
      %v2426 = vsel %vm2397, %v2393, %v2326
      %v2427 = vsel %vm2397, %v2394, %v2328
      %v2428 = vsel %vm2397, %v2395, %v2330
      %v2429 = vsel %vm2397, %v2396, %v2332
      %v2430 = vpack.c.bf16 %v2398, %v2398
      %v2431 = vpack.c.bf16 %v2399, %v2399
      %v2432 = vpack.c.bf16 %v2400, %v2400
      %v2433 = vpack.c.bf16 %v2401, %v2401
      %v2434 = vpack.c.bf16 %v2402, %v2402
      %v2435 = vpack.c.bf16 %v2403, %v2403
      %v2436 = vpack.c.bf16 %v2404, %v2404
      %v2437 = vpack.c.bf16 %v2405, %v2405
      %v2438 = vpack.c.bf16 %v2406, %v2406
      %v2439 = vpack.c.bf16 %v2407, %v2407
      %v2440 = vpack.c.bf16 %v2408, %v2408
      %v2441 = vpack.c.bf16 %v2409, %v2409
      %v2442 = vpack.c.bf16 %v2410, %v2410
      %v2443 = vpack.c.bf16 %v2411, %v2411
      %v2444 = vpack.c.bf16 %v2412, %v2412
      %v2445 = vpack.c.bf16 %v2413, %v2413
      %v2446 = vpack.c.bf16 %v2414, %v2414
      %v2447 = vpack.c.bf16 %v2415, %v2415
      %v2448 = vpack.c.bf16 %v2416, %v2416
      %v2449 = vpack.c.bf16 %v2417, %v2417
      %v2450 = vpack.c.bf16 %v2418, %v2418
      %v2451 = vpack.c.bf16 %v2419, %v2419
      %v2452 = vpack.c.bf16 %v2420, %v2420
      %v2453 = vpack.c.bf16 %v2421, %v2421
      %v2454 = vpack.c.bf16 %v2422, %v2422
      %v2455 = vpack.c.bf16 %v2423, %v2423
      %v2456 = vpack.c.bf16 %v2424, %v2424
      %v2457 = vpack.c.bf16 %v2425, %v2425
      %v2458 = vpack.c.bf16 %v2426, %v2426
      %v2459 = vpack.c.bf16 %v2427, %v2427
      %v2460 = vpack.c.bf16 %v2428, %v2428
      %v2461 = vpack.c.bf16 %v2429, %v2429
      %s2462 = scalar_lea.vmem [#allocation3], 8
      %2463 = vst.msk [vmem:[%s2462] sm:$0xf] %vm340, %v2430
      %2464 = vst.msk [vmem:[%s2462 + $0x4] sm:$0xf] %vm340, %v2431
      %2465 = vst.msk [vmem:[%s2462 + $0x8] sm:$0xf] %vm340, %v2432
      %2466 = vst.msk [vmem:[%s2462 + $0xc] sm:$0xf] %vm340, %v2433
      %2467 = vst.msk [vmem:[%s2462 + $0x10] sm:$0xf] %vm340, %v2434
      %2468 = vst.msk [vmem:[%s2462 + $0x14] sm:$0xf] %vm340, %v2435
      %2469 = vst.msk [vmem:[%s2462 + $0x18] sm:$0xf] %vm340, %v2436
      %2470 = vst.msk [vmem:[%s2462 + $0x1c] sm:$0xf] %vm340, %v2437
      %2471 = vst.msk [vmem:[%s2462 + $0x20] sm:$0xf] %vm340, %v2438
      %2472 = vst.msk [vmem:[%s2462 + $0x24] sm:$0xf] %vm340, %v2439
      %2473 = vst.msk [vmem:[%s2462 + $0x28] sm:$0xf] %vm340, %v2440
      %2474 = vst.msk [vmem:[%s2462 + $0x2c] sm:$0xf] %vm340, %v2441
      %2475 = vst.msk [vmem:[%s2462 + $0x30] sm:$0xf] %vm340, %v2442
      %2476 = vst.msk [vmem:[%s2462 + $0x34] sm:$0xf] %vm340, %v2443
      %2477 = vst.msk [vmem:[%s2462 + $0x38] sm:$0xf] %vm340, %v2444
      %2478 = vst.msk [vmem:[%s2462 + $0x3c] sm:$0xf] %vm340, %v2445
      %2479 = vst.msk [vmem:[%s2462 + $0x40] sm:$0xf] %vm340, %v2446
      %2480 = vst.msk [vmem:[%s2462 + $0x44] sm:$0xf] %vm340, %v2447
      %2481 = vst.msk [vmem:[%s2462 + $0x48] sm:$0xf] %vm340, %v2448
      %2482 = vst.msk [vmem:[%s2462 + $0x4c] sm:$0xf] %vm340, %v2449
      %2483 = vst.msk [vmem:[%s2462 + $0x50] sm:$0xf] %vm340, %v2450
      %2484 = vst.msk [vmem:[%s2462 + $0x54] sm:$0xf] %vm340, %v2451
      %2485 = vst.msk [vmem:[%s2462 + $0x58] sm:$0xf] %vm340, %v2452
      %2486 = vst.msk [vmem:[%s2462 + $0x5c] sm:$0xf] %vm340, %v2453
      %2487 = vst.msk [vmem:[%s2462 + $0x60] sm:$0xf] %vm340, %v2454
      %2488 = vst.msk [vmem:[%s2462 + $0x64] sm:$0xf] %vm340, %v2455
      %2489 = vst.msk [vmem:[%s2462 + $0x68] sm:$0xf] %vm340, %v2456
      %2490 = vst.msk [vmem:[%s2462 + $0x6c] sm:$0xf] %vm340, %v2457
      %2491 = vst.msk [vmem:[%s2462 + $0x70] sm:$0xf] %vm340, %v2458
      %2492 = vst.msk [vmem:[%s2462 + $0x74] sm:$0xf] %vm340, %v2459
      %2493 = vst.msk [vmem:[%s2462 + $0x78] sm:$0xf] %vm340, %v2460
      %2494 = vst.msk [vmem:[%s2462 + $0x7c] sm:$0xf] %vm340, %v2461
      %v2495 = vld [vmem:[#allocation3] sm:$0xf]
      %v2496 = vld [vmem:[#allocation3 + $0x4] sm:$0xf]
      %v2497 = vld [vmem:[#allocation3 + $0x8] sm:$0xf]
      %v2498 = vld [vmem:[#allocation3 + $0xc] sm:$0xf]
      %v2499 = vld [vmem:[#allocation3 + $0x10] sm:$0xf]
      %v2500 = vld [vmem:[#allocation3 + $0x14] sm:$0xf]
      %v2501 = vld [vmem:[#allocation3 + $0x18] sm:$0xf]
      %v2502 = vld [vmem:[#allocation3 + $0x1c] sm:$0xf]
      %v2503 = vld [vmem:[#allocation3 + $0x20] sm:$0xf]
      %v2504 = vld [vmem:[#allocation3 + $0x24] sm:$0xf]
      %v2505 = vld [vmem:[#allocation3 + $0x28] sm:$0xf]
      %v2506 = vld [vmem:[#allocation3 + $0x2c] sm:$0xf]
      %v2507 = vld [vmem:[#allocation3 + $0x30] sm:$0xf]
      %v2508 = vld [vmem:[#allocation3 + $0x34] sm:$0xf]
      %v2509 = vld [vmem:[#allocation3 + $0x38] sm:$0xf]
      %v2510 = vld [vmem:[#allocation3 + $0x3c] sm:$0xf]
      %v2511 = vld [vmem:[#allocation3 + $0x40] sm:$0xf]
      %v2512 = vld [vmem:[#allocation3 + $0x44] sm:$0xf]
      %v2513 = vld [vmem:[#allocation3 + $0x48] sm:$0xf]
      %v2514 = vld [vmem:[#allocation3 + $0x4c] sm:$0xf]
      %v2515 = vld [vmem:[#allocation3 + $0x50] sm:$0xf]
      %v2516 = vld [vmem:[#allocation3 + $0x54] sm:$0xf]
      %v2517 = vld [vmem:[#allocation3 + $0x58] sm:$0xf]
      %v2518 = vld [vmem:[#allocation3 + $0x5c] sm:$0xf]
      %v2519 = vld [vmem:[#allocation3 + $0x60] sm:$0xf]
      %v2520 = vld [vmem:[#allocation3 + $0x64] sm:$0xf]
      %v2521 = vld [vmem:[#allocation3 + $0x68] sm:$0xf]
      %v2522 = vld [vmem:[#allocation3 + $0x6c] sm:$0xf]
      %v2523 = vld [vmem:[#allocation3 + $0x70] sm:$0xf]
      %v2524 = vld [vmem:[#allocation3 + $0x74] sm:$0xf]
      %v2525 = vld [vmem:[#allocation3 + $0x78] sm:$0xf]
      %v2526 = vld [vmem:[#allocation3 + $0x7c] sm:$0xf]
      %v2527 = vld [vmem:[%s6] sm:$0xf]
      %v2528 = vld [vmem:[%s6 + $0x4] sm:$0xf]
      %v2529 = vld [vmem:[%s6 + $0x8] sm:$0xf]
      %v2530 = vld [vmem:[%s2462] sm:$0xf]
      %v2531 = vld [vmem:[%s2462 + $0x4] sm:$0xf]
      %v2532 = vld [vmem:[%s2462 + $0x8] sm:$0xf]
      %v2533 = vld [vmem:[%s2462 + $0xc] sm:$0xf]
      %v2534 = vld [vmem:[%s2462 + $0x10] sm:$0xf]
      %v2535 = vld [vmem:[%s2462 + $0x14] sm:$0xf]
      %v2536 = vld [vmem:[%s2462 + $0x18] sm:$0xf]
      %v2537 = vld [vmem:[%s2462 + $0x1c] sm:$0xf]
      %v2538 = vld [vmem:[%s2462 + $0x20] sm:$0xf]
      %v2539 = vld [vmem:[%s2462 + $0x24] sm:$0xf]
      %v2540 = vld [vmem:[%s2462 + $0x28] sm:$0xf]
      %v2541 = vld [vmem:[%s2462 + $0x2c] sm:$0xf]
      %v2542 = vld [vmem:[%s2462 + $0x30] sm:$0xf]
      %v2543 = vld [vmem:[%s2462 + $0x34] sm:$0xf]
      %v2544 = vld [vmem:[%s2462 + $0x38] sm:$0xf]
      %v2545 = vld [vmem:[%s2462 + $0x3c] sm:$0xf]
      %v2546 = vld [vmem:[%s2462 + $0x40] sm:$0xf]
      %v2547 = vld [vmem:[%s2462 + $0x44] sm:$0xf]
      %v2548 = vld [vmem:[%s2462 + $0x48] sm:$0xf]
      %v2549 = vld [vmem:[%s2462 + $0x4c] sm:$0xf]
      %v2550 = vld [vmem:[%s2462 + $0x50] sm:$0xf]
      %v2551 = vld [vmem:[%s2462 + $0x54] sm:$0xf]
      %v2552 = vld [vmem:[%s2462 + $0x58] sm:$0xf]
      %v2553 = vld [vmem:[%s2462 + $0x5c] sm:$0xf]
      %v2554 = vld [vmem:[%s2462 + $0x60] sm:$0xf]
      %v2555 = vld [vmem:[%s2462 + $0x64] sm:$0xf]
      %v2556 = vld [vmem:[%s2462 + $0x68] sm:$0xf]
      %v2557 = vld [vmem:[%s2462 + $0x6c] sm:$0xf]
      %v2558 = vld [vmem:[%s2462 + $0x70] sm:$0xf]
      %v2559 = vld [vmem:[%s2462 + $0x74] sm:$0xf]
      %v2560 = vld [vmem:[%s2462 + $0x78] sm:$0xf]
      %v2561 = vld [vmem:[%s2462 + $0x7c] sm:$0xf]
      %s2562 = scalar_lea.vmem %s6, 12
      %v2563 = vld [vmem:[%s2562] sm:$0xf]
      %v2564 = vld [vmem:[%s2562 + $0x4] sm:$0xf]
      %v2565 = vld [vmem:[%s2562 + $0x8] sm:$0xf]
      %v2598 = vunpack.c.l.b16 %v2530
      %v2599 = vunpack.c.l.b16 %v2531
      %v2600 = vunpack.c.l.b16 %v2532
      %v2601 = vunpack.c.l.b16 %v2533
      %v2602 = vunpack.c.l.b16 %v2534
      %v2603 = vunpack.c.l.b16 %v2535
      %v2604 = vunpack.c.l.b16 %v2536
      %v2605 = vunpack.c.l.b16 %v2537
      %v2606 = vunpack.c.l.b16 %v2538
      %v2607 = vunpack.c.l.b16 %v2539
      %v2608 = vunpack.c.l.b16 %v2540
      %v2609 = vunpack.c.l.b16 %v2541
      %v2610 = vunpack.c.l.b16 %v2542
      %v2611 = vunpack.c.l.b16 %v2543
      %v2612 = vunpack.c.l.b16 %v2544
      %v2613 = vunpack.c.l.b16 %v2545
      %v2614 = vunpack.c.l.b16 %v2546
      %v2615 = vunpack.c.l.b16 %v2547
      %v2616 = vunpack.c.l.b16 %v2548
      %v2617 = vunpack.c.l.b16 %v2549
      %v2618 = vunpack.c.l.b16 %v2550
      %v2619 = vunpack.c.l.b16 %v2551
      %v2620 = vunpack.c.l.b16 %v2552
      %v2621 = vunpack.c.l.b16 %v2553
      %v2622 = vunpack.c.l.b16 %v2554
      %v2623 = vunpack.c.l.b16 %v2555
      %v2624 = vunpack.c.l.b16 %v2556
      %v2625 = vunpack.c.l.b16 %v2557
      %v2626 = vunpack.c.l.b16 %v2558
      %v2627 = vunpack.c.l.b16 %v2559
      %v2628 = vunpack.c.l.b16 %v2560
      %v2629 = vunpack.c.l.b16 %v2561
      %v2630 = vpack.c.b16 %v2599, %v2598
      %v2631 = vpack.c.b16 %v2601, %v2600
      %v2632 = vpack.c.b16 %v2603, %v2602
      %v2633 = vpack.c.b16 %v2605, %v2604
      %v2634 = vpack.c.b16 %v2607, %v2606
      %v2635 = vpack.c.b16 %v2609, %v2608
      %v2636 = vpack.c.b16 %v2611, %v2610
      %v2637 = vpack.c.b16 %v2613, %v2612
      %v2638 = vpack.c.b16 %v2615, %v2614
      %v2639 = vpack.c.b16 %v2617, %v2616
      %v2640 = vpack.c.b16 %v2619, %v2618
      %v2641 = vpack.c.b16 %v2621, %v2620
      %v2642 = vpack.c.b16 %v2623, %v2622
      %v2643 = vpack.c.b16 %v2625, %v2624
      %v2644 = vpack.c.b16 %v2627, %v2626
      %v2645 = vpack.c.b16 %v2629, %v2628
      %v2649 = vunpack.c.l.b16 %v2563
      %v2650 = vunpack.c.l.b16 %v2564
      %v2651 = vunpack.c.l.b16 %v2565
      %v2652 = vpack.c.b16 %v2650, %v2649
      %v2653 = vpack.c.b16 %v2651, %v2651
      %vm2655 = vcmask 195584
      %v2657 = vsel %vm2655, %v2630, 0
      %v2660 = vsel %vm2655, %v2631, 0
      %v2663 = vsel %vm2655, %v2632, 0
      %v2666 = vsel %vm2655, %v2633, 0
      %v2669 = vsel %vm2655, %v2634, 0
      %v2672 = vsel %vm2655, %v2635, 0
      %v2675 = vsel %vm2655, %v2636, 0
      %v2678 = vsel %vm2655, %v2637, 0
      %v2681 = vsel %vm2655, %v2638, 0
      %v2684 = vsel %vm2655, %v2639, 0
      %v2687 = vsel %vm2655, %v2640, 0
      %v2690 = vsel %vm2655, %v2641, 0
      %v2693 = vsel %vm2655, %v2642, 0
      %v2696 = vsel %vm2655, %v2643, 0
      %v2699 = vsel %vm2655, %v2644, 0
      %v2702 = vsel %vm2655, %v2645, 0
      %vm2704 = vcmask 1043456
      %v2706 = vsel %vm2704, %v2653, 0
      %2708 = vmatpush.bf16.msra.mxu0 0
      %2709 = vmatpush.bf16.msra.mxu0 0
      %2710 = vmatpush.bf16.msra.mxu0 0
      %2711 = vmatpush.bf16.msra.mxu0 0
      %2712 = vmatpush.bf16.msra.mxu0 0
      %2713 = vmatpush.bf16.msra.mxu0 0
      %2714 = vmatpush.bf16.msra.mxu0 %v2706
      %2715 = vmatpush.bf16.msra.mxu0 %v2652
      %2716 = vmatmul.bf16.gmra.mxu0 %v2657
      %v2717 = vpop.f32.mrf.mxu0
      %v2718 = vadd.f32 0.0, %v2717
      %v2719 = vpop.f32.mrf.mxu0
      %v2720 = vadd.f32 0.0, %v2719
      %2721 = vmatmul.bf16.gmra.mxu0 %v2660
      %v2722 = vpop.f32.mrf.mxu0
      %v2723 = vadd.f32 0.0, %v2722
      %v2724 = vpop.f32.mrf.mxu0
      %v2725 = vadd.f32 0.0, %v2724
      %2726 = vmatmul.bf16.gmra.mxu0 %v2663
      %v2727 = vpop.f32.mrf.mxu0
      %v2728 = vadd.f32 0.0, %v2727
      %v2729 = vpop.f32.mrf.mxu0
      %v2730 = vadd.f32 0.0, %v2729
      %2731 = vmatmul.bf16.gmra.mxu0 %v2666
      %v2732 = vpop.f32.mrf.mxu0
      %v2733 = vadd.f32 0.0, %v2732
      %v2734 = vpop.f32.mrf.mxu0
      %v2735 = vadd.f32 0.0, %v2734
      %2736 = vmatmul.bf16.gmra.mxu0 %v2669
      %v2737 = vpop.f32.mrf.mxu0
      %v2738 = vadd.f32 0.0, %v2737
      %v2739 = vpop.f32.mrf.mxu0
      %v2740 = vadd.f32 0.0, %v2739
      %2741 = vmatmul.bf16.gmra.mxu0 %v2672
      %v2742 = vpop.f32.mrf.mxu0
      %v2743 = vadd.f32 0.0, %v2742
      %v2744 = vpop.f32.mrf.mxu0
      %v2745 = vadd.f32 0.0, %v2744
      %2746 = vmatmul.bf16.gmra.mxu0 %v2675
      %v2747 = vpop.f32.mrf.mxu0
      %v2748 = vadd.f32 0.0, %v2747
      %v2749 = vpop.f32.mrf.mxu0
      %v2750 = vadd.f32 0.0, %v2749
      %2751 = vmatmul.bf16.gmra.mxu0 %v2678
      %v2752 = vpop.f32.mrf.mxu0
      %v2753 = vadd.f32 0.0, %v2752
      %v2754 = vpop.f32.mrf.mxu0
      %v2755 = vadd.f32 0.0, %v2754
      %2756 = vmatmul.bf16.gmra.mxu0 %v2681
      %v2757 = vpop.f32.mrf.mxu0
      %v2758 = vadd.f32 0.0, %v2757
      %v2759 = vpop.f32.mrf.mxu0
      %v2760 = vadd.f32 0.0, %v2759
      %2761 = vmatmul.bf16.gmra.mxu0 %v2684
      %v2762 = vpop.f32.mrf.mxu0
      %v2763 = vadd.f32 0.0, %v2762
      %v2764 = vpop.f32.mrf.mxu0
      %v2765 = vadd.f32 0.0, %v2764
      %2766 = vmatmul.bf16.gmra.mxu0 %v2687
      %v2767 = vpop.f32.mrf.mxu0
      %v2768 = vadd.f32 0.0, %v2767
      %v2769 = vpop.f32.mrf.mxu0
      %v2770 = vadd.f32 0.0, %v2769
      %2771 = vmatmul.bf16.gmra.mxu0 %v2690
      %v2772 = vpop.f32.mrf.mxu0
      %v2773 = vadd.f32 0.0, %v2772
      %v2774 = vpop.f32.mrf.mxu0
      %v2775 = vadd.f32 0.0, %v2774
      %2776 = vmatmul.bf16.gmra.mxu0 %v2693
      %v2777 = vpop.f32.mrf.mxu0
      %v2778 = vadd.f32 0.0, %v2777
      %v2779 = vpop.f32.mrf.mxu0
      %v2780 = vadd.f32 0.0, %v2779
      %2781 = vmatmul.bf16.gmra.mxu0 %v2696
      %v2782 = vpop.f32.mrf.mxu0
      %v2783 = vadd.f32 0.0, %v2782
      %v2784 = vpop.f32.mrf.mxu0
      %v2785 = vadd.f32 0.0, %v2784
      %2786 = vmatmul.bf16.gmra.mxu0 %v2699
      %v2787 = vpop.f32.mrf.mxu0
      %v2788 = vadd.f32 0.0, %v2787
      %v2789 = vpop.f32.mrf.mxu0
      %v2790 = vadd.f32 0.0, %v2789
      %2791 = vmatmul.bf16.gmra.mxu0 %v2702
      %v2792 = vpop.f32.mrf.mxu0
      %v2793 = vadd.f32 0.0, %v2792
      %v2794 = vpop.f32.mrf.mxu0
      %v2795 = vadd.f32 0.0, %v2794
      %2796 = vdwg.mxu0
      %v2829 = vunpack.c.l.b16 %v2495
      %v2830 = vunpack.c.l.b16 %v2496
      %v2831 = vunpack.c.l.b16 %v2497
      %v2832 = vunpack.c.l.b16 %v2498
      %v2833 = vunpack.c.l.b16 %v2499
      %v2834 = vunpack.c.l.b16 %v2500
      %v2835 = vunpack.c.l.b16 %v2501
      %v2836 = vunpack.c.l.b16 %v2502
      %v2837 = vunpack.c.l.b16 %v2503
      %v2838 = vunpack.c.l.b16 %v2504
      %v2839 = vunpack.c.l.b16 %v2505
      %v2840 = vunpack.c.l.b16 %v2506
      %v2841 = vunpack.c.l.b16 %v2507
      %v2842 = vunpack.c.l.b16 %v2508
      %v2843 = vunpack.c.l.b16 %v2509
      %v2844 = vunpack.c.l.b16 %v2510
      %v2845 = vunpack.c.l.b16 %v2511
      %v2846 = vunpack.c.l.b16 %v2512
      %v2847 = vunpack.c.l.b16 %v2513
      %v2848 = vunpack.c.l.b16 %v2514
      %v2849 = vunpack.c.l.b16 %v2515
      %v2850 = vunpack.c.l.b16 %v2516
      %v2851 = vunpack.c.l.b16 %v2517
      %v2852 = vunpack.c.l.b16 %v2518
      %v2853 = vunpack.c.l.b16 %v2519
      %v2854 = vunpack.c.l.b16 %v2520
      %v2855 = vunpack.c.l.b16 %v2521
      %v2856 = vunpack.c.l.b16 %v2522
      %v2857 = vunpack.c.l.b16 %v2523
      %v2858 = vunpack.c.l.b16 %v2524
      %v2859 = vunpack.c.l.b16 %v2525
      %v2860 = vunpack.c.l.b16 %v2526
      %v2861 = vpack.c.b16 %v2830, %v2829
      %v2862 = vpack.c.b16 %v2832, %v2831
      %v2863 = vpack.c.b16 %v2834, %v2833
      %v2864 = vpack.c.b16 %v2836, %v2835
      %v2865 = vpack.c.b16 %v2838, %v2837
      %v2866 = vpack.c.b16 %v2840, %v2839
      %v2867 = vpack.c.b16 %v2842, %v2841
      %v2868 = vpack.c.b16 %v2844, %v2843
      %v2869 = vpack.c.b16 %v2846, %v2845
      %v2870 = vpack.c.b16 %v2848, %v2847
      %v2871 = vpack.c.b16 %v2850, %v2849
      %v2872 = vpack.c.b16 %v2852, %v2851
      %v2873 = vpack.c.b16 %v2854, %v2853
      %v2874 = vpack.c.b16 %v2856, %v2855
      %v2875 = vpack.c.b16 %v2858, %v2857
      %v2876 = vpack.c.b16 %v2860, %v2859
      %v2880 = vunpack.c.l.b16 %v2527
      %v2881 = vunpack.c.l.b16 %v2528
      %v2882 = vunpack.c.l.b16 %v2529
      %v2883 = vpack.c.b16 %v2881, %v2880
      %v2884 = vpack.c.b16 %v2882, %v2882
      %v2887 = vsel %vm2655, %v2861, 0
      %v2890 = vsel %vm2655, %v2862, 0
      %v2893 = vsel %vm2655, %v2863, 0
      %v2896 = vsel %vm2655, %v2864, 0
      %v2899 = vsel %vm2655, %v2865, 0
      %v2902 = vsel %vm2655, %v2866, 0
      %v2905 = vsel %vm2655, %v2867, 0
      %v2908 = vsel %vm2655, %v2868, 0
      %v2911 = vsel %vm2655, %v2869, 0
      %v2914 = vsel %vm2655, %v2870, 0
      %v2917 = vsel %vm2655, %v2871, 0
      %v2920 = vsel %vm2655, %v2872, 0
      %v2923 = vsel %vm2655, %v2873, 0
      %v2926 = vsel %vm2655, %v2874, 0
      %v2929 = vsel %vm2655, %v2875, 0
      %v2932 = vsel %vm2655, %v2876, 0
      %v2935 = vsel %vm2704, %v2884, 0
      %2937 = vmatpush.bf16.msra.mxu0 0
      %2938 = vmatpush.bf16.msra.mxu0 0
      %2939 = vmatpush.bf16.msra.mxu0 0
      %2940 = vmatpush.bf16.msra.mxu0 0
      %2941 = vmatpush.bf16.msra.mxu0 0
      %2942 = vmatpush.bf16.msra.mxu0 0
      %2943 = vmatpush.bf16.msra.mxu0 %v2935
      %2944 = vmatpush.bf16.msra.mxu0 %v2883
      %2945 = vmatmul.bf16.gmra.mxu0 %v2887
      %v2946 = vpop.f32.mrf.mxu0
      %v2947 = vadd.f32 %v2718, %v2946
      %v2948 = vpop.f32.mrf.mxu0
      %v2949 = vadd.f32 %v2720, %v2948
      %2950 = vmatmul.bf16.gmra.mxu0 %v2890
      %v2951 = vpop.f32.mrf.mxu0
      %v2952 = vadd.f32 %v2723, %v2951
      %v2953 = vpop.f32.mrf.mxu0
      %v2954 = vadd.f32 %v2725, %v2953
      %2955 = vmatmul.bf16.gmra.mxu0 %v2893
      %v2956 = vpop.f32.mrf.mxu0
      %v2957 = vadd.f32 %v2728, %v2956
      %v2958 = vpop.f32.mrf.mxu0
      %v2959 = vadd.f32 %v2730, %v2958
      %2960 = vmatmul.bf16.gmra.mxu0 %v2896
      %v2961 = vpop.f32.mrf.mxu0
      %v2962 = vadd.f32 %v2733, %v2961
      %v2963 = vpop.f32.mrf.mxu0
      %v2964 = vadd.f32 %v2735, %v2963
      %2965 = vmatmul.bf16.gmra.mxu0 %v2899
      %v2966 = vpop.f32.mrf.mxu0
      %v2967 = vadd.f32 %v2738, %v2966
      %v2968 = vpop.f32.mrf.mxu0
      %v2969 = vadd.f32 %v2740, %v2968
      %2970 = vmatmul.bf16.gmra.mxu0 %v2902
      %v2971 = vpop.f32.mrf.mxu0
      %v2972 = vadd.f32 %v2743, %v2971
      %v2973 = vpop.f32.mrf.mxu0
      %v2974 = vadd.f32 %v2745, %v2973
      %2975 = vmatmul.bf16.gmra.mxu0 %v2905
      %v2976 = vpop.f32.mrf.mxu0
      %v2977 = vadd.f32 %v2748, %v2976
      %v2978 = vpop.f32.mrf.mxu0
      %v2979 = vadd.f32 %v2750, %v2978
      %2980 = vmatmul.bf16.gmra.mxu0 %v2908
      %v2981 = vpop.f32.mrf.mxu0
      %v2982 = vadd.f32 %v2753, %v2981
      %v2983 = vpop.f32.mrf.mxu0
      %v2984 = vadd.f32 %v2755, %v2983
      %2985 = vmatmul.bf16.gmra.mxu0 %v2911
      %v2986 = vpop.f32.mrf.mxu0
      %v2987 = vadd.f32 %v2758, %v2986
      %v2988 = vpop.f32.mrf.mxu0
      %v2989 = vadd.f32 %v2760, %v2988
      %2990 = vmatmul.bf16.gmra.mxu0 %v2914
      %v2991 = vpop.f32.mrf.mxu0
      %v2992 = vadd.f32 %v2763, %v2991
      %v2993 = vpop.f32.mrf.mxu0
      %v2994 = vadd.f32 %v2765, %v2993
      %2995 = vmatmul.bf16.gmra.mxu0 %v2917
      %v2996 = vpop.f32.mrf.mxu0
      %v2997 = vadd.f32 %v2768, %v2996
      %v2998 = vpop.f32.mrf.mxu0
      %v2999 = vadd.f32 %v2770, %v2998
      %3000 = vmatmul.bf16.gmra.mxu0 %v2920
      %v3001 = vpop.f32.mrf.mxu0
      %v3002 = vadd.f32 %v2773, %v3001
      %v3003 = vpop.f32.mrf.mxu0
      %v3004 = vadd.f32 %v2775, %v3003
      %3005 = vmatmul.bf16.gmra.mxu0 %v2923
      %v3006 = vpop.f32.mrf.mxu0
      %v3007 = vadd.f32 %v2778, %v3006
      %v3008 = vpop.f32.mrf.mxu0
      %v3009 = vadd.f32 %v2780, %v3008
      %3010 = vmatmul.bf16.gmra.mxu0 %v2926
      %v3011 = vpop.f32.mrf.mxu0
      %v3012 = vadd.f32 %v2783, %v3011
      %v3013 = vpop.f32.mrf.mxu0
      %v3014 = vadd.f32 %v2785, %v3013
      %3015 = vmatmul.bf16.gmra.mxu0 %v2929
      %v3016 = vpop.f32.mrf.mxu0
      %v3017 = vadd.f32 %v2788, %v3016
      %v3018 = vpop.f32.mrf.mxu0
      %v3019 = vadd.f32 %v2790, %v3018
      %3020 = vmatmul.bf16.gmra.mxu0 %v2932
      %v3021 = vpop.f32.mrf.mxu0
      %v3022 = vadd.f32 %v2793, %v3021
      %v3023 = vpop.f32.mrf.mxu0
      %v3024 = vadd.f32 %v2795, %v3023
      %3025 = vdwg.mxu0
      %s3026 = scalar_lea.vmem [#allocation3], 16
      %v3027 = vld [vmem:[%s3026] sm:$0xf]
      %v3028 = vld [vmem:[%s3026 + $0x4] sm:$0xf]
      %v3029 = vld [vmem:[%s3026 + $0x8] sm:$0xf]
      %v3030 = vld [vmem:[%s3026 + $0xc] sm:$0xf]
      %v3031 = vld [vmem:[%s3026 + $0x10] sm:$0xf]
      %v3032 = vld [vmem:[%s3026 + $0x14] sm:$0xf]
      %v3033 = vld [vmem:[%s3026 + $0x18] sm:$0xf]
      %v3034 = vld [vmem:[%s3026 + $0x1c] sm:$0xf]
      %v3035 = vld [vmem:[%s3026 + $0x20] sm:$0xf]
      %v3036 = vld [vmem:[%s3026 + $0x24] sm:$0xf]
      %v3037 = vld [vmem:[%s3026 + $0x28] sm:$0xf]
      %v3038 = vld [vmem:[%s3026 + $0x2c] sm:$0xf]
      %v3039 = vld [vmem:[%s3026 + $0x30] sm:$0xf]
      %v3040 = vld [vmem:[%s3026 + $0x34] sm:$0xf]
      %v3041 = vld [vmem:[%s3026 + $0x38] sm:$0xf]
      %v3042 = vld [vmem:[%s3026 + $0x3c] sm:$0xf]
      %v3043 = vld [vmem:[%s3026 + $0x40] sm:$0xf]
      %v3044 = vld [vmem:[%s3026 + $0x44] sm:$0xf]
      %v3045 = vld [vmem:[%s3026 + $0x48] sm:$0xf]
      %v3046 = vld [vmem:[%s3026 + $0x4c] sm:$0xf]
      %v3047 = vld [vmem:[%s3026 + $0x50] sm:$0xf]
      %v3048 = vld [vmem:[%s3026 + $0x54] sm:$0xf]
      %v3049 = vld [vmem:[%s3026 + $0x58] sm:$0xf]
      %v3050 = vld [vmem:[%s3026 + $0x5c] sm:$0xf]
      %v3051 = vld [vmem:[%s3026 + $0x60] sm:$0xf]
      %v3052 = vld [vmem:[%s3026 + $0x64] sm:$0xf]
      %v3053 = vld [vmem:[%s3026 + $0x68] sm:$0xf]
      %v3054 = vld [vmem:[%s3026 + $0x6c] sm:$0xf]
      %v3055 = vld [vmem:[%s3026 + $0x70] sm:$0xf]
      %v3056 = vld [vmem:[%s3026 + $0x74] sm:$0xf]
      %v3057 = vld [vmem:[%s3026 + $0x78] sm:$0xf]
      %v3058 = vld [vmem:[%s3026 + $0x7c] sm:$0xf]
      %s3059 = scalar_lea.vmem %s6, 24
      %v3060 = vld [vmem:[%s3059] sm:$0xf]
      %v3061 = vld [vmem:[%s3059 + $0x4] sm:$0xf]
      %v3062 = vld [vmem:[%s3059 + $0x8] sm:$0xf]
      %v3095 = vunpack.c.l.b16 %v3027
      %v3096 = vunpack.c.l.b16 %v3028
      %v3097 = vunpack.c.l.b16 %v3029
      %v3098 = vunpack.c.l.b16 %v3030
      %v3099 = vunpack.c.l.b16 %v3031
      %v3100 = vunpack.c.l.b16 %v3032
      %v3101 = vunpack.c.l.b16 %v3033
      %v3102 = vunpack.c.l.b16 %v3034
      %v3103 = vunpack.c.l.b16 %v3035
      %v3104 = vunpack.c.l.b16 %v3036
      %v3105 = vunpack.c.l.b16 %v3037
      %v3106 = vunpack.c.l.b16 %v3038
      %v3107 = vunpack.c.l.b16 %v3039
      %v3108 = vunpack.c.l.b16 %v3040
      %v3109 = vunpack.c.l.b16 %v3041
      %v3110 = vunpack.c.l.b16 %v3042
      %v3111 = vunpack.c.l.b16 %v3043
      %v3112 = vunpack.c.l.b16 %v3044
      %v3113 = vunpack.c.l.b16 %v3045
      %v3114 = vunpack.c.l.b16 %v3046
      %v3115 = vunpack.c.l.b16 %v3047
      %v3116 = vunpack.c.l.b16 %v3048
      %v3117 = vunpack.c.l.b16 %v3049
      %v3118 = vunpack.c.l.b16 %v3050
      %v3119 = vunpack.c.l.b16 %v3051
      %v3120 = vunpack.c.l.b16 %v3052
      %v3121 = vunpack.c.l.b16 %v3053
      %v3122 = vunpack.c.l.b16 %v3054
      %v3123 = vunpack.c.l.b16 %v3055
      %v3124 = vunpack.c.l.b16 %v3056
      %v3125 = vunpack.c.l.b16 %v3057
      %v3126 = vunpack.c.l.b16 %v3058
      %v3127 = vpack.c.b16 %v3096, %v3095
      %v3128 = vpack.c.b16 %v3098, %v3097
      %v3129 = vpack.c.b16 %v3100, %v3099
      %v3130 = vpack.c.b16 %v3102, %v3101
      %v3131 = vpack.c.b16 %v3104, %v3103
      %v3132 = vpack.c.b16 %v3106, %v3105
      %v3133 = vpack.c.b16 %v3108, %v3107
      %v3134 = vpack.c.b16 %v3110, %v3109
      %v3135 = vpack.c.b16 %v3112, %v3111
      %v3136 = vpack.c.b16 %v3114, %v3113
      %v3137 = vpack.c.b16 %v3116, %v3115
      %v3138 = vpack.c.b16 %v3118, %v3117
      %v3139 = vpack.c.b16 %v3120, %v3119
      %v3140 = vpack.c.b16 %v3122, %v3121
      %v3141 = vpack.c.b16 %v3124, %v3123
      %v3142 = vpack.c.b16 %v3126, %v3125
      %v3146 = vunpack.c.l.b16 %v3060
      %v3147 = vunpack.c.l.b16 %v3061
      %v3148 = vunpack.c.l.b16 %v3062
      %v3149 = vpack.c.b16 %v3147, %v3146
      %v3150 = vpack.c.b16 %v3148, %v3148
      %v3153 = vsel %vm2655, %v3127, 0
      %v3156 = vsel %vm2655, %v3128, 0
      %v3159 = vsel %vm2655, %v3129, 0
      %v3162 = vsel %vm2655, %v3130, 0
      %v3165 = vsel %vm2655, %v3131, 0
      %v3168 = vsel %vm2655, %v3132, 0
      %v3171 = vsel %vm2655, %v3133, 0
      %v3174 = vsel %vm2655, %v3134, 0
      %v3177 = vsel %vm2655, %v3135, 0
      %v3180 = vsel %vm2655, %v3136, 0
      %v3183 = vsel %vm2655, %v3137, 0
      %v3186 = vsel %vm2655, %v3138, 0
      %v3189 = vsel %vm2655, %v3139, 0
      %v3192 = vsel %vm2655, %v3140, 0
      %v3195 = vsel %vm2655, %v3141, 0
      %v3198 = vsel %vm2655, %v3142, 0
      %v3201 = vsel %vm2704, %v3150, 0
      %3203 = vmatpush.bf16.msra.mxu0 0
      %3204 = vmatpush.bf16.msra.mxu0 0
      %3205 = vmatpush.bf16.msra.mxu0 0
      %3206 = vmatpush.bf16.msra.mxu0 0
      %3207 = vmatpush.bf16.msra.mxu0 0
      %3208 = vmatpush.bf16.msra.mxu0 0
      %3209 = vmatpush.bf16.msra.mxu0 %v3201
      %3210 = vmatpush.bf16.msra.mxu0 %v3149
      %3211 = vmatmul.bf16.gmra.mxu0 %v3153
      %v3212 = vpop.f32.mrf.mxu0
      %v3213 = vadd.f32 0.0, %v3212
      %v3214 = vpop.f32.mrf.mxu0
      %v3215 = vadd.f32 0.0, %v3214
      %3216 = vmatmul.bf16.gmra.mxu0 %v3156
      %v3217 = vpop.f32.mrf.mxu0
      %v3218 = vadd.f32 0.0, %v3217
      %v3219 = vpop.f32.mrf.mxu0
      %v3220 = vadd.f32 0.0, %v3219
      %3221 = vmatmul.bf16.gmra.mxu0 %v3159
      %v3222 = vpop.f32.mrf.mxu0
      %v3223 = vadd.f32 0.0, %v3222
      %v3224 = vpop.f32.mrf.mxu0
      %v3225 = vadd.f32 0.0, %v3224
      %3226 = vmatmul.bf16.gmra.mxu0 %v3162
      %v3227 = vpop.f32.mrf.mxu0
      %v3228 = vadd.f32 0.0, %v3227
      %v3229 = vpop.f32.mrf.mxu0
      %v3230 = vadd.f32 0.0, %v3229
      %3231 = vmatmul.bf16.gmra.mxu0 %v3165
      %v3232 = vpop.f32.mrf.mxu0
      %v3233 = vadd.f32 0.0, %v3232
      %v3234 = vpop.f32.mrf.mxu0
      %v3235 = vadd.f32 0.0, %v3234
      %3236 = vmatmul.bf16.gmra.mxu0 %v3168
      %v3237 = vpop.f32.mrf.mxu0
      %v3238 = vadd.f32 0.0, %v3237
      %v3239 = vpop.f32.mrf.mxu0
      %v3240 = vadd.f32 0.0, %v3239
      %3241 = vmatmul.bf16.gmra.mxu0 %v3171
      %v3242 = vpop.f32.mrf.mxu0
      %v3243 = vadd.f32 0.0, %v3242
      %v3244 = vpop.f32.mrf.mxu0
      %v3245 = vadd.f32 0.0, %v3244
      %3246 = vmatmul.bf16.gmra.mxu0 %v3174
      %v3247 = vpop.f32.mrf.mxu0
      %v3248 = vadd.f32 0.0, %v3247
      %v3249 = vpop.f32.mrf.mxu0
      %v3250 = vadd.f32 0.0, %v3249
      %3251 = vmatmul.bf16.gmra.mxu0 %v3177
      %v3252 = vpop.f32.mrf.mxu0
      %v3253 = vadd.f32 0.0, %v3252
      %v3254 = vpop.f32.mrf.mxu0
      %v3255 = vadd.f32 0.0, %v3254
      %3256 = vmatmul.bf16.gmra.mxu0 %v3180
      %v3257 = vpop.f32.mrf.mxu0
      %v3258 = vadd.f32 0.0, %v3257
      %v3259 = vpop.f32.mrf.mxu0
      %v3260 = vadd.f32 0.0, %v3259
      %3261 = vmatmul.bf16.gmra.mxu0 %v3183
      %v3262 = vpop.f32.mrf.mxu0
      %v3263 = vadd.f32 0.0, %v3262
      %v3264 = vpop.f32.mrf.mxu0
      %v3265 = vadd.f32 0.0, %v3264
      %3266 = vmatmul.bf16.gmra.mxu0 %v3186
      %v3267 = vpop.f32.mrf.mxu0
      %v3268 = vadd.f32 0.0, %v3267
      %v3269 = vpop.f32.mrf.mxu0
      %v3270 = vadd.f32 0.0, %v3269
      %3271 = vmatmul.bf16.gmra.mxu0 %v3189
      %v3272 = vpop.f32.mrf.mxu0
      %v3273 = vadd.f32 0.0, %v3272
      %v3274 = vpop.f32.mrf.mxu0
      %v3275 = vadd.f32 0.0, %v3274
      %3276 = vmatmul.bf16.gmra.mxu0 %v3192
      %v3277 = vpop.f32.mrf.mxu0
      %v3278 = vadd.f32 0.0, %v3277
      %v3279 = vpop.f32.mrf.mxu0
      %v3280 = vadd.f32 0.0, %v3279
      %3281 = vmatmul.bf16.gmra.mxu0 %v3195
      %v3282 = vpop.f32.mrf.mxu0
      %v3283 = vadd.f32 0.0, %v3282
      %v3284 = vpop.f32.mrf.mxu0
      %v3285 = vadd.f32 0.0, %v3284
      %3286 = vmatmul.bf16.gmra.mxu0 %v3198
      %v3287 = vpop.f32.mrf.mxu0
      %v3288 = vadd.f32 0.0, %v3287
      %v3289 = vpop.f32.mrf.mxu0
      %v3290 = vadd.f32 0.0, %v3289
      %3291 = vdwg.mxu0
      %v3292 = vadd.f32 %v2947, %v3213
      %v3293 = vadd.f32 %v2949, %v3215
      %v3294 = vadd.f32 %v2952, %v3218
      %v3295 = vadd.f32 %v2954, %v3220
      %v3296 = vadd.f32 %v2957, %v3223
      %v3297 = vadd.f32 %v2959, %v3225
      %v3298 = vadd.f32 %v2962, %v3228
      %v3299 = vadd.f32 %v2964, %v3230
      %v3300 = vadd.f32 %v2967, %v3233
      %v3301 = vadd.f32 %v2969, %v3235
      %v3302 = vadd.f32 %v2972, %v3238
      %v3303 = vadd.f32 %v2974, %v3240
      %v3304 = vadd.f32 %v2977, %v3243
      %v3305 = vadd.f32 %v2979, %v3245
      %v3306 = vadd.f32 %v2982, %v3248
      %v3307 = vadd.f32 %v2984, %v3250
      %v3308 = vadd.f32 %v2987, %v3253
      %v3309 = vadd.f32 %v2989, %v3255
      %v3310 = vadd.f32 %v2992, %v3258
      %v3311 = vadd.f32 %v2994, %v3260
      %v3312 = vadd.f32 %v2997, %v3263
      %v3313 = vadd.f32 %v2999, %v3265
      %v3314 = vadd.f32 %v3002, %v3268
      %v3315 = vadd.f32 %v3004, %v3270
      %v3316 = vadd.f32 %v3007, %v3273
      %v3317 = vadd.f32 %v3009, %v3275
      %v3318 = vadd.f32 %v3012, %v3278
      %v3319 = vadd.f32 %v3014, %v3280
      %v3320 = vadd.f32 %v3017, %v3283
      %v3321 = vadd.f32 %v3019, %v3285
      %v3322 = vadd.f32 %v3022, %v3288
      %v3323 = vadd.f32 %v3024, %v3290
      %v3324 = vld [vmem:[%s327] sm:$0xff]
      %v3325 = vld [vmem:[%s327 + $0x8] sm:$0xff]
      %v3326 = vld [vmem:[%s327 + $0x10] sm:$0xff]
      %v3327 = vld [vmem:[%s327 + $0x18] sm:$0xff]
      %v3328 = vld [vmem:[%s327 + $0x20] sm:$0xff]
      %v3329 = vld [vmem:[%s327 + $0x28] sm:$0xff]
      %v3330 = vld [vmem:[%s327 + $0x30] sm:$0xff]
      %v3331 = vld [vmem:[%s327 + $0x38] sm:$0xff]
      %v3332 = vld [vmem:[%s327 + $0x40] sm:$0xff]
      %v3333 = vld [vmem:[%s327 + $0x48] sm:$0xff]
      %v3334 = vld [vmem:[%s327 + $0x50] sm:$0xff]
      %v3335 = vld [vmem:[%s327 + $0x58] sm:$0xff]
      %v3336 = vld [vmem:[%s327 + $0x60] sm:$0xff]
      %v3337 = vld [vmem:[%s327 + $0x68] sm:$0xff]
      %v3338 = vld [vmem:[%s327 + $0x70] sm:$0xff]
      %v3339 = vld [vmem:[%s327 + $0x78] sm:$0xff]
      %v3340 = vld [vmem:[%s327 + $0x80] sm:$0xff]
      %v3341 = vld [vmem:[%s327 + $0x88] sm:$0xff]
      %v3342 = vld [vmem:[%s327 + $0x90] sm:$0xff]
      %v3343 = vld [vmem:[%s327 + $0x98] sm:$0xff]
      %v3344 = vld [vmem:[%s327 + $0xa0] sm:$0xff]
      %v3345 = vld [vmem:[%s327 + $0xa8] sm:$0xff]
      %v3346 = vld [vmem:[%s327 + $0xb0] sm:$0xff]
      %v3347 = vld [vmem:[%s327 + $0xb8] sm:$0xff]
      %v3348 = vld [vmem:[%s327 + $0xc0] sm:$0xff]
      %v3349 = vld [vmem:[%s327 + $0xc8] sm:$0xff]
      %v3350 = vld [vmem:[%s327 + $0xd0] sm:$0xff]
      %v3351 = vld [vmem:[%s327 + $0xd8] sm:$0xff]
      %v3352 = vld [vmem:[%s327 + $0xe0] sm:$0xff]
      %v3353 = vld [vmem:[%s327 + $0xe8] sm:$0xff]
      %v3354 = vld [vmem:[%s327 + $0xf0] sm:$0xff]
      %v3355 = vld [vmem:[%s327 + $0xf8] sm:$0xff]
      %v3356 = vpack.c.bf16 %v3325, %v3324
      %v3357 = vpack.c.bf16 %v3327, %v3326
      %v3358 = vpack.c.bf16 %v3329, %v3328
      %v3359 = vpack.c.bf16 %v3331, %v3330
      %v3360 = vpack.c.bf16 %v3333, %v3332
      %v3361 = vpack.c.bf16 %v3335, %v3334
      %v3362 = vpack.c.bf16 %v3337, %v3336
      %v3363 = vpack.c.bf16 %v3339, %v3338
      %v3364 = vpack.c.bf16 %v3341, %v3340
      %v3365 = vpack.c.bf16 %v3343, %v3342
      %v3366 = vpack.c.bf16 %v3345, %v3344
      %v3367 = vpack.c.bf16 %v3347, %v3346
      %v3368 = vpack.c.bf16 %v3349, %v3348
      %v3369 = vpack.c.bf16 %v3351, %v3350
      %v3370 = vpack.c.bf16 %v3353, %v3352
      %v3371 = vpack.c.bf16 %v3355, %v3354
      %v3372 = vld [vmem:[%s8] sm:$0x3]
      %v3374 = vsel %vm900, %v3356, 0
      %v3377 = vsel %vm900, %v3357, 0
      %v3380 = vsel %vm900, %v3358, 0
      %v3383 = vsel %vm900, %v3359, 0
      %v3386 = vsel %vm900, %v3360, 0
      %v3389 = vsel %vm900, %v3361, 0
      %v3392 = vsel %vm900, %v3362, 0
      %v3395 = vsel %vm900, %v3363, 0
      %v3398 = vsel %vm900, %v3364, 0
      %v3401 = vsel %vm900, %v3365, 0
      %v3404 = vsel %vm900, %v3366, 0
      %v3407 = vsel %vm900, %v3367, 0
      %v3410 = vsel %vm900, %v3368, 0
      %v3413 = vsel %vm900, %v3369, 0
      %v3416 = vsel %vm900, %v3370, 0
      %v3419 = vsel %vm900, %v3371, 0
      %vm3421 = vcmask 1041408
      %v3423 = vsel %vm3421, %v3372, 0
      %3425 = vmatpush.bf16.msra.mxu0 0
      %3426 = vmatpush.bf16.msra.mxu0 0
      %3427 = vmatpush.bf16.msra.mxu0 0
      %3428 = vmatpush.bf16.msra.mxu0 0
      %3429 = vmatpush.bf16.msra.mxu0 0
      %3430 = vmatpush.bf16.msra.mxu0 0
      %3431 = vmatpush.bf16.msra.mxu0 0
      %3432 = vmatpush.bf16.msra.mxu0 %v3423
      %3433 = vmatmul.bf16.gmra.mxu0 %v3374
      %v3434 = vpop.f32.mrf.mxu0
      %v3435 = vadd.f32 0.0, %v3434
      %v3436 = vpop.f32.mrf.mxu0
      %v3437 = vadd.f32 0.0, %v3436
      %3438 = vmatmul.bf16.gmra.mxu0 %v3377
      %v3439 = vpop.f32.mrf.mxu0
      %v3440 = vadd.f32 0.0, %v3439
      %v3441 = vpop.f32.mrf.mxu0
      %v3442 = vadd.f32 0.0, %v3441
      %3443 = vmatmul.bf16.gmra.mxu0 %v3380
      %v3444 = vpop.f32.mrf.mxu0
      %v3445 = vadd.f32 0.0, %v3444
      %v3446 = vpop.f32.mrf.mxu0
      %v3447 = vadd.f32 0.0, %v3446
      %3448 = vmatmul.bf16.gmra.mxu0 %v3383
      %v3449 = vpop.f32.mrf.mxu0
      %v3450 = vadd.f32 0.0, %v3449
      %v3451 = vpop.f32.mrf.mxu0
      %v3452 = vadd.f32 0.0, %v3451
      %3453 = vmatmul.bf16.gmra.mxu0 %v3386
      %v3454 = vpop.f32.mrf.mxu0
      %v3455 = vadd.f32 0.0, %v3454
      %v3456 = vpop.f32.mrf.mxu0
      %v3457 = vadd.f32 0.0, %v3456
      %3458 = vmatmul.bf16.gmra.mxu0 %v3389
      %v3459 = vpop.f32.mrf.mxu0
      %v3460 = vadd.f32 0.0, %v3459
      %v3461 = vpop.f32.mrf.mxu0
      %v3462 = vadd.f32 0.0, %v3461
      %3463 = vmatmul.bf16.gmra.mxu0 %v3392
      %v3464 = vpop.f32.mrf.mxu0
      %v3465 = vadd.f32 0.0, %v3464
      %v3466 = vpop.f32.mrf.mxu0
      %v3467 = vadd.f32 0.0, %v3466
      %3468 = vmatmul.bf16.gmra.mxu0 %v3395
      %v3469 = vpop.f32.mrf.mxu0
      %v3470 = vadd.f32 0.0, %v3469
      %v3471 = vpop.f32.mrf.mxu0
      %v3472 = vadd.f32 0.0, %v3471
      %3473 = vmatmul.bf16.gmra.mxu0 %v3398
      %v3474 = vpop.f32.mrf.mxu0
      %v3475 = vadd.f32 0.0, %v3474
      %v3476 = vpop.f32.mrf.mxu0
      %v3477 = vadd.f32 0.0, %v3476
      %3478 = vmatmul.bf16.gmra.mxu0 %v3401
      %v3479 = vpop.f32.mrf.mxu0
      %v3480 = vadd.f32 0.0, %v3479
      %v3481 = vpop.f32.mrf.mxu0
      %v3482 = vadd.f32 0.0, %v3481
      %3483 = vmatmul.bf16.gmra.mxu0 %v3404
      %v3484 = vpop.f32.mrf.mxu0
      %v3485 = vadd.f32 0.0, %v3484
      %v3486 = vpop.f32.mrf.mxu0
      %v3487 = vadd.f32 0.0, %v3486
      %3488 = vmatmul.bf16.gmra.mxu0 %v3407
      %v3489 = vpop.f32.mrf.mxu0
      %v3490 = vadd.f32 0.0, %v3489
      %v3491 = vpop.f32.mrf.mxu0
      %v3492 = vadd.f32 0.0, %v3491
      %3493 = vmatmul.bf16.gmra.mxu0 %v3410
      %v3494 = vpop.f32.mrf.mxu0
      %v3495 = vadd.f32 0.0, %v3494
      %v3496 = vpop.f32.mrf.mxu0
      %v3497 = vadd.f32 0.0, %v3496
      %3498 = vmatmul.bf16.gmra.mxu0 %v3413
      %v3499 = vpop.f32.mrf.mxu0
      %v3500 = vadd.f32 0.0, %v3499
      %v3501 = vpop.f32.mrf.mxu0
      %v3502 = vadd.f32 0.0, %v3501
      %3503 = vmatmul.bf16.gmra.mxu0 %v3416
      %v3504 = vpop.f32.mrf.mxu0
      %v3505 = vadd.f32 0.0, %v3504
      %v3506 = vpop.f32.mrf.mxu0
      %v3507 = vadd.f32 0.0, %v3506
      %3508 = vmatmul.bf16.gmra.mxu0 %v3419
      %v3509 = vpop.f32.mrf.mxu0
      %v3510 = vadd.f32 0.0, %v3509
      %v3511 = vpop.f32.mrf.mxu0
      %v3512 = vadd.f32 0.0, %v3511
      %3513 = vdwg.mxu0
      %v3514 = vadd.f32 %v3292, %v3435
      %v3515 = vadd.f32 %v3293, %v3437
      %v3516 = vadd.f32 %v3294, %v3440
      %v3517 = vadd.f32 %v3295, %v3442
      %v3518 = vadd.f32 %v3296, %v3445
      %v3519 = vadd.f32 %v3297, %v3447
      %v3520 = vadd.f32 %v3298, %v3450
      %v3521 = vadd.f32 %v3299, %v3452
      %v3522 = vadd.f32 %v3300, %v3455
      %v3523 = vadd.f32 %v3301, %v3457
      %v3524 = vadd.f32 %v3302, %v3460
      %v3525 = vadd.f32 %v3303, %v3462
      %v3526 = vadd.f32 %v3304, %v3465
      %v3527 = vadd.f32 %v3305, %v3467
      %v3528 = vadd.f32 %v3306, %v3470
      %v3529 = vadd.f32 %v3307, %v3472
      %v3530 = vadd.f32 %v3308, %v3475
      %v3531 = vadd.f32 %v3309, %v3477
      %v3532 = vadd.f32 %v3310, %v3480
      %v3533 = vadd.f32 %v3311, %v3482
      %v3534 = vadd.f32 %v3312, %v3485
      %v3535 = vadd.f32 %v3313, %v3487
      %v3536 = vadd.f32 %v3314, %v3490
      %v3537 = vadd.f32 %v3315, %v3492
      %v3538 = vadd.f32 %v3316, %v3495
      %v3539 = vadd.f32 %v3317, %v3497
      %v3540 = vadd.f32 %v3318, %v3500
      %v3541 = vadd.f32 %v3319, %v3502
      %v3542 = vadd.f32 %v3320, %v3505
      %v3543 = vadd.f32 %v3321, %v3507
      %v3544 = vadd.f32 %v3322, %v3510
      %v3545 = vadd.f32 %v3323, %v3512
      %v3546 = vld [vmem:[%s7] sm:$0x1]
      %v3548 = vperm.slane %v3546, 0
      %v3550 = vadd.f32 %v3514, %v3548
      %v3551 = vadd.f32 %v3515, %v3548
      %v3552 = vadd.f32 %v3516, %v3548
      %v3553 = vadd.f32 %v3517, %v3548
      %v3554 = vadd.f32 %v3518, %v3548
      %v3555 = vadd.f32 %v3519, %v3548
      %v3556 = vadd.f32 %v3520, %v3548
      %v3557 = vadd.f32 %v3521, %v3548
      %v3558 = vadd.f32 %v3522, %v3548
      %v3559 = vadd.f32 %v3523, %v3548
      %v3560 = vadd.f32 %v3524, %v3548
      %v3561 = vadd.f32 %v3525, %v3548
      %v3562 = vadd.f32 %v3526, %v3548
      %v3563 = vadd.f32 %v3527, %v3548
      %v3564 = vadd.f32 %v3528, %v3548
      %v3565 = vadd.f32 %v3529, %v3548
      %v3566 = vadd.f32 %v3530, %v3548
      %v3567 = vadd.f32 %v3531, %v3548
      %v3568 = vadd.f32 %v3532, %v3548
      %v3569 = vadd.f32 %v3533, %v3548
      %v3570 = vadd.f32 %v3534, %v3548
      %v3571 = vadd.f32 %v3535, %v3548
      %v3572 = vadd.f32 %v3536, %v3548
      %v3573 = vadd.f32 %v3537, %v3548
      %v3574 = vadd.f32 %v3538, %v3548
      %v3575 = vadd.f32 %v3539, %v3548
      %v3576 = vadd.f32 %v3540, %v3548
      %v3577 = vadd.f32 %v3541, %v3548
      %v3578 = vadd.f32 %v3542, %v3548
      %v3579 = vadd.f32 %v3543, %v3548
      %v3580 = vadd.f32 %v3544, %v3548
      %v3581 = vadd.f32 %v3545, %v3548
      %3582 = vst.msk [vmem:[%s332] sm:$0xff] %vm933, %v3550
      %3583 = vst.msk [vmem:[%s332 + $0x8] sm:$0xff] %vm933, %v3551
      %3584 = vst.msk [vmem:[%s332 + $0x10] sm:$0xff] %vm933, %v3552
      %3585 = vst.msk [vmem:[%s332 + $0x18] sm:$0xff] %vm933, %v3553
      %3586 = vst.msk [vmem:[%s332 + $0x20] sm:$0xff] %vm933, %v3554
      %3587 = vst.msk [vmem:[%s332 + $0x28] sm:$0xff] %vm933, %v3555
      %3588 = vst.msk [vmem:[%s332 + $0x30] sm:$0xff] %vm933, %v3556
      %3589 = vst.msk [vmem:[%s332 + $0x38] sm:$0xff] %vm933, %v3557
      %3590 = vst.msk [vmem:[%s332 + $0x40] sm:$0xff] %vm933, %v3558
      %3591 = vst.msk [vmem:[%s332 + $0x48] sm:$0xff] %vm933, %v3559
      %3592 = vst.msk [vmem:[%s332 + $0x50] sm:$0xff] %vm933, %v3560
      %3593 = vst.msk [vmem:[%s332 + $0x58] sm:$0xff] %vm933, %v3561
      %3594 = vst.msk [vmem:[%s332 + $0x60] sm:$0xff] %vm933, %v3562
      %3595 = vst.msk [vmem:[%s332 + $0x68] sm:$0xff] %vm933, %v3563
      %3596 = vst.msk [vmem:[%s332 + $0x70] sm:$0xff] %vm933, %v3564
      %3597 = vst.msk [vmem:[%s332 + $0x78] sm:$0xff] %vm933, %v3565
      %3598 = vst.msk [vmem:[%s332 + $0x80] sm:$0xff] %vm933, %v3566
      %3599 = vst.msk [vmem:[%s332 + $0x88] sm:$0xff] %vm933, %v3567
      %3600 = vst.msk [vmem:[%s332 + $0x90] sm:$0xff] %vm933, %v3568
      %3601 = vst.msk [vmem:[%s332 + $0x98] sm:$0xff] %vm933, %v3569
      %3602 = vst.msk [vmem:[%s332 + $0xa0] sm:$0xff] %vm933, %v3570
      %3603 = vst.msk [vmem:[%s332 + $0xa8] sm:$0xff] %vm933, %v3571
      %3604 = vst.msk [vmem:[%s332 + $0xb0] sm:$0xff] %vm933, %v3572
      %3605 = vst.msk [vmem:[%s332 + $0xb8] sm:$0xff] %vm933, %v3573
      %3606 = vst.msk [vmem:[%s332 + $0xc0] sm:$0xff] %vm933, %v3574
      %3607 = vst.msk [vmem:[%s332 + $0xc8] sm:$0xff] %vm933, %v3575
      %3608 = vst.msk [vmem:[%s332 + $0xd0] sm:$0xff] %vm933, %v3576
      %3609 = vst.msk [vmem:[%s332 + $0xd8] sm:$0xff] %vm933, %v3577
      %3610 = vst.msk [vmem:[%s332 + $0xe0] sm:$0xff] %vm933, %v3578
      %3611 = vst.msk [vmem:[%s332 + $0xe8] sm:$0xff] %vm933, %v3579
      %3612 = vst.msk [vmem:[%s332 + $0xf0] sm:$0xff] %vm933, %v3580
      %3613 = vst.msk [vmem:[%s332 + $0xf8] sm:$0xff] %vm933, %v3581
      %p3614 = scmp.lt.s32.totalorder %s20, 1
      %s3615 = scalar_select %p3614, %s20, 1
      %s3616 = smul.addr %s3615, 32
      %s3617 = smul.addr %s3616, 8
      %s3618 = scalar_lea.vmem %s9, %s3617
      // Predicated region
      $region57: #{tpu_custom_call.1} parent=55 // pred_check
        %p3619 = pneg %p232
      $region58: #{tpu_custom_call.1} parent=55 // pred_check_branch
        %3621 = sbr.rel (%p3619) target = $region60
      $region59: #{tpu_custom_call.1} parent=55 // pred_region
        _
      $region60: #{tpu_custom_call.1} parent=55 // pred_fallthru
        _
    $region56: #{tpu_custom_call.1} parent=5 // pred_fallthru
      _
    %p3622 = scmp.le.s32.totalorder 2, %s15
    // Predicated region
    $region61: #{tpu_custom_call.1} parent=5 // pred_check
      %p3623 = pneg %p3622
    $region62: #{tpu_custom_call.1} parent=5 // pred_check_branch
      %3625 = sbr.rel (%p3623) target = $region64
    $region63: #{tpu_custom_call.1} parent=5 // pred_region
      %s3626 = ssub.s32 %s15, 2
      // Predicated region
      $region65: #{tpu_custom_call.1} parent=63 // pred_check
        %p3627 = pneg %p238
      $region66: #{tpu_custom_call.1} parent=63 // pred_check_branch
        %3629 = sbr.rel (%p3627) target = $region68
      $region67: #{tpu_custom_call.1} parent=63 // pred_region
        %p3630 = scmp.lt.s32.totalorder %s21, 1
        %s3631 = scalar_select %p3630, %s21, 1
        %s3632 = smul.addr %s3631, 32
        %s3633 = smul.addr %s3632, 8
        %s3634 = scalar_lea.vmem %s9, %s3633
      $region68: #{tpu_custom_call.1} parent=63 // pred_fallthru
        _
    $region64: #{tpu_custom_call.1} parent=5 // pred_fallthru
      _
  $region6: #{tpu_custom_call.1} parent=0 // loop_footer
    %s19 = sadd.s32 1, %s15
  $region7: #{tpu_custom_call.1} parent=0 // loop_footer_branch
    %14 = sbr.rel target = $region3
  $region8: #{tpu_custom_call.1} parent=0 // loop_exit
    _

</llo_original>
